<compile_context>
chip_gen: v7x
topology: tpu7x:2x2x1
jax: 0.10.0
libtpu: 0.0.40
codegen_flags: <defaults>
</compile_context>

<pallas_src>
import jax
import jax.numpy as jnp
from jax.experimental import pallas as pl
from jax.experimental.pallas import tpu as pltpu


def _round_up(v, m):
    return (v + m - 1) // m * m


def _block_footprint(th, W, Cip, Cop):
    """Per-step VMEM bytes that scale with the row-block height."""
    im1 = (th + 2) * W * 9 * Cip * 2            # bf16 conv1 im2col (+1 row halo each side)
    pad2 = (th + 2) * (W + 2) * Cop * 2         # bf16 padded conv1 activation
    im2 = th * W * (9 * Cop + Cip) * 2          # bf16 conv2 im2col + fused shortcut cols
    outb = 2 * th * W * Cop * 4                 # double-buffered f32 output block
    return im1 + pad2 + im2 + outb


def _pick_row_block(H, W, Cip, Cop, budget_bytes):
    """Largest divisor of H (<= 8 rows preferred) whose scratch footprint fits."""
    divisors = [d for d in range(1, H + 1) if H % d == 0]
    ok = [d for d in divisors if _block_footprint(d, W, Cip, Cop) <= budget_bytes]
    if not ok:
        return min(divisors)
    capped = [d for d in ok if d <= 8]          # multiple-of-8 sublane tile target; keeps
    return max(capped) if capped else min(ok)   # enough grid steps for pipeline / megacore


def _residual_block_kernel(xp_ref, w1_ref, w2s_ref, b1_ref, b2s_ref,
                           out_ref, im1_ref, pad2_ref, im2_ref):
    # Blocks (channel dims padded to multiples of 128):
    #   xp_ref  : (1, H+4, W+2, Cip) bf16  spatially pre-padded input image (resident
    #                                      across the row-block axis of the grid)
    #   w1_ref  : (9*Cip, Cop)       bf16  conv1 im2col weights (bn1 scale folded)
    #   w2s_ref : (9*Cop+Cip, Cop)   bf16  [conv2 im2col weights ; 1x1 shortcut weights]
    #   b1_ref  : (1, Cop)           f32   bn1 folded bias
    #   b2s_ref : (1, Cop)           f32   bn2 + bn_s folded biases
    #   out_ref : (1, TH, W, Cop)    f32   one row block of the output
    # Scratch (all bf16):
    #   im1_ref : (TH+2, W, 9*Cip)         conv1 im2col (1-row halo each side)
    #   pad2_ref: (TH+2, W+2, Cop)         zero-padded conv1 activation
    #   im2_ref : (TH, W, 9*Cop+Cip)       conv2 im2col + centre-tap shortcut columns
    TH = out_ref.shape[1]
    W = out_ref.shape[2]
    Cop = out_ref.shape[3]
    Cip = xp_ref.shape[3]

    r = pl.program_id(1)
    last_r = pl.num_programs(1) - 1
    rs = pl.multiple_of(r * TH, TH)      # first output row of this block

    # ---- conv1: fused 9-tap im2col over TH+2 rows (halo rows recomputed from real
    #      neighbouring input; xp already holds the image-border zero padding) ----
    for ky in range(3):
        for kx in range(3):
            tap = ky * 3 + kx
            im1_ref[:, :, tap * Cip:(tap + 1) * Cip] = (
                xp_ref[0, pl.ds(rs + ky, TH + 2), kx:kx + W, :])

    patches1 = im1_ref[...].reshape((TH + 2) * W, 9 * Cip)
    acc1 = jnp.dot(patches1, w1_ref[...], preferred_element_type=jnp.float32)
    out1 = jnp.maximum(acc1 + b1_ref[...], 0.0)          # bn1 scale folded into w1

    # ---- zero-padded conv1 activation (bf16). Interior + side columns rewritten every
    #      step; top/bottom halo rows are zeroed ONLY at true image borders. ----
    pad2_ref[:, 1:W + 1, :] = out1.reshape(TH + 2, W, Cop).astype(jnp.bfloat16)
    pad2_ref[:, 0:1, :] = jnp.zeros((TH + 2, 1, Cop), jnp.bfloat16)
    pad2_ref[:, W + 1:W + 2, :] = jnp.zeros((TH + 2, 1, Cop), jnp.bfloat16)

    @pl.when(r == 0)                     # conv2 zero padding above the image
    def _():
        pad2_ref[0:1, :, :] = jnp.zeros((1, W + 2, Cop), jnp.bfloat16)

    @pl.when(r == last_r)                # conv2 zero padding below the image
    def _():
        pad2_ref[TH + 1:TH + 2, :, :] = jnp.zeros((1, W + 2, Cop), jnp.bfloat16)

    # ---- conv2 im2col + K-fused 1x1 shortcut (centre tap of the conv1 im2col is
    #      exactly x for the TH rows of this block) ----
    for ky in range(3):
        for kx in range(3):
            tap = ky * 3 + kx
            im2_ref[:, :, tap * Cop:(tap + 1) * Cop] = pad2_ref[ky:ky + TH, kx:kx + W, :]
    im2_ref[:, :, 9 * Cop:] = im1_ref[1:TH + 1, :, 4 * Cip:5 * Cip]

    patches2 = im2_ref[...].reshape(TH * W, 9 * Cop + Cip)
    acc2 = jnp.dot(patches2, w2s_ref[...], preferred_element_type=jnp.float32)
    out = jnp.maximum(acc2 + b2s_ref[...], 0.0)          # b2s = bn2 bias + bn_s bias
    out_ref[0] = out.reshape(TH, W, Cop).astype(out_ref.dtype)


def residual_block(x_nchw, p, eps=1e-5):
    """Forward pass of ResidualBlock (stride=1; Cin != Cout => conv shortcut)."""
    N, Ci, H, W = x_nchw.shape
    Co = p["w1"].shape[0]
    Cip = _round_up(Ci, 128)             # lane-dense / MXU-sized channel padding
    Cop = _round_up(Co, 128)

    # NCHW -> NHWC, pad channels to lane multiples, pre-pad spatially once in HBM with
    # the halo needed by BOTH convs (2 rows top/bottom, 1 col left/right), cast to bf16.
    x = jnp.transpose(x_nchw, (0, 2, 3, 1)).astype(jnp.float32)
    xp = jnp.pad(x, ((0, 0), (2, 2), (1, 1), (0, Cip - Ci))).astype(jnp.bfloat16)

    def fold_scale_bias(g, b, m, v):
        s = g / jnp.sqrt(v + eps)
        bias = b - m * s
        return s, jnp.pad(bias, (0, Cop - Co)).reshape(1, Cop).astype(jnp.float32)

    s1, b1 = fold_scale_bias(p["g1"], p["b1"], p["m1"], p["v1"])
    s2, b2 = fold_scale_bias(p["g2"], p["b2"], p["m2"], p["v2"])
    ss, bs = fold_scale_bias(p["gs"], p["bs"], p["ms"], p["vs"])

    # PyTorch conv weight (Co, Ci, kh, kw) -> (kh, kw, Ci, Co); fold BN scale on Co,
    # zero-pad channels, flatten tap-major (im2col form), cast to bf16 for the MXU.
    w1 = jnp.transpose(p["w1"], (2, 3, 1, 0)) * s1
    w1 = jnp.pad(w1, ((0, 0), (0, 0), (0, Cip - Ci), (0, Cop - Co)))
    w1 = w1.reshape(9 * Cip, Cop).astype(jnp.bfloat16)

    w2 = jnp.transpose(p["w2"], (2, 3, 1, 0)) * s2
    w2 = jnp.pad(w2, ((0, 0), (0, 0), (0, Cop - Co), (0, Cop - Co))).reshape(9 * Cop, Cop)

    ws = p["ws"][:, :, 0, 0].T * ss                      # (Ci, Co)
    ws = jnp.pad(ws, ((0, Cip - Ci), (0, Cop - Co)))

    # K-fuse the shortcut into conv2: stack ws under w2, fold bs into b2.
    w2s = jnp.concatenate([w2, ws], axis=0).astype(jnp.bfloat16)   # (9*Cop+Cip, Cop)
    b2s = b2 + bs

    # ---- generation-aware VMEM budgeting & row-block selection ----
    fixed_bytes = ((9 * Cip * Cop + (9 * Cop + Cip) * Cop) * 2     # bf16 weights
                   + 2 * Cop * 4 * 2                               # biases
                   + 2 * (H + 4) * (W + 2) * Cip * 2)              # double-buffered image
    try:
        vmem_cap = pltpu.get_tpu_info().vmem_capacity_bytes        # 128 MiB v5e/v6e, 64 v7x
    except Exception:
        vmem_cap = 64 * 1024 * 1024                                # conservative (v7x) floor
    block_budget = max(4 << 20, int(0.6 * vmem_cap) - 2 * fixed_bytes)
    TH = _pick_row_block(H, W, Cip, Cop, block_budget)
    est = 2 * fixed_bytes + _block_footprint(TH, W, Cip, Cop)
    vmem_limit = int(min(0.9 * vmem_cap, max(32 << 20, 1.5 * est)))

    def build_call(single_buffer_consts):
        def const_spec(shape):
            # Grid-invariant operands: never re-DMA'd; Buffered(1) drops their second
            # (useless) VMEM buffer when supported by this JAX/Mosaic build.
            if single_buffer_consts:
                return pl.BlockSpec(shape, lambda n, r: (0,) * len(shape),
                                    pipeline_mode=pl.Buffered(1))
            return pl.BlockSpec(shape, lambda n, r: (0,) * len(shape))

        return pl.pallas_call(
            _residual_block_kernel,
            out_shape=jax.ShapeDtypeStruct((N, H, W, Cop), jnp.float32),
            grid_spec=pltpu.PrefetchScalarGridSpec(
                num_scalar_prefetch=0,
                grid=(N, H // TH),
                in_specs=[
                    pl.BlockSpec((1, H + 4, W + 2, Cip), lambda n, r: (n, 0, 0, 0)),
                    const_spec((9 * Cip, Cop)),
                    const_spec((9 * Cop + Cip, Cop)),
                    const_spec((1, Cop)),
                    const_spec((1, Cop)),
                ],
                out_specs=pl.BlockSpec((1, TH, W, Cop), lambda n, r: (n, r, 0, 0)),
                scratch_shapes=[
                    pltpu.VMEM((TH + 2, W, 9 * Cip), jnp.bfloat16),        # conv1 im2col
                    pltpu.VMEM((TH + 2, W + 2, Cop), jnp.bfloat16),        # padded conv1 act
                    pltpu.VMEM((TH, W, 9 * Cop + Cip), jnp.bfloat16),      # conv2 im2col+sc
                ],
            ),
            compiler_params=pltpu.CompilerParams(
                dimension_semantics=("parallel", "parallel"),   # disjoint output blocks
                vmem_limit_bytes=vmem_limit),
        )

    try:
        out_nhwc = build_call(True)(xp, w1, w2s, b1, b2s)
    except Exception:
        # pipeline_mode=pl.Buffered(1) not available on this build; default buffering.
        out_nhwc = build_call(False)(xp, w1, w2s, b1, b2s)

    # drop channel padding, NHWC -> NCHW
    return jnp.transpose(out_nhwc[..., :Co], (0, 3, 1, 2))


def _reference(x, p, eps=1e-5):
    """Pure-JAX reference matching the PyTorch forward (inference-mode BN)."""
    dn = ("NCHW", "OIHW", "NCHW")

    def bn(y, g, b, m, v):
        sh = (1, -1, 1, 1)
        return (y - m.reshape(sh)) / jnp.sqrt(v.reshape(sh) + eps) \
            * g.reshape(sh) + b.reshape(sh)

    out = jax.lax.conv_general_dilated(x, p["w1"], (1, 1), ((1, 1), (1, 1)),
                                       dimension_numbers=dn)
    out = jax.nn.relu(bn(out, p["g1"], p["b1"], p["m1"], p["v1"]))
    out = jax.lax.conv_general_dilated(out, p["w2"], (1, 1), ((1, 1), (1, 1)),
                                       dimension_numbers=dn)
    out = bn(out, p["g2"], p["b2"], p["m2"], p["v2"])
    sc = jax.lax.conv_general_dilated(x, p["ws"], (1, 1), ((0, 0), (0, 0)),
                                      dimension_numbers=dn)
    sc = bn(sc, p["gs"], p["bs"], p["ms"], p["vs"])
    return jax.nn.relu(out + sc)


if __name__ == "__main__":
    N, Ci, Co, H, W = 2, 4, 8, 16, 16
    keys = jax.random.split(jax.random.PRNGKey(0), 16)

    x = jax.random.normal(keys[0], (N, Ci, H, W), jnp.float32)

    def bn_params(k, c):
        k1, k2, k3, k4 = jax.random.split(k, 4)
        return (1.0 + 0.1 * jax.random.normal(k1, (c,), jnp.float32),    # gamma
                0.1 * jax.random.normal(k2, (c,), jnp.float32),          # beta
                0.1 * jax.random.normal(k3, (c,), jnp.float32),          # running mean
                0.5 + jnp.abs(jax.random.normal(k4, (c,), jnp.float32))) # running var

    g1, b1, m1, v1 = bn_params(keys[4], Co)
    g2, b2, m2, v2 = bn_params(keys[5], Co)
    gs, bs, ms, vs = bn_params(keys[6], Co)

    params = dict(
        w1=0.2 * jax.random.normal(keys[1], (Co, Ci, 3, 3), jnp.float32),
        w2=0.2 * jax.random.normal(keys[2], (Co, Co, 3, 3), jnp.float32),
        ws=0.2 * jax.random.normal(keys[3], (Co, Ci, 1, 1), jnp.float32),
        g1=g1, b1=b1, m1=m1, v1=v1,
        g2=g2, b2=b2, m2=m2, v2=v2,
        gs=gs, bs=bs, ms=ms, vs=vs,
    )

    out = jax.block_until_ready(residual_block(x, params))
    ref = jax.block_until_ready(_reference(x, params))

    assert out.shape == (N, Co, H, W), out.shape
    assert jnp.allclose(out, ref, atol=5e-2, rtol=5e-2), \
        float(jnp.max(jnp.abs(out - ref)))

    print("KERNEL_OK")
</pallas_src>

<mosaic_0001>
module attributes {stable_mosaic.version = 11 : i64} {
  func.func @_residual_block_kernel(%arg0: i32, %arg1: i32, %arg2: memref<1x20x18x128xbf16, #tpu.memory_space<vmem>>, %arg3: memref<1152x128xbf16, #tpu.memory_space<vmem>>, %arg4: memref<1280x128xbf16, #tpu.memory_space<vmem>>, %arg5: memref<1x128xf32, #tpu.memory_space<vmem>>, %arg6: memref<1x128xf32, #tpu.memory_space<vmem>>, %arg7: memref<1x8x16x128xf32, #tpu.memory_space<vmem>>, %arg8: memref<10x16x1152xbf16, #tpu.memory_space<vmem>>, %arg9: memref<10x18x128xbf16, #tpu.memory_space<vmem>>, %arg10: memref<8x16x1280xbf16, #tpu.memory_space<vmem>>) attributes {dimension_semantics = [#tpu.dimension_semantics<parallel>, #tpu.dimension_semantics<parallel>], iteration_bounds = array<i64: 2, 2>, scalar_prefetch = 0 : i64, scratch_operands = 3 : i64, tpu.core_type = #tpu.core_type<tc>, window_params = [{transform_indices = @transform_0, window_bounds = array<i64: 1, 20, 18, 128>}, {pipeline_mode = #tpu.pipeline_mode<synchronous>, transform_indices = @transform_1, window_bounds = array<i64: 1152, 128>}, {pipeline_mode = #tpu.pipeline_mode<synchronous>, transform_indices = @transform_2, window_bounds = array<i64: 1280, 128>}, {pipeline_mode = #tpu.pipeline_mode<synchronous>, transform_indices = @transform_3, window_bounds = array<i64: 1, 128>}, {pipeline_mode = #tpu.pipeline_mode<synchronous>, transform_indices = @transform_4, window_bounds = array<i64: 1, 128>}, {transform_indices = @transform_5, window_bounds = array<i64: 1, 8, 16, 128>}]} {
    %c8_i32 = arith.constant 8 : i32
    %0 = arith.muli %arg1, %c8_i32 : i32
    %1 = tpu.assume_multiple %0, 8 : i32
    %c0_i32 = arith.constant 0 : i32
    %2 = arith.addi %1, %c0_i32 : i32
    %c0 = arith.constant 0 : index
    %3 = arith.index_cast %2 : i32 to index
    %c0_0 = arith.constant 0 : index
    %c0_1 = arith.constant 0 : index
    %4 = vector.load %arg2[%c0, %3, %c0_0, %c0_1] : memref<1x20x18x128xbf16, #tpu.memory_space<vmem>>, vector<1x10x16x128xbf16>
    %5 = vector.shape_cast %4 : vector<1x10x16x128xbf16> to vector<10x16x128xbf16>
    %c0_2 = arith.constant 0 : index
    %c0_3 = arith.constant 0 : index
    %c0_4 = arith.constant 0 : index
    %6 = vector.load %arg8[%c0_2, %c0_3, %c0_4] : memref<10x16x1152xbf16, #tpu.memory_space<vmem>>, vector<10x16x128xbf16>
    tpu.vector_store %arg8[%c0_2, %c0_3, %c0_4], %5 {strides = array<i32>} : memref<10x16x1152xbf16, #tpu.memory_space<vmem>>, vector<10x16x128xbf16>,
    %c0_i32_5 = arith.constant 0 : i32
    %7 = arith.addi %1, %c0_i32_5 : i32
    %c0_6 = arith.constant 0 : index
    %8 = arith.index_cast %7 : i32 to index
    %c1 = arith.constant 1 : index
    %c0_7 = arith.constant 0 : index
    %9 = vector.load %arg2[%c0_6, %8, %c1, %c0_7] : memref<1x20x18x128xbf16, #tpu.memory_space<vmem>>, vector<1x10x16x128xbf16>
    %10 = vector.shape_cast %9 : vector<1x10x16x128xbf16> to vector<10x16x128xbf16>
    %c0_8 = arith.constant 0 : index
    %c0_9 = arith.constant 0 : index
    %c128 = arith.constant 128 : index
    %11 = vector.load %arg8[%c0_8, %c0_9, %c128] : memref<10x16x1152xbf16, #tpu.memory_space<vmem>>, vector<10x16x128xbf16>
    tpu.vector_store %arg8[%c0_8, %c0_9, %c128], %10 {strides = array<i32>} : memref<10x16x1152xbf16, #tpu.memory_space<vmem>>, vector<10x16x128xbf16>,
    %c0_i32_10 = arith.constant 0 : i32
    %12 = arith.addi %1, %c0_i32_10 : i32
    %c0_11 = arith.constant 0 : index
    %13 = arith.index_cast %12 : i32 to index
    %c2 = arith.constant 2 : index
    %c0_12 = arith.constant 0 : index
    %14 = vector.load %arg2[%c0_11, %13, %c2, %c0_12] : memref<1x20x18x128xbf16, #tpu.memory_space<vmem>>, vector<1x10x16x128xbf16>
    %15 = vector.shape_cast %14 : vector<1x10x16x128xbf16> to vector<10x16x128xbf16>
    %c0_13 = arith.constant 0 : index
    %c0_14 = arith.constant 0 : index
    %c256 = arith.constant 256 : index
    %16 = vector.load %arg8[%c0_13, %c0_14, %c256] : memref<10x16x1152xbf16, #tpu.memory_space<vmem>>, vector<10x16x128xbf16>
    tpu.vector_store %arg8[%c0_13, %c0_14, %c256], %15 {strides = array<i32>} : memref<10x16x1152xbf16, #tpu.memory_space<vmem>>, vector<10x16x128xbf16>,
    %c1_i32 = arith.constant 1 : i32
    %17 = arith.addi %1, %c1_i32 : i32
    %c0_15 = arith.constant 0 : index
    %18 = arith.index_cast %17 : i32 to index
    %c0_16 = arith.constant 0 : index
    %c0_17 = arith.constant 0 : index
    %19 = vector.load %arg2[%c0_15, %18, %c0_16, %c0_17] : memref<1x20x18x128xbf16, #tpu.memory_space<vmem>>, vector<1x10x16x128xbf16>
    %20 = vector.shape_cast %19 : vector<1x10x16x128xbf16> to vector<10x16x128xbf16>
    %c0_18 = arith.constant 0 : index
    %c0_19 = arith.constant 0 : index
    %c384 = arith.constant 384 : index
    %21 = vector.load %arg8[%c0_18, %c0_19, %c384] : memref<10x16x1152xbf16, #tpu.memory_space<vmem>>, vector<10x16x128xbf16>
    tpu.vector_store %arg8[%c0_18, %c0_19, %c384], %20 {strides = array<i32>} : memref<10x16x1152xbf16, #tpu.memory_space<vmem>>, vector<10x16x128xbf16>,
    %c1_i32_20 = arith.constant 1 : i32
    %22 = arith.addi %1, %c1_i32_20 : i32
    %c0_21 = arith.constant 0 : index
    %23 = arith.index_cast %22 : i32 to index
    %c1_22 = arith.constant 1 : index
    %c0_23 = arith.constant 0 : index
    %24 = vector.load %arg2[%c0_21, %23, %c1_22, %c0_23] : memref<1x20x18x128xbf16, #tpu.memory_space<vmem>>, vector<1x10x16x128xbf16>
    %25 = vector.shape_cast %24 : vector<1x10x16x128xbf16> to vector<10x16x128xbf16>
    %c0_24 = arith.constant 0 : index
    %c0_25 = arith.constant 0 : index
    %c512 = arith.constant 512 : index
    %26 = vector.load %arg8[%c0_24, %c0_25, %c512] : memref<10x16x1152xbf16, #tpu.memory_space<vmem>>, vector<10x16x128xbf16>
    tpu.vector_store %arg8[%c0_24, %c0_25, %c512], %25 {strides = array<i32>} : memref<10x16x1152xbf16, #tpu.memory_space<vmem>>, vector<10x16x128xbf16>,
    %c1_i32_26 = arith.constant 1 : i32
    %27 = arith.addi %1, %c1_i32_26 : i32
    %c0_27 = arith.constant 0 : index
    %28 = arith.index_cast %27 : i32 to index
    %c2_28 = arith.constant 2 : index
    %c0_29 = arith.constant 0 : index
    %29 = vector.load %arg2[%c0_27, %28, %c2_28, %c0_29] : memref<1x20x18x128xbf16, #tpu.memory_space<vmem>>, vector<1x10x16x128xbf16>
    %30 = vector.shape_cast %29 : vector<1x10x16x128xbf16> to vector<10x16x128xbf16>
    %c0_30 = arith.constant 0 : index
    %c0_31 = arith.constant 0 : index
    %c640 = arith.constant 640 : index
    %31 = vector.load %arg8[%c0_30, %c0_31, %c640] : memref<10x16x1152xbf16, #tpu.memory_space<vmem>>, vector<10x16x128xbf16>
    tpu.vector_store %arg8[%c0_30, %c0_31, %c640], %30 {strides = array<i32>} : memref<10x16x1152xbf16, #tpu.memory_space<vmem>>, vector<10x16x128xbf16>,
    %c2_i32 = arith.constant 2 : i32
    %32 = arith.addi %1, %c2_i32 : i32
    %c0_32 = arith.constant 0 : index
    %33 = arith.index_cast %32 : i32 to index
    %c0_33 = arith.constant 0 : index
    %c0_34 = arith.constant 0 : index
    %34 = vector.load %arg2[%c0_32, %33, %c0_33, %c0_34] : memref<1x20x18x128xbf16, #tpu.memory_space<vmem>>, vector<1x10x16x128xbf16>
    %35 = vector.shape_cast %34 : vector<1x10x16x128xbf16> to vector<10x16x128xbf16>
    %c0_35 = arith.constant 0 : index
    %c0_36 = arith.constant 0 : index
    %c768 = arith.constant 768 : index
    %36 = vector.load %arg8[%c0_35, %c0_36, %c768] : memref<10x16x1152xbf16, #tpu.memory_space<vmem>>, vector<10x16x128xbf16>
    tpu.vector_store %arg8[%c0_35, %c0_36, %c768], %35 {strides = array<i32>} : memref<10x16x1152xbf16, #tpu.memory_space<vmem>>, vector<10x16x128xbf16>,
    %c2_i32_37 = arith.constant 2 : i32
    %37 = arith.addi %1, %c2_i32_37 : i32
    %c0_38 = arith.constant 0 : index
    %38 = arith.index_cast %37 : i32 to index
    %c1_39 = arith.constant 1 : index
    %c0_40 = arith.constant 0 : index
    %39 = vector.load %arg2[%c0_38, %38, %c1_39, %c0_40] : memref<1x20x18x128xbf16, #tpu.memory_space<vmem>>, vector<1x10x16x128xbf16>
    %40 = vector.shape_cast %39 : vector<1x10x16x128xbf16> to vector<10x16x128xbf16>
    %c0_41 = arith.constant 0 : index
    %c0_42 = arith.constant 0 : index
    %c896 = arith.constant 896 : index
    %41 = vector.load %arg8[%c0_41, %c0_42, %c896] : memref<10x16x1152xbf16, #tpu.memory_space<vmem>>, vector<10x16x128xbf16>
    tpu.vector_store %arg8[%c0_41, %c0_42, %c896], %40 {strides = array<i32>} : memref<10x16x1152xbf16, #tpu.memory_space<vmem>>, vector<10x16x128xbf16>,
    %c2_i32_43 = arith.constant 2 : i32
    %42 = arith.addi %1, %c2_i32_43 : i32
    %c0_44 = arith.constant 0 : index
    %43 = arith.index_cast %42 : i32 to index
    %c2_45 = arith.constant 2 : index
    %c0_46 = arith.constant 0 : index
    %44 = vector.load %arg2[%c0_44, %43, %c2_45, %c0_46] : memref<1x20x18x128xbf16, #tpu.memory_space<vmem>>, vector<1x10x16x128xbf16>
    %45 = vector.shape_cast %44 : vector<1x10x16x128xbf16> to vector<10x16x128xbf16>
    %c0_47 = arith.constant 0 : index
    %c0_48 = arith.constant 0 : index
    %c1024 = arith.constant 1024 : index
    %46 = vector.load %arg8[%c0_47, %c0_48, %c1024] : memref<10x16x1152xbf16, #tpu.memory_space<vmem>>, vector<10x16x128xbf16>
    tpu.vector_store %arg8[%c0_47, %c0_48, %c1024], %45 {strides = array<i32>} : memref<10x16x1152xbf16, #tpu.memory_space<vmem>>, vector<10x16x128xbf16>,
    %c0_49 = arith.constant 0 : index
    %c0_50 = arith.constant 0 : index
    %c0_51 = arith.constant 0 : index
    %47 = vector.load %arg8[%c0_49, %c0_50, %c0_51] : memref<10x16x1152xbf16, #tpu.memory_space<vmem>>, vector<10x16x1152xbf16>
    %48 = vector.shape_cast %47 : vector<10x16x1152xbf16> to vector<160x1152xbf16>
    %c0_52 = arith.constant 0 : index
    %c0_53 = arith.constant 0 : index
    %49 = vector.load %arg3[%c0_52, %c0_53] : memref<1152x128xbf16, #tpu.memory_space<vmem>>, vector<1152x128xbf16>
    %cst = arith.constant dense<0.000000e+00> : vector<160x128xf32>
    %50 = tpu.matmul %48, %49, %cst {dimension_numbers = #tpu.dot_dimension_numbers<[1], [0], [0], [1], [0, 0, 1, 1], [], []>} : vector<160x1152xbf16>, vector<1152x128xbf16>, vector<160x128xf32> -> vector<160x128xf32>
    %c0_54 = arith.constant 0 : index
    %c0_55 = arith.constant 0 : index
    %51 = vector.load %arg5[%c0_54, %c0_55] : memref<1x128xf32, #tpu.memory_space<vmem>>, vector<1x128xf32>
    %52 = vector.broadcast %51 : vector<1x128xf32> to vector<160x128xf32>
    %53 = arith.addf %50, %52 : vector<160x128xf32>
    %cst_56 = arith.constant 0.000000e+00 : f32
    %54 = vector.broadcast %cst_56 : f32 to vector<160x128xf32>
    %55 = arith.maximumf %53, %54 : vector<160x128xf32>
    %56 = vector.shape_cast %55 : vector<160x128xf32> to vector<10x16x128xf32>
    %57 = arith.truncf %56 : vector<10x16x128xf32> to vector<10x16x128xbf16>
    %c0_57 = arith.constant 0 : index
    %c1_58 = arith.constant 1 : index
    %c0_59 = arith.constant 0 : index
    %58 = vector.load %arg9[%c0_57, %c1_58, %c0_59] : memref<10x18x128xbf16, #tpu.memory_space<vmem>>, vector<10x16x128xbf16>
    tpu.vector_store %arg9[%c0_57, %c1_58, %c0_59], %57 {strides = array<i32>} : memref<10x18x128xbf16, #tpu.memory_space<vmem>>, vector<10x16x128xbf16>,
    %cst_60 = arith.constant 0.000000e+00 : bf16
    %59 = vector.broadcast %cst_60 : bf16 to vector<10x1x128xbf16>
    %c0_61 = arith.constant 0 : index
    %c0_62 = arith.constant 0 : index
    %c0_63 = arith.constant 0 : index
    %60 = vector.load %arg9[%c0_61, %c0_62, %c0_63] : memref<10x18x128xbf16, #tpu.memory_space<vmem>>, vector<10x1x128xbf16>
    tpu.vector_store %arg9[%c0_61, %c0_62, %c0_63], %59 {strides = array<i32>} : memref<10x18x128xbf16, #tpu.memory_space<vmem>>, vector<10x1x128xbf16>,
    %cst_64 = arith.constant 0.000000e+00 : bf16
    %61 = vector.broadcast %cst_64 : bf16 to vector<10x1x128xbf16>
    %c0_65 = arith.constant 0 : index
    %c17 = arith.constant 17 : index
    %c0_66 = arith.constant 0 : index
    %62 = vector.load %arg9[%c0_65, %c17, %c0_66] : memref<10x18x128xbf16, #tpu.memory_space<vmem>>, vector<10x1x128xbf16>
    tpu.vector_store %arg9[%c0_65, %c17, %c0_66], %61 {strides = array<i32>} : memref<10x18x128xbf16, #tpu.memory_space<vmem>>, vector<10x1x128xbf16>,
    %c0_i32_67 = arith.constant 0 : i32
    %63 = arith.cmpi eq, %arg1, %c0_i32_67 : i32
    %64 = arith.extui %63 : i1 to i32
    %c0_i32_68 = arith.constant 0 : i32
    %65 = arith.cmpi ne, %64, %c0_i32_68 : i32
    scf.if %65 {
      %cst_143 = arith.constant 0.000000e+00 : bf16
      %102 = vector.broadcast %cst_143 : bf16 to vector<1x18x128xbf16>
      %c0_144 = arith.constant 0 : index
      %c0_145 = arith.constant 0 : index
      %c0_146 = arith.constant 0 : index
      %103 = vector.load %arg9[%c0_144, %c0_145, %c0_146] : memref<10x18x128xbf16, #tpu.memory_space<vmem>>, vector<1x18x128xbf16>
      tpu.vector_store %arg9[%c0_144, %c0_145, %c0_146], %102 {strides = array<i32>} : memref<10x18x128xbf16, #tpu.memory_space<vmem>>, vector<1x18x128xbf16>,
    } else {
    }
    %c1_i32_69 = arith.constant 1 : i32
    %66 = arith.cmpi eq, %arg1, %c1_i32_69 : i32
    %67 = arith.extui %66 : i1 to i32
    %c0_i32_70 = arith.constant 0 : i32
    %68 = arith.cmpi ne, %67, %c0_i32_70 : i32
    scf.if %68 {
      %cst_143 = arith.constant 0.000000e+00 : bf16
      %102 = vector.broadcast %cst_143 : bf16 to vector<1x18x128xbf16>
      %c9 = arith.constant 9 : index
      %c0_144 = arith.constant 0 : index
      %c0_145 = arith.constant 0 : index
      %103 = vector.load %arg9[%c9, %c0_144, %c0_145] : memref<10x18x128xbf16, #tpu.memory_space<vmem>>, vector<1x18x128xbf16>
      tpu.vector_store %arg9[%c9, %c0_144, %c0_145], %102 {strides = array<i32>} : memref<10x18x128xbf16, #tpu.memory_space<vmem>>, vector<1x18x128xbf16>,
    } else {
    }
    %c0_71 = arith.constant 0 : index
    %c0_72 = arith.constant 0 : index
    %c0_73 = arith.constant 0 : index
    %69 = vector.load %arg9[%c0_71, %c0_72, %c0_73] : memref<10x18x128xbf16, #tpu.memory_space<vmem>>, vector<8x16x128xbf16>
    %c0_74 = arith.constant 0 : index
    %c0_75 = arith.constant 0 : index
    %c0_76 = arith.constant 0 : index
    %70 = vector.load %arg10[%c0_74, %c0_75, %c0_76] : memref<8x16x1280xbf16, #tpu.memory_space<vmem>>, vector<8x16x128xbf16>
    tpu.vector_store %arg10[%c0_74, %c0_75, %c0_76], %69 {strides = array<i32>} : memref<8x16x1280xbf16, #tpu.memory_space<vmem>>, vector<8x16x128xbf16>,
    %c0_77 = arith.constant 0 : index
    %c1_78 = arith.constant 1 : index
    %c0_79 = arith.constant 0 : index
    %71 = vector.load %arg9[%c0_77, %c1_78, %c0_79] : memref<10x18x128xbf16, #tpu.memory_space<vmem>>, vector<8x16x128xbf16>
    %c0_80 = arith.constant 0 : index
    %c0_81 = arith.constant 0 : index
    %c128_82 = arith.constant 128 : index
    %72 = vector.load %arg10[%c0_80, %c0_81, %c128_82] : memref<8x16x1280xbf16, #tpu.memory_space<vmem>>, vector<8x16x128xbf16>
    tpu.vector_store %arg10[%c0_80, %c0_81, %c128_82], %71 {strides = array<i32>} : memref<8x16x1280xbf16, #tpu.memory_space<vmem>>, vector<8x16x128xbf16>,
    %c0_83 = arith.constant 0 : index
    %c2_84 = arith.constant 2 : index
    %c0_85 = arith.constant 0 : index
    %73 = vector.load %arg9[%c0_83, %c2_84, %c0_85] : memref<10x18x128xbf16, #tpu.memory_space<vmem>>, vector<8x16x128xbf16>
    %c0_86 = arith.constant 0 : index
    %c0_87 = arith.constant 0 : index
    %c256_88 = arith.constant 256 : index
    %74 = vector.load %arg10[%c0_86, %c0_87, %c256_88] : memref<8x16x1280xbf16, #tpu.memory_space<vmem>>, vector<8x16x128xbf16>
    tpu.vector_store %arg10[%c0_86, %c0_87, %c256_88], %73 {strides = array<i32>} : memref<8x16x1280xbf16, #tpu.memory_space<vmem>>, vector<8x16x128xbf16>,
    %c1_89 = arith.constant 1 : index
    %c0_90 = arith.constant 0 : index
    %c0_91 = arith.constant 0 : index
    %75 = vector.load %arg9[%c1_89, %c0_90, %c0_91] : memref<10x18x128xbf16, #tpu.memory_space<vmem>>, vector<8x16x128xbf16>
    %c0_92 = arith.constant 0 : index
    %c0_93 = arith.constant 0 : index
    %c384_94 = arith.constant 384 : index
    %76 = vector.load %arg10[%c0_92, %c0_93, %c384_94] : memref<8x16x1280xbf16, #tpu.memory_space<vmem>>, vector<8x16x128xbf16>
    tpu.vector_store %arg10[%c0_92, %c0_93, %c384_94], %75 {strides = array<i32>} : memref<8x16x1280xbf16, #tpu.memory_space<vmem>>, vector<8x16x128xbf16>,
    %c1_95 = arith.constant 1 : index
    %c1_96 = arith.constant 1 : index
    %c0_97 = arith.constant 0 : index
    %77 = vector.load %arg9[%c1_95, %c1_96, %c0_97] : memref<10x18x128xbf16, #tpu.memory_space<vmem>>, vector<8x16x128xbf16>
    %c0_98 = arith.constant 0 : index
    %c0_99 = arith.constant 0 : index
    %c512_100 = arith.constant 512 : index
    %78 = vector.load %arg10[%c0_98, %c0_99, %c512_100] : memref<8x16x1280xbf16, #tpu.memory_space<vmem>>, vector<8x16x128xbf16>
    tpu.vector_store %arg10[%c0_98, %c0_99, %c512_100], %77 {strides = array<i32>} : memref<8x16x1280xbf16, #tpu.memory_space<vmem>>, vector<8x16x128xbf16>,
    %c1_101 = arith.constant 1 : index
    %c2_102 = arith.constant 2 : index
    %c0_103 = arith.constant 0 : index
    %79 = vector.load %arg9[%c1_101, %c2_102, %c0_103] : memref<10x18x128xbf16, #tpu.memory_space<vmem>>, vector<8x16x128xbf16>
    %c0_104 = arith.constant 0 : index
    %c0_105 = arith.constant 0 : index
    %c640_106 = arith.constant 640 : index
    %80 = vector.load %arg10[%c0_104, %c0_105, %c640_106] : memref<8x16x1280xbf16, #tpu.memory_space<vmem>>, vector<8x16x128xbf16>
    tpu.vector_store %arg10[%c0_104, %c0_105, %c640_106], %79 {strides = array<i32>} : memref<8x16x1280xbf16, #tpu.memory_space<vmem>>, vector<8x16x128xbf16>,
    %c2_107 = arith.constant 2 : index
    %c0_108 = arith.constant 0 : index
    %c0_109 = arith.constant 0 : index
    %81 = vector.load %arg9[%c2_107, %c0_108, %c0_109] : memref<10x18x128xbf16, #tpu.memory_space<vmem>>, vector<8x16x128xbf16>
    %c0_110 = arith.constant 0 : index
    %c0_111 = arith.constant 0 : index
    %c768_112 = arith.constant 768 : index
    %82 = vector.load %arg10[%c0_110, %c0_111, %c768_112] : memref<8x16x1280xbf16, #tpu.memory_space<vmem>>, vector<8x16x128xbf16>
    tpu.vector_store %arg10[%c0_110, %c0_111, %c768_112], %81 {strides = array<i32>} : memref<8x16x1280xbf16, #tpu.memory_space<vmem>>, vector<8x16x128xbf16>,
    %c2_113 = arith.constant 2 : index
    %c1_114 = arith.constant 1 : index
    %c0_115 = arith.constant 0 : index
    %83 = vector.load %arg9[%c2_113, %c1_114, %c0_115] : memref<10x18x128xbf16, #tpu.memory_space<vmem>>, vector<8x16x128xbf16>
    %c0_116 = arith.constant 0 : index
    %c0_117 = arith.constant 0 : index
    %c896_118 = arith.constant 896 : index
    %84 = vector.load %arg10[%c0_116, %c0_117, %c896_118] : memref<8x16x1280xbf16, #tpu.memory_space<vmem>>, vector<8x16x128xbf16>
    tpu.vector_store %arg10[%c0_116, %c0_117, %c896_118], %83 {strides = array<i32>} : memref<8x16x1280xbf16, #tpu.memory_space<vmem>>, vector<8x16x128xbf16>,
    %c2_119 = arith.constant 2 : index
    %c2_120 = arith.constant 2 : index
    %c0_121 = arith.constant 0 : index
    %85 = vector.load %arg9[%c2_119, %c2_120, %c0_121] : memref<10x18x128xbf16, #tpu.memory_space<vmem>>, vector<8x16x128xbf16>
    %c0_122 = arith.constant 0 : index
    %c0_123 = arith.constant 0 : index
    %c1024_124 = arith.constant 1024 : index
    %86 = vector.load %arg10[%c0_122, %c0_123, %c1024_124] : memref<8x16x1280xbf16, #tpu.memory_space<vmem>>, vector<8x16x128xbf16>
    tpu.vector_store %arg10[%c0_122, %c0_123, %c1024_124], %85 {strides = array<i32>} : memref<8x16x1280xbf16, #tpu.memory_space<vmem>>, vector<8x16x128xbf16>,
    %c1_125 = arith.constant 1 : index
    %c0_126 = arith.constant 0 : index
    %c512_127 = arith.constant 512 : index
    %87 = vector.load %arg8[%c1_125, %c0_126, %c512_127] : memref<10x16x1152xbf16, #tpu.memory_space<vmem>>, vector<8x16x128xbf16>
    %c0_128 = arith.constant 0 : index
    %c0_129 = arith.constant 0 : index
    %c1152 = arith.constant 1152 : index
    %88 = vector.load %arg10[%c0_128, %c0_129, %c1152] : memref<8x16x1280xbf16, #tpu.memory_space<vmem>>, vector<8x16x128xbf16>
    tpu.vector_store %arg10[%c0_128, %c0_129, %c1152], %87 {strides = array<i32>} : memref<8x16x1280xbf16, #tpu.memory_space<vmem>>, vector<8x16x128xbf16>,
    %c0_130 = arith.constant 0 : index
    %c0_131 = arith.constant 0 : index
    %c0_132 = arith.constant 0 : index
    %89 = vector.load %arg10[%c0_130, %c0_131, %c0_132] : memref<8x16x1280xbf16, #tpu.memory_space<vmem>>, vector<8x16x1280xbf16>
    %90 = vector.shape_cast %89 : vector<8x16x1280xbf16> to vector<128x1280xbf16>
    %c0_133 = arith.constant 0 : index
    %c0_134 = arith.constant 0 : index
    %91 = vector.load %arg4[%c0_133, %c0_134] : memref<1280x128xbf16, #tpu.memory_space<vmem>>, vector<1280x128xbf16>
    %cst_135 = arith.constant dense<0.000000e+00> : vector<128x128xf32>
    %92 = tpu.matmul %90, %91, %cst_135 {dimension_numbers = #tpu.dot_dimension_numbers<[1], [0], [0], [1], [0, 0, 1, 1], [], []>} : vector<128x1280xbf16>, vector<1280x128xbf16>, vector<128x128xf32> -> vector<128x128xf32>
    %c0_136 = arith.constant 0 : index
    %c0_137 = arith.constant 0 : index
    %93 = vector.load %arg6[%c0_136, %c0_137] : memref<1x128xf32, #tpu.memory_space<vmem>>, vector<1x128xf32>
    %94 = vector.broadcast %93 : vector<1x128xf32> to vector<128x128xf32>
    %95 = arith.addf %92, %94 : vector<128x128xf32>
    %cst_138 = arith.constant 0.000000e+00 : f32
    %96 = vector.broadcast %cst_138 : f32 to vector<128x128xf32>
    %97 = arith.maximumf %95, %96 : vector<128x128xf32>
    %98 = vector.shape_cast %97 : vector<128x128xf32> to vector<8x16x128xf32>
    %c0_139 = arith.constant 0 : index
    %c0_140 = arith.constant 0 : index
    %c0_141 = arith.constant 0 : index
    %c0_142 = arith.constant 0 : index
    %99 = vector.load %arg7[%c0_139, %c0_140, %c0_141, %c0_142] : memref<1x8x16x128xf32, #tpu.memory_space<vmem>>, vector<1x8x16x128xf32>
    %100 = vector.shape_cast %99 : vector<1x8x16x128xf32> to vector<8x16x128xf32>
    %101 = vector.shape_cast %98 : vector<8x16x128xf32> to vector<1x8x16x128xf32>
    tpu.vector_store %arg7[%c0_139, %c0_140, %c0_141, %c0_142], %101 {strides = array<i32>} : memref<1x8x16x128xf32, #tpu.memory_space<vmem>>, vector<1x8x16x128xf32>,
    return
  }
  func.func @transform_0(%arg0: i32, %arg1: i32) -> (i32, i32, i32, i32) {
    %c0_i32 = arith.constant 0 : i32
    %c0_i32_0 = arith.constant 0 : i32
    %c0_i32_1 = arith.constant 0 : i32
    %c0_i32_2 = arith.constant 0 : i32
    return %arg0, %c0_i32, %c0_i32_0, %c0_i32_1 : i32, i32, i32, i32
  }
  func.func @transform_1(%arg0: i32, %arg1: i32) -> (i32, i32) {
    %c0_i32 = arith.constant 0 : i32
    %c0_i32_0 = arith.constant 0 : i32
    %c0_i32_1 = arith.constant 0 : i32
    return %c0_i32, %c0_i32_0 : i32, i32
  }
  func.func @transform_2(%arg0: i32, %arg1: i32) -> (i32, i32) {
    %c0_i32 = arith.constant 0 : i32
    %c0_i32_0 = arith.constant 0 : i32
    %c0_i32_1 = arith.constant 0 : i32
    return %c0_i32, %c0_i32_0 : i32, i32
  }
  func.func @transform_3(%arg0: i32, %arg1: i32) -> (i32, i32) {
    %c0_i32 = arith.constant 0 : i32
    %c0_i32_0 = arith.constant 0 : i32
    %c0_i32_1 = arith.constant 0 : i32
    return %c0_i32, %c0_i32_0 : i32, i32
  }
  func.func @transform_4(%arg0: i32, %arg1: i32) -> (i32, i32) {
    %c0_i32 = arith.constant 0 : i32
    %c0_i32_0 = arith.constant 0 : i32
    %c0_i32_1 = arith.constant 0 : i32
    return %c0_i32, %c0_i32_0 : i32, i32
  }
  func.func @transform_5(%arg0: i32, %arg1: i32) -> (i32, i32, i32, i32) {
    %c0_i32 = arith.constant 0 : i32
    %c0_i32_0 = arith.constant 0 : i32
    %c0_i32_1 = arith.constant 0 : i32
    return %arg0, %arg1, %c0_i32, %c0_i32_0 : i32, i32, i32, i32
  }
}

module attributes {stable_mosaic.version = 11 : i64} {
  func.func @_residual_block_kernel(%arg0: i32, %arg1: i32, %arg2: memref<1x20x18x128xbf16, #tpu.memory_space<vmem>>, %arg3: memref<1152x128xbf16, #tpu.memory_space<vmem>>, %arg4: memref<1280x128xbf16, #tpu.memory_space<vmem>>, %arg5: memref<1x128xf32, #tpu.memory_space<vmem>>, %arg6: memref<1x128xf32, #tpu.memory_space<vmem>>, %arg7: memref<1x8x16x128xf32, #tpu.memory_space<vmem>>, %arg8: memref<10x16x1152xbf16, #tpu.memory_space<vmem>>, %arg9: memref<10x18x128xbf16, #tpu.memory_space<vmem>>, %arg10: memref<8x16x1280xbf16, #tpu.memory_space<vmem>>) attributes {dimension_semantics = [#tpu.dimension_semantics<parallel>, #tpu.dimension_semantics<parallel>], iteration_bounds = array<i64: 2, 2>, scalar_prefetch = 0 : i64, scratch_operands = 3 : i64, tpu.core_type = #tpu.core_type<tc>, window_params = [{transform_indices = @transform_0, window_bounds = array<i64: 1, 20, 18, 128>}, {pipeline_mode = #tpu.pipeline_mode<synchronous>, transform_indices = @transform_1, window_bounds = array<i64: 1152, 128>}, {pipeline_mode = #tpu.pipeline_mode<synchronous>, transform_indices = @transform_2, window_bounds = array<i64: 1280, 128>}, {pipeline_mode = #tpu.pipeline_mode<synchronous>, transform_indices = @transform_3, window_bounds = array<i64: 1, 128>}, {pipeline_mode = #tpu.pipeline_mode<synchronous>, transform_indices = @transform_4, window_bounds = array<i64: 1, 128>}, {transform_indices = @transform_5, window_bounds = array<i64: 1, 8, 16, 128>}]} {
    %c8_i32 = arith.constant 8 : i32
    %0 = arith.muli %arg1, %c8_i32 : i32
    %1 = tpu.assume_multiple %0, 8 : i32
    %c0_i32 = arith.constant 0 : i32
    %2 = arith.addi %1, %c0_i32 : i32
    %c0 = arith.constant 0 : index
    %3 = arith.index_cast %2 : i32 to index
    %c0_0 = arith.constant 0 : index
    %c0_1 = arith.constant 0 : index
    %4 = vector.load %arg2[%c0, %3, %c0_0, %c0_1] : memref<1x20x18x128xbf16, #tpu.memory_space<vmem>>, vector<1x10x16x128xbf16>
    %5 = vector.shape_cast %4 : vector<1x10x16x128xbf16> to vector<10x16x128xbf16>
    %c0_2 = arith.constant 0 : index
    %c0_3 = arith.constant 0 : index
    %c0_4 = arith.constant 0 : index
    %6 = vector.load %arg8[%c0_2, %c0_3, %c0_4] : memref<10x16x1152xbf16, #tpu.memory_space<vmem>>, vector<10x16x128xbf16>
    tpu.vector_store %arg8[%c0_2, %c0_3, %c0_4], %5 {strides = array<i32>} : memref<10x16x1152xbf16, #tpu.memory_space<vmem>>, vector<10x16x128xbf16>,
    %c0_i32_5 = arith.constant 0 : i32
    %7 = arith.addi %1, %c0_i32_5 : i32
    %c0_6 = arith.constant 0 : index
    %8 = arith.index_cast %7 : i32 to index
    %c1 = arith.constant 1 : index
    %c0_7 = arith.constant 0 : index
    %9 = vector.load %arg2[%c0_6, %8, %c1, %c0_7] : memref<1x20x18x128xbf16, #tpu.memory_space<vmem>>, vector<1x10x16x128xbf16>
    %10 = vector.shape_cast %9 : vector<1x10x16x128xbf16> to vector<10x16x128xbf16>
    %c0_8 = arith.constant 0 : index
    %c0_9 = arith.constant 0 : index
    %c128 = arith.constant 128 : index
    %11 = vector.load %arg8[%c0_8, %c0_9, %c128] : memref<10x16x1152xbf16, #tpu.memory_space<vmem>>, vector<10x16x128xbf16>
    tpu.vector_store %arg8[%c0_8, %c0_9, %c128], %10 {strides = array<i32>} : memref<10x16x1152xbf16, #tpu.memory_space<vmem>>, vector<10x16x128xbf16>,
    %c0_i32_10 = arith.constant 0 : i32
    %12 = arith.addi %1, %c0_i32_10 : i32
    %c0_11 = arith.constant 0 : index
    %13 = arith.index_cast %12 : i32 to index
    %c2 = arith.constant 2 : index
    %c0_12 = arith.constant 0 : index
    %14 = vector.load %arg2[%c0_11, %13, %c2, %c0_12] : memref<1x20x18x128xbf16, #tpu.memory_space<vmem>>, vector<1x10x16x128xbf16>
    %15 = vector.shape_cast %14 : vector<1x10x16x128xbf16> to vector<10x16x128xbf16>
    %c0_13 = arith.constant 0 : index
    %c0_14 = arith.constant 0 : index
    %c256 = arith.constant 256 : index
    %16 = vector.load %arg8[%c0_13, %c0_14, %c256] : memref<10x16x1152xbf16, #tpu.memory_space<vmem>>, vector<10x16x128xbf16>
    tpu.vector_store %arg8[%c0_13, %c0_14, %c256], %15 {strides = array<i32>} : memref<10x16x1152xbf16, #tpu.memory_space<vmem>>, vector<10x16x128xbf16>,
    %c1_i32 = arith.constant 1 : i32
    %17 = arith.addi %1, %c1_i32 : i32
    %c0_15 = arith.constant 0 : index
    %18 = arith.index_cast %17 : i32 to index
    %c0_16 = arith.constant 0 : index
    %c0_17 = arith.constant 0 : index
    %19 = vector.load %arg2[%c0_15, %18, %c0_16, %c0_17] : memref<1x20x18x128xbf16, #tpu.memory_space<vmem>>, vector<1x10x16x128xbf16>
    %20 = vector.shape_cast %19 : vector<1x10x16x128xbf16> to vector<10x16x128xbf16>
    %c0_18 = arith.constant 0 : index
    %c0_19 = arith.constant 0 : index
    %c384 = arith.constant 384 : index
    %21 = vector.load %arg8[%c0_18, %c0_19, %c384] : memref<10x16x1152xbf16, #tpu.memory_space<vmem>>, vector<10x16x128xbf16>
    tpu.vector_store %arg8[%c0_18, %c0_19, %c384], %20 {strides = array<i32>} : memref<10x16x1152xbf16, #tpu.memory_space<vmem>>, vector<10x16x128xbf16>,
    %c1_i32_20 = arith.constant 1 : i32
    %22 = arith.addi %1, %c1_i32_20 : i32
    %c0_21 = arith.constant 0 : index
    %23 = arith.index_cast %22 : i32 to index
    %c1_22 = arith.constant 1 : index
    %c0_23 = arith.constant 0 : index
    %24 = vector.load %arg2[%c0_21, %23, %c1_22, %c0_23] : memref<1x20x18x128xbf16, #tpu.memory_space<vmem>>, vector<1x10x16x128xbf16>
    %25 = vector.shape_cast %24 : vector<1x10x16x128xbf16> to vector<10x16x128xbf16>
    %c0_24 = arith.constant 0 : index
    %c0_25 = arith.constant 0 : index
    %c512 = arith.constant 512 : index
    %26 = vector.load %arg8[%c0_24, %c0_25, %c512] : memref<10x16x1152xbf16, #tpu.memory_space<vmem>>, vector<10x16x128xbf16>
    tpu.vector_store %arg8[%c0_24, %c0_25, %c512], %25 {strides = array<i32>} : memref<10x16x1152xbf16, #tpu.memory_space<vmem>>, vector<10x16x128xbf16>,
    %c1_i32_26 = arith.constant 1 : i32
    %27 = arith.addi %1, %c1_i32_26 : i32
    %c0_27 = arith.constant 0 : index
    %28 = arith.index_cast %27 : i32 to index
    %c2_28 = arith.constant 2 : index
    %c0_29 = arith.constant 0 : index
    %29 = vector.load %arg2[%c0_27, %28, %c2_28, %c0_29] : memref<1x20x18x128xbf16, #tpu.memory_space<vmem>>, vector<1x10x16x128xbf16>
    %30 = vector.shape_cast %29 : vector<1x10x16x128xbf16> to vector<10x16x128xbf16>
    %c0_30 = arith.constant 0 : index
    %c0_31 = arith.constant 0 : index
    %c640 = arith.constant 640 : index
    %31 = vector.load %arg8[%c0_30, %c0_31, %c640] : memref<10x16x1152xbf16, #tpu.memory_space<vmem>>, vector<10x16x128xbf16>
    tpu.vector_store %arg8[%c0_30, %c0_31, %c640], %30 {strides = array<i32>} : memref<10x16x1152xbf16, #tpu.memory_space<vmem>>, vector<10x16x128xbf16>,
    %c2_i32 = arith.constant 2 : i32
    %32 = arith.addi %1, %c2_i32 : i32
    %c0_32 = arith.constant 0 : index
    %33 = arith.index_cast %32 : i32 to index
    %c0_33 = arith.constant 0 : index
    %c0_34 = arith.constant 0 : index
    %34 = vector.load %arg2[%c0_32, %33, %c0_33, %c0_34] : memref<1x20x18x128xbf16, #tpu.memory_space<vmem>>, vector<1x10x16x128xbf16>
    %35 = vector.shape_cast %34 : vector<1x10x16x128xbf16> to vector<10x16x128xbf16>
    %c0_35 = arith.constant 0 : index
    %c0_36 = arith.constant 0 : index
    %c768 = arith.constant 768 : index
    %36 = vector.load %arg8[%c0_35, %c0_36, %c768] : memref<10x16x1152xbf16, #tpu.memory_space<vmem>>, vector<10x16x128xbf16>
    tpu.vector_store %arg8[%c0_35, %c0_36, %c768], %35 {strides = array<i32>} : memref<10x16x1152xbf16, #tpu.memory_space<vmem>>, vector<10x16x128xbf16>,
    %c2_i32_37 = arith.constant 2 : i32
    %37 = arith.addi %1, %c2_i32_37 : i32
    %c0_38 = arith.constant 0 : index
    %38 = arith.index_cast %37 : i32 to index
    %c1_39 = arith.constant 1 : index
    %c0_40 = arith.constant 0 : index
    %39 = vector.load %arg2[%c0_38, %38, %c1_39, %c0_40] : memref<1x20x18x128xbf16, #tpu.memory_space<vmem>>, vector<1x10x16x128xbf16>
    %40 = vector.shape_cast %39 : vector<1x10x16x128xbf16> to vector<10x16x128xbf16>
    %c0_41 = arith.constant 0 : index
    %c0_42 = arith.constant 0 : index
    %c896 = arith.constant 896 : index
    %41 = vector.load %arg8[%c0_41, %c0_42, %c896] : memref<10x16x1152xbf16, #tpu.memory_space<vmem>>, vector<10x16x128xbf16>
    tpu.vector_store %arg8[%c0_41, %c0_42, %c896], %40 {strides = array<i32>} : memref<10x16x1152xbf16, #tpu.memory_space<vmem>>, vector<10x16x128xbf16>,
    %c2_i32_43 = arith.constant 2 : i32
    %42 = arith.addi %1, %c2_i32_43 : i32
    %c0_44 = arith.constant 0 : index
    %43 = arith.index_cast %42 : i32 to index
    %c2_45 = arith.constant 2 : index
    %c0_46 = arith.constant 0 : index
    %44 = vector.load %arg2[%c0_44, %43, %c2_45, %c0_46] : memref<1x20x18x128xbf16, #tpu.memory_space<vmem>>, vector<1x10x16x128xbf16>
    %45 = vector.shape_cast %44 : vector<1x10x16x128xbf16> to vector<10x16x128xbf16>
    %c0_47 = arith.constant 0 : index
    %c0_48 = arith.constant 0 : index
    %c1024 = arith.constant 1024 : index
    %46 = vector.load %arg8[%c0_47, %c0_48, %c1024] : memref<10x16x1152xbf16, #tpu.memory_space<vmem>>, vector<10x16x128xbf16>
    tpu.vector_store %arg8[%c0_47, %c0_48, %c1024], %45 {strides = array<i32>} : memref<10x16x1152xbf16, #tpu.memory_space<vmem>>, vector<10x16x128xbf16>,
    %c0_49 = arith.constant 0 : index
    %c0_50 = arith.constant 0 : index
    %c0_51 = arith.constant 0 : index
    %47 = vector.load %arg8[%c0_49, %c0_50, %c0_51] : memref<10x16x1152xbf16, #tpu.memory_space<vmem>>, vector<10x16x1152xbf16>
    %48 = vector.shape_cast %47 : vector<10x16x1152xbf16> to vector<160x1152xbf16>
    %c0_52 = arith.constant 0 : index
    %c0_53 = arith.constant 0 : index
    %49 = vector.load %arg3[%c0_52, %c0_53] : memref<1152x128xbf16, #tpu.memory_space<vmem>>, vector<1152x128xbf16>
    %cst = arith.constant dense<0.000000e+00> : vector<160x128xf32>
    %50 = tpu.matmul %48, %49, %cst {dimension_numbers = #tpu.dot_dimension_numbers<[1], [0], [0], [1], [0, 0, 1, 1], [], []>} : vector<160x1152xbf16>, vector<1152x128xbf16>, vector<160x128xf32> -> vector<160x128xf32>
    %c0_54 = arith.constant 0 : index
    %c0_55 = arith.constant 0 : index
    %51 = vector.load %arg5[%c0_54, %c0_55] : memref<1x128xf32, #tpu.memory_space<vmem>>, vector<1x128xf32>
    %52 = vector.broadcast %51 : vector<1x128xf32> to vector<160x128xf32>
    %53 = arith.addf %50, %52 : vector<160x128xf32>
    %cst_56 = arith.constant 0.000000e+00 : f32
    %54 = vector.broadcast %cst_56 : f32 to vector<160x128xf32>
    %55 = arith.maximumf %53, %54 : vector<160x128xf32>
    %56 = vector.shape_cast %55 : vector<160x128xf32> to vector<10x16x128xf32>
    %57 = arith.truncf %56 : vector<10x16x128xf32> to vector<10x16x128xbf16>
    %c0_57 = arith.constant 0 : index
    %c1_58 = arith.constant 1 : index
    %c0_59 = arith.constant 0 : index
    %58 = vector.load %arg9[%c0_57, %c1_58, %c0_59] : memref<10x18x128xbf16, #tpu.memory_space<vmem>>, vector<10x16x128xbf16>
    tpu.vector_store %arg9[%c0_57, %c1_58, %c0_59], %57 {strides = array<i32>} : memref<10x18x128xbf16, #tpu.memory_space<vmem>>, vector<10x16x128xbf16>,
    %cst_60 = arith.constant 0.000000e+00 : bf16
    %59 = vector.broadcast %cst_60 : bf16 to vector<10x1x128xbf16>
    %c0_61 = arith.constant 0 : index
    %c0_62 = arith.constant 0 : index
    %c0_63 = arith.constant 0 : index
    %60 = vector.load %arg9[%c0_61, %c0_62, %c0_63] : memref<10x18x128xbf16, #tpu.memory_space<vmem>>, vector<10x1x128xbf16>
    tpu.vector_store %arg9[%c0_61, %c0_62, %c0_63], %59 {strides = array<i32>} : memref<10x18x128xbf16, #tpu.memory_space<vmem>>, vector<10x1x128xbf16>,
    %cst_64 = arith.constant 0.000000e+00 : bf16
    %61 = vector.broadcast %cst_64 : bf16 to vector<10x1x128xbf16>
    %c0_65 = arith.constant 0 : index
    %c17 = arith.constant 17 : index
    %c0_66 = arith.constant 0 : index
    %62 = vector.load %arg9[%c0_65, %c17, %c0_66] : memref<10x18x128xbf16, #tpu.memory_space<vmem>>, vector<10x1x128xbf16>
    tpu.vector_store %arg9[%c0_65, %c17, %c0_66], %61 {strides = array<i32>} : memref<10x18x128xbf16, #tpu.memory_space<vmem>>, vector<10x1x128xbf16>,
    %c0_i32_67 = arith.constant 0 : i32
    %63 = arith.cmpi eq, %arg1, %c0_i32_67 : i32
    %64 = arith.extui %63 : i1 to i32
    %c0_i32_68 = arith.constant 0 : i32
    %65 = arith.cmpi ne, %64, %c0_i32_68 : i32
    scf.if %65 {
      %cst_143 = arith.constant 0.000000e+00 : bf16
      %102 = vector.broadcast %cst_143 : bf16 to vector<1x18x128xbf16>
      %c0_144 = arith.constant 0 : index
      %c0_145 = arith.constant 0 : index
      %c0_146 = arith.constant 0 : index
      %103 = vector.load %arg9[%c0_144, %c0_145, %c0_146] : memref<10x18x128xbf16, #tpu.memory_space<vmem>>, vector<1x18x128xbf16>
      tpu.vector_store %arg9[%c0_144, %c0_145, %c0_146], %102 {strides = array<i32>} : memref<10x18x128xbf16, #tpu.memory_space<vmem>>, vector<1x18x128xbf16>,
    } else {
    }
    %c1_i32_69 = arith.constant 1 : i32
    %66 = arith.cmpi eq, %arg1, %c1_i32_69 : i32
    %67 = arith.extui %66 : i1 to i32
    %c0_i32_70 = arith.constant 0 : i32
    %68 = arith.cmpi ne, %67, %c0_i32_70 : i32
    scf.if %68 {
      %cst_143 = arith.constant 0.000000e+00 : bf16
      %102 = vector.broadcast %cst_143 : bf16 to vector<1x18x128xbf16>
      %c9 = arith.constant 9 : index
      %c0_144 = arith.constant 0 : index
      %c0_145 = arith.constant 0 : index
      %103 = vector.load %arg9[%c9, %c0_144, %c0_145] : memref<10x18x128xbf16, #tpu.memory_space<vmem>>, vector<1x18x128xbf16>
      tpu.vector_store %arg9[%c9, %c0_144, %c0_145], %102 {strides = array<i32>} : memref<10x18x128xbf16, #tpu.memory_space<vmem>>, vector<1x18x128xbf16>,
    } else {
    }
    %c0_71 = arith.constant 0 : index
    %c0_72 = arith.constant 0 : index
    %c0_73 = arith.constant 0 : index
    %69 = vector.load %arg9[%c0_71, %c0_72, %c0_73] : memref<10x18x128xbf16, #tpu.memory_space<vmem>>, vector<8x16x128xbf16>
    %c0_74 = arith.constant 0 : index
    %c0_75 = arith.constant 0 : index
    %c0_76 = arith.constant 0 : index
    %70 = vector.load %arg10[%c0_74, %c0_75, %c0_76] : memref<8x16x1280xbf16, #tpu.memory_space<vmem>>, vector<8x16x128xbf16>
    tpu.vector_store %arg10[%c0_74, %c0_75, %c0_76], %69 {strides = array<i32>} : memref<8x16x1280xbf16, #tpu.memory_space<vmem>>, vector<8x16x128xbf16>,
    %c0_77 = arith.constant 0 : index
    %c1_78 = arith.constant 1 : index
    %c0_79 = arith.constant 0 : index
    %71 = vector.load %arg9[%c0_77, %c1_78, %c0_79] : memref<10x18x128xbf16, #tpu.memory_space<vmem>>, vector<8x16x128xbf16>
    %c0_80 = arith.constant 0 : index
    %c0_81 = arith.constant 0 : index
    %c128_82 = arith.constant 128 : index
    %72 = vector.load %arg10[%c0_80, %c0_81, %c128_82] : memref<8x16x1280xbf16, #tpu.memory_space<vmem>>, vector<8x16x128xbf16>
    tpu.vector_store %arg10[%c0_80, %c0_81, %c128_82], %71 {strides = array<i32>} : memref<8x16x1280xbf16, #tpu.memory_space<vmem>>, vector<8x16x128xbf16>,
    %c0_83 = arith.constant 0 : index
    %c2_84 = arith.constant 2 : index
    %c0_85 = arith.constant 0 : index
    %73 = vector.load %arg9[%c0_83, %c2_84, %c0_85] : memref<10x18x128xbf16, #tpu.memory_space<vmem>>, vector<8x16x128xbf16>
    %c0_86 = arith.constant 0 : index
    %c0_87 = arith.constant 0 : index
    %c256_88 = arith.constant 256 : index
    %74 = vector.load %arg10[%c0_86, %c0_87, %c256_88] : memref<8x16x1280xbf16, #tpu.memory_space<vmem>>, vector<8x16x128xbf16>
    tpu.vector_store %arg10[%c0_86, %c0_87, %c256_88], %73 {strides = array<i32>} : memref<8x16x1280xbf16, #tpu.memory_space<vmem>>, vector<8x16x128xbf16>,
    %c1_89 = arith.constant 1 : index
    %c0_90 = arith.constant 0 : index
    %c0_91 = arith.constant 0 : index
    %75 = vector.load %arg9[%c1_89, %c0_90, %c0_91] : memref<10x18x128xbf16, #tpu.memory_space<vmem>>, vector<8x16x128xbf16>
    %c0_92 = arith.constant 0 : index
    %c0_93 = arith.constant 0 : index
    %c384_94 = arith.constant 384 : index
    %76 = vector.load %arg10[%c0_92, %c0_93, %c384_94] : memref<8x16x1280xbf16, #tpu.memory_space<vmem>>, vector<8x16x128xbf16>
    tpu.vector_store %arg10[%c0_92, %c0_93, %c384_94], %75 {strides = array<i32>} : memref<8x16x1280xbf16, #tpu.memory_space<vmem>>, vector<8x16x128xbf16>,
    %c1_95 = arith.constant 1 : index
    %c1_96 = arith.constant 1 : index
    %c0_97 = arith.constant 0 : index
    %77 = vector.load %arg9[%c1_95, %c1_96, %c0_97] : memref<10x18x128xbf16, #tpu.memory_space<vmem>>, vector<8x16x128xbf16>
    %c0_98 = arith.constant 0 : index
    %c0_99 = arith.constant 0 : index
    %c512_100 = arith.constant 512 : index
    %78 = vector.load %arg10[%c0_98, %c0_99, %c512_100] : memref<8x16x1280xbf16, #tpu.memory_space<vmem>>, vector<8x16x128xbf16>
    tpu.vector_store %arg10[%c0_98, %c0_99, %c512_100], %77 {strides = array<i32>} : memref<8x16x1280xbf16, #tpu.memory_space<vmem>>, vector<8x16x128xbf16>,
    %c1_101 = arith.constant 1 : index
    %c2_102 = arith.constant 2 : index
    %c0_103 = arith.constant 0 : index
    %79 = vector.load %arg9[%c1_101, %c2_102, %c0_103] : memref<10x18x128xbf16, #tpu.memory_space<vmem>>, vector<8x16x128xbf16>
    %c0_104 = arith.constant 0 : index
    %c0_105 = arith.constant 0 : index
    %c640_106 = arith.constant 640 : index
    %80 = vector.load %arg10[%c0_104, %c0_105, %c640_106] : memref<8x16x1280xbf16, #tpu.memory_space<vmem>>, vector<8x16x128xbf16>
    tpu.vector_store %arg10[%c0_104, %c0_105, %c640_106], %79 {strides = array<i32>} : memref<8x16x1280xbf16, #tpu.memory_space<vmem>>, vector<8x16x128xbf16>,
    %c2_107 = arith.constant 2 : index
    %c0_108 = arith.constant 0 : index
    %c0_109 = arith.constant 0 : index
    %81 = vector.load %arg9[%c2_107, %c0_108, %c0_109] : memref<10x18x128xbf16, #tpu.memory_space<vmem>>, vector<8x16x128xbf16>
    %c0_110 = arith.constant 0 : index
    %c0_111 = arith.constant 0 : index
    %c768_112 = arith.constant 768 : index
    %82 = vector.load %arg10[%c0_110, %c0_111, %c768_112] : memref<8x16x1280xbf16, #tpu.memory_space<vmem>>, vector<8x16x128xbf16>
    tpu.vector_store %arg10[%c0_110, %c0_111, %c768_112], %81 {strides = array<i32>} : memref<8x16x1280xbf16, #tpu.memory_space<vmem>>, vector<8x16x128xbf16>,
    %c2_113 = arith.constant 2 : index
    %c1_114 = arith.constant 1 : index
    %c0_115 = arith.constant 0 : index
    %83 = vector.load %arg9[%c2_113, %c1_114, %c0_115] : memref<10x18x128xbf16, #tpu.memory_space<vmem>>, vector<8x16x128xbf16>
    %c0_116 = arith.constant 0 : index
    %c0_117 = arith.constant 0 : index
    %c896_118 = arith.constant 896 : index
    %84 = vector.load %arg10[%c0_116, %c0_117, %c896_118] : memref<8x16x1280xbf16, #tpu.memory_space<vmem>>, vector<8x16x128xbf16>
    tpu.vector_store %arg10[%c0_116, %c0_117, %c896_118], %83 {strides = array<i32>} : memref<8x16x1280xbf16, #tpu.memory_space<vmem>>, vector<8x16x128xbf16>,
    %c2_119 = arith.constant 2 : index
    %c2_120 = arith.constant 2 : index
    %c0_121 = arith.constant 0 : index
    %85 = vector.load %arg9[%c2_119, %c2_120, %c0_121] : memref<10x18x128xbf16, #tpu.memory_space<vmem>>, vector<8x16x128xbf16>
    %c0_122 = arith.constant 0 : index
    %c0_123 = arith.constant 0 : index
    %c1024_124 = arith.constant 1024 : index
    %86 = vector.load %arg10[%c0_122, %c0_123, %c1024_124] : memref<8x16x1280xbf16, #tpu.memory_space<vmem>>, vector<8x16x128xbf16>
    tpu.vector_store %arg10[%c0_122, %c0_123, %c1024_124], %85 {strides = array<i32>} : memref<8x16x1280xbf16, #tpu.memory_space<vmem>>, vector<8x16x128xbf16>,
    %c1_125 = arith.constant 1 : index
    %c0_126 = arith.constant 0 : index
    %c512_127 = arith.constant 512 : index
    %87 = vector.load %arg8[%c1_125, %c0_126, %c512_127] : memref<10x16x1152xbf16, #tpu.memory_space<vmem>>, vector<8x16x128xbf16>
    %c0_128 = arith.constant 0 : index
    %c0_129 = arith.constant 0 : index
    %c1152 = arith.constant 1152 : index
    %88 = vector.load %arg10[%c0_128, %c0_129, %c1152] : memref<8x16x1280xbf16, #tpu.memory_space<vmem>>, vector<8x16x128xbf16>
    tpu.vector_store %arg10[%c0_128, %c0_129, %c1152], %87 {strides = array<i32>} : memref<8x16x1280xbf16, #tpu.memory_space<vmem>>, vector<8x16x128xbf16>,
    %c0_130 = arith.constant 0 : index
    %c0_131 = arith.constant 0 : index
    %c0_132 = arith.constant 0 : index
    %89 = vector.load %arg10[%c0_130, %c0_131, %c0_132] : memref<8x16x1280xbf16, #tpu.memory_space<vmem>>, vector<8x16x1280xbf16>
    %90 = vector.shape_cast %89 : vector<8x16x1280xbf16> to vector<128x1280xbf16>
    %c0_133 = arith.constant 0 : index
    %c0_134 = arith.constant 0 : index
    %91 = vector.load %arg4[%c0_133, %c0_134] : memref<1280x128xbf16, #tpu.memory_space<vmem>>, vector<1280x128xbf16>
    %cst_135 = arith.constant dense<0.000000e+00> : vector<128x128xf32>
    %92 = tpu.matmul %90, %91, %cst_135 {dimension_numbers = #tpu.dot_dimension_numbers<[1], [0], [0], [1], [0, 0, 1, 1], [], []>} : vector<128x1280xbf16>, vector<1280x128xbf16>, vector<128x128xf32> -> vector<128x128xf32>
    %c0_136 = arith.constant 0 : index
    %c0_137 = arith.constant 0 : index
    %93 = vector.load %arg6[%c0_136, %c0_137] : memref<1x128xf32, #tpu.memory_space<vmem>>, vector<1x128xf32>
    %94 = vector.broadcast %93 : vector<1x128xf32> to vector<128x128xf32>
    %95 = arith.addf %92, %94 : vector<128x128xf32>
    %cst_138 = arith.constant 0.000000e+00 : f32
    %96 = vector.broadcast %cst_138 : f32 to vector<128x128xf32>
    %97 = arith.maximumf %95, %96 : vector<128x128xf32>
    %98 = vector.shape_cast %97 : vector<128x128xf32> to vector<8x16x128xf32>
    %c0_139 = arith.constant 0 : index
    %c0_140 = arith.constant 0 : index
    %c0_141 = arith.constant 0 : index
    %c0_142 = arith.constant 0 : index
    %99 = vector.load %arg7[%c0_139, %c0_140, %c0_141, %c0_142] : memref<1x8x16x128xf32, #tpu.memory_space<vmem>>, vector<1x8x16x128xf32>
    %100 = vector.shape_cast %99 : vector<1x8x16x128xf32> to vector<8x16x128xf32>
    %101 = vector.shape_cast %98 : vector<8x16x128xf32> to vector<1x8x16x128xf32>
    tpu.vector_store %arg7[%c0_139, %c0_140, %c0_141, %c0_142], %101 {strides = array<i32>} : memref<1x8x16x128xf32, #tpu.memory_space<vmem>>, vector<1x8x16x128xf32>,
    return
  }
  func.func @transform_0(%arg0: i32, %arg1: i32) -> (i32, i32, i32, i32) {
    %c0_i32 = arith.constant 0 : i32
    %c0_i32_0 = arith.constant 0 : i32
    %c0_i32_1 = arith.constant 0 : i32
    %c0_i32_2 = arith.constant 0 : i32
    return %arg0, %c0_i32, %c0_i32_0, %c0_i32_1 : i32, i32, i32, i32
  }
  func.func @transform_1(%arg0: i32, %arg1: i32) -> (i32, i32) {
    %c0_i32 = arith.constant 0 : i32
    %c0_i32_0 = arith.constant 0 : i32
    %c0_i32_1 = arith.constant 0 : i32
    return %c0_i32, %c0_i32_0 : i32, i32
  }
  func.func @transform_2(%arg0: i32, %arg1: i32) -> (i32, i32) {
    %c0_i32 = arith.constant 0 : i32
    %c0_i32_0 = arith.constant 0 : i32
    %c0_i32_1 = arith.constant 0 : i32
    return %c0_i32, %c0_i32_0 : i32, i32
  }
  func.func @transform_3(%arg0: i32, %arg1: i32) -> (i32, i32) {
    %c0_i32 = arith.constant 0 : i32
    %c0_i32_0 = arith.constant 0 : i32
    %c0_i32_1 = arith.constant 0 : i32
    return %c0_i32, %c0_i32_0 : i32, i32
  }
  func.func @transform_4(%arg0: i32, %arg1: i32) -> (i32, i32) {
    %c0_i32 = arith.constant 0 : i32
    %c0_i32_0 = arith.constant 0 : i32
    %c0_i32_1 = arith.constant 0 : i32
    return %c0_i32, %c0_i32_0 : i32, i32
  }
  func.func @transform_5(%arg0: i32, %arg1: i32) -> (i32, i32, i32, i32) {
    %c0_i32 = arith.constant 0 : i32
    %c0_i32_0 = arith.constant 0 : i32
    %c0_i32_1 = arith.constant 0 : i32
    return %arg0, %arg1, %c0_i32, %c0_i32_0 : i32, i32, i32, i32
  }
}

</mosaic_0001>

<llo_original>
// kernel: tpu_custom_call.1
$region0: #{tpu_custom_call.1}
  #allocation0 [shape = 'u32[]', space=smem, size = 0x4, offset = 0x4, fixed_abs, tag = 'smem constant byte address 0x4 - core index']
  #allocation1 [shape = 'u32[144,128]{1,0:T(1,128)}', space=vmem, size = 0x12000, scoped, tag = 'internal scratch']
  #allocation2 [shape = 'bf16[10,16,1152]{2,1,0:T(16,128)(2,1)}', space=vmem, size = 0x5a000, scoped, tag = 'scratch operand']
  #allocation3 [shape = 'bf16[10,18,128]{2,1,0:T(8,128)(2,1)}', space=vmem, size = 0xf000, scoped, tag = 'scratch operand']
  #allocation4 [shape = 'bf16[8,16,1280]{2,1,0:T(16,128)(2,1)}', space=vmem, size = 0x50000, scoped, tag = 'scratch operand']
  %s0 = inlined_call_operand.vmem [shape: bf16[2,20,18,128], index: 0, kind: input, shape index: {}]
  %s1 = inlined_call_operand.hbm [shape: bf16[1152,128], index: 1, kind: input, shape index: {}]
  %s2 = inlined_call_operand.vmem [shape: bf16[1280,128], index: 2, kind: input, shape index: {}]
  %s3 = inlined_call_operand.vmem [shape: f32[1,128], index: 3, kind: input, shape index: {}]
  %s4 = inlined_call_operand.vmem [shape: f32[1,128], index: 4, kind: input, shape index: {}]
  %s5 = inlined_call_operand.hbm [shape: f32[2,16,16,128], index: 5, kind: output, shape index: {}]
  %s6 = sld [smem:[#allocation0]]
  $region65: #{tpu_custom_call.1} parent=0
    _
  %s8 = ssub.s32 1, %s6
  %s9 = scalar_select 0, %s8, %s6
  $region1: #{tpu_custom_call.1} parent=0
    #allocation5 [shape = 'u8[294912]{0}', space=vmem, size = 0x48000, scoped, tag = 'input window, operand 1, single buffered']
    #allocation6 [shape = 's32[2]{0}', space=sflag, size = 0x8, scoped, tag = 'scoped memory for tpu_custom_call.1']
    #allocation7 [shape = 's32[2]{0}', space=sflag, size = 0x8, scoped, tag = 'scoped memory for tpu_custom_call.1']
    #allocation8 [shape = 'u8[131072]{0}', space=vmem, size = 0x20000, scoped, tag = 'output window, operand 0']
    %10 = vsyncpa [#allocation6], 0
    %11 = vsyncpa [#allocation7], 0
    %s12 = scalar_lea.sflag [#allocation7], 1
    %13 = vsyncpa %s12, 0
    loop: start=0, step=1, limit=6
    $region2: #{tpu_custom_call.1} parent=1 // loop_pre_header
      _
    $region3: #{tpu_custom_call.1} parent=1 // loop_header
      %s15 = sphi 0, %s19
      %p16 = scmp.ge.s32.totalorder %s15, 6
      %s22 = sphi 0, %s34
      %s23 = sphi 0, %s30
      %s24 = sphi 0, %s22
      %s25 = sphi 0, %s23
      %s26 = sphi 0, %s24
      %s27 = sphi 0, %s25
      %s37 = sphi 0, %s39
      %s40 = sphi 0, %s37
      %s41 = sphi 0, %s40
      %s57 = sphi 0, %s41
      %s61 = sphi 0, %s61
      %s63 = sphi 0, %s61
      %s64 = sphi 0, %s63
      %s78 = sphi 0, %s64
      %s82 = sphi 0, %s82
      %s84 = sphi 0, %s82
      %s85 = sphi 0, %s84
      %s99 = sphi 0, %s85
      %s103 = sphi 0, %s103
      %s105 = sphi 0, %s103
      %s106 = sphi 0, %s105
      %s120 = sphi 0, %s106
      %s124 = sphi 0, %s124
      %s126 = sphi 0, %s124
      %s127 = sphi 0, %s126
      %s141 = sphi 0, %s127
      %s149 = sphi 0, %s151
      %s152 = sphi 0, %s149
      %s153 = sphi 0, %s152
      %s169 = sphi 0, %s153
    $region4: #{tpu_custom_call.1} parent=1 // loop_header_branch
      %18 = sbr.rel (%p16) target = $region8
    $region5: #{tpu_custom_call.1} parent=1 // loop_body
      %s20 = ssub.s32 %s15, 1
      %s21 = ssub.s32 %s15, 2
      %s28 = sadd.s32 1, %s23
      %p29 = scmp.ge.s32.totalorder %s28, 2
      %s30 = scalar_select %p29, 0, %s28
      %s31 = sadd.s32 1, %s22
      %s32 = scalar_select %p29, %s31, %s22
      %p33 = scmp.ge.s32.totalorder %s32, 2
      %s34 = scalar_select %p33, 0, %s32
      %s35 = ssub.s32 %s22, %s34
      %p36 = scmp.eq.s32.totalorder %s35, 0
      %s38 = sadd.s32 %s37, 1
      %s39 = scalar_select %p36, %s37, %s38
      %p42 = pneg %p36
      %p43 = scmp.eq.s32.totalorder %s15, 3
      %p44 = por %p42, %p43
      %p45 = scmp.ne.s32.totalorder %s37, %s40
      %p46 = scmp.eq.s32.totalorder %s15, 0
      %p47 = por %p45, %p46
      %p48 = scmp.ne.s32.totalorder %s37, %s40
      %p49 = scmp.eq.s32.totalorder %s20, 3
      %p50 = por %p48, %p49
      %p51 = scmp.ne.s32.totalorder %s40, %s41
      %p52 = scmp.eq.s32.totalorder %s20, 0
      %p53 = por %p51, %p52
      %p54 = scmp.ne.s32.totalorder %s40, %s41
      %p55 = scmp.eq.s32.totalorder %s21, 3
      %p56 = por %p54, %p55
      %p58 = scmp.ne.s32.totalorder %s41, %s57
      %p59 = scmp.eq.s32.totalorder %s21, 0
      %p60 = por %p58, %p59
      %s62 = sadd.s32 %s61, 1
      %p65 = scmp.eq.s32.totalorder %s15, 3
      %p66 = scmp.ne.s32.totalorder %s61, %s63
      %p67 = scmp.eq.s32.totalorder %s15, 0
      %p68 = por %p66, %p67
      %p69 = scmp.ne.s32.totalorder %s61, %s63
      %p70 = scmp.eq.s32.totalorder %s20, 3
      %p71 = por %p69, %p70
      %p72 = scmp.ne.s32.totalorder %s63, %s64
      %p73 = scmp.eq.s32.totalorder %s20, 0
      %p74 = por %p72, %p73
      %p75 = scmp.ne.s32.totalorder %s63, %s64
      %p76 = scmp.eq.s32.totalorder %s21, 3
      %p77 = por %p75, %p76
      %p79 = scmp.ne.s32.totalorder %s64, %s78
      %p80 = scmp.eq.s32.totalorder %s21, 0
      %p81 = por %p79, %p80
      %s83 = sadd.s32 %s82, 1
      %p86 = scmp.eq.s32.totalorder %s15, 3
      %p87 = scmp.ne.s32.totalorder %s82, %s84
      %p88 = scmp.eq.s32.totalorder %s15, 0
      %p89 = por %p87, %p88
      %p90 = scmp.ne.s32.totalorder %s82, %s84
      %p91 = scmp.eq.s32.totalorder %s20, 3
      %p92 = por %p90, %p91
      %p93 = scmp.ne.s32.totalorder %s84, %s85
      %p94 = scmp.eq.s32.totalorder %s20, 0
      %p95 = por %p93, %p94
      %p96 = scmp.ne.s32.totalorder %s84, %s85
      %p97 = scmp.eq.s32.totalorder %s21, 3
      %p98 = por %p96, %p97
      %p100 = scmp.ne.s32.totalorder %s85, %s99
      %p101 = scmp.eq.s32.totalorder %s21, 0
      %p102 = por %p100, %p101
      %s104 = sadd.s32 %s103, 1
      %p107 = scmp.eq.s32.totalorder %s15, 3
      %p108 = scmp.ne.s32.totalorder %s103, %s105
      %p109 = scmp.eq.s32.totalorder %s15, 0
      %p110 = por %p108, %p109
      %p111 = scmp.ne.s32.totalorder %s103, %s105
      %p112 = scmp.eq.s32.totalorder %s20, 3
      %p113 = por %p111, %p112
      %p114 = scmp.ne.s32.totalorder %s105, %s106
      %p115 = scmp.eq.s32.totalorder %s20, 0
      %p116 = por %p114, %p115
      %p117 = scmp.ne.s32.totalorder %s105, %s106
      %p118 = scmp.eq.s32.totalorder %s21, 3
      %p119 = por %p117, %p118
      %p121 = scmp.ne.s32.totalorder %s106, %s120
      %p122 = scmp.eq.s32.totalorder %s21, 0
      %p123 = por %p121, %p122
      %s125 = sadd.s32 %s124, 1
      %p128 = scmp.eq.s32.totalorder %s15, 3
      %p129 = scmp.ne.s32.totalorder %s124, %s126
      %p130 = scmp.eq.s32.totalorder %s15, 0
      %p131 = por %p129, %p130
      %p132 = scmp.ne.s32.totalorder %s124, %s126
      %p133 = scmp.eq.s32.totalorder %s20, 3
      %p134 = por %p132, %p133
      %p135 = scmp.ne.s32.totalorder %s126, %s127
      %p136 = scmp.eq.s32.totalorder %s20, 0
      %p137 = por %p135, %p136
      %p138 = scmp.ne.s32.totalorder %s126, %s127
      %p139 = scmp.eq.s32.totalorder %s21, 3
      %p140 = por %p138, %p139
      %p142 = scmp.ne.s32.totalorder %s127, %s141
      %p143 = scmp.eq.s32.totalorder %s21, 0
      %p144 = por %p142, %p143
      %s145 = ssub.s32 %s22, %s34
      %s146 = ssub.s32 %s23, %s30
      %s147 = sor.u32 %s145, %s146
      %p148 = scmp.eq.s32.totalorder %s147, 0
      %s150 = sadd.s32 %s149, 1
      %s151 = scalar_select %p148, %s149, %s150
      %p154 = pneg %p148
      %p155 = scmp.eq.s32.totalorder %s15, 3
      %p156 = por %p154, %p155
      %p157 = scmp.ne.s32.totalorder %s149, %s152
      %p158 = scmp.eq.s32.totalorder %s15, 0
      %p159 = por %p157, %p158
      %p160 = scmp.ne.s32.totalorder %s149, %s152
      %p161 = scmp.eq.s32.totalorder %s20, 3
      %p162 = por %p160, %p161
      %p163 = scmp.ne.s32.totalorder %s152, %s153
      %p164 = scmp.eq.s32.totalorder %s20, 0
      %p165 = por %p163, %p164
      %p166 = scmp.ne.s32.totalorder %s152, %s153
      %p167 = scmp.eq.s32.totalorder %s21, 3
      %p168 = por %p166, %p167
      %p170 = scmp.ne.s32.totalorder %s153, %s169
      %p171 = scmp.eq.s32.totalorder %s21, 0
      %p172 = por %p170, %p171
      %p173 = scmp.le.s32.totalorder 1, %s15
      %p174 = scmp.lt.s32.totalorder %s15, 5
      %p175 = pnand %p173, %p174
      %p176 = pneg %p175
      // Predicated region
      $region9: #{tpu_custom_call.1} parent=5 // pred_check
        _
      $region10: #{tpu_custom_call.1} parent=5 // pred_check_branch
        %178 = sbr.rel (%p175) target = $region12
      $region11: #{tpu_custom_call.1} parent=5 // pred_region
        %s179 = ssub.s32 %s15, 1
        // Predicated region
        $region13: #{tpu_custom_call.1} parent=11 // pred_check
          %p180 = pneg %p74
        $region14: #{tpu_custom_call.1} parent=11 // pred_check_branch
          %182 = sbr.rel (%p180) target = $region16
        $region15: #{tpu_custom_call.1} parent=11 // pred_region
          %s184 = ssub.s32 9216, 9216
          %185 = vsyncadd [#allocation6], %s184
          %s186 = sshll.u32 [#allocation5], 4
          %s187 = int_to_ptr.vmem [resolvable:$true] %s186
          %192 = dma.hbm_to_vmem [thread:$0]  %s1, 9216, %s187, [#allocation6], 64, 64, 4
        $region16: #{tpu_custom_call.1} parent=11 // pred_fallthru
          _
        // Predicated region
        $region17: #{tpu_custom_call.1} parent=11 // pred_check
          %p193 = pneg %p95
        $region18: #{tpu_custom_call.1} parent=11 // pred_check_branch
          %195 = sbr.rel (%p193) target = $region20
        $region19: #{tpu_custom_call.1} parent=11 // pred_region
          _
        $region20: #{tpu_custom_call.1} parent=11 // pred_fallthru
          _
        // Predicated region
        $region21: #{tpu_custom_call.1} parent=11 // pred_check
          %p196 = pneg %p116
        $region22: #{tpu_custom_call.1} parent=11 // pred_check_branch
          %198 = sbr.rel (%p196) target = $region24
        $region23: #{tpu_custom_call.1} parent=11 // pred_region
          _
        $region24: #{tpu_custom_call.1} parent=11 // pred_fallthru
          _
        // Predicated region
        $region25: #{tpu_custom_call.1} parent=11 // pred_check
          %p199 = pneg %p137
        $region26: #{tpu_custom_call.1} parent=11 // pred_check_branch
          %201 = sbr.rel (%p199) target = $region28
        $region27: #{tpu_custom_call.1} parent=11 // pred_region
          _
        $region28: #{tpu_custom_call.1} parent=11 // pred_fallthru
          _
      $region12: #{tpu_custom_call.1} parent=5 // pred_fallthru
        _
      %p202 = scmp.lt.s32.totalorder %s15, 4
      // Predicated region
      $region29: #{tpu_custom_call.1} parent=5 // pred_check
        %p203 = pneg %p202
      $region30: #{tpu_custom_call.1} parent=5 // pred_check_branch
        %205 = sbr.rel (%p203) target = $region32
      $region31: #{tpu_custom_call.1} parent=5 // pred_region
        // Predicated region
        $region33: #{tpu_custom_call.1} parent=31 // pred_check
          %p206 = pneg %p47
        $region34: #{tpu_custom_call.1} parent=31 // pred_check_branch
          %208 = sbr.rel (%p206) target = $region36
        $region35: #{tpu_custom_call.1} parent=31 // pred_region
          %p209 = scmp.lt.s32.totalorder %s22, 1
          %s210 = scalar_select %p209, %s22, 1
          %s211 = smul.addr %s210, 60
          %s212 = smul.addr %s211, 4
          %s213 = scalar_lea.vmem %s0, %s212
        $region36: #{tpu_custom_call.1} parent=31 // pred_fallthru
          _
      $region32: #{tpu_custom_call.1} parent=5 // pred_fallthru
        _
      %p214 = scmp.le.s32.totalorder 1, %s15
      %p215 = scmp.lt.s32.totalorder %s15, 5
      %p216 = pnand %p214, %p215
      %p217 = pneg %p216
      // Predicated region
      $region37: #{tpu_custom_call.1} parent=5 // pred_check
        _
      $region38: #{tpu_custom_call.1} parent=5 // pred_check_branch
        %219 = sbr.rel (%p216) target = $region40
      $region39: #{tpu_custom_call.1} parent=5 // pred_region
        %s220 = ssub.s32 %s15, 1
        // Predicated region
        $region41: #{tpu_custom_call.1} parent=39 // pred_check
          %p221 = pneg %p74
        $region42: #{tpu_custom_call.1} parent=39 // pred_check_branch
          %223 = sbr.rel (%p221) target = $region44
        $region43: #{tpu_custom_call.1} parent=39 // pred_region
          %224 = dma.done [#allocation6], 9216
        $region44: #{tpu_custom_call.1} parent=39 // pred_fallthru
          _
        %p225 = scmp.lt.s32.totalorder %s24, 1
        %s226 = scalar_select %p225, %s24, 1
        %s227 = smul.addr %s226, 60
        %s228 = smul.addr %s227, 4
        %s229 = scalar_lea.vmem %s0, %s228
        %p230 = pneg %p53
        %p231 = pneg %p50
        %p232 = pneg %p74
        %p233 = pneg %p71
        %p234 = pneg %p95
        %p235 = pneg %p92
        %p236 = pneg %p116
        %p237 = pneg %p113
        %p238 = pneg %p137
        %p239 = pneg %p134
        %p240 = pneg %p165
        %p241 = pneg %p162
        %s242 = sand.u32 %s152, 1
        %s243 = scalar_lea.sflag [#allocation7], %s242
        %s244 = sand.u32 %s152, 1
        %s245 = smul.addr %s244, 128
        %s246 = scalar_lea.vmem [#allocation8], %s245
        %p247 = scmp.lt.s32.totalorder %s24, 1
        %s248 = scalar_select %p247, %s24, 1
        %s249 = smul.addr %s248, 60
        %s250 = smul.addr %s249, 4
        %s251 = scalar_lea.vmem %s0, %s250
        %s252 = smul.u32 8, %s25
        %s254 = smul.u32 %s25, 8
        %s255 = smul.u32 %s254, 3
        %s256 = smul.addr %s255, 4
        %s257 = scalar_lea.vmem %s251, %s256
        %v258 = vld [vmem:[%s257] sm:$0xf]
        %v259 = vld [vmem:[%s257 + $0x4] sm:$0xf]
        %v260 = vld [vmem:[%s257 + $0xc] sm:$0xf]
        %v261 = vld [vmem:[%s257 + $0x10] sm:$0xf]
        %v262 = vld [vmem:[%s257 + $0x18] sm:$0xf]
        %v263 = vld [vmem:[%s257 + $0x1c] sm:$0xf]
        %v264 = vld [vmem:[%s257 + $0x24] sm:$0xf]
        %v265 = vld [vmem:[%s257 + $0x28] sm:$0xf]
        %v266 = vld [vmem:[%s257 + $0x30] sm:$0xf]
        %v267 = vld [vmem:[%s257 + $0x34] sm:$0xf]
        %v268 = vld [vmem:[%s257 + $0x3c] sm:$0xf]
        %v269 = vld [vmem:[%s257 + $0x40] sm:$0xf]
        %v270 = vld [vmem:[%s257 + $0x48] sm:$0xf]
        %v271 = vld [vmem:[%s257 + $0x4c] sm:$0xf]
        %v272 = vld [vmem:[%s257 + $0x54] sm:$0xf]
        %v273 = vld [vmem:[%s257 + $0x58] sm:$0xf]
        %v274 = vld [vmem:[%s257 + $0x60] sm:$0xf]
        %v275 = vld [vmem:[%s257 + $0x64] sm:$0xf]
        %v276 = vld [vmem:[%s257 + $0x6c] sm:$0xf]
        %v277 = vld [vmem:[%s257 + $0x70] sm:$0xf]
        %v298 = vunpack.c.l.b16 %v258
        %v299 = vunpack.c.l.b16 %v259
        %v300 = vunpack.c.l.b16 %v260
        %v301 = vunpack.c.l.b16 %v261
        %v302 = vunpack.c.l.b16 %v262
        %v303 = vunpack.c.l.b16 %v263
        %v304 = vunpack.c.l.b16 %v264
        %v305 = vunpack.c.l.b16 %v265
        %v306 = vunpack.c.l.b16 %v266
        %v307 = vunpack.c.l.b16 %v267
        %v308 = vunpack.c.l.b16 %v268
        %v309 = vunpack.c.l.b16 %v269
        %v310 = vunpack.c.l.b16 %v270
        %v311 = vunpack.c.l.b16 %v271
        %v312 = vunpack.c.l.b16 %v272
        %v313 = vunpack.c.l.b16 %v273
        %v314 = vunpack.c.l.b16 %v274
        %v315 = vunpack.c.l.b16 %v275
        %v316 = vunpack.c.l.b16 %v276
        %v317 = vunpack.c.l.b16 %v277
        %v318 = vpack.c.b16 %v299, %v298
        %v319 = vpack.c.b16 %v301, %v300
        %v320 = vpack.c.b16 %v303, %v302
        %v321 = vpack.c.b16 %v305, %v304
        %v322 = vpack.c.b16 %v307, %v306
        %v323 = vpack.c.b16 %v309, %v308
        %v324 = vpack.c.b16 %v311, %v310
        %v325 = vpack.c.b16 %v313, %v312
        %v326 = vpack.c.b16 %v315, %v314
        %v327 = vpack.c.b16 %v317, %v316
        %338 = vst [vmem:[#allocation2] sm:$0xff] %v318
        %339 = vst [vmem:[#allocation2 + $0x48] sm:$0xff] %v319
        %340 = vst [vmem:[#allocation2 + $0x90] sm:$0xff] %v320
        %341 = vst [vmem:[#allocation2 + $0xd8] sm:$0xff] %v321
        %342 = vst [vmem:[#allocation2 + $0x120] sm:$0xff] %v322
        %343 = vst [vmem:[#allocation2 + $0x168] sm:$0xff] %v323
        %344 = vst [vmem:[#allocation2 + $0x1b0] sm:$0xff] %v324
        %345 = vst [vmem:[#allocation2 + $0x1f8] sm:$0xff] %v325
        %346 = vst [vmem:[#allocation2 + $0x240] sm:$0xff] %v326
        %347 = vst [vmem:[#allocation2 + $0x288] sm:$0xff] %v327
        %v348 = vld [vmem:[%s257] sm:$0xf]
        %v349 = vld [vmem:[%s257 + $0x4] sm:$0xf]
        %v350 = vld [vmem:[%s257 + $0x8] sm:$0x1]
        %v351 = vld [vmem:[%s257 + $0xc] sm:$0xf]
        %v352 = vld [vmem:[%s257 + $0x10] sm:$0xf]
        %v353 = vld [vmem:[%s257 + $0x14] sm:$0x1]
        %v354 = vld [vmem:[%s257 + $0x18] sm:$0xf]
        %v355 = vld [vmem:[%s257 + $0x1c] sm:$0xf]
        %v356 = vld [vmem:[%s257 + $0x20] sm:$0x1]
        %v357 = vld [vmem:[%s257 + $0x24] sm:$0xf]
        %v358 = vld [vmem:[%s257 + $0x28] sm:$0xf]
        %v359 = vld [vmem:[%s257 + $0x2c] sm:$0x1]
        %v360 = vld [vmem:[%s257 + $0x30] sm:$0xf]
        %v361 = vld [vmem:[%s257 + $0x34] sm:$0xf]
        %v362 = vld [vmem:[%s257 + $0x38] sm:$0x1]
        %v363 = vld [vmem:[%s257 + $0x3c] sm:$0xf]
        %v364 = vld [vmem:[%s257 + $0x40] sm:$0xf]
        %v365 = vld [vmem:[%s257 + $0x44] sm:$0x1]
        %v366 = vld [vmem:[%s257 + $0x48] sm:$0xf]
        %v367 = vld [vmem:[%s257 + $0x4c] sm:$0xf]
        %v368 = vld [vmem:[%s257 + $0x50] sm:$0x1]
        %v369 = vld [vmem:[%s257 + $0x54] sm:$0xf]
        %v370 = vld [vmem:[%s257 + $0x58] sm:$0xf]
        %v371 = vld [vmem:[%s257 + $0x5c] sm:$0x1]
        %v372 = vld [vmem:[%s257 + $0x60] sm:$0xf]
        %v373 = vld [vmem:[%s257 + $0x64] sm:$0xf]
        %v374 = vld [vmem:[%s257 + $0x68] sm:$0x1]
        %v375 = vld [vmem:[%s257 + $0x6c] sm:$0xf]
        %v376 = vld [vmem:[%s257 + $0x70] sm:$0xf]
        %v377 = vld [vmem:[%s257 + $0x74] sm:$0x1]
        %v408 = vunpack.c.l.b16 %v348
        %v409 = vunpack.c.l.b16 %v349
        %v410 = vunpack.c.l.b16 %v350
        %v411 = vunpack.c.l.b16 %v351
        %v412 = vunpack.c.l.b16 %v352
        %v413 = vunpack.c.l.b16 %v353
        %v414 = vunpack.c.l.b16 %v354
        %v415 = vunpack.c.l.b16 %v355
        %v416 = vunpack.c.l.b16 %v356
        %v417 = vunpack.c.l.b16 %v357
        %v418 = vunpack.c.l.b16 %v358
        %v419 = vunpack.c.l.b16 %v359
        %v420 = vunpack.c.l.b16 %v360
        %v421 = vunpack.c.l.b16 %v361
        %v422 = vunpack.c.l.b16 %v362
        %v423 = vunpack.c.l.b16 %v363
        %v424 = vunpack.c.l.b16 %v364
        %v425 = vunpack.c.l.b16 %v365
        %v426 = vunpack.c.l.b16 %v366
        %v427 = vunpack.c.l.b16 %v367
        %v428 = vunpack.c.l.b16 %v368
        %v429 = vunpack.c.l.b16 %v369
        %v430 = vunpack.c.l.b16 %v370
        %v431 = vunpack.c.l.b16 %v371
        %v432 = vunpack.c.l.b16 %v372
        %v433 = vunpack.c.l.b16 %v373
        %v434 = vunpack.c.l.b16 %v374
        %v435 = vunpack.c.l.b16 %v375
        %v436 = vunpack.c.l.b16 %v376
        %v437 = vunpack.c.l.b16 %v377
        %v438 = vpack.c.b16 %v409, %v408
        %v439 = vpack.c.b16 %v410, %v410
        %v440 = vpack.c.b16 %v412, %v411
        %v441 = vpack.c.b16 %v413, %v413
        %v442 = vpack.c.b16 %v415, %v414
        %v443 = vpack.c.b16 %v416, %v416
        %v444 = vpack.c.b16 %v418, %v417
        %v445 = vpack.c.b16 %v419, %v419
        %v446 = vpack.c.b16 %v421, %v420
        %v447 = vpack.c.b16 %v422, %v422
        %v448 = vpack.c.b16 %v424, %v423
        %v449 = vpack.c.b16 %v425, %v425
        %v450 = vpack.c.b16 %v427, %v426
        %v451 = vpack.c.b16 %v428, %v428
        %v452 = vpack.c.b16 %v430, %v429
        %v453 = vpack.c.b16 %v431, %v431
        %v454 = vpack.c.b16 %v433, %v432
        %v455 = vpack.c.b16 %v434, %v434
        %v456 = vpack.c.b16 %v436, %v435
        %v457 = vpack.c.b16 %v437, %v437
        %vm458 = vsmask.f32 7424
        %v460 = vshrl.u32 %v438, 16
        %v462 = vshll.u32 %v438, 16
        %v464 = vrot.slane %v462, 1
        %v465 = vor.u32 %v460, %v464
        %v467 = vshll.u32 %v439, 16
        %v469 = vrot.slane %v467, 1
        %v470 = vsel %vm458, %v465, %v469
        %v472 = vshrl.u32 %v440, 16
        %v474 = vshll.u32 %v440, 16
        %v476 = vrot.slane %v474, 1
        %v477 = vor.u32 %v472, %v476
        %v479 = vshll.u32 %v441, 16
        %v481 = vrot.slane %v479, 1
        %v482 = vsel %vm458, %v477, %v481
        %v484 = vshrl.u32 %v442, 16
        %v486 = vshll.u32 %v442, 16
        %v488 = vrot.slane %v486, 1
        %v489 = vor.u32 %v484, %v488
        %v491 = vshll.u32 %v443, 16
        %v493 = vrot.slane %v491, 1
        %v494 = vsel %vm458, %v489, %v493
        %v496 = vshrl.u32 %v444, 16
        %v498 = vshll.u32 %v444, 16
        %v500 = vrot.slane %v498, 1
        %v501 = vor.u32 %v496, %v500
        %v503 = vshll.u32 %v445, 16
        %v505 = vrot.slane %v503, 1
        %v506 = vsel %vm458, %v501, %v505
        %v508 = vshrl.u32 %v446, 16
        %v510 = vshll.u32 %v446, 16
        %v512 = vrot.slane %v510, 1
        %v513 = vor.u32 %v508, %v512
        %v515 = vshll.u32 %v447, 16
        %v517 = vrot.slane %v515, 1
        %v518 = vsel %vm458, %v513, %v517
        %v520 = vshrl.u32 %v448, 16
        %v522 = vshll.u32 %v448, 16
        %v524 = vrot.slane %v522, 1
        %v525 = vor.u32 %v520, %v524
        %v527 = vshll.u32 %v449, 16
        %v529 = vrot.slane %v527, 1
        %v530 = vsel %vm458, %v525, %v529
        %v532 = vshrl.u32 %v450, 16
        %v534 = vshll.u32 %v450, 16
        %v536 = vrot.slane %v534, 1
        %v537 = vor.u32 %v532, %v536
        %v539 = vshll.u32 %v451, 16
        %v541 = vrot.slane %v539, 1
        %v542 = vsel %vm458, %v537, %v541
        %v544 = vshrl.u32 %v452, 16
        %v546 = vshll.u32 %v452, 16
        %v548 = vrot.slane %v546, 1
        %v549 = vor.u32 %v544, %v548
        %v551 = vshll.u32 %v453, 16
        %v553 = vrot.slane %v551, 1
        %v554 = vsel %vm458, %v549, %v553
        %v556 = vshrl.u32 %v454, 16
        %v558 = vshll.u32 %v454, 16
        %v560 = vrot.slane %v558, 1
        %v561 = vor.u32 %v556, %v560
        %v563 = vshll.u32 %v455, 16
        %v565 = vrot.slane %v563, 1
        %v566 = vsel %vm458, %v561, %v565
        %v568 = vshrl.u32 %v456, 16
        %v570 = vshll.u32 %v456, 16
        %v572 = vrot.slane %v570, 1
        %v573 = vor.u32 %v568, %v572
        %v575 = vshll.u32 %v457, 16
        %v577 = vrot.slane %v575, 1
        %v578 = vsel %vm458, %v573, %v577
        %589 = vst [vmem:[#allocation2 + $0x8] sm:$0xff] %v470
        %590 = vst [vmem:[#allocation2 + $0x50] sm:$0xff] %v482
        %591 = vst [vmem:[#allocation2 + $0x98] sm:$0xff] %v494
        %592 = vst [vmem:[#allocation2 + $0xe0] sm:$0xff] %v506
        %593 = vst [vmem:[#allocation2 + $0x128] sm:$0xff] %v518
        %594 = vst [vmem:[#allocation2 + $0x170] sm:$0xff] %v530
        %595 = vst [vmem:[#allocation2 + $0x1b8] sm:$0xff] %v542
        %596 = vst [vmem:[#allocation2 + $0x200] sm:$0xff] %v554
        %597 = vst [vmem:[#allocation2 + $0x248] sm:$0xff] %v566
        %598 = vst [vmem:[#allocation2 + $0x290] sm:$0xff] %v578
        %v599 = vld [vmem:[%s257] sm:$0xe]
        %v600 = vld [vmem:[%s257 + $0x4] sm:$0xf]
        %v601 = vld [vmem:[%s257 + $0x8] sm:$0x1]
        %v602 = vld [vmem:[%s257 + $0xc] sm:$0xe]
        %v603 = vld [vmem:[%s257 + $0x10] sm:$0xf]
        %v604 = vld [vmem:[%s257 + $0x14] sm:$0x1]
        %v605 = vld [vmem:[%s257 + $0x18] sm:$0xe]
        %v606 = vld [vmem:[%s257 + $0x1c] sm:$0xf]
        %v607 = vld [vmem:[%s257 + $0x20] sm:$0x1]
        %v608 = vld [vmem:[%s257 + $0x24] sm:$0xe]
        %v609 = vld [vmem:[%s257 + $0x28] sm:$0xf]
        %v610 = vld [vmem:[%s257 + $0x2c] sm:$0x1]
        %v611 = vld [vmem:[%s257 + $0x30] sm:$0xe]
        %v612 = vld [vmem:[%s257 + $0x34] sm:$0xf]
        %v613 = vld [vmem:[%s257 + $0x38] sm:$0x1]
        %v614 = vld [vmem:[%s257 + $0x3c] sm:$0xe]
        %v615 = vld [vmem:[%s257 + $0x40] sm:$0xf]
        %v616 = vld [vmem:[%s257 + $0x44] sm:$0x1]
        %v617 = vld [vmem:[%s257 + $0x48] sm:$0xe]
        %v618 = vld [vmem:[%s257 + $0x4c] sm:$0xf]
        %v619 = vld [vmem:[%s257 + $0x50] sm:$0x1]
        %v620 = vld [vmem:[%s257 + $0x54] sm:$0xe]
        %v621 = vld [vmem:[%s257 + $0x58] sm:$0xf]
        %v622 = vld [vmem:[%s257 + $0x5c] sm:$0x1]
        %v623 = vld [vmem:[%s257 + $0x60] sm:$0xe]
        %v624 = vld [vmem:[%s257 + $0x64] sm:$0xf]
        %v625 = vld [vmem:[%s257 + $0x68] sm:$0x1]
        %v626 = vld [vmem:[%s257 + $0x6c] sm:$0xe]
        %v627 = vld [vmem:[%s257 + $0x70] sm:$0xf]
        %v628 = vld [vmem:[%s257 + $0x74] sm:$0x1]
        %v659 = vunpack.c.l.b16 %v599
        %v660 = vunpack.c.l.b16 %v600
        %v661 = vunpack.c.l.b16 %v601
        %v662 = vunpack.c.l.b16 %v602
        %v663 = vunpack.c.l.b16 %v603
        %v664 = vunpack.c.l.b16 %v604
        %v665 = vunpack.c.l.b16 %v605
        %v666 = vunpack.c.l.b16 %v606
        %v667 = vunpack.c.l.b16 %v607
        %v668 = vunpack.c.l.b16 %v608
        %v669 = vunpack.c.l.b16 %v609
        %v670 = vunpack.c.l.b16 %v610
        %v671 = vunpack.c.l.b16 %v611
        %v672 = vunpack.c.l.b16 %v612
        %v673 = vunpack.c.l.b16 %v613
        %v674 = vunpack.c.l.b16 %v614
        %v675 = vunpack.c.l.b16 %v615
        %v676 = vunpack.c.l.b16 %v616
        %v677 = vunpack.c.l.b16 %v617
        %v678 = vunpack.c.l.b16 %v618
        %v679 = vunpack.c.l.b16 %v619
        %v680 = vunpack.c.l.b16 %v620
        %v681 = vunpack.c.l.b16 %v621
        %v682 = vunpack.c.l.b16 %v622
        %v683 = vunpack.c.l.b16 %v623
        %v684 = vunpack.c.l.b16 %v624
        %v685 = vunpack.c.l.b16 %v625
        %v686 = vunpack.c.l.b16 %v626
        %v687 = vunpack.c.l.b16 %v627
        %v688 = vunpack.c.l.b16 %v628
        %v689 = vpack.c.b16 %v660, %v659
        %v690 = vpack.c.b16 %v661, %v661
        %v691 = vpack.c.b16 %v663, %v662
        %v692 = vpack.c.b16 %v664, %v664
        %v693 = vpack.c.b16 %v666, %v665
        %v694 = vpack.c.b16 %v667, %v667
        %v695 = vpack.c.b16 %v669, %v668
        %v696 = vpack.c.b16 %v670, %v670
        %v697 = vpack.c.b16 %v672, %v671
        %v698 = vpack.c.b16 %v673, %v673
        %v699 = vpack.c.b16 %v675, %v674
        %v700 = vpack.c.b16 %v676, %v676
        %v701 = vpack.c.b16 %v678, %v677
        %v702 = vpack.c.b16 %v679, %v679
        %v703 = vpack.c.b16 %v681, %v680
        %v704 = vpack.c.b16 %v682, %v682
        %v705 = vpack.c.b16 %v684, %v683
        %v706 = vpack.c.b16 %v685, %v685
        %v707 = vpack.c.b16 %v687, %v686
        %v708 = vpack.c.b16 %v688, %v688
        %vm709 = vcmask 1046528
        %v710 = vrot.slane %v689, 1
        %v711 = vrot.slane %v690, 1
        %v712 = vsel %vm709, %v710, %v711
        %v713 = vrot.slane %v691, 1
        %v714 = vrot.slane %v692, 1
        %v715 = vsel %vm709, %v713, %v714
        %v716 = vrot.slane %v693, 1
        %v717 = vrot.slane %v694, 1
        %v718 = vsel %vm709, %v716, %v717
        %v719 = vrot.slane %v695, 1
        %v720 = vrot.slane %v696, 1
        %v721 = vsel %vm709, %v719, %v720
        %v722 = vrot.slane %v697, 1
        %v723 = vrot.slane %v698, 1
        %v724 = vsel %vm709, %v722, %v723
        %v725 = vrot.slane %v699, 1
        %v726 = vrot.slane %v700, 1
        %v727 = vsel %vm709, %v725, %v726
        %v728 = vrot.slane %v701, 1
        %v729 = vrot.slane %v702, 1
        %v730 = vsel %vm709, %v728, %v729
        %v731 = vrot.slane %v703, 1
        %v732 = vrot.slane %v704, 1
        %v733 = vsel %vm709, %v731, %v732
        %v734 = vrot.slane %v705, 1
        %v735 = vrot.slane %v706, 1
        %v736 = vsel %vm709, %v734, %v735
        %v737 = vrot.slane %v707, 1
        %v738 = vrot.slane %v708, 1
        %v739 = vsel %vm709, %v737, %v738
        %750 = vst [vmem:[#allocation2 + $0x10] sm:$0xff] %v712
        %751 = vst [vmem:[#allocation2 + $0x58] sm:$0xff] %v715
        %752 = vst [vmem:[#allocation2 + $0xa0] sm:$0xff] %v718
        %753 = vst [vmem:[#allocation2 + $0xe8] sm:$0xff] %v721
        %754 = vst [vmem:[#allocation2 + $0x130] sm:$0xff] %v724
        %755 = vst [vmem:[#allocation2 + $0x178] sm:$0xff] %v727
        %756 = vst [vmem:[#allocation2 + $0x1c0] sm:$0xff] %v730
        %757 = vst [vmem:[#allocation2 + $0x208] sm:$0xff] %v733
        %758 = vst [vmem:[#allocation2 + $0x250] sm:$0xff] %v736
        %759 = vst [vmem:[#allocation2 + $0x298] sm:$0xff] %v739
        %s760 = sadd.s32 %s254, 1
        %s761 = smul.u32 %s760, 3
        %s762 = smul.addr %s761, 4
        %s763 = scalar_lea.vmem %s251, %s762
        %v764 = vld [vmem:[%s763] sm:$0xf]
        %v765 = vld [vmem:[%s763 + $0x4] sm:$0xf]
        %v766 = vld [vmem:[%s763 + $0xc] sm:$0xf]
        %v767 = vld [vmem:[%s763 + $0x10] sm:$0xf]
        %v768 = vld [vmem:[%s763 + $0x18] sm:$0xf]
        %v769 = vld [vmem:[%s763 + $0x1c] sm:$0xf]
        %v770 = vld [vmem:[%s763 + $0x24] sm:$0xf]
        %v771 = vld [vmem:[%s763 + $0x28] sm:$0xf]
        %v772 = vld [vmem:[%s763 + $0x30] sm:$0xf]
        %v773 = vld [vmem:[%s763 + $0x34] sm:$0xf]
        %v774 = vld [vmem:[%s763 + $0x3c] sm:$0xf]
        %v775 = vld [vmem:[%s763 + $0x40] sm:$0xf]
        %v776 = vld [vmem:[%s763 + $0x48] sm:$0xf]
        %v777 = vld [vmem:[%s763 + $0x4c] sm:$0xf]
        %v778 = vld [vmem:[%s763 + $0x54] sm:$0xf]
        %v779 = vld [vmem:[%s763 + $0x58] sm:$0xf]
        %v780 = vld [vmem:[%s763 + $0x60] sm:$0xf]
        %v781 = vld [vmem:[%s763 + $0x64] sm:$0xf]
        %v782 = vld [vmem:[%s763 + $0x6c] sm:$0xf]
        %v783 = vld [vmem:[%s763 + $0x70] sm:$0xf]
        %v804 = vunpack.c.l.b16 %v764
        %v805 = vunpack.c.l.b16 %v765
        %v806 = vunpack.c.l.b16 %v766
        %v807 = vunpack.c.l.b16 %v767
        %v808 = vunpack.c.l.b16 %v768
        %v809 = vunpack.c.l.b16 %v769
        %v810 = vunpack.c.l.b16 %v770
        %v811 = vunpack.c.l.b16 %v771
        %v812 = vunpack.c.l.b16 %v772
        %v813 = vunpack.c.l.b16 %v773
        %v814 = vunpack.c.l.b16 %v774
        %v815 = vunpack.c.l.b16 %v775
        %v816 = vunpack.c.l.b16 %v776
        %v817 = vunpack.c.l.b16 %v777
        %v818 = vunpack.c.l.b16 %v778
        %v819 = vunpack.c.l.b16 %v779
        %v820 = vunpack.c.l.b16 %v780
        %v821 = vunpack.c.l.b16 %v781
        %v822 = vunpack.c.l.b16 %v782
        %v823 = vunpack.c.l.b16 %v783
        %v824 = vpack.c.b16 %v805, %v804
        %v825 = vpack.c.b16 %v807, %v806
        %v826 = vpack.c.b16 %v809, %v808
        %v827 = vpack.c.b16 %v811, %v810
        %v828 = vpack.c.b16 %v813, %v812
        %v829 = vpack.c.b16 %v815, %v814
        %v830 = vpack.c.b16 %v817, %v816
        %v831 = vpack.c.b16 %v819, %v818
        %v832 = vpack.c.b16 %v821, %v820
        %v833 = vpack.c.b16 %v823, %v822
        %844 = vst [vmem:[#allocation2 + $0x18] sm:$0xff] %v824
        %845 = vst [vmem:[#allocation2 + $0x60] sm:$0xff] %v825
        %846 = vst [vmem:[#allocation2 + $0xa8] sm:$0xff] %v826
        %847 = vst [vmem:[#allocation2 + $0xf0] sm:$0xff] %v827
        %848 = vst [vmem:[#allocation2 + $0x138] sm:$0xff] %v828
        %849 = vst [vmem:[#allocation2 + $0x180] sm:$0xff] %v829
        %850 = vst [vmem:[#allocation2 + $0x1c8] sm:$0xff] %v830
        %851 = vst [vmem:[#allocation2 + $0x210] sm:$0xff] %v831
        %852 = vst [vmem:[#allocation2 + $0x258] sm:$0xff] %v832
        %853 = vst [vmem:[#allocation2 + $0x2a0] sm:$0xff] %v833
        %v854 = vld [vmem:[%s763] sm:$0xf]
        %v855 = vld [vmem:[%s763 + $0x4] sm:$0xf]
        %v856 = vld [vmem:[%s763 + $0x8] sm:$0x1]
        %v857 = vld [vmem:[%s763 + $0xc] sm:$0xf]
        %v858 = vld [vmem:[%s763 + $0x10] sm:$0xf]
        %v859 = vld [vmem:[%s763 + $0x14] sm:$0x1]
        %v860 = vld [vmem:[%s763 + $0x18] sm:$0xf]
        %v861 = vld [vmem:[%s763 + $0x1c] sm:$0xf]
        %v862 = vld [vmem:[%s763 + $0x20] sm:$0x1]
        %v863 = vld [vmem:[%s763 + $0x24] sm:$0xf]
        %v864 = vld [vmem:[%s763 + $0x28] sm:$0xf]
        %v865 = vld [vmem:[%s763 + $0x2c] sm:$0x1]
        %v866 = vld [vmem:[%s763 + $0x30] sm:$0xf]
        %v867 = vld [vmem:[%s763 + $0x34] sm:$0xf]
        %v868 = vld [vmem:[%s763 + $0x38] sm:$0x1]
        %v869 = vld [vmem:[%s763 + $0x3c] sm:$0xf]
        %v870 = vld [vmem:[%s763 + $0x40] sm:$0xf]
        %v871 = vld [vmem:[%s763 + $0x44] sm:$0x1]
        %v872 = vld [vmem:[%s763 + $0x48] sm:$0xf]
        %v873 = vld [vmem:[%s763 + $0x4c] sm:$0xf]
        %v874 = vld [vmem:[%s763 + $0x50] sm:$0x1]
        %v875 = vld [vmem:[%s763 + $0x54] sm:$0xf]
        %v876 = vld [vmem:[%s763 + $0x58] sm:$0xf]
        %v877 = vld [vmem:[%s763 + $0x5c] sm:$0x1]
        %v878 = vld [vmem:[%s763 + $0x60] sm:$0xf]
        %v879 = vld [vmem:[%s763 + $0x64] sm:$0xf]
        %v880 = vld [vmem:[%s763 + $0x68] sm:$0x1]
        %v881 = vld [vmem:[%s763 + $0x6c] sm:$0xf]
        %v882 = vld [vmem:[%s763 + $0x70] sm:$0xf]
        %v883 = vld [vmem:[%s763 + $0x74] sm:$0x1]
        %v914 = vunpack.c.l.b16 %v854
        %v915 = vunpack.c.l.b16 %v855
        %v916 = vunpack.c.l.b16 %v856
        %v917 = vunpack.c.l.b16 %v857
        %v918 = vunpack.c.l.b16 %v858
        %v919 = vunpack.c.l.b16 %v859
        %v920 = vunpack.c.l.b16 %v860
        %v921 = vunpack.c.l.b16 %v861
        %v922 = vunpack.c.l.b16 %v862
        %v923 = vunpack.c.l.b16 %v863
        %v924 = vunpack.c.l.b16 %v864
        %v925 = vunpack.c.l.b16 %v865
        %v926 = vunpack.c.l.b16 %v866
        %v927 = vunpack.c.l.b16 %v867
        %v928 = vunpack.c.l.b16 %v868
        %v929 = vunpack.c.l.b16 %v869
        %v930 = vunpack.c.l.b16 %v870
        %v931 = vunpack.c.l.b16 %v871
        %v932 = vunpack.c.l.b16 %v872
        %v933 = vunpack.c.l.b16 %v873
        %v934 = vunpack.c.l.b16 %v874
        %v935 = vunpack.c.l.b16 %v875
        %v936 = vunpack.c.l.b16 %v876
        %v937 = vunpack.c.l.b16 %v877
        %v938 = vunpack.c.l.b16 %v878
        %v939 = vunpack.c.l.b16 %v879
        %v940 = vunpack.c.l.b16 %v880
        %v941 = vunpack.c.l.b16 %v881
        %v942 = vunpack.c.l.b16 %v882
        %v943 = vunpack.c.l.b16 %v883
        %v944 = vpack.c.b16 %v915, %v914
        %v945 = vpack.c.b16 %v916, %v916
        %v946 = vpack.c.b16 %v918, %v917
        %v947 = vpack.c.b16 %v919, %v919
        %v948 = vpack.c.b16 %v921, %v920
        %v949 = vpack.c.b16 %v922, %v922
        %v950 = vpack.c.b16 %v924, %v923
        %v951 = vpack.c.b16 %v925, %v925
        %v952 = vpack.c.b16 %v927, %v926
        %v953 = vpack.c.b16 %v928, %v928
        %v954 = vpack.c.b16 %v930, %v929
        %v955 = vpack.c.b16 %v931, %v931
        %v956 = vpack.c.b16 %v933, %v932
        %v957 = vpack.c.b16 %v934, %v934
        %v958 = vpack.c.b16 %v936, %v935
        %v959 = vpack.c.b16 %v937, %v937
        %v960 = vpack.c.b16 %v939, %v938
        %v961 = vpack.c.b16 %v940, %v940
        %v962 = vpack.c.b16 %v942, %v941
        %v963 = vpack.c.b16 %v943, %v943
        %v965 = vshrl.u32 %v944, 16
        %v967 = vshll.u32 %v944, 16
        %v969 = vrot.slane %v967, 1
        %v970 = vor.u32 %v965, %v969
        %v972 = vshll.u32 %v945, 16
        %v974 = vrot.slane %v972, 1
        %v975 = vsel %vm458, %v970, %v974
        %v977 = vshrl.u32 %v946, 16
        %v979 = vshll.u32 %v946, 16
        %v981 = vrot.slane %v979, 1
        %v982 = vor.u32 %v977, %v981
        %v984 = vshll.u32 %v947, 16
        %v986 = vrot.slane %v984, 1
        %v987 = vsel %vm458, %v982, %v986
        %v989 = vshrl.u32 %v948, 16
        %v991 = vshll.u32 %v948, 16
        %v993 = vrot.slane %v991, 1
        %v994 = vor.u32 %v989, %v993
        %v996 = vshll.u32 %v949, 16
        %v998 = vrot.slane %v996, 1
        %v999 = vsel %vm458, %v994, %v998
        %v1001 = vshrl.u32 %v950, 16
        %v1003 = vshll.u32 %v950, 16
        %v1005 = vrot.slane %v1003, 1
        %v1006 = vor.u32 %v1001, %v1005
        %v1008 = vshll.u32 %v951, 16
        %v1010 = vrot.slane %v1008, 1
        %v1011 = vsel %vm458, %v1006, %v1010
        %v1013 = vshrl.u32 %v952, 16
        %v1015 = vshll.u32 %v952, 16
        %v1017 = vrot.slane %v1015, 1
        %v1018 = vor.u32 %v1013, %v1017
        %v1020 = vshll.u32 %v953, 16
        %v1022 = vrot.slane %v1020, 1
        %v1023 = vsel %vm458, %v1018, %v1022
        %v1025 = vshrl.u32 %v954, 16
        %v1027 = vshll.u32 %v954, 16
        %v1029 = vrot.slane %v1027, 1
        %v1030 = vor.u32 %v1025, %v1029
        %v1032 = vshll.u32 %v955, 16
        %v1034 = vrot.slane %v1032, 1
        %v1035 = vsel %vm458, %v1030, %v1034
        %v1037 = vshrl.u32 %v956, 16
        %v1039 = vshll.u32 %v956, 16
        %v1041 = vrot.slane %v1039, 1
        %v1042 = vor.u32 %v1037, %v1041
        %v1044 = vshll.u32 %v957, 16
        %v1046 = vrot.slane %v1044, 1
        %v1047 = vsel %vm458, %v1042, %v1046
        %v1049 = vshrl.u32 %v958, 16
        %v1051 = vshll.u32 %v958, 16
        %v1053 = vrot.slane %v1051, 1
        %v1054 = vor.u32 %v1049, %v1053
        %v1056 = vshll.u32 %v959, 16
        %v1058 = vrot.slane %v1056, 1
        %v1059 = vsel %vm458, %v1054, %v1058
        %v1061 = vshrl.u32 %v960, 16
        %v1063 = vshll.u32 %v960, 16
        %v1065 = vrot.slane %v1063, 1
        %v1066 = vor.u32 %v1061, %v1065
        %v1068 = vshll.u32 %v961, 16
        %v1070 = vrot.slane %v1068, 1
        %v1071 = vsel %vm458, %v1066, %v1070
        %v1073 = vshrl.u32 %v962, 16
        %v1075 = vshll.u32 %v962, 16
        %v1077 = vrot.slane %v1075, 1
        %v1078 = vor.u32 %v1073, %v1077
        %v1080 = vshll.u32 %v963, 16
        %v1082 = vrot.slane %v1080, 1
        %v1083 = vsel %vm458, %v1078, %v1082
        %1094 = vst [vmem:[#allocation2 + $0x20] sm:$0xff] %v975
        %1095 = vst [vmem:[#allocation2 + $0x68] sm:$0xff] %v987
        %1096 = vst [vmem:[#allocation2 + $0xb0] sm:$0xff] %v999
        %1097 = vst [vmem:[#allocation2 + $0xf8] sm:$0xff] %v1011
        %1098 = vst [vmem:[#allocation2 + $0x140] sm:$0xff] %v1023
        %1099 = vst [vmem:[#allocation2 + $0x188] sm:$0xff] %v1035
        %1100 = vst [vmem:[#allocation2 + $0x1d0] sm:$0xff] %v1047
        %1101 = vst [vmem:[#allocation2 + $0x218] sm:$0xff] %v1059
        %1102 = vst [vmem:[#allocation2 + $0x260] sm:$0xff] %v1071
        %1103 = vst [vmem:[#allocation2 + $0x2a8] sm:$0xff] %v1083
        %v1104 = vld [vmem:[%s763] sm:$0xe]
        %v1105 = vld [vmem:[%s763 + $0x4] sm:$0xf]
        %v1106 = vld [vmem:[%s763 + $0x8] sm:$0x1]
        %v1107 = vld [vmem:[%s763 + $0xc] sm:$0xe]
        %v1108 = vld [vmem:[%s763 + $0x10] sm:$0xf]
        %v1109 = vld [vmem:[%s763 + $0x14] sm:$0x1]
        %v1110 = vld [vmem:[%s763 + $0x18] sm:$0xe]
        %v1111 = vld [vmem:[%s763 + $0x1c] sm:$0xf]
        %v1112 = vld [vmem:[%s763 + $0x20] sm:$0x1]
        %v1113 = vld [vmem:[%s763 + $0x24] sm:$0xe]
        %v1114 = vld [vmem:[%s763 + $0x28] sm:$0xf]
        %v1115 = vld [vmem:[%s763 + $0x2c] sm:$0x1]
        %v1116 = vld [vmem:[%s763 + $0x30] sm:$0xe]
        %v1117 = vld [vmem:[%s763 + $0x34] sm:$0xf]
        %v1118 = vld [vmem:[%s763 + $0x38] sm:$0x1]
        %v1119 = vld [vmem:[%s763 + $0x3c] sm:$0xe]
        %v1120 = vld [vmem:[%s763 + $0x40] sm:$0xf]
        %v1121 = vld [vmem:[%s763 + $0x44] sm:$0x1]
        %v1122 = vld [vmem:[%s763 + $0x48] sm:$0xe]
        %v1123 = vld [vmem:[%s763 + $0x4c] sm:$0xf]
        %v1124 = vld [vmem:[%s763 + $0x50] sm:$0x1]
        %v1125 = vld [vmem:[%s763 + $0x54] sm:$0xe]
        %v1126 = vld [vmem:[%s763 + $0x58] sm:$0xf]
        %v1127 = vld [vmem:[%s763 + $0x5c] sm:$0x1]
        %v1128 = vld [vmem:[%s763 + $0x60] sm:$0xe]
        %v1129 = vld [vmem:[%s763 + $0x64] sm:$0xf]
        %v1130 = vld [vmem:[%s763 + $0x68] sm:$0x1]
        %v1131 = vld [vmem:[%s763 + $0x6c] sm:$0xe]
        %v1132 = vld [vmem:[%s763 + $0x70] sm:$0xf]
        %v1133 = vld [vmem:[%s763 + $0x74] sm:$0x1]
        %v1164 = vunpack.c.l.b16 %v1104
        %v1165 = vunpack.c.l.b16 %v1105
        %v1166 = vunpack.c.l.b16 %v1106
        %v1167 = vunpack.c.l.b16 %v1107
        %v1168 = vunpack.c.l.b16 %v1108
        %v1169 = vunpack.c.l.b16 %v1109
        %v1170 = vunpack.c.l.b16 %v1110
        %v1171 = vunpack.c.l.b16 %v1111
        %v1172 = vunpack.c.l.b16 %v1112
        %v1173 = vunpack.c.l.b16 %v1113
        %v1174 = vunpack.c.l.b16 %v1114
        %v1175 = vunpack.c.l.b16 %v1115
        %v1176 = vunpack.c.l.b16 %v1116
        %v1177 = vunpack.c.l.b16 %v1117
        %v1178 = vunpack.c.l.b16 %v1118
        %v1179 = vunpack.c.l.b16 %v1119
        %v1180 = vunpack.c.l.b16 %v1120
        %v1181 = vunpack.c.l.b16 %v1121
        %v1182 = vunpack.c.l.b16 %v1122
        %v1183 = vunpack.c.l.b16 %v1123
        %v1184 = vunpack.c.l.b16 %v1124
        %v1185 = vunpack.c.l.b16 %v1125
        %v1186 = vunpack.c.l.b16 %v1126
        %v1187 = vunpack.c.l.b16 %v1127
        %v1188 = vunpack.c.l.b16 %v1128
        %v1189 = vunpack.c.l.b16 %v1129
        %v1190 = vunpack.c.l.b16 %v1130
        %v1191 = vunpack.c.l.b16 %v1131
        %v1192 = vunpack.c.l.b16 %v1132
        %v1193 = vunpack.c.l.b16 %v1133
        %v1194 = vpack.c.b16 %v1165, %v1164
        %v1195 = vpack.c.b16 %v1166, %v1166
        %v1196 = vpack.c.b16 %v1168, %v1167
        %v1197 = vpack.c.b16 %v1169, %v1169
        %v1198 = vpack.c.b16 %v1171, %v1170
        %v1199 = vpack.c.b16 %v1172, %v1172
        %v1200 = vpack.c.b16 %v1174, %v1173
        %v1201 = vpack.c.b16 %v1175, %v1175
        %v1202 = vpack.c.b16 %v1177, %v1176
        %v1203 = vpack.c.b16 %v1178, %v1178
        %v1204 = vpack.c.b16 %v1180, %v1179
        %v1205 = vpack.c.b16 %v1181, %v1181
        %v1206 = vpack.c.b16 %v1183, %v1182
        %v1207 = vpack.c.b16 %v1184, %v1184
        %v1208 = vpack.c.b16 %v1186, %v1185
        %v1209 = vpack.c.b16 %v1187, %v1187
        %v1210 = vpack.c.b16 %v1189, %v1188
        %v1211 = vpack.c.b16 %v1190, %v1190
        %v1212 = vpack.c.b16 %v1192, %v1191
        %v1213 = vpack.c.b16 %v1193, %v1193
        %v1214 = vrot.slane %v1194, 1
        %v1215 = vrot.slane %v1195, 1
        %v1216 = vsel %vm709, %v1214, %v1215
        %v1217 = vrot.slane %v1196, 1
        %v1218 = vrot.slane %v1197, 1
        %v1219 = vsel %vm709, %v1217, %v1218
        %v1220 = vrot.slane %v1198, 1
        %v1221 = vrot.slane %v1199, 1
        %v1222 = vsel %vm709, %v1220, %v1221
        %v1223 = vrot.slane %v1200, 1
        %v1224 = vrot.slane %v1201, 1
        %v1225 = vsel %vm709, %v1223, %v1224
        %v1226 = vrot.slane %v1202, 1
        %v1227 = vrot.slane %v1203, 1
        %v1228 = vsel %vm709, %v1226, %v1227
        %v1229 = vrot.slane %v1204, 1
        %v1230 = vrot.slane %v1205, 1
        %v1231 = vsel %vm709, %v1229, %v1230
        %v1232 = vrot.slane %v1206, 1
        %v1233 = vrot.slane %v1207, 1
        %v1234 = vsel %vm709, %v1232, %v1233
        %v1235 = vrot.slane %v1208, 1
        %v1236 = vrot.slane %v1209, 1
        %v1237 = vsel %vm709, %v1235, %v1236
        %v1238 = vrot.slane %v1210, 1
        %v1239 = vrot.slane %v1211, 1
        %v1240 = vsel %vm709, %v1238, %v1239
        %v1241 = vrot.slane %v1212, 1
        %v1242 = vrot.slane %v1213, 1
        %v1243 = vsel %vm709, %v1241, %v1242
        %1254 = vst [vmem:[#allocation2 + $0x28] sm:$0xff] %v1216
        %1255 = vst [vmem:[#allocation2 + $0x70] sm:$0xff] %v1219
        %1256 = vst [vmem:[#allocation2 + $0xb8] sm:$0xff] %v1222
        %1257 = vst [vmem:[#allocation2 + $0x100] sm:$0xff] %v1225
        %1258 = vst [vmem:[#allocation2 + $0x148] sm:$0xff] %v1228
        %1259 = vst [vmem:[#allocation2 + $0x190] sm:$0xff] %v1231
        %1260 = vst [vmem:[#allocation2 + $0x1d8] sm:$0xff] %v1234
        %1261 = vst [vmem:[#allocation2 + $0x220] sm:$0xff] %v1237
        %1262 = vst [vmem:[#allocation2 + $0x268] sm:$0xff] %v1240
        %1263 = vst [vmem:[#allocation2 + $0x2b0] sm:$0xff] %v1243
        %s1264 = sadd.s32 %s254, 2
        %s1265 = smul.u32 %s1264, 3
        %s1266 = smul.addr %s1265, 4
        %s1267 = scalar_lea.vmem %s251, %s1266
        %v1268 = vld [vmem:[%s1267] sm:$0xf]
        %v1269 = vld [vmem:[%s1267 + $0x4] sm:$0xf]
        %v1270 = vld [vmem:[%s1267 + $0xc] sm:$0xf]
        %v1271 = vld [vmem:[%s1267 + $0x10] sm:$0xf]
        %v1272 = vld [vmem:[%s1267 + $0x18] sm:$0xf]
        %v1273 = vld [vmem:[%s1267 + $0x1c] sm:$0xf]
        %v1274 = vld [vmem:[%s1267 + $0x24] sm:$0xf]
        %v1275 = vld [vmem:[%s1267 + $0x28] sm:$0xf]
        %v1276 = vld [vmem:[%s1267 + $0x30] sm:$0xf]
        %v1277 = vld [vmem:[%s1267 + $0x34] sm:$0xf]
        %v1278 = vld [vmem:[%s1267 + $0x3c] sm:$0xf]
        %v1279 = vld [vmem:[%s1267 + $0x40] sm:$0xf]
        %v1280 = vld [vmem:[%s1267 + $0x48] sm:$0xf]
        %v1281 = vld [vmem:[%s1267 + $0x4c] sm:$0xf]
        %v1282 = vld [vmem:[%s1267 + $0x54] sm:$0xf]
        %v1283 = vld [vmem:[%s1267 + $0x58] sm:$0xf]
        %v1284 = vld [vmem:[%s1267 + $0x60] sm:$0xf]
        %v1285 = vld [vmem:[%s1267 + $0x64] sm:$0xf]
        %v1286 = vld [vmem:[%s1267 + $0x6c] sm:$0xf]
        %v1287 = vld [vmem:[%s1267 + $0x70] sm:$0xf]
        %v1308 = vunpack.c.l.b16 %v1268
        %v1309 = vunpack.c.l.b16 %v1269
        %v1310 = vunpack.c.l.b16 %v1270
        %v1311 = vunpack.c.l.b16 %v1271
        %v1312 = vunpack.c.l.b16 %v1272
        %v1313 = vunpack.c.l.b16 %v1273
        %v1314 = vunpack.c.l.b16 %v1274
        %v1315 = vunpack.c.l.b16 %v1275
        %v1316 = vunpack.c.l.b16 %v1276
        %v1317 = vunpack.c.l.b16 %v1277
        %v1318 = vunpack.c.l.b16 %v1278
        %v1319 = vunpack.c.l.b16 %v1279
        %v1320 = vunpack.c.l.b16 %v1280
        %v1321 = vunpack.c.l.b16 %v1281
        %v1322 = vunpack.c.l.b16 %v1282
        %v1323 = vunpack.c.l.b16 %v1283
        %v1324 = vunpack.c.l.b16 %v1284
        %v1325 = vunpack.c.l.b16 %v1285
        %v1326 = vunpack.c.l.b16 %v1286
        %v1327 = vunpack.c.l.b16 %v1287
        %v1328 = vpack.c.b16 %v1309, %v1308
        %v1329 = vpack.c.b16 %v1311, %v1310
        %v1330 = vpack.c.b16 %v1313, %v1312
        %v1331 = vpack.c.b16 %v1315, %v1314
        %v1332 = vpack.c.b16 %v1317, %v1316
        %v1333 = vpack.c.b16 %v1319, %v1318
        %v1334 = vpack.c.b16 %v1321, %v1320
        %v1335 = vpack.c.b16 %v1323, %v1322
        %v1336 = vpack.c.b16 %v1325, %v1324
        %v1337 = vpack.c.b16 %v1327, %v1326
        %1348 = vst [vmem:[#allocation2 + $0x30] sm:$0xff] %v1328
        %1349 = vst [vmem:[#allocation2 + $0x78] sm:$0xff] %v1329
        %1350 = vst [vmem:[#allocation2 + $0xc0] sm:$0xff] %v1330
        %1351 = vst [vmem:[#allocation2 + $0x108] sm:$0xff] %v1331
        %1352 = vst [vmem:[#allocation2 + $0x150] sm:$0xff] %v1332
        %1353 = vst [vmem:[#allocation2 + $0x198] sm:$0xff] %v1333
        %1354 = vst [vmem:[#allocation2 + $0x1e0] sm:$0xff] %v1334
        %1355 = vst [vmem:[#allocation2 + $0x228] sm:$0xff] %v1335
        %1356 = vst [vmem:[#allocation2 + $0x270] sm:$0xff] %v1336
        %1357 = vst [vmem:[#allocation2 + $0x2b8] sm:$0xff] %v1337
        %v1358 = vld [vmem:[%s1267] sm:$0xf]
        %v1359 = vld [vmem:[%s1267 + $0x4] sm:$0xf]
        %v1360 = vld [vmem:[%s1267 + $0x8] sm:$0x1]
        %v1361 = vld [vmem:[%s1267 + $0xc] sm:$0xf]
        %v1362 = vld [vmem:[%s1267 + $0x10] sm:$0xf]
        %v1363 = vld [vmem:[%s1267 + $0x14] sm:$0x1]
        %v1364 = vld [vmem:[%s1267 + $0x18] sm:$0xf]
        %v1365 = vld [vmem:[%s1267 + $0x1c] sm:$0xf]
        %v1366 = vld [vmem:[%s1267 + $0x20] sm:$0x1]
        %v1367 = vld [vmem:[%s1267 + $0x24] sm:$0xf]
        %v1368 = vld [vmem:[%s1267 + $0x28] sm:$0xf]
        %v1369 = vld [vmem:[%s1267 + $0x2c] sm:$0x1]
        %v1370 = vld [vmem:[%s1267 + $0x30] sm:$0xf]
        %v1371 = vld [vmem:[%s1267 + $0x34] sm:$0xf]
        %v1372 = vld [vmem:[%s1267 + $0x38] sm:$0x1]
        %v1373 = vld [vmem:[%s1267 + $0x3c] sm:$0xf]
        %v1374 = vld [vmem:[%s1267 + $0x40] sm:$0xf]
        %v1375 = vld [vmem:[%s1267 + $0x44] sm:$0x1]
        %v1376 = vld [vmem:[%s1267 + $0x48] sm:$0xf]
        %v1377 = vld [vmem:[%s1267 + $0x4c] sm:$0xf]
        %v1378 = vld [vmem:[%s1267 + $0x50] sm:$0x1]
        %v1379 = vld [vmem:[%s1267 + $0x54] sm:$0xf]
        %v1380 = vld [vmem:[%s1267 + $0x58] sm:$0xf]
        %v1381 = vld [vmem:[%s1267 + $0x5c] sm:$0x1]
        %v1382 = vld [vmem:[%s1267 + $0x60] sm:$0xf]
        %v1383 = vld [vmem:[%s1267 + $0x64] sm:$0xf]
        %v1384 = vld [vmem:[%s1267 + $0x68] sm:$0x1]
        %v1385 = vld [vmem:[%s1267 + $0x6c] sm:$0xf]
        %v1386 = vld [vmem:[%s1267 + $0x70] sm:$0xf]
        %v1387 = vld [vmem:[%s1267 + $0x74] sm:$0x1]
        %v1418 = vunpack.c.l.b16 %v1358
        %v1419 = vunpack.c.l.b16 %v1359
        %v1420 = vunpack.c.l.b16 %v1360
        %v1421 = vunpack.c.l.b16 %v1361
        %v1422 = vunpack.c.l.b16 %v1362
        %v1423 = vunpack.c.l.b16 %v1363
        %v1424 = vunpack.c.l.b16 %v1364
        %v1425 = vunpack.c.l.b16 %v1365
        %v1426 = vunpack.c.l.b16 %v1366
        %v1427 = vunpack.c.l.b16 %v1367
        %v1428 = vunpack.c.l.b16 %v1368
        %v1429 = vunpack.c.l.b16 %v1369
        %v1430 = vunpack.c.l.b16 %v1370
        %v1431 = vunpack.c.l.b16 %v1371
        %v1432 = vunpack.c.l.b16 %v1372
        %v1433 = vunpack.c.l.b16 %v1373
        %v1434 = vunpack.c.l.b16 %v1374
        %v1435 = vunpack.c.l.b16 %v1375
        %v1436 = vunpack.c.l.b16 %v1376
        %v1437 = vunpack.c.l.b16 %v1377
        %v1438 = vunpack.c.l.b16 %v1378
        %v1439 = vunpack.c.l.b16 %v1379
        %v1440 = vunpack.c.l.b16 %v1380
        %v1441 = vunpack.c.l.b16 %v1381
        %v1442 = vunpack.c.l.b16 %v1382
        %v1443 = vunpack.c.l.b16 %v1383
        %v1444 = vunpack.c.l.b16 %v1384
        %v1445 = vunpack.c.l.b16 %v1385
        %v1446 = vunpack.c.l.b16 %v1386
        %v1447 = vunpack.c.l.b16 %v1387
        %v1448 = vpack.c.b16 %v1419, %v1418
        %v1449 = vpack.c.b16 %v1420, %v1420
        %v1450 = vpack.c.b16 %v1422, %v1421
        %v1451 = vpack.c.b16 %v1423, %v1423
        %v1452 = vpack.c.b16 %v1425, %v1424
        %v1453 = vpack.c.b16 %v1426, %v1426
        %v1454 = vpack.c.b16 %v1428, %v1427
        %v1455 = vpack.c.b16 %v1429, %v1429
        %v1456 = vpack.c.b16 %v1431, %v1430
        %v1457 = vpack.c.b16 %v1432, %v1432
        %v1458 = vpack.c.b16 %v1434, %v1433
        %v1459 = vpack.c.b16 %v1435, %v1435
        %v1460 = vpack.c.b16 %v1437, %v1436
        %v1461 = vpack.c.b16 %v1438, %v1438
        %v1462 = vpack.c.b16 %v1440, %v1439
        %v1463 = vpack.c.b16 %v1441, %v1441
        %v1464 = vpack.c.b16 %v1443, %v1442
        %v1465 = vpack.c.b16 %v1444, %v1444
        %v1466 = vpack.c.b16 %v1446, %v1445
        %v1467 = vpack.c.b16 %v1447, %v1447
        %v1469 = vshrl.u32 %v1448, 16
        %v1471 = vshll.u32 %v1448, 16
        %v1473 = vrot.slane %v1471, 1
        %v1474 = vor.u32 %v1469, %v1473
        %v1476 = vshll.u32 %v1449, 16
        %v1478 = vrot.slane %v1476, 1
        %v1479 = vsel %vm458, %v1474, %v1478
        %v1481 = vshrl.u32 %v1450, 16
        %v1483 = vshll.u32 %v1450, 16
        %v1485 = vrot.slane %v1483, 1
        %v1486 = vor.u32 %v1481, %v1485
        %v1488 = vshll.u32 %v1451, 16
        %v1490 = vrot.slane %v1488, 1
        %v1491 = vsel %vm458, %v1486, %v1490
        %v1493 = vshrl.u32 %v1452, 16
        %v1495 = vshll.u32 %v1452, 16
        %v1497 = vrot.slane %v1495, 1
        %v1498 = vor.u32 %v1493, %v1497
        %v1500 = vshll.u32 %v1453, 16
        %v1502 = vrot.slane %v1500, 1
        %v1503 = vsel %vm458, %v1498, %v1502
        %v1505 = vshrl.u32 %v1454, 16
        %v1507 = vshll.u32 %v1454, 16
        %v1509 = vrot.slane %v1507, 1
        %v1510 = vor.u32 %v1505, %v1509
        %v1512 = vshll.u32 %v1455, 16
        %v1514 = vrot.slane %v1512, 1
        %v1515 = vsel %vm458, %v1510, %v1514
        %v1517 = vshrl.u32 %v1456, 16
        %v1519 = vshll.u32 %v1456, 16
        %v1521 = vrot.slane %v1519, 1
        %v1522 = vor.u32 %v1517, %v1521
        %v1524 = vshll.u32 %v1457, 16
        %v1526 = vrot.slane %v1524, 1
        %v1527 = vsel %vm458, %v1522, %v1526
        %v1529 = vshrl.u32 %v1458, 16
        %v1531 = vshll.u32 %v1458, 16
        %v1533 = vrot.slane %v1531, 1
        %v1534 = vor.u32 %v1529, %v1533
        %v1536 = vshll.u32 %v1459, 16
        %v1538 = vrot.slane %v1536, 1
        %v1539 = vsel %vm458, %v1534, %v1538
        %v1541 = vshrl.u32 %v1460, 16
        %v1543 = vshll.u32 %v1460, 16
        %v1545 = vrot.slane %v1543, 1
        %v1546 = vor.u32 %v1541, %v1545
        %v1548 = vshll.u32 %v1461, 16
        %v1550 = vrot.slane %v1548, 1
        %v1551 = vsel %vm458, %v1546, %v1550
        %v1553 = vshrl.u32 %v1462, 16
        %v1555 = vshll.u32 %v1462, 16
        %v1557 = vrot.slane %v1555, 1
        %v1558 = vor.u32 %v1553, %v1557
        %v1560 = vshll.u32 %v1463, 16
        %v1562 = vrot.slane %v1560, 1
        %v1563 = vsel %vm458, %v1558, %v1562
        %v1565 = vshrl.u32 %v1464, 16
        %v1567 = vshll.u32 %v1464, 16
        %v1569 = vrot.slane %v1567, 1
        %v1570 = vor.u32 %v1565, %v1569
        %v1572 = vshll.u32 %v1465, 16
        %v1574 = vrot.slane %v1572, 1
        %v1575 = vsel %vm458, %v1570, %v1574
        %v1577 = vshrl.u32 %v1466, 16
        %v1579 = vshll.u32 %v1466, 16
        %v1581 = vrot.slane %v1579, 1
        %v1582 = vor.u32 %v1577, %v1581
        %v1584 = vshll.u32 %v1467, 16
        %v1586 = vrot.slane %v1584, 1
        %v1587 = vsel %vm458, %v1582, %v1586
        %1598 = vst [vmem:[#allocation2 + $0x38] sm:$0xff] %v1479
        %1599 = vst [vmem:[#allocation2 + $0x80] sm:$0xff] %v1491
        %1600 = vst [vmem:[#allocation2 + $0xc8] sm:$0xff] %v1503
        %1601 = vst [vmem:[#allocation2 + $0x110] sm:$0xff] %v1515
        %1602 = vst [vmem:[#allocation2 + $0x158] sm:$0xff] %v1527
        %1603 = vst [vmem:[#allocation2 + $0x1a0] sm:$0xff] %v1539
        %1604 = vst [vmem:[#allocation2 + $0x1e8] sm:$0xff] %v1551
        %1605 = vst [vmem:[#allocation2 + $0x230] sm:$0xff] %v1563
        %1606 = vst [vmem:[#allocation2 + $0x278] sm:$0xff] %v1575
        %1607 = vst [vmem:[#allocation2 + $0x2c0] sm:$0xff] %v1587
        %v1608 = vld [vmem:[%s1267] sm:$0xe]
        %v1609 = vld [vmem:[%s1267 + $0x4] sm:$0xf]
        %v1610 = vld [vmem:[%s1267 + $0x8] sm:$0x1]
        %v1611 = vld [vmem:[%s1267 + $0xc] sm:$0xe]
        %v1612 = vld [vmem:[%s1267 + $0x10] sm:$0xf]
        %v1613 = vld [vmem:[%s1267 + $0x14] sm:$0x1]
        %v1614 = vld [vmem:[%s1267 + $0x18] sm:$0xe]
        %v1615 = vld [vmem:[%s1267 + $0x1c] sm:$0xf]
        %v1616 = vld [vmem:[%s1267 + $0x20] sm:$0x1]
        %v1617 = vld [vmem:[%s1267 + $0x24] sm:$0xe]
        %v1618 = vld [vmem:[%s1267 + $0x28] sm:$0xf]
        %v1619 = vld [vmem:[%s1267 + $0x2c] sm:$0x1]
        %v1620 = vld [vmem:[%s1267 + $0x30] sm:$0xe]
        %v1621 = vld [vmem:[%s1267 + $0x34] sm:$0xf]
        %v1622 = vld [vmem:[%s1267 + $0x38] sm:$0x1]
        %v1623 = vld [vmem:[%s1267 + $0x3c] sm:$0xe]
        %v1624 = vld [vmem:[%s1267 + $0x40] sm:$0xf]
        %v1625 = vld [vmem:[%s1267 + $0x44] sm:$0x1]
        %v1626 = vld [vmem:[%s1267 + $0x48] sm:$0xe]
        %v1627 = vld [vmem:[%s1267 + $0x4c] sm:$0xf]
        %v1628 = vld [vmem:[%s1267 + $0x50] sm:$0x1]
        %v1629 = vld [vmem:[%s1267 + $0x54] sm:$0xe]
        %v1630 = vld [vmem:[%s1267 + $0x58] sm:$0xf]
        %v1631 = vld [vmem:[%s1267 + $0x5c] sm:$0x1]
        %v1632 = vld [vmem:[%s1267 + $0x60] sm:$0xe]
        %v1633 = vld [vmem:[%s1267 + $0x64] sm:$0xf]
        %v1634 = vld [vmem:[%s1267 + $0x68] sm:$0x1]
        %v1635 = vld [vmem:[%s1267 + $0x6c] sm:$0xe]
        %v1636 = vld [vmem:[%s1267 + $0x70] sm:$0xf]
        %v1637 = vld [vmem:[%s1267 + $0x74] sm:$0x1]
        %v1668 = vunpack.c.l.b16 %v1608
        %v1669 = vunpack.c.l.b16 %v1609
        %v1670 = vunpack.c.l.b16 %v1610
        %v1671 = vunpack.c.l.b16 %v1611
        %v1672 = vunpack.c.l.b16 %v1612
        %v1673 = vunpack.c.l.b16 %v1613
        %v1674 = vunpack.c.l.b16 %v1614
        %v1675 = vunpack.c.l.b16 %v1615
        %v1676 = vunpack.c.l.b16 %v1616
        %v1677 = vunpack.c.l.b16 %v1617
        %v1678 = vunpack.c.l.b16 %v1618
        %v1679 = vunpack.c.l.b16 %v1619
        %v1680 = vunpack.c.l.b16 %v1620
        %v1681 = vunpack.c.l.b16 %v1621
        %v1682 = vunpack.c.l.b16 %v1622
        %v1683 = vunpack.c.l.b16 %v1623
        %v1684 = vunpack.c.l.b16 %v1624
        %v1685 = vunpack.c.l.b16 %v1625
        %v1686 = vunpack.c.l.b16 %v1626
        %v1687 = vunpack.c.l.b16 %v1627
        %v1688 = vunpack.c.l.b16 %v1628
        %v1689 = vunpack.c.l.b16 %v1629
        %v1690 = vunpack.c.l.b16 %v1630
        %v1691 = vunpack.c.l.b16 %v1631
        %v1692 = vunpack.c.l.b16 %v1632
        %v1693 = vunpack.c.l.b16 %v1633
        %v1694 = vunpack.c.l.b16 %v1634
        %v1695 = vunpack.c.l.b16 %v1635
        %v1696 = vunpack.c.l.b16 %v1636
        %v1697 = vunpack.c.l.b16 %v1637
        %v1698 = vpack.c.b16 %v1669, %v1668
        %v1699 = vpack.c.b16 %v1670, %v1670
        %v1700 = vpack.c.b16 %v1672, %v1671
        %v1701 = vpack.c.b16 %v1673, %v1673
        %v1702 = vpack.c.b16 %v1675, %v1674
        %v1703 = vpack.c.b16 %v1676, %v1676
        %v1704 = vpack.c.b16 %v1678, %v1677
        %v1705 = vpack.c.b16 %v1679, %v1679
        %v1706 = vpack.c.b16 %v1681, %v1680
        %v1707 = vpack.c.b16 %v1682, %v1682
        %v1708 = vpack.c.b16 %v1684, %v1683
        %v1709 = vpack.c.b16 %v1685, %v1685
        %v1710 = vpack.c.b16 %v1687, %v1686
        %v1711 = vpack.c.b16 %v1688, %v1688
        %v1712 = vpack.c.b16 %v1690, %v1689
        %v1713 = vpack.c.b16 %v1691, %v1691
        %v1714 = vpack.c.b16 %v1693, %v1692
        %v1715 = vpack.c.b16 %v1694, %v1694
        %v1716 = vpack.c.b16 %v1696, %v1695
        %v1717 = vpack.c.b16 %v1697, %v1697
        %v1718 = vrot.slane %v1698, 1
        %v1719 = vrot.slane %v1699, 1
        %v1720 = vsel %vm709, %v1718, %v1719
        %v1721 = vrot.slane %v1700, 1
        %v1722 = vrot.slane %v1701, 1
        %v1723 = vsel %vm709, %v1721, %v1722
        %v1724 = vrot.slane %v1702, 1
        %v1725 = vrot.slane %v1703, 1
        %v1726 = vsel %vm709, %v1724, %v1725
        %v1727 = vrot.slane %v1704, 1
        %v1728 = vrot.slane %v1705, 1
        %v1729 = vsel %vm709, %v1727, %v1728
        %v1730 = vrot.slane %v1706, 1
        %v1731 = vrot.slane %v1707, 1
        %v1732 = vsel %vm709, %v1730, %v1731
        %v1733 = vrot.slane %v1708, 1
        %v1734 = vrot.slane %v1709, 1
        %v1735 = vsel %vm709, %v1733, %v1734
        %v1736 = vrot.slane %v1710, 1
        %v1737 = vrot.slane %v1711, 1
        %v1738 = vsel %vm709, %v1736, %v1737
        %v1739 = vrot.slane %v1712, 1
        %v1740 = vrot.slane %v1713, 1
        %v1741 = vsel %vm709, %v1739, %v1740
        %v1742 = vrot.slane %v1714, 1
        %v1743 = vrot.slane %v1715, 1
        %v1744 = vsel %vm709, %v1742, %v1743
        %v1745 = vrot.slane %v1716, 1
        %v1746 = vrot.slane %v1717, 1
        %v1747 = vsel %vm709, %v1745, %v1746
        %1758 = vst [vmem:[#allocation2 + $0x40] sm:$0xff] %v1720
        %1759 = vst [vmem:[#allocation2 + $0x88] sm:$0xff] %v1723
        %1760 = vst [vmem:[#allocation2 + $0xd0] sm:$0xff] %v1726
        %1761 = vst [vmem:[#allocation2 + $0x118] sm:$0xff] %v1729
        %1762 = vst [vmem:[#allocation2 + $0x160] sm:$0xff] %v1732
        %1763 = vst [vmem:[#allocation2 + $0x1a8] sm:$0xff] %v1735
        %1764 = vst [vmem:[#allocation2 + $0x1f0] sm:$0xff] %v1738
        %1765 = vst [vmem:[#allocation2 + $0x238] sm:$0xff] %v1741
        %1766 = vst [vmem:[#allocation2 + $0x280] sm:$0xff] %v1744
        %1767 = vst [vmem:[#allocation2 + $0x2c8] sm:$0xff] %v1747
        %v1768 = vld [vmem:[#allocation2] sm:$0xff]
        %v1769 = vld [vmem:[#allocation2 + $0x8] sm:$0xff]
        %v1770 = vld [vmem:[#allocation2 + $0x10] sm:$0xff]
        %v1771 = vld [vmem:[#allocation2 + $0x18] sm:$0xff]
        %v1772 = vld [vmem:[#allocation2 + $0x20] sm:$0xff]
        %v1773 = vld [vmem:[#allocation2 + $0x28] sm:$0xff]
        %v1774 = vld [vmem:[#allocation2 + $0x30] sm:$0xff]
        %v1775 = vld [vmem:[#allocation2 + $0x38] sm:$0xff]
        %v1776 = vld [vmem:[#allocation2 + $0x40] sm:$0xff]
        %v1777 = vld [vmem:[#allocation2 + $0x48] sm:$0xff]
        %v1778 = vld [vmem:[#allocation2 + $0x50] sm:$0xff]
        %v1779 = vld [vmem:[#allocation2 + $0x58] sm:$0xff]
        %v1780 = vld [vmem:[#allocation2 + $0x60] sm:$0xff]
        %v1781 = vld [vmem:[#allocation2 + $0x68] sm:$0xff]
        %v1782 = vld [vmem:[#allocation2 + $0x70] sm:$0xff]
        %v1783 = vld [vmem:[#allocation2 + $0x78] sm:$0xff]
        %v1784 = vld [vmem:[#allocation2 + $0x80] sm:$0xff]
        %v1785 = vld [vmem:[#allocation2 + $0x88] sm:$0xff]
        %v1786 = vld [vmem:[#allocation2 + $0x90] sm:$0xff]
        %v1787 = vld [vmem:[#allocation2 + $0x98] sm:$0xff]
        %v1788 = vld [vmem:[#allocation2 + $0xa0] sm:$0xff]
        %v1789 = vld [vmem:[#allocation2 + $0xa8] sm:$0xff]
        %v1790 = vld [vmem:[#allocation2 + $0xb0] sm:$0xff]
        %v1791 = vld [vmem:[#allocation2 + $0xb8] sm:$0xff]
        %v1792 = vld [vmem:[#allocation2 + $0xc0] sm:$0xff]
        %v1793 = vld [vmem:[#allocation2 + $0xc8] sm:$0xff]
        %v1794 = vld [vmem:[#allocation2 + $0xd0] sm:$0xff]
        %v1795 = vld [vmem:[#allocation2 + $0xd8] sm:$0xff]
        %v1796 = vld [vmem:[#allocation2 + $0xe0] sm:$0xff]
        %v1797 = vld [vmem:[#allocation2 + $0xe8] sm:$0xff]
        %v1798 = vld [vmem:[#allocation2 + $0xf0] sm:$0xff]
        %v1799 = vld [vmem:[#allocation2 + $0xf8] sm:$0xff]
        %v1800 = vld [vmem:[#allocation2 + $0x100] sm:$0xff]
        %v1801 = vld [vmem:[#allocation2 + $0x108] sm:$0xff]
        %v1802 = vld [vmem:[#allocation2 + $0x110] sm:$0xff]
        %v1803 = vld [vmem:[#allocation2 + $0x118] sm:$0xff]
        %v1804 = vld [vmem:[#allocation2 + $0x120] sm:$0xff]
        %v1805 = vld [vmem:[#allocation2 + $0x128] sm:$0xff]
        %v1806 = vld [vmem:[#allocation2 + $0x130] sm:$0xff]
        %v1807 = vld [vmem:[#allocation2 + $0x138] sm:$0xff]
        %v1808 = vld [vmem:[#allocation2 + $0x140] sm:$0xff]
        %v1809 = vld [vmem:[#allocation2 + $0x148] sm:$0xff]
        %v1810 = vld [vmem:[#allocation2 + $0x150] sm:$0xff]
        %v1811 = vld [vmem:[#allocation2 + $0x158] sm:$0xff]
        %v1812 = vld [vmem:[#allocation2 + $0x160] sm:$0xff]
        %v1813 = vld [vmem:[#allocation2 + $0x168] sm:$0xff]
        %v1814 = vld [vmem:[#allocation2 + $0x170] sm:$0xff]
        %v1815 = vld [vmem:[#allocation2 + $0x178] sm:$0xff]
        %v1816 = vld [vmem:[#allocation2 + $0x180] sm:$0xff]
        %v1817 = vld [vmem:[#allocation2 + $0x188] sm:$0xff]
        %v1818 = vld [vmem:[#allocation2 + $0x190] sm:$0xff]
        %v1819 = vld [vmem:[#allocation2 + $0x198] sm:$0xff]
        %v1820 = vld [vmem:[#allocation2 + $0x1a0] sm:$0xff]
        %v1821 = vld [vmem:[#allocation2 + $0x1a8] sm:$0xff]
        %v1822 = vld [vmem:[#allocation2 + $0x1b0] sm:$0xff]
        %v1823 = vld [vmem:[#allocation2 + $0x1b8] sm:$0xff]
        %v1824 = vld [vmem:[#allocation2 + $0x1c0] sm:$0xff]
        %v1825 = vld [vmem:[#allocation2 + $0x1c8] sm:$0xff]
        %v1826 = vld [vmem:[#allocation2 + $0x1d0] sm:$0xff]
        %v1827 = vld [vmem:[#allocation2 + $0x1d8] sm:$0xff]
        %v1828 = vld [vmem:[#allocation2 + $0x1e0] sm:$0xff]
        %v1829 = vld [vmem:[#allocation2 + $0x1e8] sm:$0xff]
        %v1830 = vld [vmem:[#allocation2 + $0x1f0] sm:$0xff]
        %v1831 = vld [vmem:[#allocation2 + $0x1f8] sm:$0xff]
        %v1832 = vld [vmem:[#allocation2 + $0x200] sm:$0xff]
        %v1833 = vld [vmem:[#allocation2 + $0x208] sm:$0xff]
        %v1834 = vld [vmem:[#allocation2 + $0x210] sm:$0xff]
        %v1835 = vld [vmem:[#allocation2 + $0x218] sm:$0xff]
        %v1836 = vld [vmem:[#allocation2 + $0x220] sm:$0xff]
        %v1837 = vld [vmem:[#allocation2 + $0x228] sm:$0xff]
        %v1838 = vld [vmem:[#allocation2 + $0x230] sm:$0xff]
        %v1839 = vld [vmem:[#allocation2 + $0x238] sm:$0xff]
        %v1840 = vld [vmem:[#allocation2 + $0x240] sm:$0xff]
        %v1841 = vld [vmem:[#allocation2 + $0x248] sm:$0xff]
        %v1842 = vld [vmem:[#allocation2 + $0x250] sm:$0xff]
        %v1843 = vld [vmem:[#allocation2 + $0x258] sm:$0xff]
        %v1844 = vld [vmem:[#allocation2 + $0x260] sm:$0xff]
        %v1845 = vld [vmem:[#allocation2 + $0x268] sm:$0xff]
        %v1846 = vld [vmem:[#allocation2 + $0x270] sm:$0xff]
        %v1847 = vld [vmem:[#allocation2 + $0x278] sm:$0xff]
        %v1848 = vld [vmem:[#allocation2 + $0x280] sm:$0xff]
        %v1849 = vld [vmem:[#allocation2 + $0x288] sm:$0xff]
        %v1850 = vld [vmem:[#allocation2 + $0x290] sm:$0xff]
        %v1851 = vld [vmem:[#allocation2 + $0x298] sm:$0xff]
        %v1852 = vld [vmem:[#allocation2 + $0x2a0] sm:$0xff]
        %v1853 = vld [vmem:[#allocation2 + $0x2a8] sm:$0xff]
        %v1854 = vld [vmem:[#allocation2 + $0x2b0] sm:$0xff]
        %v1855 = vld [vmem:[#allocation2 + $0x2b8] sm:$0xff]
        %v1856 = vld [vmem:[#allocation2 + $0x2c0] sm:$0xff]
        %v1857 = vld [vmem:[#allocation2 + $0x2c8] sm:$0xff]
        %v1858 = vld [vmem:[#allocation5] sm:$0xf]
        %v1859 = vld [vmem:[#allocation5 + $0x4] sm:$0xf]
        %v1860 = vld [vmem:[#allocation5 + $0x8] sm:$0xf]
        %v1861 = vld [vmem:[#allocation5 + $0xc] sm:$0xf]
        %v1862 = vld [vmem:[#allocation5 + $0x10] sm:$0xf]
        %v1863 = vld [vmem:[#allocation5 + $0x14] sm:$0xf]
        %v1864 = vld [vmem:[#allocation5 + $0x18] sm:$0xf]
        %v1865 = vld [vmem:[#allocation5 + $0x1c] sm:$0xf]
        %v1866 = vld [vmem:[#allocation5 + $0x20] sm:$0xf]
        %v1867 = vld [vmem:[#allocation5 + $0x24] sm:$0xf]
        %v1868 = vld [vmem:[#allocation5 + $0x28] sm:$0xf]
        %v1869 = vld [vmem:[#allocation5 + $0x2c] sm:$0xf]
        %v1870 = vld [vmem:[#allocation5 + $0x30] sm:$0xf]
        %v1871 = vld [vmem:[#allocation5 + $0x34] sm:$0xf]
        %v1872 = vld [vmem:[#allocation5 + $0x38] sm:$0xf]
        %v1873 = vld [vmem:[#allocation5 + $0x3c] sm:$0xf]
        %v1874 = vld [vmem:[#allocation5 + $0x40] sm:$0xf]
        %v1875 = vld [vmem:[#allocation5 + $0x44] sm:$0xf]
        %v1876 = vld [vmem:[#allocation5 + $0x48] sm:$0xf]
        %v1877 = vld [vmem:[#allocation5 + $0x4c] sm:$0xf]
        %v1878 = vld [vmem:[#allocation5 + $0x50] sm:$0xf]
        %v1879 = vld [vmem:[#allocation5 + $0x54] sm:$0xf]
        %v1880 = vld [vmem:[#allocation5 + $0x58] sm:$0xf]
        %v1881 = vld [vmem:[#allocation5 + $0x5c] sm:$0xf]
        %v1882 = vld [vmem:[#allocation5 + $0x60] sm:$0xf]
        %v1883 = vld [vmem:[#allocation5 + $0x64] sm:$0xf]
        %v1884 = vld [vmem:[#allocation5 + $0x68] sm:$0xf]
        %v1885 = vld [vmem:[#allocation5 + $0x6c] sm:$0xf]
        %v1886 = vld [vmem:[#allocation5 + $0x70] sm:$0xf]
        %v1887 = vld [vmem:[#allocation5 + $0x74] sm:$0xf]
        %v1888 = vld [vmem:[#allocation5 + $0x78] sm:$0xf]
        %v1889 = vld [vmem:[#allocation5 + $0x7c] sm:$0xf]
        %v1890 = vld [vmem:[#allocation5 + $0x80] sm:$0xf]
        %v1891 = vld [vmem:[#allocation5 + $0x84] sm:$0xf]
        %v1892 = vld [vmem:[#allocation5 + $0x88] sm:$0xf]
        %v1893 = vld [vmem:[#allocation5 + $0x8c] sm:$0xf]
        %v1894 = vld [vmem:[#allocation5 + $0x90] sm:$0xf]
        %v1895 = vld [vmem:[#allocation5 + $0x94] sm:$0xf]
        %v1896 = vld [vmem:[#allocation5 + $0x98] sm:$0xf]
        %v1897 = vld [vmem:[#allocation5 + $0x9c] sm:$0xf]
        %v1898 = vld [vmem:[#allocation5 + $0xa0] sm:$0xf]
        %v1899 = vld [vmem:[#allocation5 + $0xa4] sm:$0xf]
        %v1900 = vld [vmem:[#allocation5 + $0xa8] sm:$0xf]
        %v1901 = vld [vmem:[#allocation5 + $0xac] sm:$0xf]
        %v1902 = vld [vmem:[#allocation5 + $0xb0] sm:$0xf]
        %v1903 = vld [vmem:[#allocation5 + $0xb4] sm:$0xf]
        %v1904 = vld [vmem:[#allocation5 + $0xb8] sm:$0xf]
        %v1905 = vld [vmem:[#allocation5 + $0xbc] sm:$0xf]
        %v1906 = vld [vmem:[#allocation5 + $0xc0] sm:$0xf]
        %v1907 = vld [vmem:[#allocation5 + $0xc4] sm:$0xf]
        %v1908 = vld [vmem:[#allocation5 + $0xc8] sm:$0xf]
        %v1909 = vld [vmem:[#allocation5 + $0xcc] sm:$0xf]
        %v1910 = vld [vmem:[#allocation5 + $0xd0] sm:$0xf]
        %v1911 = vld [vmem:[#allocation5 + $0xd4] sm:$0xf]
        %v1912 = vld [vmem:[#allocation5 + $0xd8] sm:$0xf]
        %v1913 = vld [vmem:[#allocation5 + $0xdc] sm:$0xf]
        %v1914 = vld [vmem:[#allocation5 + $0xe0] sm:$0xf]
        %v1915 = vld [vmem:[#allocation5 + $0xe4] sm:$0xf]
        %v1916 = vld [vmem:[#allocation5 + $0xe8] sm:$0xf]
        %v1917 = vld [vmem:[#allocation5 + $0xec] sm:$0xf]
        %v1918 = vld [vmem:[#allocation5 + $0xf0] sm:$0xf]
        %v1919 = vld [vmem:[#allocation5 + $0xf4] sm:$0xf]
        %v1920 = vld [vmem:[#allocation5 + $0xf8] sm:$0xf]
        %v1921 = vld [vmem:[#allocation5 + $0xfc] sm:$0xf]
        %v1922 = vld [vmem:[#allocation5 + $0x100] sm:$0xf]
        %v1923 = vld [vmem:[#allocation5 + $0x104] sm:$0xf]
        %v1924 = vld [vmem:[#allocation5 + $0x108] sm:$0xf]
        %v1925 = vld [vmem:[#allocation5 + $0x10c] sm:$0xf]
        %v1926 = vld [vmem:[#allocation5 + $0x110] sm:$0xf]
        %v1927 = vld [vmem:[#allocation5 + $0x114] sm:$0xf]
        %v1928 = vld [vmem:[#allocation5 + $0x118] sm:$0xf]
        %v1929 = vld [vmem:[#allocation5 + $0x11c] sm:$0xf]
        %v1930 = vld [vmem:[#allocation5 + $0x120] sm:$0xf]
        %v1931 = vld [vmem:[#allocation5 + $0x124] sm:$0xf]
        %v1932 = vld [vmem:[#allocation5 + $0x128] sm:$0xf]
        %v1933 = vld [vmem:[#allocation5 + $0x12c] sm:$0xf]
        %v1934 = vld [vmem:[#allocation5 + $0x130] sm:$0xf]
        %v1935 = vld [vmem:[#allocation5 + $0x134] sm:$0xf]
        %v1936 = vld [vmem:[#allocation5 + $0x138] sm:$0xf]
        %v1937 = vld [vmem:[#allocation5 + $0x13c] sm:$0xf]
        %v1938 = vld [vmem:[#allocation5 + $0x140] sm:$0xf]
        %v1939 = vld [vmem:[#allocation5 + $0x144] sm:$0xf]
        %v1940 = vld [vmem:[#allocation5 + $0x148] sm:$0xf]
        %v1941 = vld [vmem:[#allocation5 + $0x14c] sm:$0xf]
        %v1942 = vld [vmem:[#allocation5 + $0x150] sm:$0xf]
        %v1943 = vld [vmem:[#allocation5 + $0x154] sm:$0xf]
        %v1944 = vld [vmem:[#allocation5 + $0x158] sm:$0xf]
        %v1945 = vld [vmem:[#allocation5 + $0x15c] sm:$0xf]
        %v1946 = vld [vmem:[#allocation5 + $0x160] sm:$0xf]
        %v1947 = vld [vmem:[#allocation5 + $0x164] sm:$0xf]
        %v1948 = vld [vmem:[#allocation5 + $0x168] sm:$0xf]
        %v1949 = vld [vmem:[#allocation5 + $0x16c] sm:$0xf]
        %v1950 = vld [vmem:[#allocation5 + $0x170] sm:$0xf]
        %v1951 = vld [vmem:[#allocation5 + $0x174] sm:$0xf]
        %v1952 = vld [vmem:[#allocation5 + $0x178] sm:$0xf]
        %v1953 = vld [vmem:[#allocation5 + $0x17c] sm:$0xf]
        %v1954 = vld [vmem:[#allocation5 + $0x180] sm:$0xf]
        %v1955 = vld [vmem:[#allocation5 + $0x184] sm:$0xf]
        %v1956 = vld [vmem:[#allocation5 + $0x188] sm:$0xf]
        %v1957 = vld [vmem:[#allocation5 + $0x18c] sm:$0xf]
        %v1958 = vld [vmem:[#allocation5 + $0x190] sm:$0xf]
        %v1959 = vld [vmem:[#allocation5 + $0x194] sm:$0xf]
        %v1960 = vld [vmem:[#allocation5 + $0x198] sm:$0xf]
        %v1961 = vld [vmem:[#allocation5 + $0x19c] sm:$0xf]
        %v1962 = vld [vmem:[#allocation5 + $0x1a0] sm:$0xf]
        %v1963 = vld [vmem:[#allocation5 + $0x1a4] sm:$0xf]
        %v1964 = vld [vmem:[#allocation5 + $0x1a8] sm:$0xf]
        %v1965 = vld [vmem:[#allocation5 + $0x1ac] sm:$0xf]
        %v1966 = vld [vmem:[#allocation5 + $0x1b0] sm:$0xf]
        %v1967 = vld [vmem:[#allocation5 + $0x1b4] sm:$0xf]
        %v1968 = vld [vmem:[#allocation5 + $0x1b8] sm:$0xf]
        %v1969 = vld [vmem:[#allocation5 + $0x1bc] sm:$0xf]
        %v1970 = vld [vmem:[#allocation5 + $0x1c0] sm:$0xf]
        %v1971 = vld [vmem:[#allocation5 + $0x1c4] sm:$0xf]
        %v1972 = vld [vmem:[#allocation5 + $0x1c8] sm:$0xf]
        %v1973 = vld [vmem:[#allocation5 + $0x1cc] sm:$0xf]
        %v1974 = vld [vmem:[#allocation5 + $0x1d0] sm:$0xf]
        %v1975 = vld [vmem:[#allocation5 + $0x1d4] sm:$0xf]
        %v1976 = vld [vmem:[#allocation5 + $0x1d8] sm:$0xf]
        %v1977 = vld [vmem:[#allocation5 + $0x1dc] sm:$0xf]
        %v1978 = vld [vmem:[#allocation5 + $0x1e0] sm:$0xf]
        %v1979 = vld [vmem:[#allocation5 + $0x1e4] sm:$0xf]
        %v1980 = vld [vmem:[#allocation5 + $0x1e8] sm:$0xf]
        %v1981 = vld [vmem:[#allocation5 + $0x1ec] sm:$0xf]
        %v1982 = vld [vmem:[#allocation5 + $0x1f0] sm:$0xf]
        %v1983 = vld [vmem:[#allocation5 + $0x1f4] sm:$0xf]
        %v1984 = vld [vmem:[#allocation5 + $0x1f8] sm:$0xf]
        %v1985 = vld [vmem:[#allocation5 + $0x1fc] sm:$0xf]
        %v1986 = vld [vmem:[#allocation5 + $0x200] sm:$0xf]
        %v1987 = vld [vmem:[#allocation5 + $0x204] sm:$0xf]
        %v1988 = vld [vmem:[#allocation5 + $0x208] sm:$0xf]
        %v1989 = vld [vmem:[#allocation5 + $0x20c] sm:$0xf]
        %v1990 = vld [vmem:[#allocation5 + $0x210] sm:$0xf]
        %v1991 = vld [vmem:[#allocation5 + $0x214] sm:$0xf]
        %v1992 = vld [vmem:[#allocation5 + $0x218] sm:$0xf]
        %v1993 = vld [vmem:[#allocation5 + $0x21c] sm:$0xf]
        %v1994 = vld [vmem:[#allocation5 + $0x220] sm:$0xf]
        %v1995 = vld [vmem:[#allocation5 + $0x224] sm:$0xf]
        %v1996 = vld [vmem:[#allocation5 + $0x228] sm:$0xf]
        %v1997 = vld [vmem:[#allocation5 + $0x22c] sm:$0xf]
        %v1998 = vld [vmem:[#allocation5 + $0x230] sm:$0xf]
        %v1999 = vld [vmem:[#allocation5 + $0x234] sm:$0xf]
        %v2000 = vld [vmem:[#allocation5 + $0x238] sm:$0xf]
        %v2001 = vld [vmem:[#allocation5 + $0x23c] sm:$0xf]
        %v2002 = vld [vmem:[%s3] sm:$0x1]
        %v2004 = vlaneseq
        %v2005 = vshrl.u32 %v2004, 7
        %v2006 = vsub.s32 0, %v2005
        %v2007 = vrot.slane %v2002, %v2006
        %v2153 = vunpack.c.l.b16 %v1858
        %v2154 = vunpack.c.l.b16 %v1859
        %v2155 = vunpack.c.l.b16 %v1860
        %v2156 = vunpack.c.l.b16 %v1861
        %v2157 = vunpack.c.l.b16 %v1862
        %v2158 = vunpack.c.l.b16 %v1863
        %v2159 = vunpack.c.l.b16 %v1864
        %v2160 = vunpack.c.l.b16 %v1865
        %v2161 = vunpack.c.l.b16 %v1866
        %v2162 = vunpack.c.l.b16 %v1867
        %v2163 = vunpack.c.l.b16 %v1868
        %v2164 = vunpack.c.l.b16 %v1869
        %v2165 = vunpack.c.l.b16 %v1870
        %v2166 = vunpack.c.l.b16 %v1871
        %v2167 = vunpack.c.l.b16 %v1872
        %v2168 = vunpack.c.l.b16 %v1873
        %v2169 = vunpack.c.l.b16 %v1874
        %v2170 = vunpack.c.l.b16 %v1875
        %v2171 = vunpack.c.l.b16 %v1876
        %v2172 = vunpack.c.l.b16 %v1877
        %v2173 = vunpack.c.l.b16 %v1878
        %v2174 = vunpack.c.l.b16 %v1879
        %v2175 = vunpack.c.l.b16 %v1880
        %v2176 = vunpack.c.l.b16 %v1881
        %v2177 = vunpack.c.l.b16 %v1882
        %v2178 = vunpack.c.l.b16 %v1883
        %v2179 = vunpack.c.l.b16 %v1884
        %v2180 = vunpack.c.l.b16 %v1885
        %v2181 = vunpack.c.l.b16 %v1886
        %v2182 = vunpack.c.l.b16 %v1887
        %v2183 = vunpack.c.l.b16 %v1888
        %v2184 = vunpack.c.l.b16 %v1889
        %v2185 = vunpack.c.l.b16 %v1890
        %v2186 = vunpack.c.l.b16 %v1891
        %v2187 = vunpack.c.l.b16 %v1892
        %v2188 = vunpack.c.l.b16 %v1893
        %v2189 = vunpack.c.l.b16 %v1894
        %v2190 = vunpack.c.l.b16 %v1895
        %v2191 = vunpack.c.l.b16 %v1896
        %v2192 = vunpack.c.l.b16 %v1897
        %v2193 = vunpack.c.l.b16 %v1898
        %v2194 = vunpack.c.l.b16 %v1899
        %v2195 = vunpack.c.l.b16 %v1900
        %v2196 = vunpack.c.l.b16 %v1901
        %v2197 = vunpack.c.l.b16 %v1902
        %v2198 = vunpack.c.l.b16 %v1903
        %v2199 = vunpack.c.l.b16 %v1904
        %v2200 = vunpack.c.l.b16 %v1905
        %v2201 = vunpack.c.l.b16 %v1906
        %v2202 = vunpack.c.l.b16 %v1907
        %v2203 = vunpack.c.l.b16 %v1908
        %v2204 = vunpack.c.l.b16 %v1909
        %v2205 = vunpack.c.l.b16 %v1910
        %v2206 = vunpack.c.l.b16 %v1911
        %v2207 = vunpack.c.l.b16 %v1912
        %v2208 = vunpack.c.l.b16 %v1913
        %v2209 = vunpack.c.l.b16 %v1914
        %v2210 = vunpack.c.l.b16 %v1915
        %v2211 = vunpack.c.l.b16 %v1916
        %v2212 = vunpack.c.l.b16 %v1917
        %v2213 = vunpack.c.l.b16 %v1918
        %v2214 = vunpack.c.l.b16 %v1919
        %v2215 = vunpack.c.l.b16 %v1920
        %v2216 = vunpack.c.l.b16 %v1921
        %v2217 = vunpack.c.l.b16 %v1922
        %v2218 = vunpack.c.l.b16 %v1923
        %v2219 = vunpack.c.l.b16 %v1924
        %v2220 = vunpack.c.l.b16 %v1925
        %v2221 = vunpack.c.l.b16 %v1926
        %v2222 = vunpack.c.l.b16 %v1927
        %v2223 = vunpack.c.l.b16 %v1928
        %v2224 = vunpack.c.l.b16 %v1929
        %v2225 = vunpack.c.l.b16 %v1930
        %v2226 = vunpack.c.l.b16 %v1931
        %v2227 = vunpack.c.l.b16 %v1932
        %v2228 = vunpack.c.l.b16 %v1933
        %v2229 = vunpack.c.l.b16 %v1934
        %v2230 = vunpack.c.l.b16 %v1935
        %v2231 = vunpack.c.l.b16 %v1936
        %v2232 = vunpack.c.l.b16 %v1937
        %v2233 = vunpack.c.l.b16 %v1938
        %v2234 = vunpack.c.l.b16 %v1939
        %v2235 = vunpack.c.l.b16 %v1940
        %v2236 = vunpack.c.l.b16 %v1941
        %v2237 = vunpack.c.l.b16 %v1942
        %v2238 = vunpack.c.l.b16 %v1943
        %v2239 = vunpack.c.l.b16 %v1944
        %v2240 = vunpack.c.l.b16 %v1945
        %v2241 = vunpack.c.l.b16 %v1946
        %v2242 = vunpack.c.l.b16 %v1947
        %v2243 = vunpack.c.l.b16 %v1948
        %v2244 = vunpack.c.l.b16 %v1949
        %v2245 = vunpack.c.l.b16 %v1950
        %v2246 = vunpack.c.l.b16 %v1951
        %v2247 = vunpack.c.l.b16 %v1952
        %v2248 = vunpack.c.l.b16 %v1953
        %v2249 = vunpack.c.l.b16 %v1954
        %v2250 = vunpack.c.l.b16 %v1955
        %v2251 = vunpack.c.l.b16 %v1956
        %v2252 = vunpack.c.l.b16 %v1957
        %v2253 = vunpack.c.l.b16 %v1958
        %v2254 = vunpack.c.l.b16 %v1959
        %v2255 = vunpack.c.l.b16 %v1960
        %v2256 = vunpack.c.l.b16 %v1961
        %v2257 = vunpack.c.l.b16 %v1962
        %v2258 = vunpack.c.l.b16 %v1963
        %v2259 = vunpack.c.l.b16 %v1964
        %v2260 = vunpack.c.l.b16 %v1965
        %v2261 = vunpack.c.l.b16 %v1966
        %v2262 = vunpack.c.l.b16 %v1967
        %v2263 = vunpack.c.l.b16 %v1968
        %v2264 = vunpack.c.l.b16 %v1969
        %v2265 = vunpack.c.l.b16 %v1970
        %v2266 = vunpack.c.l.b16 %v1971
        %v2267 = vunpack.c.l.b16 %v1972
        %v2268 = vunpack.c.l.b16 %v1973
        %v2269 = vunpack.c.l.b16 %v1974
        %v2270 = vunpack.c.l.b16 %v1975
        %v2271 = vunpack.c.l.b16 %v1976
        %v2272 = vunpack.c.l.b16 %v1977
        %v2273 = vunpack.c.l.b16 %v1978
        %v2274 = vunpack.c.l.b16 %v1979
        %v2275 = vunpack.c.l.b16 %v1980
        %v2276 = vunpack.c.l.b16 %v1981
        %v2277 = vunpack.c.l.b16 %v1982
        %v2278 = vunpack.c.l.b16 %v1983
        %v2279 = vunpack.c.l.b16 %v1984
        %v2280 = vunpack.c.l.b16 %v1985
        %v2281 = vunpack.c.l.b16 %v1986
        %v2282 = vunpack.c.l.b16 %v1987
        %v2283 = vunpack.c.l.b16 %v1988
        %v2284 = vunpack.c.l.b16 %v1989
        %v2285 = vunpack.c.l.b16 %v1990
        %v2286 = vunpack.c.l.b16 %v1991
        %v2287 = vunpack.c.l.b16 %v1992
        %v2288 = vunpack.c.l.b16 %v1993
        %v2289 = vunpack.c.l.b16 %v1994
        %v2290 = vunpack.c.l.b16 %v1995
        %v2291 = vunpack.c.l.b16 %v1996
        %v2292 = vunpack.c.l.b16 %v1997
        %v2293 = vunpack.c.l.b16 %v1998
        %v2294 = vunpack.c.l.b16 %v1999
        %v2295 = vunpack.c.l.b16 %v2000
        %v2296 = vunpack.c.l.b16 %v2001
        %v2297 = vpack.c.b16 %v2154, %v2153
        %v2298 = vpack.c.b16 %v2156, %v2155
        %v2299 = vpack.c.b16 %v2158, %v2157
        %v2300 = vpack.c.b16 %v2160, %v2159
        %v2301 = vpack.c.b16 %v2162, %v2161
        %v2302 = vpack.c.b16 %v2164, %v2163
        %v2303 = vpack.c.b16 %v2166, %v2165
        %v2304 = vpack.c.b16 %v2168, %v2167
        %v2305 = vpack.c.b16 %v2170, %v2169
        %v2306 = vpack.c.b16 %v2172, %v2171
        %v2307 = vpack.c.b16 %v2174, %v2173
        %v2308 = vpack.c.b16 %v2176, %v2175
        %v2309 = vpack.c.b16 %v2178, %v2177
        %v2310 = vpack.c.b16 %v2180, %v2179
        %v2311 = vpack.c.b16 %v2182, %v2181
        %v2312 = vpack.c.b16 %v2184, %v2183
        %v2313 = vpack.c.b16 %v2186, %v2185
        %v2314 = vpack.c.b16 %v2188, %v2187
        %v2315 = vpack.c.b16 %v2190, %v2189
        %v2316 = vpack.c.b16 %v2192, %v2191
        %v2317 = vpack.c.b16 %v2194, %v2193
        %v2318 = vpack.c.b16 %v2196, %v2195
        %v2319 = vpack.c.b16 %v2198, %v2197
        %v2320 = vpack.c.b16 %v2200, %v2199
        %v2321 = vpack.c.b16 %v2202, %v2201
        %v2322 = vpack.c.b16 %v2204, %v2203
        %v2323 = vpack.c.b16 %v2206, %v2205
        %v2324 = vpack.c.b16 %v2208, %v2207
        %v2325 = vpack.c.b16 %v2210, %v2209
        %v2326 = vpack.c.b16 %v2212, %v2211
        %v2327 = vpack.c.b16 %v2214, %v2213
        %v2328 = vpack.c.b16 %v2216, %v2215
        %v2329 = vpack.c.b16 %v2218, %v2217
        %v2330 = vpack.c.b16 %v2220, %v2219
        %v2331 = vpack.c.b16 %v2222, %v2221
        %v2332 = vpack.c.b16 %v2224, %v2223
        %v2333 = vpack.c.b16 %v2226, %v2225
        %v2334 = vpack.c.b16 %v2228, %v2227
        %v2335 = vpack.c.b16 %v2230, %v2229
        %v2336 = vpack.c.b16 %v2232, %v2231
        %v2337 = vpack.c.b16 %v2234, %v2233
        %v2338 = vpack.c.b16 %v2236, %v2235
        %v2339 = vpack.c.b16 %v2238, %v2237
        %v2340 = vpack.c.b16 %v2240, %v2239
        %v2341 = vpack.c.b16 %v2242, %v2241
        %v2342 = vpack.c.b16 %v2244, %v2243
        %v2343 = vpack.c.b16 %v2246, %v2245
        %v2344 = vpack.c.b16 %v2248, %v2247
        %v2345 = vpack.c.b16 %v2250, %v2249
        %v2346 = vpack.c.b16 %v2252, %v2251
        %v2347 = vpack.c.b16 %v2254, %v2253
        %v2348 = vpack.c.b16 %v2256, %v2255
        %v2349 = vpack.c.b16 %v2258, %v2257
        %v2350 = vpack.c.b16 %v2260, %v2259
        %v2351 = vpack.c.b16 %v2262, %v2261
        %v2352 = vpack.c.b16 %v2264, %v2263
        %v2353 = vpack.c.b16 %v2266, %v2265
        %v2354 = vpack.c.b16 %v2268, %v2267
        %v2355 = vpack.c.b16 %v2270, %v2269
        %v2356 = vpack.c.b16 %v2272, %v2271
        %v2357 = vpack.c.b16 %v2274, %v2273
        %v2358 = vpack.c.b16 %v2276, %v2275
        %v2359 = vpack.c.b16 %v2278, %v2277
        %v2360 = vpack.c.b16 %v2280, %v2279
        %v2361 = vpack.c.b16 %v2282, %v2281
        %v2362 = vpack.c.b16 %v2284, %v2283
        %v2363 = vpack.c.b16 %v2286, %v2285
        %v2364 = vpack.c.b16 %v2288, %v2287
        %v2365 = vpack.c.b16 %v2290, %v2289
        %v2366 = vpack.c.b16 %v2292, %v2291
        %v2367 = vpack.c.b16 %v2294, %v2293
        %v2368 = vpack.c.b16 %v2296, %v2295
        %2441 = vmatprep.subr.bf16.mxu0 0
        %2442 = vmatpush1.bf16.msra.mxu0 %v2297
        %2443 = vmatprep.subr.bf16.mxu0 0
        %2444 = vmatpush1.bf16.msra.mxu0 %v2298
        %2445 = vmatprep.subr.bf16.mxu0 0
        %2446 = vmatpush1.bf16.msra.mxu0 %v2299
        %2447 = vmatprep.subr.bf16.mxu0 0
        %2448 = vmatpush1.bf16.msra.mxu0 %v2300
        %2449 = vmatprep.subr.bf16.mxu0 0
        %2450 = vmatpush1.bf16.msra.mxu0 %v2301
        %2451 = vmatprep.subr.bf16.mxu0 0
        %2452 = vmatpush1.bf16.msra.mxu0 %v2302
        %2453 = vmatprep.subr.bf16.mxu0 0
        %2454 = vmatpush1.bf16.msra.mxu0 %v2303
        %2455 = vmatprep.subr.bf16.mxu0 0
        %2456 = vmatpush1.bf16.msra.mxu0 %v2304
        %2457 = vmatprep.subr.bf16.mxu0 0
        %2458 = vmatpush1.bf16.msra.mxu0 %v2305
        %2459 = vmatprep.subr.bf16.mxu0 0
        %2460 = vmatpush1.bf16.msra.mxu0 %v2306
        %2461 = vmatprep.subr.bf16.mxu0 0
        %2462 = vmatpush1.bf16.msra.mxu0 %v2307
        %2463 = vmatprep.subr.bf16.mxu0 0
        %2464 = vmatpush1.bf16.msra.mxu0 %v2308
        %2465 = vmatprep.subr.bf16.mxu0 0
        %2466 = vmatpush1.bf16.msra.mxu0 %v2309
        %2467 = vmatprep.subr.bf16.mxu0 0
        %2468 = vmatpush1.bf16.msra.mxu0 %v2310
        %2469 = vmatprep.subr.bf16.mxu0 0
        %2470 = vmatpush1.bf16.msra.mxu0 %v2311
        %2471 = vmatprep.subr.bf16.mxu0 0
        %2472 = vmatpush1.bf16.msra.mxu0 %v2312
        %2473 = vmatprep.mubr.bf16.mxu0 %v1769
        %2474 = vmatmul.mubr.bf16.gmra.mrb[0].mxu0 %v1768
        %v2475 = vpop.f32.mrb[0].mxu0
        %v2476 = vadd.f32 %v2007, %v2475
        %v2477 = vpop.f32.mrb[0].mxu0
        %v2478 = vpop.f32.mrb[0].mxu0
        %v2479 = vadd.f32 %v2007, %v2478
        %v2480 = vpop.f32.mrb[0].mxu0
        %2481 = vmatprep.mubr.bf16.mxu0 %v1778
        %2482 = vmatmul.mubr.bf16.gmra.mrb[0].mxu0 %v1777
        %v2483 = vpop.f32.mrb[0].mxu0
        %v2484 = vadd.f32 %v2007, %v2483
        %v2485 = vpop.f32.mrb[0].mxu0
        %v2486 = vpop.f32.mrb[0].mxu0
        %v2487 = vadd.f32 %v2007, %v2486
        %v2488 = vpop.f32.mrb[0].mxu0
        %2489 = vmatprep.mubr.bf16.mxu0 %v1787
        %2490 = vmatmul.mubr.bf16.gmra.mrb[0].mxu0 %v1786
        %v2491 = vpop.f32.mrb[0].mxu0
        %v2492 = vadd.f32 %v2007, %v2491
        %v2493 = vpop.f32.mrb[0].mxu0
        %v2494 = vpop.f32.mrb[0].mxu0
        %v2495 = vadd.f32 %v2007, %v2494
        %v2496 = vpop.f32.mrb[0].mxu0
        %2497 = vmatprep.mubr.bf16.mxu0 %v1796
        %2498 = vmatmul.mubr.bf16.gmra.mrb[0].mxu0 %v1795
        %v2499 = vpop.f32.mrb[0].mxu0
        %v2500 = vadd.f32 %v2007, %v2499
        %v2501 = vpop.f32.mrb[0].mxu0
        %v2502 = vpop.f32.mrb[0].mxu0
        %v2503 = vadd.f32 %v2007, %v2502
        %v2504 = vpop.f32.mrb[0].mxu0
        %2505 = vmatprep.mubr.bf16.mxu0 %v1805
        %2506 = vmatmul.mubr.bf16.gmra.mrb[0].mxu0 %v1804
        %v2507 = vpop.f32.mrb[0].mxu0
        %v2508 = vadd.f32 %v2007, %v2507
        %v2509 = vpop.f32.mrb[0].mxu0
        %v2510 = vpop.f32.mrb[0].mxu0
        %v2511 = vadd.f32 %v2007, %v2510
        %v2512 = vpop.f32.mrb[0].mxu0
        %2513 = vmatprep.mubr.bf16.mxu0 %v1814
        %2514 = vmatmul.mubr.bf16.gmra.mrb[0].mxu0 %v1813
        %v2515 = vpop.f32.mrb[0].mxu0
        %v2516 = vadd.f32 %v2007, %v2515
        %v2517 = vpop.f32.mrb[0].mxu0
        %v2518 = vpop.f32.mrb[0].mxu0
        %v2519 = vadd.f32 %v2007, %v2518
        %v2520 = vpop.f32.mrb[0].mxu0
        %2521 = vmatprep.mubr.bf16.mxu0 %v1823
        %2522 = vmatmul.mubr.bf16.gmra.mrb[0].mxu0 %v1822
        %v2523 = vpop.f32.mrb[0].mxu0
        %v2524 = vadd.f32 %v2007, %v2523
        %v2525 = vpop.f32.mrb[0].mxu0
        %v2526 = vpop.f32.mrb[0].mxu0
        %v2527 = vadd.f32 %v2007, %v2526
        %v2528 = vpop.f32.mrb[0].mxu0
        %2529 = vmatprep.mubr.bf16.mxu0 %v1832
        %2530 = vmatmul.mubr.bf16.gmra.mrb[0].mxu0 %v1831
        %v2531 = vpop.f32.mrb[0].mxu0
        %v2532 = vadd.f32 %v2007, %v2531
        %v2533 = vpop.f32.mrb[0].mxu0
        %v2534 = vpop.f32.mrb[0].mxu0
        %v2535 = vadd.f32 %v2007, %v2534
        %v2536 = vpop.f32.mrb[0].mxu0
        %2537 = vmatprep.mubr.bf16.mxu0 %v1841
        %2538 = vmatmul.mubr.bf16.gmra.mrb[0].mxu0 %v1840
        %v2539 = vpop.f32.mrb[0].mxu0
        %v2540 = vadd.f32 %v2007, %v2539
        %v2541 = vpop.f32.mrb[0].mxu0
        %v2542 = vpop.f32.mrb[0].mxu0
        %v2543 = vadd.f32 %v2007, %v2542
        %v2544 = vpop.f32.mrb[0].mxu0
        %2545 = vmatprep.mubr.bf16.mxu0 %v1850
        %2546 = vmatmul.mubr.bf16.gmra.mrb[0].mxu0 %v1849
        %v2547 = vpop.f32.mrb[0].mxu0
        %v2548 = vadd.f32 %v2007, %v2547
        %v2549 = vpop.f32.mrb[0].mxu0
        %v2550 = vpop.f32.mrb[0].mxu0
        %v2551 = vadd.f32 %v2007, %v2550
        %v2552 = vpop.f32.mrb[0].mxu0
        %2553 = vdwg.mxu0
        %2554 = vmatprep.subr.bf16.mxu0 0
        %2555 = vmatpush1.bf16.msra.mxu0 %v2313
        %2556 = vmatprep.subr.bf16.mxu0 0
        %2557 = vmatpush1.bf16.msra.mxu0 %v2314
        %2558 = vmatprep.subr.bf16.mxu0 0
        %2559 = vmatpush1.bf16.msra.mxu0 %v2315
        %2560 = vmatprep.subr.bf16.mxu0 0
        %2561 = vmatpush1.bf16.msra.mxu0 %v2316
        %2562 = vmatprep.subr.bf16.mxu0 0
        %2563 = vmatpush1.bf16.msra.mxu0 %v2317
        %2564 = vmatprep.subr.bf16.mxu0 0
        %2565 = vmatpush1.bf16.msra.mxu0 %v2318
        %2566 = vmatprep.subr.bf16.mxu0 0
        %2567 = vmatpush1.bf16.msra.mxu0 %v2319
        %2568 = vmatprep.subr.bf16.mxu0 0
        %2569 = vmatpush1.bf16.msra.mxu0 %v2320
        %2570 = vmatprep.subr.bf16.mxu0 0
        %2571 = vmatpush1.bf16.msra.mxu0 %v2321
        %2572 = vmatprep.subr.bf16.mxu0 0
        %2573 = vmatpush1.bf16.msra.mxu0 %v2322
        %2574 = vmatprep.subr.bf16.mxu0 0
        %2575 = vmatpush1.bf16.msra.mxu0 %v2323
        %2576 = vmatprep.subr.bf16.mxu0 0
        %2577 = vmatpush1.bf16.msra.mxu0 %v2324
        %2578 = vmatprep.subr.bf16.mxu0 0
        %2579 = vmatpush1.bf16.msra.mxu0 %v2325
        %2580 = vmatprep.subr.bf16.mxu0 0
        %2581 = vmatpush1.bf16.msra.mxu0 %v2326
        %2582 = vmatprep.subr.bf16.mxu0 0
        %2583 = vmatpush1.bf16.msra.mxu0 %v2327
        %2584 = vmatprep.subr.bf16.mxu0 0
        %2585 = vmatpush1.bf16.msra.mxu0 %v2328
        %2586 = vmatprep.mubr.bf16.mxu0 %v1771
        %2587 = vmatmul.mubr.bf16.gmra.mrb[0].mxu0 %v1770
        %v2588 = vpop.f32.mrb[0].mxu0
        %v2589 = vadd.f32 %v2476, %v2588
        %v2590 = vpop.f32.mrb[0].mxu0
        %v2591 = vpop.f32.mrb[0].mxu0
        %v2592 = vadd.f32 %v2479, %v2591
        %v2593 = vpop.f32.mrb[0].mxu0
        %2594 = vmatprep.mubr.bf16.mxu0 %v1780
        %2595 = vmatmul.mubr.bf16.gmra.mrb[0].mxu0 %v1779
        %v2596 = vpop.f32.mrb[0].mxu0
        %v2597 = vadd.f32 %v2484, %v2596
        %v2598 = vpop.f32.mrb[0].mxu0
        %v2599 = vpop.f32.mrb[0].mxu0
        %v2600 = vadd.f32 %v2487, %v2599
        %v2601 = vpop.f32.mrb[0].mxu0
        %2602 = vmatprep.mubr.bf16.mxu0 %v1789
        %2603 = vmatmul.mubr.bf16.gmra.mrb[0].mxu0 %v1788
        %v2604 = vpop.f32.mrb[0].mxu0
        %v2605 = vadd.f32 %v2492, %v2604
        %v2606 = vpop.f32.mrb[0].mxu0
        %v2607 = vpop.f32.mrb[0].mxu0
        %v2608 = vadd.f32 %v2495, %v2607
        %v2609 = vpop.f32.mrb[0].mxu0
        %2610 = vmatprep.mubr.bf16.mxu0 %v1798
        %2611 = vmatmul.mubr.bf16.gmra.mrb[0].mxu0 %v1797
        %v2612 = vpop.f32.mrb[0].mxu0
        %v2613 = vadd.f32 %v2500, %v2612
        %v2614 = vpop.f32.mrb[0].mxu0
        %v2615 = vpop.f32.mrb[0].mxu0
        %v2616 = vadd.f32 %v2503, %v2615
        %v2617 = vpop.f32.mrb[0].mxu0
        %2618 = vmatprep.mubr.bf16.mxu0 %v1807
        %2619 = vmatmul.mubr.bf16.gmra.mrb[0].mxu0 %v1806
        %v2620 = vpop.f32.mrb[0].mxu0
        %v2621 = vadd.f32 %v2508, %v2620
        %v2622 = vpop.f32.mrb[0].mxu0
        %v2623 = vpop.f32.mrb[0].mxu0
        %v2624 = vadd.f32 %v2511, %v2623
        %v2625 = vpop.f32.mrb[0].mxu0
        %2626 = vmatprep.mubr.bf16.mxu0 %v1816
        %2627 = vmatmul.mubr.bf16.gmra.mrb[0].mxu0 %v1815
        %v2628 = vpop.f32.mrb[0].mxu0
        %v2629 = vadd.f32 %v2516, %v2628
        %v2630 = vpop.f32.mrb[0].mxu0
        %v2631 = vpop.f32.mrb[0].mxu0
        %v2632 = vadd.f32 %v2519, %v2631
        %v2633 = vpop.f32.mrb[0].mxu0
        %2634 = vmatprep.mubr.bf16.mxu0 %v1825
        %2635 = vmatmul.mubr.bf16.gmra.mrb[0].mxu0 %v1824
        %v2636 = vpop.f32.mrb[0].mxu0
        %v2637 = vadd.f32 %v2524, %v2636
        %v2638 = vpop.f32.mrb[0].mxu0
        %v2639 = vpop.f32.mrb[0].mxu0
        %v2640 = vadd.f32 %v2527, %v2639
        %v2641 = vpop.f32.mrb[0].mxu0
        %2642 = vmatprep.mubr.bf16.mxu0 %v1834
        %2643 = vmatmul.mubr.bf16.gmra.mrb[0].mxu0 %v1833
        %v2644 = vpop.f32.mrb[0].mxu0
        %v2645 = vadd.f32 %v2532, %v2644
        %v2646 = vpop.f32.mrb[0].mxu0
        %v2647 = vpop.f32.mrb[0].mxu0
        %v2648 = vadd.f32 %v2535, %v2647
        %v2649 = vpop.f32.mrb[0].mxu0
        %2650 = vmatprep.mubr.bf16.mxu0 %v1843
        %2651 = vmatmul.mubr.bf16.gmra.mrb[0].mxu0 %v1842
        %v2652 = vpop.f32.mrb[0].mxu0
        %v2653 = vadd.f32 %v2540, %v2652
        %v2654 = vpop.f32.mrb[0].mxu0
        %v2655 = vpop.f32.mrb[0].mxu0
        %v2656 = vadd.f32 %v2543, %v2655
        %v2657 = vpop.f32.mrb[0].mxu0
        %2658 = vmatprep.mubr.bf16.mxu0 %v1852
        %2659 = vmatmul.mubr.bf16.gmra.mrb[0].mxu0 %v1851
        %v2660 = vpop.f32.mrb[0].mxu0
        %v2661 = vadd.f32 %v2548, %v2660
        %v2662 = vpop.f32.mrb[0].mxu0
        %v2663 = vpop.f32.mrb[0].mxu0
        %v2664 = vadd.f32 %v2551, %v2663
        %v2665 = vpop.f32.mrb[0].mxu0
        %2666 = vdwg.mxu0
        %2667 = vmatprep.subr.bf16.mxu0 0
        %2668 = vmatpush1.bf16.msra.mxu0 %v2329
        %2669 = vmatprep.subr.bf16.mxu0 0
        %2670 = vmatpush1.bf16.msra.mxu0 %v2330
        %2671 = vmatprep.subr.bf16.mxu0 0
        %2672 = vmatpush1.bf16.msra.mxu0 %v2331
        %2673 = vmatprep.subr.bf16.mxu0 0
        %2674 = vmatpush1.bf16.msra.mxu0 %v2332
        %2675 = vmatprep.subr.bf16.mxu0 0
        %2676 = vmatpush1.bf16.msra.mxu0 %v2333
        %2677 = vmatprep.subr.bf16.mxu0 0
        %2678 = vmatpush1.bf16.msra.mxu0 %v2334
        %2679 = vmatprep.subr.bf16.mxu0 0
        %2680 = vmatpush1.bf16.msra.mxu0 %v2335
        %2681 = vmatprep.subr.bf16.mxu0 0
        %2682 = vmatpush1.bf16.msra.mxu0 %v2336
        %2683 = vmatprep.subr.bf16.mxu0 0
        %2684 = vmatpush1.bf16.msra.mxu0 %v2337
        %2685 = vmatprep.subr.bf16.mxu0 0
        %2686 = vmatpush1.bf16.msra.mxu0 %v2338
        %2687 = vmatprep.subr.bf16.mxu0 0
        %2688 = vmatpush1.bf16.msra.mxu0 %v2339
        %2689 = vmatprep.subr.bf16.mxu0 0
        %2690 = vmatpush1.bf16.msra.mxu0 %v2340
        %2691 = vmatprep.subr.bf16.mxu0 0
        %2692 = vmatpush1.bf16.msra.mxu0 %v2341
        %2693 = vmatprep.subr.bf16.mxu0 0
        %2694 = vmatpush1.bf16.msra.mxu0 %v2342
        %2695 = vmatprep.subr.bf16.mxu0 0
        %2696 = vmatpush1.bf16.msra.mxu0 %v2343
        %2697 = vmatprep.subr.bf16.mxu0 0
        %2698 = vmatpush1.bf16.msra.mxu0 %v2344
        %2699 = vmatprep.mubr.bf16.mxu0 %v1773
        %2700 = vmatmul.mubr.bf16.gmra.mrb[0].mxu0 %v1772
        %v2701 = vpop.f32.mrb[0].mxu0
        %v2702 = vadd.f32 %v2589, %v2701
        %v2703 = vpop.f32.mrb[0].mxu0
        %v2704 = vpop.f32.mrb[0].mxu0
        %v2705 = vadd.f32 %v2592, %v2704
        %v2706 = vpop.f32.mrb[0].mxu0
        %2707 = vmatprep.mubr.bf16.mxu0 %v1782
        %2708 = vmatmul.mubr.bf16.gmra.mrb[0].mxu0 %v1781
        %v2709 = vpop.f32.mrb[0].mxu0
        %v2710 = vadd.f32 %v2597, %v2709
        %v2711 = vpop.f32.mrb[0].mxu0
        %v2712 = vpop.f32.mrb[0].mxu0
        %v2713 = vadd.f32 %v2600, %v2712
        %v2714 = vpop.f32.mrb[0].mxu0
        %2715 = vmatprep.mubr.bf16.mxu0 %v1791
        %2716 = vmatmul.mubr.bf16.gmra.mrb[0].mxu0 %v1790
        %v2717 = vpop.f32.mrb[0].mxu0
        %v2718 = vadd.f32 %v2605, %v2717
        %v2719 = vpop.f32.mrb[0].mxu0
        %v2720 = vpop.f32.mrb[0].mxu0
        %v2721 = vadd.f32 %v2608, %v2720
        %v2722 = vpop.f32.mrb[0].mxu0
        %2723 = vmatprep.mubr.bf16.mxu0 %v1800
        %2724 = vmatmul.mubr.bf16.gmra.mrb[0].mxu0 %v1799
        %v2725 = vpop.f32.mrb[0].mxu0
        %v2726 = vadd.f32 %v2613, %v2725
        %v2727 = vpop.f32.mrb[0].mxu0
        %v2728 = vpop.f32.mrb[0].mxu0
        %v2729 = vadd.f32 %v2616, %v2728
        %v2730 = vpop.f32.mrb[0].mxu0
        %2731 = vmatprep.mubr.bf16.mxu0 %v1809
        %2732 = vmatmul.mubr.bf16.gmra.mrb[0].mxu0 %v1808
        %v2733 = vpop.f32.mrb[0].mxu0
        %v2734 = vadd.f32 %v2621, %v2733
        %v2735 = vpop.f32.mrb[0].mxu0
        %v2736 = vpop.f32.mrb[0].mxu0
        %v2737 = vadd.f32 %v2624, %v2736
        %v2738 = vpop.f32.mrb[0].mxu0
        %2739 = vmatprep.mubr.bf16.mxu0 %v1818
        %2740 = vmatmul.mubr.bf16.gmra.mrb[0].mxu0 %v1817
        %v2741 = vpop.f32.mrb[0].mxu0
        %v2742 = vadd.f32 %v2629, %v2741
        %v2743 = vpop.f32.mrb[0].mxu0
        %v2744 = vpop.f32.mrb[0].mxu0
        %v2745 = vadd.f32 %v2632, %v2744
        %v2746 = vpop.f32.mrb[0].mxu0
        %2747 = vmatprep.mubr.bf16.mxu0 %v1827
        %2748 = vmatmul.mubr.bf16.gmra.mrb[0].mxu0 %v1826
        %v2749 = vpop.f32.mrb[0].mxu0
        %v2750 = vadd.f32 %v2637, %v2749
        %v2751 = vpop.f32.mrb[0].mxu0
        %v2752 = vpop.f32.mrb[0].mxu0
        %v2753 = vadd.f32 %v2640, %v2752
        %v2754 = vpop.f32.mrb[0].mxu0
        %2755 = vmatprep.mubr.bf16.mxu0 %v1836
        %2756 = vmatmul.mubr.bf16.gmra.mrb[0].mxu0 %v1835
        %v2757 = vpop.f32.mrb[0].mxu0
        %v2758 = vadd.f32 %v2645, %v2757
        %v2759 = vpop.f32.mrb[0].mxu0
        %v2760 = vpop.f32.mrb[0].mxu0
        %v2761 = vadd.f32 %v2648, %v2760
        %v2762 = vpop.f32.mrb[0].mxu0
        %2763 = vmatprep.mubr.bf16.mxu0 %v1845
        %2764 = vmatmul.mubr.bf16.gmra.mrb[0].mxu0 %v1844
        %v2765 = vpop.f32.mrb[0].mxu0
        %v2766 = vadd.f32 %v2653, %v2765
        %v2767 = vpop.f32.mrb[0].mxu0
        %v2768 = vpop.f32.mrb[0].mxu0
        %v2769 = vadd.f32 %v2656, %v2768
        %v2770 = vpop.f32.mrb[0].mxu0
        %2771 = vmatprep.mubr.bf16.mxu0 %v1854
        %2772 = vmatmul.mubr.bf16.gmra.mrb[0].mxu0 %v1853
        %v2773 = vpop.f32.mrb[0].mxu0
        %v2774 = vadd.f32 %v2661, %v2773
        %v2775 = vpop.f32.mrb[0].mxu0
        %v2776 = vpop.f32.mrb[0].mxu0
        %v2777 = vadd.f32 %v2664, %v2776
        %v2778 = vpop.f32.mrb[0].mxu0
        %2779 = vdwg.mxu0
        %2780 = vmatprep.subr.bf16.mxu0 0
        %2781 = vmatpush1.bf16.msra.mxu0 %v2345
        %2782 = vmatprep.subr.bf16.mxu0 0
        %2783 = vmatpush1.bf16.msra.mxu0 %v2346
        %2784 = vmatprep.subr.bf16.mxu0 0
        %2785 = vmatpush1.bf16.msra.mxu0 %v2347
        %2786 = vmatprep.subr.bf16.mxu0 0
        %2787 = vmatpush1.bf16.msra.mxu0 %v2348
        %2788 = vmatprep.subr.bf16.mxu0 0
        %2789 = vmatpush1.bf16.msra.mxu0 %v2349
        %2790 = vmatprep.subr.bf16.mxu0 0
        %2791 = vmatpush1.bf16.msra.mxu0 %v2350
        %2792 = vmatprep.subr.bf16.mxu0 0
        %2793 = vmatpush1.bf16.msra.mxu0 %v2351
        %2794 = vmatprep.subr.bf16.mxu0 0
        %2795 = vmatpush1.bf16.msra.mxu0 %v2352
        %2796 = vmatprep.subr.bf16.mxu0 0
        %2797 = vmatpush1.bf16.msra.mxu0 %v2353
        %2798 = vmatprep.subr.bf16.mxu0 0
        %2799 = vmatpush1.bf16.msra.mxu0 %v2354
        %2800 = vmatprep.subr.bf16.mxu0 0
        %2801 = vmatpush1.bf16.msra.mxu0 %v2355
        %2802 = vmatprep.subr.bf16.mxu0 0
        %2803 = vmatpush1.bf16.msra.mxu0 %v2356
        %2804 = vmatprep.subr.bf16.mxu0 0
        %2805 = vmatpush1.bf16.msra.mxu0 %v2357
        %2806 = vmatprep.subr.bf16.mxu0 0
        %2807 = vmatpush1.bf16.msra.mxu0 %v2358
        %2808 = vmatprep.subr.bf16.mxu0 0
        %2809 = vmatpush1.bf16.msra.mxu0 %v2359
        %2810 = vmatprep.subr.bf16.mxu0 0
        %2811 = vmatpush1.bf16.msra.mxu0 %v2360
        %2812 = vmatprep.mubr.bf16.mxu0 %v1775
        %2813 = vmatmul.mubr.bf16.gmra.mrb[0].mxu0 %v1774
        %v2814 = vpop.f32.mrb[0].mxu0
        %v2815 = vadd.f32 %v2702, %v2814
        %v2816 = vpop.f32.mrb[0].mxu0
        %v2817 = vpop.f32.mrb[0].mxu0
        %v2818 = vadd.f32 %v2705, %v2817
        %v2819 = vpop.f32.mrb[0].mxu0
        %2820 = vmatprep.mubr.bf16.mxu0 %v1784
        %2821 = vmatmul.mubr.bf16.gmra.mrb[0].mxu0 %v1783
        %v2822 = vpop.f32.mrb[0].mxu0
        %v2823 = vadd.f32 %v2710, %v2822
        %v2824 = vpop.f32.mrb[0].mxu0
        %v2825 = vpop.f32.mrb[0].mxu0
        %v2826 = vadd.f32 %v2713, %v2825
        %v2827 = vpop.f32.mrb[0].mxu0
        %2828 = vmatprep.mubr.bf16.mxu0 %v1793
        %2829 = vmatmul.mubr.bf16.gmra.mrb[0].mxu0 %v1792
        %v2830 = vpop.f32.mrb[0].mxu0
        %v2831 = vadd.f32 %v2718, %v2830
        %v2832 = vpop.f32.mrb[0].mxu0
        %v2833 = vpop.f32.mrb[0].mxu0
        %v2834 = vadd.f32 %v2721, %v2833
        %v2835 = vpop.f32.mrb[0].mxu0
        %2836 = vmatprep.mubr.bf16.mxu0 %v1802
        %2837 = vmatmul.mubr.bf16.gmra.mrb[0].mxu0 %v1801
        %v2838 = vpop.f32.mrb[0].mxu0
        %v2839 = vadd.f32 %v2726, %v2838
        %v2840 = vpop.f32.mrb[0].mxu0
        %v2841 = vpop.f32.mrb[0].mxu0
        %v2842 = vadd.f32 %v2729, %v2841
        %v2843 = vpop.f32.mrb[0].mxu0
        %2844 = vmatprep.mubr.bf16.mxu0 %v1811
        %2845 = vmatmul.mubr.bf16.gmra.mrb[0].mxu0 %v1810
        %v2846 = vpop.f32.mrb[0].mxu0
        %v2847 = vadd.f32 %v2734, %v2846
        %v2848 = vpop.f32.mrb[0].mxu0
        %v2849 = vpop.f32.mrb[0].mxu0
        %v2850 = vadd.f32 %v2737, %v2849
        %v2851 = vpop.f32.mrb[0].mxu0
        %2852 = vmatprep.mubr.bf16.mxu0 %v1820
        %2853 = vmatmul.mubr.bf16.gmra.mrb[0].mxu0 %v1819
        %v2854 = vpop.f32.mrb[0].mxu0
        %v2855 = vadd.f32 %v2742, %v2854
        %v2856 = vpop.f32.mrb[0].mxu0
        %v2857 = vpop.f32.mrb[0].mxu0
        %v2858 = vadd.f32 %v2745, %v2857
        %v2859 = vpop.f32.mrb[0].mxu0
        %2860 = vmatprep.mubr.bf16.mxu0 %v1829
        %2861 = vmatmul.mubr.bf16.gmra.mrb[0].mxu0 %v1828
        %v2862 = vpop.f32.mrb[0].mxu0
        %v2863 = vadd.f32 %v2750, %v2862
        %v2864 = vpop.f32.mrb[0].mxu0
        %v2865 = vpop.f32.mrb[0].mxu0
        %v2866 = vadd.f32 %v2753, %v2865
        %v2867 = vpop.f32.mrb[0].mxu0
        %2868 = vmatprep.mubr.bf16.mxu0 %v1838
        %2869 = vmatmul.mubr.bf16.gmra.mrb[0].mxu0 %v1837
        %v2870 = vpop.f32.mrb[0].mxu0
        %v2871 = vadd.f32 %v2758, %v2870
        %v2872 = vpop.f32.mrb[0].mxu0
        %v2873 = vpop.f32.mrb[0].mxu0
        %v2874 = vadd.f32 %v2761, %v2873
        %v2875 = vpop.f32.mrb[0].mxu0
        %2876 = vmatprep.mubr.bf16.mxu0 %v1847
        %2877 = vmatmul.mubr.bf16.gmra.mrb[0].mxu0 %v1846
        %v2878 = vpop.f32.mrb[0].mxu0
        %v2879 = vadd.f32 %v2766, %v2878
        %v2880 = vpop.f32.mrb[0].mxu0
        %v2881 = vpop.f32.mrb[0].mxu0
        %v2882 = vadd.f32 %v2769, %v2881
        %v2883 = vpop.f32.mrb[0].mxu0
        %2884 = vmatprep.mubr.bf16.mxu0 %v1856
        %2885 = vmatmul.mubr.bf16.gmra.mrb[0].mxu0 %v1855
        %v2886 = vpop.f32.mrb[0].mxu0
        %v2887 = vadd.f32 %v2774, %v2886
        %v2888 = vpop.f32.mrb[0].mxu0
        %v2889 = vpop.f32.mrb[0].mxu0
        %v2890 = vadd.f32 %v2777, %v2889
        %v2891 = vpop.f32.mrb[0].mxu0
        %2892 = vdwg.mxu0
        %2893 = vmatprep.subr.bf16.mxu0 0
        %2894 = vmatpush1.bf16.msra.mxu0 %v2361
        %2895 = vmatprep.subr.bf16.mxu0 0
        %2896 = vmatpush1.bf16.msra.mxu0 %v2362
        %2897 = vmatprep.subr.bf16.mxu0 0
        %2898 = vmatpush1.bf16.msra.mxu0 %v2363
        %2899 = vmatprep.subr.bf16.mxu0 0
        %2900 = vmatpush1.bf16.msra.mxu0 %v2364
        %2901 = vmatprep.subr.bf16.mxu0 0
        %2902 = vmatpush1.bf16.msra.mxu0 %v2365
        %2903 = vmatprep.subr.bf16.mxu0 0
        %2904 = vmatpush1.bf16.msra.mxu0 %v2366
        %2905 = vmatprep.subr.bf16.mxu0 0
        %2906 = vmatpush1.bf16.msra.mxu0 %v2367
        %2907 = vmatprep.subr.bf16.mxu0 0
        %2908 = vmatpush1.bf16.msra.mxu0 %v2368
        %2909 = vmatprep.subr.bf16.mxu0 0
        %2910 = vmatpush1.bf16.msra.mxu0 0
        %2911 = vmatprep.subr.bf16.mxu0 0
        %2912 = vmatpush1.bf16.msra.mxu0 0
        %2913 = vmatprep.subr.bf16.mxu0 0
        %2914 = vmatpush1.bf16.msra.mxu0 0
        %2915 = vmatprep.subr.bf16.mxu0 0
        %2916 = vmatpush1.bf16.msra.mxu0 0
        %2917 = vmatprep.subr.bf16.mxu0 0
        %2918 = vmatpush1.bf16.msra.mxu0 0
        %2919 = vmatprep.subr.bf16.mxu0 0
        %2920 = vmatpush1.bf16.msra.mxu0 0
        %2921 = vmatprep.subr.bf16.mxu0 0
        %2922 = vmatpush1.bf16.msra.mxu0 0
        %2923 = vmatprep.subr.bf16.mxu0 0
        %2924 = vmatpush1.bf16.msra.mxu0 0
        %2925 = vmatprep.mubr.bf16.mxu0 0
        %2926 = vmatmul.mubr.bf16.gmra.mrb[0].mxu0 %v1776
        %v2927 = vpop.f32.mrb[0].mxu0
        %v2928 = vadd.f32 %v2815, %v2927
        %v2929 = vpop.f32.mrb[0].mxu0
        %v2930 = vpop.f32.mrb[0].mxu0
        %v2931 = vadd.f32 %v2818, %v2930
        %v2932 = vpop.f32.mrb[0].mxu0
        %2933 = vmatprep.mubr.bf16.mxu0 0
        %2934 = vmatmul.mubr.bf16.gmra.mrb[0].mxu0 %v1785
        %v2935 = vpop.f32.mrb[0].mxu0
        %v2936 = vadd.f32 %v2823, %v2935
        %v2937 = vpop.f32.mrb[0].mxu0
        %v2938 = vpop.f32.mrb[0].mxu0
        %v2939 = vadd.f32 %v2826, %v2938
        %v2940 = vpop.f32.mrb[0].mxu0
        %2941 = vmatprep.mubr.bf16.mxu0 0
        %2942 = vmatmul.mubr.bf16.gmra.mrb[0].mxu0 %v1794
        %v2943 = vpop.f32.mrb[0].mxu0
        %v2944 = vadd.f32 %v2831, %v2943
        %v2945 = vpop.f32.mrb[0].mxu0
        %v2946 = vpop.f32.mrb[0].mxu0
        %v2947 = vadd.f32 %v2834, %v2946
        %v2948 = vpop.f32.mrb[0].mxu0
        %2949 = vmatprep.mubr.bf16.mxu0 0
        %2950 = vmatmul.mubr.bf16.gmra.mrb[0].mxu0 %v1803
        %v2951 = vpop.f32.mrb[0].mxu0
        %v2952 = vadd.f32 %v2839, %v2951
        %v2953 = vpop.f32.mrb[0].mxu0
        %v2954 = vpop.f32.mrb[0].mxu0
        %v2955 = vadd.f32 %v2842, %v2954
        %v2956 = vpop.f32.mrb[0].mxu0
        %2957 = vmatprep.mubr.bf16.mxu0 0
        %2958 = vmatmul.mubr.bf16.gmra.mrb[0].mxu0 %v1812
        %v2959 = vpop.f32.mrb[0].mxu0
        %v2960 = vadd.f32 %v2847, %v2959
        %v2961 = vpop.f32.mrb[0].mxu0
        %v2962 = vpop.f32.mrb[0].mxu0
        %v2963 = vadd.f32 %v2850, %v2962
        %v2964 = vpop.f32.mrb[0].mxu0
        %2965 = vmatprep.mubr.bf16.mxu0 0
        %2966 = vmatmul.mubr.bf16.gmra.mrb[0].mxu0 %v1821
        %v2967 = vpop.f32.mrb[0].mxu0
        %v2968 = vadd.f32 %v2855, %v2967
        %v2969 = vpop.f32.mrb[0].mxu0
        %v2970 = vpop.f32.mrb[0].mxu0
        %v2971 = vadd.f32 %v2858, %v2970
        %v2972 = vpop.f32.mrb[0].mxu0
        %2973 = vmatprep.mubr.bf16.mxu0 0
        %2974 = vmatmul.mubr.bf16.gmra.mrb[0].mxu0 %v1830
        %v2975 = vpop.f32.mrb[0].mxu0
        %v2976 = vadd.f32 %v2863, %v2975
        %v2977 = vpop.f32.mrb[0].mxu0
        %v2978 = vpop.f32.mrb[0].mxu0
        %v2979 = vadd.f32 %v2866, %v2978
        %v2980 = vpop.f32.mrb[0].mxu0
        %2981 = vmatprep.mubr.bf16.mxu0 0
        %2982 = vmatmul.mubr.bf16.gmra.mrb[0].mxu0 %v1839
        %v2983 = vpop.f32.mrb[0].mxu0
        %v2984 = vadd.f32 %v2871, %v2983
        %v2985 = vpop.f32.mrb[0].mxu0
        %v2986 = vpop.f32.mrb[0].mxu0
        %v2987 = vadd.f32 %v2874, %v2986
        %v2988 = vpop.f32.mrb[0].mxu0
        %2989 = vmatprep.mubr.bf16.mxu0 0
        %2990 = vmatmul.mubr.bf16.gmra.mrb[0].mxu0 %v1848
        %v2991 = vpop.f32.mrb[0].mxu0
        %v2992 = vadd.f32 %v2879, %v2991
        %v2993 = vpop.f32.mrb[0].mxu0
        %v2994 = vpop.f32.mrb[0].mxu0
        %v2995 = vadd.f32 %v2882, %v2994
        %v2996 = vpop.f32.mrb[0].mxu0
        %2997 = vmatprep.mubr.bf16.mxu0 0
        %2998 = vmatmul.mubr.bf16.gmra.mrb[0].mxu0 %v1857
        %v2999 = vpop.f32.mrb[0].mxu0
        %v3000 = vadd.f32 %v2887, %v2999
        %v3001 = vpop.f32.mrb[0].mxu0
        %v3002 = vpop.f32.mrb[0].mxu0
        %v3003 = vadd.f32 %v2890, %v3002
        %v3004 = vpop.f32.mrb[0].mxu0
        %3005 = vdwg.mxu0
        %v3006 = vmax.f32 %v2928, 0.0
        %v3007 = vmax.f32 %v2931, 0.0
        %v3008 = vmax.f32 %v2936, 0.0
        %v3009 = vmax.f32 %v2939, 0.0
        %v3010 = vmax.f32 %v2944, 0.0
        %v3011 = vmax.f32 %v2947, 0.0
        %v3012 = vmax.f32 %v2952, 0.0
        %v3013 = vmax.f32 %v2955, 0.0
        %v3014 = vmax.f32 %v2960, 0.0
        %v3015 = vmax.f32 %v2963, 0.0
        %v3016 = vmax.f32 %v2968, 0.0
        %v3017 = vmax.f32 %v2971, 0.0
        %v3018 = vmax.f32 %v2976, 0.0
        %v3019 = vmax.f32 %v2979, 0.0
        %v3020 = vmax.f32 %v2984, 0.0
        %v3021 = vmax.f32 %v2987, 0.0
        %v3022 = vmax.f32 %v2992, 0.0
        %v3023 = vmax.f32 %v2995, 0.0
        %v3024 = vmax.f32 %v3000, 0.0
        %v3025 = vmax.f32 %v3003, 0.0
        %v3026 = vpack.c.bf16 %v3007, %v3006
        %v3027 = vpack.c.bf16 %v3009, %v3008
        %v3028 = vpack.c.bf16 %v3011, %v3010
        %v3029 = vpack.c.bf16 %v3013, %v3012
        %v3030 = vpack.c.bf16 %v3015, %v3014
        %v3031 = vpack.c.bf16 %v3017, %v3016
        %v3032 = vpack.c.bf16 %v3019, %v3018
        %v3033 = vpack.c.bf16 %v3021, %v3020
        %v3034 = vpack.c.bf16 %v3023, %v3022
        %v3035 = vpack.c.bf16 %v3025, %v3024
        %v3046 = vunpack.c.l.b16 %v3026
        %v3047 = vunpack.c.h.b16 %v3026
        %v3048 = vunpack.c.l.b16 %v3027
        %v3049 = vunpack.c.h.b16 %v3027
        %v3050 = vunpack.c.l.b16 %v3028
        %v3051 = vunpack.c.h.b16 %v3028
        %v3052 = vunpack.c.l.b16 %v3029
        %v3053 = vunpack.c.h.b16 %v3029
        %v3054 = vunpack.c.l.b16 %v3030
        %v3055 = vunpack.c.h.b16 %v3030
        %v3056 = vunpack.c.l.b16 %v3031
        %v3057 = vunpack.c.h.b16 %v3031
        %v3058 = vunpack.c.l.b16 %v3032
        %v3059 = vunpack.c.h.b16 %v3032
        %v3060 = vunpack.c.l.b16 %v3033
        %v3061 = vunpack.c.h.b16 %v3033
        %v3062 = vunpack.c.l.b16 %v3034
        %v3063 = vunpack.c.h.b16 %v3034
        %v3064 = vunpack.c.l.b16 %v3035
        %v3065 = vunpack.c.h.b16 %v3035
        %v3066 = vpack.c.b16 %v3046, %v3046
        %v3067 = vpack.c.b16 %v3047, %v3047
        %v3068 = vpack.c.b16 %v3048, %v3048
        %v3069 = vpack.c.b16 %v3049, %v3049
        %v3070 = vpack.c.b16 %v3050, %v3050
        %v3071 = vpack.c.b16 %v3051, %v3051
        %v3072 = vpack.c.b16 %v3052, %v3052
        %v3073 = vpack.c.b16 %v3053, %v3053
        %v3074 = vpack.c.b16 %v3054, %v3054
        %v3075 = vpack.c.b16 %v3055, %v3055
        %v3076 = vpack.c.b16 %v3056, %v3056
        %v3077 = vpack.c.b16 %v3057, %v3057
        %v3078 = vpack.c.b16 %v3058, %v3058
        %v3079 = vpack.c.b16 %v3059, %v3059
        %v3080 = vpack.c.b16 %v3060, %v3060
        %v3081 = vpack.c.b16 %v3061, %v3061
        %v3082 = vpack.c.b16 %v3062, %v3062
        %v3083 = vpack.c.b16 %v3063, %v3063
        %v3084 = vpack.c.b16 %v3064, %v3064
        %v3085 = vpack.c.b16 %v3065, %v3065
        %vm3086 = vsmask.f32 256
        %vm3087 = vsmask.f32 4368
        %vm3088 = vmor %vm3086, %vm3087
        %v3090 = vshrl.u32 %v3066, 16
        %v3092 = vrot.slane %v3090, 7
        %v3093 = vshll.u32 %v3066, 16
        %v3095 = vor.u32 %v3092, %v3093
        %v3096 = vrot.slane %v3092, 4
        %v3098 = vshrl.u32 %v3067, 16
        %v3100 = vrot.slane %v3098, 7
        %v3101 = vshll.u32 %v3067, 16
        %v3103 = vor.u32 %v3100, %v3101
        %v3104 = vsel %vm3088, %v3096, %v3103
        %v3105 = vrot.slane %v3100, 4
        %v3107 = vshrl.u32 %v3068, 16
        %v3109 = vrot.slane %v3107, 7
        %v3110 = vshll.u32 %v3068, 16
        %v3112 = vor.u32 %v3109, %v3110
        %v3113 = vrot.slane %v3109, 4
        %v3115 = vshrl.u32 %v3069, 16
        %v3117 = vrot.slane %v3115, 7
        %v3118 = vshll.u32 %v3069, 16
        %v3120 = vor.u32 %v3117, %v3118
        %v3121 = vsel %vm3088, %v3113, %v3120
        %v3122 = vrot.slane %v3117, 4
        %v3124 = vshrl.u32 %v3070, 16
        %v3126 = vrot.slane %v3124, 7
        %v3127 = vshll.u32 %v3070, 16
        %v3129 = vor.u32 %v3126, %v3127
        %v3130 = vrot.slane %v3126, 4
        %v3132 = vshrl.u32 %v3071, 16
        %v3134 = vrot.slane %v3132, 7
        %v3135 = vshll.u32 %v3071, 16
        %v3137 = vor.u32 %v3134, %v3135
        %v3138 = vsel %vm3088, %v3130, %v3137
        %v3139 = vrot.slane %v3134, 4
        %v3141 = vshrl.u32 %v3072, 16
        %v3143 = vrot.slane %v3141, 7
        %v3144 = vshll.u32 %v3072, 16
        %v3146 = vor.u32 %v3143, %v3144
        %v3147 = vrot.slane %v3143, 4
        %v3149 = vshrl.u32 %v3073, 16
        %v3151 = vrot.slane %v3149, 7
        %v3152 = vshll.u32 %v3073, 16
        %v3154 = vor.u32 %v3151, %v3152
        %v3155 = vsel %vm3088, %v3147, %v3154
        %v3156 = vrot.slane %v3151, 4
        %v3158 = vshrl.u32 %v3074, 16
        %v3160 = vrot.slane %v3158, 7
        %v3161 = vshll.u32 %v3074, 16
        %v3163 = vor.u32 %v3160, %v3161
        %v3164 = vrot.slane %v3160, 4
        %v3166 = vshrl.u32 %v3075, 16
        %v3168 = vrot.slane %v3166, 7
        %v3169 = vshll.u32 %v3075, 16
        %v3171 = vor.u32 %v3168, %v3169
        %v3172 = vsel %vm3088, %v3164, %v3171
        %v3173 = vrot.slane %v3168, 4
        %v3175 = vshrl.u32 %v3076, 16
        %v3177 = vrot.slane %v3175, 7
        %v3178 = vshll.u32 %v3076, 16
        %v3180 = vor.u32 %v3177, %v3178
        %v3181 = vrot.slane %v3177, 4
        %v3183 = vshrl.u32 %v3077, 16
        %v3185 = vrot.slane %v3183, 7
        %v3186 = vshll.u32 %v3077, 16
        %v3188 = vor.u32 %v3185, %v3186
        %v3189 = vsel %vm3088, %v3181, %v3188
        %v3190 = vrot.slane %v3185, 4
        %v3192 = vshrl.u32 %v3078, 16
        %v3194 = vrot.slane %v3192, 7
        %v3195 = vshll.u32 %v3078, 16
        %v3197 = vor.u32 %v3194, %v3195
        %v3198 = vrot.slane %v3194, 4
        %v3200 = vshrl.u32 %v3079, 16
        %v3202 = vrot.slane %v3200, 7
        %v3203 = vshll.u32 %v3079, 16
        %v3205 = vor.u32 %v3202, %v3203
        %v3206 = vsel %vm3088, %v3198, %v3205
        %v3207 = vrot.slane %v3202, 4
        %v3209 = vshrl.u32 %v3080, 16
        %v3211 = vrot.slane %v3209, 7
        %v3212 = vshll.u32 %v3080, 16
        %v3214 = vor.u32 %v3211, %v3212
        %v3215 = vrot.slane %v3211, 4
        %v3217 = vshrl.u32 %v3081, 16
        %v3219 = vrot.slane %v3217, 7
        %v3220 = vshll.u32 %v3081, 16
        %v3222 = vor.u32 %v3219, %v3220
        %v3223 = vsel %vm3088, %v3215, %v3222
        %v3224 = vrot.slane %v3219, 4
        %v3226 = vshrl.u32 %v3082, 16
        %v3228 = vrot.slane %v3226, 7
        %v3229 = vshll.u32 %v3082, 16
        %v3231 = vor.u32 %v3228, %v3229
        %v3232 = vrot.slane %v3228, 4
        %v3234 = vshrl.u32 %v3083, 16
        %v3236 = vrot.slane %v3234, 7
        %v3237 = vshll.u32 %v3083, 16
        %v3239 = vor.u32 %v3236, %v3237
        %v3240 = vsel %vm3088, %v3232, %v3239
        %v3241 = vrot.slane %v3236, 4
        %v3243 = vshrl.u32 %v3084, 16
        %v3245 = vrot.slane %v3243, 7
        %v3246 = vshll.u32 %v3084, 16
        %v3248 = vor.u32 %v3245, %v3246
        %v3249 = vrot.slane %v3245, 4
        %v3251 = vshrl.u32 %v3085, 16
        %v3253 = vrot.slane %v3251, 7
        %v3254 = vshll.u32 %v3085, 16
        %v3256 = vor.u32 %v3253, %v3254
        %v3257 = vsel %vm3088, %v3249, %v3256
        %v3258 = vrot.slane %v3253, 4
        %vm3289 = vcmask 1043456
        %vm3290 = vsmask.f32 7938
        %vm3291 = vmand %vm3289, %vm3290
        %v3292 = vld [vmem:[#allocation3] sm:$0xf]
        %v3293 = vsel %vm3291, %v3095, %v3292
        %3294 = vst [vmem:[#allocation3] sm:$0xf] %v3293
        %3295 = vst [vmem:[#allocation3 + $0x4] sm:$0xf] %v3104
        %vm3296 = vcmask 1040384
        %vm3297 = vmand %vm3296, %vm3086
        %v3298 = vld [vmem:[#allocation3 + $0x8] sm:$0x1]
        %v3299 = vsel %vm3297, %v3105, %v3298
        %3300 = vst [vmem:[#allocation3 + $0x8] sm:$0x1] %v3299
        %v3301 = vld [vmem:[#allocation3 + $0xc] sm:$0xf]
        %v3302 = vsel %vm3291, %v3112, %v3301
        %3303 = vst [vmem:[#allocation3 + $0xc] sm:$0xf] %v3302
        %3304 = vst [vmem:[#allocation3 + $0x10] sm:$0xf] %v3121
        %v3305 = vld [vmem:[#allocation3 + $0x14] sm:$0x1]
        %v3306 = vsel %vm3297, %v3122, %v3305
        %3307 = vst [vmem:[#allocation3 + $0x14] sm:$0x1] %v3306
        %v3308 = vld [vmem:[#allocation3 + $0x18] sm:$0xf]
        %v3309 = vsel %vm3291, %v3129, %v3308
        %3310 = vst [vmem:[#allocation3 + $0x18] sm:$0xf] %v3309
        %3311 = vst [vmem:[#allocation3 + $0x1c] sm:$0xf] %v3138
        %v3312 = vld [vmem:[#allocation3 + $0x20] sm:$0x1]
        %v3313 = vsel %vm3297, %v3139, %v3312
        %3314 = vst [vmem:[#allocation3 + $0x20] sm:$0x1] %v3313
        %v3315 = vld [vmem:[#allocation3 + $0x24] sm:$0xf]
        %v3316 = vsel %vm3291, %v3146, %v3315
        %3317 = vst [vmem:[#allocation3 + $0x24] sm:$0xf] %v3316
        %3318 = vst [vmem:[#allocation3 + $0x28] sm:$0xf] %v3155
        %v3319 = vld [vmem:[#allocation3 + $0x2c] sm:$0x1]
        %v3320 = vsel %vm3297, %v3156, %v3319
        %3321 = vst [vmem:[#allocation3 + $0x2c] sm:$0x1] %v3320
        %v3322 = vld [vmem:[#allocation3 + $0x30] sm:$0xf]
        %v3323 = vsel %vm3291, %v3163, %v3322
        %3324 = vst [vmem:[#allocation3 + $0x30] sm:$0xf] %v3323
        %3325 = vst [vmem:[#allocation3 + $0x34] sm:$0xf] %v3172
        %v3326 = vld [vmem:[#allocation3 + $0x38] sm:$0x1]
        %v3327 = vsel %vm3297, %v3173, %v3326
        %3328 = vst [vmem:[#allocation3 + $0x38] sm:$0x1] %v3327
        %v3329 = vld [vmem:[#allocation3 + $0x3c] sm:$0xf]
        %v3330 = vsel %vm3291, %v3180, %v3329
        %3331 = vst [vmem:[#allocation3 + $0x3c] sm:$0xf] %v3330
        %3332 = vst [vmem:[#allocation3 + $0x40] sm:$0xf] %v3189
        %v3333 = vld [vmem:[#allocation3 + $0x44] sm:$0x1]
        %v3334 = vsel %vm3297, %v3190, %v3333
        %3335 = vst [vmem:[#allocation3 + $0x44] sm:$0x1] %v3334
        %v3336 = vld [vmem:[#allocation3 + $0x48] sm:$0xf]
        %v3337 = vsel %vm3291, %v3197, %v3336
        %3338 = vst [vmem:[#allocation3 + $0x48] sm:$0xf] %v3337
        %3339 = vst [vmem:[#allocation3 + $0x4c] sm:$0xf] %v3206
        %v3340 = vld [vmem:[#allocation3 + $0x50] sm:$0x1]
        %v3341 = vsel %vm3297, %v3207, %v3340
        %3342 = vst [vmem:[#allocation3 + $0x50] sm:$0x1] %v3341
        %v3343 = vld [vmem:[#allocation3 + $0x54] sm:$0xf]
        %v3344 = vsel %vm3291, %v3214, %v3343
        %3345 = vst [vmem:[#allocation3 + $0x54] sm:$0xf] %v3344
        %3346 = vst [vmem:[#allocation3 + $0x58] sm:$0xf] %v3223
        %v3347 = vld [vmem:[#allocation3 + $0x5c] sm:$0x1]
        %v3348 = vsel %vm3297, %v3224, %v3347
        %3349 = vst [vmem:[#allocation3 + $0x5c] sm:$0x1] %v3348
        %v3350 = vld [vmem:[#allocation3 + $0x60] sm:$0xf]
        %v3351 = vsel %vm3291, %v3231, %v3350
        %3352 = vst [vmem:[#allocation3 + $0x60] sm:$0xf] %v3351
        %3353 = vst [vmem:[#allocation3 + $0x64] sm:$0xf] %v3240
        %v3354 = vld [vmem:[#allocation3 + $0x68] sm:$0x1]
        %v3355 = vsel %vm3297, %v3241, %v3354
        %3356 = vst [vmem:[#allocation3 + $0x68] sm:$0x1] %v3355
        %v3357 = vld [vmem:[#allocation3 + $0x6c] sm:$0xf]
        %v3358 = vsel %vm3291, %v3248, %v3357
        %3359 = vst [vmem:[#allocation3 + $0x6c] sm:$0xf] %v3358
        %3360 = vst [vmem:[#allocation3 + $0x70] sm:$0xf] %v3257
        %v3361 = vld [vmem:[#allocation3 + $0x74] sm:$0x1]
        %v3362 = vsel %vm3297, %v3258, %v3361
        %3363 = vst [vmem:[#allocation3 + $0x74] sm:$0x1] %v3362
        %v3364 = vld [vmem:[#allocation3] sm:$0x1]
        %v3365 = vsel %vm3297, 0, %v3364
        %3366 = vst [vmem:[#allocation3] sm:$0x1] %v3365
        %v3367 = vld [vmem:[#allocation3 + $0xc] sm:$0x1]
        %v3368 = vsel %vm3297, 0, %v3367
        %3369 = vst [vmem:[#allocation3 + $0xc] sm:$0x1] %v3368
        %v3370 = vld [vmem:[#allocation3 + $0x18] sm:$0x1]
        %v3371 = vsel %vm3297, 0, %v3370
        %3372 = vst [vmem:[#allocation3 + $0x18] sm:$0x1] %v3371
        %v3373 = vld [vmem:[#allocation3 + $0x24] sm:$0x1]
        %v3374 = vsel %vm3297, 0, %v3373
        %3375 = vst [vmem:[#allocation3 + $0x24] sm:$0x1] %v3374
        %v3376 = vld [vmem:[#allocation3 + $0x30] sm:$0x1]
        %v3377 = vsel %vm3297, 0, %v3376
        %3378 = vst [vmem:[#allocation3 + $0x30] sm:$0x1] %v3377
        %v3379 = vld [vmem:[#allocation3 + $0x3c] sm:$0x1]
        %v3380 = vsel %vm3297, 0, %v3379
        %3381 = vst [vmem:[#allocation3 + $0x3c] sm:$0x1] %v3380
        %v3382 = vld [vmem:[#allocation3 + $0x48] sm:$0x1]
        %v3383 = vsel %vm3297, 0, %v3382
        %3384 = vst [vmem:[#allocation3 + $0x48] sm:$0x1] %v3383
        %v3385 = vld [vmem:[#allocation3 + $0x54] sm:$0x1]
        %v3386 = vsel %vm3297, 0, %v3385
        %3387 = vst [vmem:[#allocation3 + $0x54] sm:$0x1] %v3386
        %v3388 = vld [vmem:[#allocation3 + $0x60] sm:$0x1]
        %v3389 = vsel %vm3297, 0, %v3388
        %3390 = vst [vmem:[#allocation3 + $0x60] sm:$0x1] %v3389
        %v3391 = vld [vmem:[#allocation3 + $0x6c] sm:$0x1]
        %v3392 = vsel %vm3297, 0, %v3391
        %3393 = vst [vmem:[#allocation3 + $0x6c] sm:$0x1] %v3392
        %vm3394 = vmand %vm3296, %vm3290
        %v3395 = vld [vmem:[#allocation3 + $0x8] sm:$0x1]
        %v3396 = vsel %vm3394, 0, %v3395
        %3397 = vst [vmem:[#allocation3 + $0x8] sm:$0x1] %v3396
        %v3398 = vld [vmem:[#allocation3 + $0x14] sm:$0x1]
        %v3399 = vsel %vm3394, 0, %v3398
        %3400 = vst [vmem:[#allocation3 + $0x14] sm:$0x1] %v3399
        %v3401 = vld [vmem:[#allocation3 + $0x20] sm:$0x1]
        %v3402 = vsel %vm3394, 0, %v3401
        %3403 = vst [vmem:[#allocation3 + $0x20] sm:$0x1] %v3402
        %v3404 = vld [vmem:[#allocation3 + $0x2c] sm:$0x1]
        %v3405 = vsel %vm3394, 0, %v3404
        %3406 = vst [vmem:[#allocation3 + $0x2c] sm:$0x1] %v3405
        %v3407 = vld [vmem:[#allocation3 + $0x38] sm:$0x1]
        %v3408 = vsel %vm3394, 0, %v3407
        %3409 = vst [vmem:[#allocation3 + $0x38] sm:$0x1] %v3408
        %v3410 = vld [vmem:[#allocation3 + $0x44] sm:$0x1]
        %v3411 = vsel %vm3394, 0, %v3410
        %3412 = vst [vmem:[#allocation3 + $0x44] sm:$0x1] %v3411
        %v3413 = vld [vmem:[#allocation3 + $0x50] sm:$0x1]
        %v3414 = vsel %vm3394, 0, %v3413
        %3415 = vst [vmem:[#allocation3 + $0x50] sm:$0x1] %v3414
        %v3416 = vld [vmem:[#allocation3 + $0x5c] sm:$0x1]
        %v3417 = vsel %vm3394, 0, %v3416
        %3418 = vst [vmem:[#allocation3 + $0x5c] sm:$0x1] %v3417
        %v3419 = vld [vmem:[#allocation3 + $0x68] sm:$0x1]
        %v3420 = vsel %vm3394, 0, %v3419
        %3421 = vst [vmem:[#allocation3 + $0x68] sm:$0x1] %v3420
        %v3422 = vld [vmem:[#allocation3 + $0x74] sm:$0x1]
        %v3423 = vsel %vm3394, 0, %v3422
        %3424 = vst [vmem:[#allocation3 + $0x74] sm:$0x1] %v3423
        %p3425 = scmp.eq.s32.totalorder %s25, 0
        // Predicated region
        $region45: #{tpu_custom_call.1} parent=39 // pred_check
          %p3426 = pneg %p3425
        $region46: #{tpu_custom_call.1} parent=39 // pred_check_branch
          %3428 = sbr.rel (%p3426) target = $region48
        $region47: #{tpu_custom_call.1} parent=39 // pred_region
          %3429 = vst [vmem:[#allocation3] sm:$0xf] 0
          %3430 = vst [vmem:[#allocation3 + $0x4] sm:$0xf] 0
          %3431 = vst [vmem:[#allocation3 + $0x8] sm:$0x1] 0
        $region48: #{tpu_custom_call.1} parent=39 // pred_fallthru
          _
        %p3432 = scmp.eq.s32.totalorder %s25, 1
        // Predicated region
        $region49: #{tpu_custom_call.1} parent=39 // pred_check
          %p3433 = pneg %p3432
        $region50: #{tpu_custom_call.1} parent=39 // pred_check_branch
          %3435 = sbr.rel (%p3433) target = $region52
        $region51: #{tpu_custom_call.1} parent=39 // pred_region
          %s3436 = scalar_lea.vmem [#allocation3], 108
          %3437 = vst [vmem:[%s3436] sm:$0xf] 0
          %3438 = vst [vmem:[%s3436 + $0x4] sm:$0xf] 0
          %3439 = vst [vmem:[%s3436 + $0x8] sm:$0x1] 0
        $region52: #{tpu_custom_call.1} parent=39 // pred_fallthru
          _
        %v3440 = vld [vmem:[#allocation3] sm:$0xf]
        %v3441 = vld [vmem:[#allocation3 + $0x4] sm:$0xf]
        %v3442 = vld [vmem:[#allocation3 + $0xc] sm:$0xf]
        %v3443 = vld [vmem:[#allocation3 + $0x10] sm:$0xf]
        %v3444 = vld [vmem:[#allocation3 + $0x18] sm:$0xf]
        %v3445 = vld [vmem:[#allocation3 + $0x1c] sm:$0xf]
        %v3446 = vld [vmem:[#allocation3 + $0x24] sm:$0xf]
        %v3447 = vld [vmem:[#allocation3 + $0x28] sm:$0xf]
        %v3448 = vld [vmem:[#allocation3 + $0x30] sm:$0xf]
        %v3449 = vld [vmem:[#allocation3 + $0x34] sm:$0xf]
        %v3450 = vld [vmem:[#allocation3 + $0x3c] sm:$0xf]
        %v3451 = vld [vmem:[#allocation3 + $0x40] sm:$0xf]
        %v3452 = vld [vmem:[#allocation3 + $0x48] sm:$0xf]
        %v3453 = vld [vmem:[#allocation3 + $0x4c] sm:$0xf]
        %v3454 = vld [vmem:[#allocation3 + $0x54] sm:$0xf]
        %v3455 = vld [vmem:[#allocation3 + $0x58] sm:$0xf]
        %v3472 = vunpack.c.l.b16 %v3440
        %v3473 = vunpack.c.l.b16 %v3441
        %v3474 = vunpack.c.l.b16 %v3442
        %v3475 = vunpack.c.l.b16 %v3443
        %v3476 = vunpack.c.l.b16 %v3444
        %v3477 = vunpack.c.l.b16 %v3445
        %v3478 = vunpack.c.l.b16 %v3446
        %v3479 = vunpack.c.l.b16 %v3447
        %v3480 = vunpack.c.l.b16 %v3448
        %v3481 = vunpack.c.l.b16 %v3449
        %v3482 = vunpack.c.l.b16 %v3450
        %v3483 = vunpack.c.l.b16 %v3451
        %v3484 = vunpack.c.l.b16 %v3452
        %v3485 = vunpack.c.l.b16 %v3453
        %v3486 = vunpack.c.l.b16 %v3454
        %v3487 = vunpack.c.l.b16 %v3455
        %v3488 = vpack.c.b16 %v3473, %v3472
        %v3489 = vpack.c.b16 %v3475, %v3474
        %v3490 = vpack.c.b16 %v3477, %v3476
        %v3491 = vpack.c.b16 %v3479, %v3478
        %v3492 = vpack.c.b16 %v3481, %v3480
        %v3493 = vpack.c.b16 %v3483, %v3482
        %v3494 = vpack.c.b16 %v3485, %v3484
        %v3495 = vpack.c.b16 %v3487, %v3486
        %3504 = vst [vmem:[#allocation4] sm:$0xff] %v3488
        %3505 = vst [vmem:[#allocation4 + $0x50] sm:$0xff] %v3489
        %3506 = vst [vmem:[#allocation4 + $0xa0] sm:$0xff] %v3490
        %3507 = vst [vmem:[#allocation4 + $0xf0] sm:$0xff] %v3491
        %3508 = vst [vmem:[#allocation4 + $0x140] sm:$0xff] %v3492
        %3509 = vst [vmem:[#allocation4 + $0x190] sm:$0xff] %v3493
        %3510 = vst [vmem:[#allocation4 + $0x1e0] sm:$0xff] %v3494
        %3511 = vst [vmem:[#allocation4 + $0x230] sm:$0xff] %v3495
        %v3512 = vld [vmem:[#allocation3] sm:$0xf]
        %v3513 = vld [vmem:[#allocation3 + $0x4] sm:$0xf]
        %v3514 = vld [vmem:[#allocation3 + $0x8] sm:$0x1]
        %v3515 = vld [vmem:[#allocation3 + $0xc] sm:$0xf]
        %v3516 = vld [vmem:[#allocation3 + $0x10] sm:$0xf]
        %v3517 = vld [vmem:[#allocation3 + $0x14] sm:$0x1]
        %v3518 = vld [vmem:[#allocation3 + $0x18] sm:$0xf]
        %v3519 = vld [vmem:[#allocation3 + $0x1c] sm:$0xf]
        %v3520 = vld [vmem:[#allocation3 + $0x20] sm:$0x1]
        %v3521 = vld [vmem:[#allocation3 + $0x24] sm:$0xf]
        %v3522 = vld [vmem:[#allocation3 + $0x28] sm:$0xf]
        %v3523 = vld [vmem:[#allocation3 + $0x2c] sm:$0x1]
        %v3524 = vld [vmem:[#allocation3 + $0x30] sm:$0xf]
        %v3525 = vld [vmem:[#allocation3 + $0x34] sm:$0xf]
        %v3526 = vld [vmem:[#allocation3 + $0x38] sm:$0x1]
        %v3527 = vld [vmem:[#allocation3 + $0x3c] sm:$0xf]
        %v3528 = vld [vmem:[#allocation3 + $0x40] sm:$0xf]
        %v3529 = vld [vmem:[#allocation3 + $0x44] sm:$0x1]
        %v3530 = vld [vmem:[#allocation3 + $0x48] sm:$0xf]
        %v3531 = vld [vmem:[#allocation3 + $0x4c] sm:$0xf]
        %v3532 = vld [vmem:[#allocation3 + $0x50] sm:$0x1]
        %v3533 = vld [vmem:[#allocation3 + $0x54] sm:$0xf]
        %v3534 = vld [vmem:[#allocation3 + $0x58] sm:$0xf]
        %v3535 = vld [vmem:[#allocation3 + $0x5c] sm:$0x1]
        %v3560 = vunpack.c.l.b16 %v3512
        %v3561 = vunpack.c.l.b16 %v3513
        %v3562 = vunpack.c.l.b16 %v3514
        %v3563 = vunpack.c.l.b16 %v3515
        %v3564 = vunpack.c.l.b16 %v3516
        %v3565 = vunpack.c.l.b16 %v3517
        %v3566 = vunpack.c.l.b16 %v3518
        %v3567 = vunpack.c.l.b16 %v3519
        %v3568 = vunpack.c.l.b16 %v3520
        %v3569 = vunpack.c.l.b16 %v3521
        %v3570 = vunpack.c.l.b16 %v3522
        %v3571 = vunpack.c.l.b16 %v3523
        %v3572 = vunpack.c.l.b16 %v3524
        %v3573 = vunpack.c.l.b16 %v3525
        %v3574 = vunpack.c.l.b16 %v3526
        %v3575 = vunpack.c.l.b16 %v3527
        %v3576 = vunpack.c.l.b16 %v3528
        %v3577 = vunpack.c.l.b16 %v3529
        %v3578 = vunpack.c.l.b16 %v3530
        %v3579 = vunpack.c.l.b16 %v3531
        %v3580 = vunpack.c.l.b16 %v3532
        %v3581 = vunpack.c.l.b16 %v3533
        %v3582 = vunpack.c.l.b16 %v3534
        %v3583 = vunpack.c.l.b16 %v3535
        %v3584 = vpack.c.b16 %v3561, %v3560
        %v3585 = vpack.c.b16 %v3562, %v3562
        %v3586 = vpack.c.b16 %v3564, %v3563
        %v3587 = vpack.c.b16 %v3565, %v3565
        %v3588 = vpack.c.b16 %v3567, %v3566
        %v3589 = vpack.c.b16 %v3568, %v3568
        %v3590 = vpack.c.b16 %v3570, %v3569
        %v3591 = vpack.c.b16 %v3571, %v3571
        %v3592 = vpack.c.b16 %v3573, %v3572
        %v3593 = vpack.c.b16 %v3574, %v3574
        %v3594 = vpack.c.b16 %v3576, %v3575
        %v3595 = vpack.c.b16 %v3577, %v3577
        %v3596 = vpack.c.b16 %v3579, %v3578
        %v3597 = vpack.c.b16 %v3580, %v3580
        %v3598 = vpack.c.b16 %v3582, %v3581
        %v3599 = vpack.c.b16 %v3583, %v3583
        %v3601 = vshrl.u32 %v3584, 16
        %v3603 = vshll.u32 %v3584, 16
        %v3605 = vrot.slane %v3603, 1
        %v3606 = vor.u32 %v3601, %v3605
        %v3608 = vshll.u32 %v3585, 16
        %v3610 = vrot.slane %v3608, 1
        %v3611 = vsel %vm458, %v3606, %v3610
        %v3613 = vshrl.u32 %v3586, 16
        %v3615 = vshll.u32 %v3586, 16
        %v3617 = vrot.slane %v3615, 1
        %v3618 = vor.u32 %v3613, %v3617
        %v3620 = vshll.u32 %v3587, 16
        %v3622 = vrot.slane %v3620, 1
        %v3623 = vsel %vm458, %v3618, %v3622
        %v3625 = vshrl.u32 %v3588, 16
        %v3627 = vshll.u32 %v3588, 16
        %v3629 = vrot.slane %v3627, 1
        %v3630 = vor.u32 %v3625, %v3629
        %v3632 = vshll.u32 %v3589, 16
        %v3634 = vrot.slane %v3632, 1
        %v3635 = vsel %vm458, %v3630, %v3634
        %v3637 = vshrl.u32 %v3590, 16
        %v3639 = vshll.u32 %v3590, 16
        %v3641 = vrot.slane %v3639, 1
        %v3642 = vor.u32 %v3637, %v3641
        %v3644 = vshll.u32 %v3591, 16
        %v3646 = vrot.slane %v3644, 1
        %v3647 = vsel %vm458, %v3642, %v3646
        %v3649 = vshrl.u32 %v3592, 16
        %v3651 = vshll.u32 %v3592, 16
        %v3653 = vrot.slane %v3651, 1
        %v3654 = vor.u32 %v3649, %v3653
        %v3656 = vshll.u32 %v3593, 16
        %v3658 = vrot.slane %v3656, 1
        %v3659 = vsel %vm458, %v3654, %v3658
        %v3661 = vshrl.u32 %v3594, 16
        %v3663 = vshll.u32 %v3594, 16
        %v3665 = vrot.slane %v3663, 1
        %v3666 = vor.u32 %v3661, %v3665
        %v3668 = vshll.u32 %v3595, 16
        %v3670 = vrot.slane %v3668, 1
        %v3671 = vsel %vm458, %v3666, %v3670
        %v3673 = vshrl.u32 %v3596, 16
        %v3675 = vshll.u32 %v3596, 16
        %v3677 = vrot.slane %v3675, 1
        %v3678 = vor.u32 %v3673, %v3677
        %v3680 = vshll.u32 %v3597, 16
        %v3682 = vrot.slane %v3680, 1
        %v3683 = vsel %vm458, %v3678, %v3682
        %v3685 = vshrl.u32 %v3598, 16
        %v3687 = vshll.u32 %v3598, 16
        %v3689 = vrot.slane %v3687, 1
        %v3690 = vor.u32 %v3685, %v3689
        %v3692 = vshll.u32 %v3599, 16
        %v3694 = vrot.slane %v3692, 1
        %v3695 = vsel %vm458, %v3690, %v3694
        %3704 = vst [vmem:[#allocation4 + $0x8] sm:$0xff] %v3611
        %3705 = vst [vmem:[#allocation4 + $0x58] sm:$0xff] %v3623
        %3706 = vst [vmem:[#allocation4 + $0xa8] sm:$0xff] %v3635
        %3707 = vst [vmem:[#allocation4 + $0xf8] sm:$0xff] %v3647
        %3708 = vst [vmem:[#allocation4 + $0x148] sm:$0xff] %v3659
        %3709 = vst [vmem:[#allocation4 + $0x198] sm:$0xff] %v3671
        %3710 = vst [vmem:[#allocation4 + $0x1e8] sm:$0xff] %v3683
        %3711 = vst [vmem:[#allocation4 + $0x238] sm:$0xff] %v3695
        %v3712 = vld [vmem:[#allocation3] sm:$0xe]
        %v3713 = vld [vmem:[#allocation3 + $0x4] sm:$0xf]
        %v3714 = vld [vmem:[#allocation3 + $0x8] sm:$0x1]
        %v3715 = vld [vmem:[#allocation3 + $0xc] sm:$0xe]
        %v3716 = vld [vmem:[#allocation3 + $0x10] sm:$0xf]
        %v3717 = vld [vmem:[#allocation3 + $0x14] sm:$0x1]
        %v3718 = vld [vmem:[#allocation3 + $0x18] sm:$0xe]
        %v3719 = vld [vmem:[#allocation3 + $0x1c] sm:$0xf]
        %v3720 = vld [vmem:[#allocation3 + $0x20] sm:$0x1]
        %v3721 = vld [vmem:[#allocation3 + $0x24] sm:$0xe]
        %v3722 = vld [vmem:[#allocation3 + $0x28] sm:$0xf]
        %v3723 = vld [vmem:[#allocation3 + $0x2c] sm:$0x1]
        %v3724 = vld [vmem:[#allocation3 + $0x30] sm:$0xe]
        %v3725 = vld [vmem:[#allocation3 + $0x34] sm:$0xf]
        %v3726 = vld [vmem:[#allocation3 + $0x38] sm:$0x1]
        %v3727 = vld [vmem:[#allocation3 + $0x3c] sm:$0xe]
        %v3728 = vld [vmem:[#allocation3 + $0x40] sm:$0xf]
        %v3729 = vld [vmem:[#allocation3 + $0x44] sm:$0x1]
        %v3730 = vld [vmem:[#allocation3 + $0x48] sm:$0xe]
        %v3731 = vld [vmem:[#allocation3 + $0x4c] sm:$0xf]
        %v3732 = vld [vmem:[#allocation3 + $0x50] sm:$0x1]
        %v3733 = vld [vmem:[#allocation3 + $0x54] sm:$0xe]
        %v3734 = vld [vmem:[#allocation3 + $0x58] sm:$0xf]
        %v3735 = vld [vmem:[#allocation3 + $0x5c] sm:$0x1]
        %v3760 = vunpack.c.l.b16 %v3712
        %v3761 = vunpack.c.l.b16 %v3713
        %v3762 = vunpack.c.l.b16 %v3714
        %v3763 = vunpack.c.l.b16 %v3715
        %v3764 = vunpack.c.l.b16 %v3716
        %v3765 = vunpack.c.l.b16 %v3717
        %v3766 = vunpack.c.l.b16 %v3718
        %v3767 = vunpack.c.l.b16 %v3719
        %v3768 = vunpack.c.l.b16 %v3720
        %v3769 = vunpack.c.l.b16 %v3721
        %v3770 = vunpack.c.l.b16 %v3722
        %v3771 = vunpack.c.l.b16 %v3723
        %v3772 = vunpack.c.l.b16 %v3724
        %v3773 = vunpack.c.l.b16 %v3725
        %v3774 = vunpack.c.l.b16 %v3726
        %v3775 = vunpack.c.l.b16 %v3727
        %v3776 = vunpack.c.l.b16 %v3728
        %v3777 = vunpack.c.l.b16 %v3729
        %v3778 = vunpack.c.l.b16 %v3730
        %v3779 = vunpack.c.l.b16 %v3731
        %v3780 = vunpack.c.l.b16 %v3732
        %v3781 = vunpack.c.l.b16 %v3733
        %v3782 = vunpack.c.l.b16 %v3734
        %v3783 = vunpack.c.l.b16 %v3735
        %v3784 = vpack.c.b16 %v3761, %v3760
        %v3785 = vpack.c.b16 %v3762, %v3762
        %v3786 = vpack.c.b16 %v3764, %v3763
        %v3787 = vpack.c.b16 %v3765, %v3765
        %v3788 = vpack.c.b16 %v3767, %v3766
        %v3789 = vpack.c.b16 %v3768, %v3768
        %v3790 = vpack.c.b16 %v3770, %v3769
        %v3791 = vpack.c.b16 %v3771, %v3771
        %v3792 = vpack.c.b16 %v3773, %v3772
        %v3793 = vpack.c.b16 %v3774, %v3774
        %v3794 = vpack.c.b16 %v3776, %v3775
        %v3795 = vpack.c.b16 %v3777, %v3777
        %v3796 = vpack.c.b16 %v3779, %v3778
        %v3797 = vpack.c.b16 %v3780, %v3780
        %v3798 = vpack.c.b16 %v3782, %v3781
        %v3799 = vpack.c.b16 %v3783, %v3783
        %v3800 = vrot.slane %v3784, 1
        %v3801 = vrot.slane %v3785, 1
        %v3802 = vsel %vm709, %v3800, %v3801
        %v3803 = vrot.slane %v3786, 1
        %v3804 = vrot.slane %v3787, 1
        %v3805 = vsel %vm709, %v3803, %v3804
        %v3806 = vrot.slane %v3788, 1
        %v3807 = vrot.slane %v3789, 1
        %v3808 = vsel %vm709, %v3806, %v3807
        %v3809 = vrot.slane %v3790, 1
        %v3810 = vrot.slane %v3791, 1
        %v3811 = vsel %vm709, %v3809, %v3810
        %v3812 = vrot.slane %v3792, 1
        %v3813 = vrot.slane %v3793, 1
        %v3814 = vsel %vm709, %v3812, %v3813
        %v3815 = vrot.slane %v3794, 1
        %v3816 = vrot.slane %v3795, 1
        %v3817 = vsel %vm709, %v3815, %v3816
        %v3818 = vrot.slane %v3796, 1
        %v3819 = vrot.slane %v3797, 1
        %v3820 = vsel %vm709, %v3818, %v3819
        %v3821 = vrot.slane %v3798, 1
        %v3822 = vrot.slane %v3799, 1
        %v3823 = vsel %vm709, %v3821, %v3822
        %3832 = vst [vmem:[#allocation4 + $0x10] sm:$0xff] %v3802
        %3833 = vst [vmem:[#allocation4 + $0x60] sm:$0xff] %v3805
        %3834 = vst [vmem:[#allocation4 + $0xb0] sm:$0xff] %v3808
        %3835 = vst [vmem:[#allocation4 + $0x100] sm:$0xff] %v3811
        %3836 = vst [vmem:[#allocation4 + $0x150] sm:$0xff] %v3814
        %3837 = vst [vmem:[#allocation4 + $0x1a0] sm:$0xff] %v3817
        %3838 = vst [vmem:[#allocation4 + $0x1f0] sm:$0xff] %v3820
        %3839 = vst [vmem:[#allocation4 + $0x240] sm:$0xff] %v3823
        %s3840 = scalar_lea.vmem [#allocation3], 12
        %v3841 = vld [vmem:[%s3840] sm:$0xf]
        %v3842 = vld [vmem:[%s3840 + $0x4] sm:$0xf]
        %v3843 = vld [vmem:[%s3840 + $0xc] sm:$0xf]
        %v3844 = vld [vmem:[%s3840 + $0x10] sm:$0xf]
        %v3845 = vld [vmem:[%s3840 + $0x18] sm:$0xf]
        %v3846 = vld [vmem:[%s3840 + $0x1c] sm:$0xf]
        %v3847 = vld [vmem:[%s3840 + $0x24] sm:$0xf]
        %v3848 = vld [vmem:[%s3840 + $0x28] sm:$0xf]
        %v3849 = vld [vmem:[%s3840 + $0x30] sm:$0xf]
        %v3850 = vld [vmem:[%s3840 + $0x34] sm:$0xf]
        %v3851 = vld [vmem:[%s3840 + $0x3c] sm:$0xf]
        %v3852 = vld [vmem:[%s3840 + $0x40] sm:$0xf]
        %v3853 = vld [vmem:[%s3840 + $0x48] sm:$0xf]
        %v3854 = vld [vmem:[%s3840 + $0x4c] sm:$0xf]
        %v3855 = vld [vmem:[%s3840 + $0x54] sm:$0xf]
        %v3856 = vld [vmem:[%s3840 + $0x58] sm:$0xf]
        %v3873 = vunpack.c.l.b16 %v3841
        %v3874 = vunpack.c.l.b16 %v3842
        %v3875 = vunpack.c.l.b16 %v3843
        %v3876 = vunpack.c.l.b16 %v3844
        %v3877 = vunpack.c.l.b16 %v3845
        %v3878 = vunpack.c.l.b16 %v3846
        %v3879 = vunpack.c.l.b16 %v3847
        %v3880 = vunpack.c.l.b16 %v3848
        %v3881 = vunpack.c.l.b16 %v3849
        %v3882 = vunpack.c.l.b16 %v3850
        %v3883 = vunpack.c.l.b16 %v3851
        %v3884 = vunpack.c.l.b16 %v3852
        %v3885 = vunpack.c.l.b16 %v3853
        %v3886 = vunpack.c.l.b16 %v3854
        %v3887 = vunpack.c.l.b16 %v3855
        %v3888 = vunpack.c.l.b16 %v3856
        %v3889 = vpack.c.b16 %v3874, %v3873
        %v3890 = vpack.c.b16 %v3876, %v3875
        %v3891 = vpack.c.b16 %v3878, %v3877
        %v3892 = vpack.c.b16 %v3880, %v3879
        %v3893 = vpack.c.b16 %v3882, %v3881
        %v3894 = vpack.c.b16 %v3884, %v3883
        %v3895 = vpack.c.b16 %v3886, %v3885
        %v3896 = vpack.c.b16 %v3888, %v3887
        %3905 = vst [vmem:[#allocation4 + $0x18] sm:$0xff] %v3889
        %3906 = vst [vmem:[#allocation4 + $0x68] sm:$0xff] %v3890
        %3907 = vst [vmem:[#allocation4 + $0xb8] sm:$0xff] %v3891
        %3908 = vst [vmem:[#allocation4 + $0x108] sm:$0xff] %v3892
        %3909 = vst [vmem:[#allocation4 + $0x158] sm:$0xff] %v3893
        %3910 = vst [vmem:[#allocation4 + $0x1a8] sm:$0xff] %v3894
        %3911 = vst [vmem:[#allocation4 + $0x1f8] sm:$0xff] %v3895
        %3912 = vst [vmem:[#allocation4 + $0x248] sm:$0xff] %v3896
        %v3913 = vld [vmem:[%s3840] sm:$0xf]
        %v3914 = vld [vmem:[%s3840 + $0x4] sm:$0xf]
        %v3915 = vld [vmem:[%s3840 + $0x8] sm:$0x1]
        %v3916 = vld [vmem:[%s3840 + $0xc] sm:$0xf]
        %v3917 = vld [vmem:[%s3840 + $0x10] sm:$0xf]
        %v3918 = vld [vmem:[%s3840 + $0x14] sm:$0x1]
        %v3919 = vld [vmem:[%s3840 + $0x18] sm:$0xf]
        %v3920 = vld [vmem:[%s3840 + $0x1c] sm:$0xf]
        %v3921 = vld [vmem:[%s3840 + $0x20] sm:$0x1]
        %v3922 = vld [vmem:[%s3840 + $0x24] sm:$0xf]
        %v3923 = vld [vmem:[%s3840 + $0x28] sm:$0xf]
        %v3924 = vld [vmem:[%s3840 + $0x2c] sm:$0x1]
        %v3925 = vld [vmem:[%s3840 + $0x30] sm:$0xf]
        %v3926 = vld [vmem:[%s3840 + $0x34] sm:$0xf]
        %v3927 = vld [vmem:[%s3840 + $0x38] sm:$0x1]
        %v3928 = vld [vmem:[%s3840 + $0x3c] sm:$0xf]
        %v3929 = vld [vmem:[%s3840 + $0x40] sm:$0xf]
        %v3930 = vld [vmem:[%s3840 + $0x44] sm:$0x1]
        %v3931 = vld [vmem:[%s3840 + $0x48] sm:$0xf]
        %v3932 = vld [vmem:[%s3840 + $0x4c] sm:$0xf]
        %v3933 = vld [vmem:[%s3840 + $0x50] sm:$0x1]
        %v3934 = vld [vmem:[%s3840 + $0x54] sm:$0xf]
        %v3935 = vld [vmem:[%s3840 + $0x58] sm:$0xf]
        %v3936 = vld [vmem:[%s3840 + $0x5c] sm:$0x1]
        %v3961 = vunpack.c.l.b16 %v3913
        %v3962 = vunpack.c.l.b16 %v3914
        %v3963 = vunpack.c.l.b16 %v3915
        %v3964 = vunpack.c.l.b16 %v3916
        %v3965 = vunpack.c.l.b16 %v3917
        %v3966 = vunpack.c.l.b16 %v3918
        %v3967 = vunpack.c.l.b16 %v3919
        %v3968 = vunpack.c.l.b16 %v3920
        %v3969 = vunpack.c.l.b16 %v3921
        %v3970 = vunpack.c.l.b16 %v3922
        %v3971 = vunpack.c.l.b16 %v3923
        %v3972 = vunpack.c.l.b16 %v3924
        %v3973 = vunpack.c.l.b16 %v3925
        %v3974 = vunpack.c.l.b16 %v3926
        %v3975 = vunpack.c.l.b16 %v3927
        %v3976 = vunpack.c.l.b16 %v3928
        %v3977 = vunpack.c.l.b16 %v3929
        %v3978 = vunpack.c.l.b16 %v3930
        %v3979 = vunpack.c.l.b16 %v3931
        %v3980 = vunpack.c.l.b16 %v3932
        %v3981 = vunpack.c.l.b16 %v3933
        %v3982 = vunpack.c.l.b16 %v3934
        %v3983 = vunpack.c.l.b16 %v3935
        %v3984 = vunpack.c.l.b16 %v3936
        %v3985 = vpack.c.b16 %v3962, %v3961
        %v3986 = vpack.c.b16 %v3963, %v3963
        %v3987 = vpack.c.b16 %v3965, %v3964
        %v3988 = vpack.c.b16 %v3966, %v3966
        %v3989 = vpack.c.b16 %v3968, %v3967
        %v3990 = vpack.c.b16 %v3969, %v3969
        %v3991 = vpack.c.b16 %v3971, %v3970
        %v3992 = vpack.c.b16 %v3972, %v3972
        %v3993 = vpack.c.b16 %v3974, %v3973
        %v3994 = vpack.c.b16 %v3975, %v3975
        %v3995 = vpack.c.b16 %v3977, %v3976
        %v3996 = vpack.c.b16 %v3978, %v3978
        %v3997 = vpack.c.b16 %v3980, %v3979
        %v3998 = vpack.c.b16 %v3981, %v3981
        %v3999 = vpack.c.b16 %v3983, %v3982
        %v4000 = vpack.c.b16 %v3984, %v3984
        %v4002 = vshrl.u32 %v3985, 16
        %v4004 = vshll.u32 %v3985, 16
        %v4006 = vrot.slane %v4004, 1
        %v4007 = vor.u32 %v4002, %v4006
        %v4009 = vshll.u32 %v3986, 16
        %v4011 = vrot.slane %v4009, 1
        %v4012 = vsel %vm458, %v4007, %v4011
        %v4014 = vshrl.u32 %v3987, 16
        %v4016 = vshll.u32 %v3987, 16
        %v4018 = vrot.slane %v4016, 1
        %v4019 = vor.u32 %v4014, %v4018
        %v4021 = vshll.u32 %v3988, 16
        %v4023 = vrot.slane %v4021, 1
        %v4024 = vsel %vm458, %v4019, %v4023
        %v4026 = vshrl.u32 %v3989, 16
        %v4028 = vshll.u32 %v3989, 16
        %v4030 = vrot.slane %v4028, 1
        %v4031 = vor.u32 %v4026, %v4030
        %v4033 = vshll.u32 %v3990, 16
        %v4035 = vrot.slane %v4033, 1
        %v4036 = vsel %vm458, %v4031, %v4035
        %v4038 = vshrl.u32 %v3991, 16
        %v4040 = vshll.u32 %v3991, 16
        %v4042 = vrot.slane %v4040, 1
        %v4043 = vor.u32 %v4038, %v4042
        %v4045 = vshll.u32 %v3992, 16
        %v4047 = vrot.slane %v4045, 1
        %v4048 = vsel %vm458, %v4043, %v4047
        %v4050 = vshrl.u32 %v3993, 16
        %v4052 = vshll.u32 %v3993, 16
        %v4054 = vrot.slane %v4052, 1
        %v4055 = vor.u32 %v4050, %v4054
        %v4057 = vshll.u32 %v3994, 16
        %v4059 = vrot.slane %v4057, 1
        %v4060 = vsel %vm458, %v4055, %v4059
        %v4062 = vshrl.u32 %v3995, 16
        %v4064 = vshll.u32 %v3995, 16
        %v4066 = vrot.slane %v4064, 1
        %v4067 = vor.u32 %v4062, %v4066
        %v4069 = vshll.u32 %v3996, 16
        %v4071 = vrot.slane %v4069, 1
        %v4072 = vsel %vm458, %v4067, %v4071
        %v4074 = vshrl.u32 %v3997, 16
        %v4076 = vshll.u32 %v3997, 16
        %v4078 = vrot.slane %v4076, 1
        %v4079 = vor.u32 %v4074, %v4078
        %v4081 = vshll.u32 %v3998, 16
        %v4083 = vrot.slane %v4081, 1
        %v4084 = vsel %vm458, %v4079, %v4083
        %v4086 = vshrl.u32 %v3999, 16
        %v4088 = vshll.u32 %v3999, 16
        %v4090 = vrot.slane %v4088, 1
        %v4091 = vor.u32 %v4086, %v4090
        %v4093 = vshll.u32 %v4000, 16
        %v4095 = vrot.slane %v4093, 1
        %v4096 = vsel %vm458, %v4091, %v4095
        %4105 = vst [vmem:[#allocation4 + $0x20] sm:$0xff] %v4012
        %4106 = vst [vmem:[#allocation4 + $0x70] sm:$0xff] %v4024
        %4107 = vst [vmem:[#allocation4 + $0xc0] sm:$0xff] %v4036
        %4108 = vst [vmem:[#allocation4 + $0x110] sm:$0xff] %v4048
        %4109 = vst [vmem:[#allocation4 + $0x160] sm:$0xff] %v4060
        %4110 = vst [vmem:[#allocation4 + $0x1b0] sm:$0xff] %v4072
        %4111 = vst [vmem:[#allocation4 + $0x200] sm:$0xff] %v4084
        %4112 = vst [vmem:[#allocation4 + $0x250] sm:$0xff] %v4096
        %v4113 = vld [vmem:[%s3840] sm:$0xe]
        %v4114 = vld [vmem:[%s3840 + $0x4] sm:$0xf]
        %v4115 = vld [vmem:[%s3840 + $0x8] sm:$0x1]
        %v4116 = vld [vmem:[%s3840 + $0xc] sm:$0xe]
        %v4117 = vld [vmem:[%s3840 + $0x10] sm:$0xf]
        %v4118 = vld [vmem:[%s3840 + $0x14] sm:$0x1]
        %v4119 = vld [vmem:[%s3840 + $0x18] sm:$0xe]
        %v4120 = vld [vmem:[%s3840 + $0x1c] sm:$0xf]
        %v4121 = vld [vmem:[%s3840 + $0x20] sm:$0x1]
        %v4122 = vld [vmem:[%s3840 + $0x24] sm:$0xe]
        %v4123 = vld [vmem:[%s3840 + $0x28] sm:$0xf]
        %v4124 = vld [vmem:[%s3840 + $0x2c] sm:$0x1]
        %v4125 = vld [vmem:[%s3840 + $0x30] sm:$0xe]
        %v4126 = vld [vmem:[%s3840 + $0x34] sm:$0xf]
        %v4127 = vld [vmem:[%s3840 + $0x38] sm:$0x1]
        %v4128 = vld [vmem:[%s3840 + $0x3c] sm:$0xe]
        %v4129 = vld [vmem:[%s3840 + $0x40] sm:$0xf]
        %v4130 = vld [vmem:[%s3840 + $0x44] sm:$0x1]
        %v4131 = vld [vmem:[%s3840 + $0x48] sm:$0xe]
        %v4132 = vld [vmem:[%s3840 + $0x4c] sm:$0xf]
        %v4133 = vld [vmem:[%s3840 + $0x50] sm:$0x1]
        %v4134 = vld [vmem:[%s3840 + $0x54] sm:$0xe]
        %v4135 = vld [vmem:[%s3840 + $0x58] sm:$0xf]
        %v4136 = vld [vmem:[%s3840 + $0x5c] sm:$0x1]
        %v4161 = vunpack.c.l.b16 %v4113
        %v4162 = vunpack.c.l.b16 %v4114
        %v4163 = vunpack.c.l.b16 %v4115
        %v4164 = vunpack.c.l.b16 %v4116
        %v4165 = vunpack.c.l.b16 %v4117
        %v4166 = vunpack.c.l.b16 %v4118
        %v4167 = vunpack.c.l.b16 %v4119
        %v4168 = vunpack.c.l.b16 %v4120
        %v4169 = vunpack.c.l.b16 %v4121
        %v4170 = vunpack.c.l.b16 %v4122
        %v4171 = vunpack.c.l.b16 %v4123
        %v4172 = vunpack.c.l.b16 %v4124
        %v4173 = vunpack.c.l.b16 %v4125
        %v4174 = vunpack.c.l.b16 %v4126
        %v4175 = vunpack.c.l.b16 %v4127
        %v4176 = vunpack.c.l.b16 %v4128
        %v4177 = vunpack.c.l.b16 %v4129
        %v4178 = vunpack.c.l.b16 %v4130
        %v4179 = vunpack.c.l.b16 %v4131
        %v4180 = vunpack.c.l.b16 %v4132
        %v4181 = vunpack.c.l.b16 %v4133
        %v4182 = vunpack.c.l.b16 %v4134
        %v4183 = vunpack.c.l.b16 %v4135
        %v4184 = vunpack.c.l.b16 %v4136
        %v4185 = vpack.c.b16 %v4162, %v4161
        %v4186 = vpack.c.b16 %v4163, %v4163
        %v4187 = vpack.c.b16 %v4165, %v4164
        %v4188 = vpack.c.b16 %v4166, %v4166
        %v4189 = vpack.c.b16 %v4168, %v4167
        %v4190 = vpack.c.b16 %v4169, %v4169
        %v4191 = vpack.c.b16 %v4171, %v4170
        %v4192 = vpack.c.b16 %v4172, %v4172
        %v4193 = vpack.c.b16 %v4174, %v4173
        %v4194 = vpack.c.b16 %v4175, %v4175
        %v4195 = vpack.c.b16 %v4177, %v4176
        %v4196 = vpack.c.b16 %v4178, %v4178
        %v4197 = vpack.c.b16 %v4180, %v4179
        %v4198 = vpack.c.b16 %v4181, %v4181
        %v4199 = vpack.c.b16 %v4183, %v4182
        %v4200 = vpack.c.b16 %v4184, %v4184
        %v4201 = vrot.slane %v4185, 1
        %v4202 = vrot.slane %v4186, 1
        %v4203 = vsel %vm709, %v4201, %v4202
        %v4204 = vrot.slane %v4187, 1
        %v4205 = vrot.slane %v4188, 1
        %v4206 = vsel %vm709, %v4204, %v4205
        %v4207 = vrot.slane %v4189, 1
        %v4208 = vrot.slane %v4190, 1
        %v4209 = vsel %vm709, %v4207, %v4208
        %v4210 = vrot.slane %v4191, 1
        %v4211 = vrot.slane %v4192, 1
        %v4212 = vsel %vm709, %v4210, %v4211
        %v4213 = vrot.slane %v4193, 1
        %v4214 = vrot.slane %v4194, 1
        %v4215 = vsel %vm709, %v4213, %v4214
        %v4216 = vrot.slane %v4195, 1
        %v4217 = vrot.slane %v4196, 1
        %v4218 = vsel %vm709, %v4216, %v4217
        %v4219 = vrot.slane %v4197, 1
        %v4220 = vrot.slane %v4198, 1
        %v4221 = vsel %vm709, %v4219, %v4220
        %v4222 = vrot.slane %v4199, 1
        %v4223 = vrot.slane %v4200, 1
        %v4224 = vsel %vm709, %v4222, %v4223
        %4233 = vst [vmem:[#allocation4 + $0x28] sm:$0xff] %v4203
        %4234 = vst [vmem:[#allocation4 + $0x78] sm:$0xff] %v4206
        %4235 = vst [vmem:[#allocation4 + $0xc8] sm:$0xff] %v4209
        %4236 = vst [vmem:[#allocation4 + $0x118] sm:$0xff] %v4212
        %4237 = vst [vmem:[#allocation4 + $0x168] sm:$0xff] %v4215
        %4238 = vst [vmem:[#allocation4 + $0x1b8] sm:$0xff] %v4218
        %4239 = vst [vmem:[#allocation4 + $0x208] sm:$0xff] %v4221
        %4240 = vst [vmem:[#allocation4 + $0x258] sm:$0xff] %v4224
        %s4241 = scalar_lea.vmem [#allocation3], 24
        %v4242 = vld [vmem:[%s4241] sm:$0xf]
        %v4243 = vld [vmem:[%s4241 + $0x4] sm:$0xf]
        %v4244 = vld [vmem:[%s4241 + $0xc] sm:$0xf]
        %v4245 = vld [vmem:[%s4241 + $0x10] sm:$0xf]
        %v4246 = vld [vmem:[%s4241 + $0x18] sm:$0xf]
        %v4247 = vld [vmem:[%s4241 + $0x1c] sm:$0xf]
        %v4248 = vld [vmem:[%s4241 + $0x24] sm:$0xf]
        %v4249 = vld [vmem:[%s4241 + $0x28] sm:$0xf]
        %v4250 = vld [vmem:[%s4241 + $0x30] sm:$0xf]
        %v4251 = vld [vmem:[%s4241 + $0x34] sm:$0xf]
        %v4252 = vld [vmem:[%s4241 + $0x3c] sm:$0xf]
        %v4253 = vld [vmem:[%s4241 + $0x40] sm:$0xf]
        %v4254 = vld [vmem:[%s4241 + $0x48] sm:$0xf]
        %v4255 = vld [vmem:[%s4241 + $0x4c] sm:$0xf]
        %v4256 = vld [vmem:[%s4241 + $0x54] sm:$0xf]
        %v4257 = vld [vmem:[%s4241 + $0x58] sm:$0xf]
        %v4274 = vunpack.c.l.b16 %v4242
        %v4275 = vunpack.c.l.b16 %v4243
        %v4276 = vunpack.c.l.b16 %v4244
        %v4277 = vunpack.c.l.b16 %v4245
        %v4278 = vunpack.c.l.b16 %v4246
        %v4279 = vunpack.c.l.b16 %v4247
        %v4280 = vunpack.c.l.b16 %v4248
        %v4281 = vunpack.c.l.b16 %v4249
        %v4282 = vunpack.c.l.b16 %v4250
        %v4283 = vunpack.c.l.b16 %v4251
        %v4284 = vunpack.c.l.b16 %v4252
        %v4285 = vunpack.c.l.b16 %v4253
        %v4286 = vunpack.c.l.b16 %v4254
        %v4287 = vunpack.c.l.b16 %v4255
        %v4288 = vunpack.c.l.b16 %v4256
        %v4289 = vunpack.c.l.b16 %v4257
        %v4290 = vpack.c.b16 %v4275, %v4274
        %v4291 = vpack.c.b16 %v4277, %v4276
        %v4292 = vpack.c.b16 %v4279, %v4278
        %v4293 = vpack.c.b16 %v4281, %v4280
        %v4294 = vpack.c.b16 %v4283, %v4282
        %v4295 = vpack.c.b16 %v4285, %v4284
        %v4296 = vpack.c.b16 %v4287, %v4286
        %v4297 = vpack.c.b16 %v4289, %v4288
        %4306 = vst [vmem:[#allocation4 + $0x30] sm:$0xff] %v4290
        %4307 = vst [vmem:[#allocation4 + $0x80] sm:$0xff] %v4291
        %4308 = vst [vmem:[#allocation4 + $0xd0] sm:$0xff] %v4292
        %4309 = vst [vmem:[#allocation4 + $0x120] sm:$0xff] %v4293
        %4310 = vst [vmem:[#allocation4 + $0x170] sm:$0xff] %v4294
        %4311 = vst [vmem:[#allocation4 + $0x1c0] sm:$0xff] %v4295
        %4312 = vst [vmem:[#allocation4 + $0x210] sm:$0xff] %v4296
        %4313 = vst [vmem:[#allocation4 + $0x260] sm:$0xff] %v4297
        %v4314 = vld [vmem:[%s4241] sm:$0xf]
        %v4315 = vld [vmem:[%s4241 + $0x4] sm:$0xf]
        %v4316 = vld [vmem:[%s4241 + $0x8] sm:$0x1]
        %v4317 = vld [vmem:[%s4241 + $0xc] sm:$0xf]
        %v4318 = vld [vmem:[%s4241 + $0x10] sm:$0xf]
        %v4319 = vld [vmem:[%s4241 + $0x14] sm:$0x1]
        %v4320 = vld [vmem:[%s4241 + $0x18] sm:$0xf]
        %v4321 = vld [vmem:[%s4241 + $0x1c] sm:$0xf]
        %v4322 = vld [vmem:[%s4241 + $0x20] sm:$0x1]
        %v4323 = vld [vmem:[%s4241 + $0x24] sm:$0xf]
        %v4324 = vld [vmem:[%s4241 + $0x28] sm:$0xf]
        %v4325 = vld [vmem:[%s4241 + $0x2c] sm:$0x1]
        %v4326 = vld [vmem:[%s4241 + $0x30] sm:$0xf]
        %v4327 = vld [vmem:[%s4241 + $0x34] sm:$0xf]
        %v4328 = vld [vmem:[%s4241 + $0x38] sm:$0x1]
        %v4329 = vld [vmem:[%s4241 + $0x3c] sm:$0xf]
        %v4330 = vld [vmem:[%s4241 + $0x40] sm:$0xf]
        %v4331 = vld [vmem:[%s4241 + $0x44] sm:$0x1]
        %v4332 = vld [vmem:[%s4241 + $0x48] sm:$0xf]
        %v4333 = vld [vmem:[%s4241 + $0x4c] sm:$0xf]
        %v4334 = vld [vmem:[%s4241 + $0x50] sm:$0x1]
        %v4335 = vld [vmem:[%s4241 + $0x54] sm:$0xf]
        %v4336 = vld [vmem:[%s4241 + $0x58] sm:$0xf]
        %v4337 = vld [vmem:[%s4241 + $0x5c] sm:$0x1]
        %v4362 = vunpack.c.l.b16 %v4314
        %v4363 = vunpack.c.l.b16 %v4315
        %v4364 = vunpack.c.l.b16 %v4316
        %v4365 = vunpack.c.l.b16 %v4317
        %v4366 = vunpack.c.l.b16 %v4318
        %v4367 = vunpack.c.l.b16 %v4319
        %v4368 = vunpack.c.l.b16 %v4320
        %v4369 = vunpack.c.l.b16 %v4321
        %v4370 = vunpack.c.l.b16 %v4322
        %v4371 = vunpack.c.l.b16 %v4323
        %v4372 = vunpack.c.l.b16 %v4324
        %v4373 = vunpack.c.l.b16 %v4325
        %v4374 = vunpack.c.l.b16 %v4326
        %v4375 = vunpack.c.l.b16 %v4327
        %v4376 = vunpack.c.l.b16 %v4328
        %v4377 = vunpack.c.l.b16 %v4329
        %v4378 = vunpack.c.l.b16 %v4330
        %v4379 = vunpack.c.l.b16 %v4331
        %v4380 = vunpack.c.l.b16 %v4332
        %v4381 = vunpack.c.l.b16 %v4333
        %v4382 = vunpack.c.l.b16 %v4334
        %v4383 = vunpack.c.l.b16 %v4335
        %v4384 = vunpack.c.l.b16 %v4336
        %v4385 = vunpack.c.l.b16 %v4337
        %v4386 = vpack.c.b16 %v4363, %v4362
        %v4387 = vpack.c.b16 %v4364, %v4364
        %v4388 = vpack.c.b16 %v4366, %v4365
        %v4389 = vpack.c.b16 %v4367, %v4367
        %v4390 = vpack.c.b16 %v4369, %v4368
        %v4391 = vpack.c.b16 %v4370, %v4370
        %v4392 = vpack.c.b16 %v4372, %v4371
        %v4393 = vpack.c.b16 %v4373, %v4373
        %v4394 = vpack.c.b16 %v4375, %v4374
        %v4395 = vpack.c.b16 %v4376, %v4376
        %v4396 = vpack.c.b16 %v4378, %v4377
        %v4397 = vpack.c.b16 %v4379, %v4379
        %v4398 = vpack.c.b16 %v4381, %v4380
        %v4399 = vpack.c.b16 %v4382, %v4382
        %v4400 = vpack.c.b16 %v4384, %v4383
        %v4401 = vpack.c.b16 %v4385, %v4385
        %v4403 = vshrl.u32 %v4386, 16
        %v4405 = vshll.u32 %v4386, 16
        %v4407 = vrot.slane %v4405, 1
        %v4408 = vor.u32 %v4403, %v4407
        %v4410 = vshll.u32 %v4387, 16
        %v4412 = vrot.slane %v4410, 1
        %v4413 = vsel %vm458, %v4408, %v4412
        %v4415 = vshrl.u32 %v4388, 16
        %v4417 = vshll.u32 %v4388, 16
        %v4419 = vrot.slane %v4417, 1
        %v4420 = vor.u32 %v4415, %v4419
        %v4422 = vshll.u32 %v4389, 16
        %v4424 = vrot.slane %v4422, 1
        %v4425 = vsel %vm458, %v4420, %v4424
        %v4427 = vshrl.u32 %v4390, 16
        %v4429 = vshll.u32 %v4390, 16
        %v4431 = vrot.slane %v4429, 1
        %v4432 = vor.u32 %v4427, %v4431
        %v4434 = vshll.u32 %v4391, 16
        %v4436 = vrot.slane %v4434, 1
        %v4437 = vsel %vm458, %v4432, %v4436
        %v4439 = vshrl.u32 %v4392, 16
        %v4441 = vshll.u32 %v4392, 16
        %v4443 = vrot.slane %v4441, 1
        %v4444 = vor.u32 %v4439, %v4443
        %v4446 = vshll.u32 %v4393, 16
        %v4448 = vrot.slane %v4446, 1
        %v4449 = vsel %vm458, %v4444, %v4448
        %v4451 = vshrl.u32 %v4394, 16
        %v4453 = vshll.u32 %v4394, 16
        %v4455 = vrot.slane %v4453, 1
        %v4456 = vor.u32 %v4451, %v4455
        %v4458 = vshll.u32 %v4395, 16
        %v4460 = vrot.slane %v4458, 1
        %v4461 = vsel %vm458, %v4456, %v4460
        %v4463 = vshrl.u32 %v4396, 16
        %v4465 = vshll.u32 %v4396, 16
        %v4467 = vrot.slane %v4465, 1
        %v4468 = vor.u32 %v4463, %v4467
        %v4470 = vshll.u32 %v4397, 16
        %v4472 = vrot.slane %v4470, 1
        %v4473 = vsel %vm458, %v4468, %v4472
        %v4475 = vshrl.u32 %v4398, 16
        %v4477 = vshll.u32 %v4398, 16
        %v4479 = vrot.slane %v4477, 1
        %v4480 = vor.u32 %v4475, %v4479
        %v4482 = vshll.u32 %v4399, 16
        %v4484 = vrot.slane %v4482, 1
        %v4485 = vsel %vm458, %v4480, %v4484
        %v4487 = vshrl.u32 %v4400, 16
        %v4489 = vshll.u32 %v4400, 16
        %v4491 = vrot.slane %v4489, 1
        %v4492 = vor.u32 %v4487, %v4491
        %v4494 = vshll.u32 %v4401, 16
        %v4496 = vrot.slane %v4494, 1
        %v4497 = vsel %vm458, %v4492, %v4496
        %4506 = vst [vmem:[#allocation4 + $0x38] sm:$0xff] %v4413
        %4507 = vst [vmem:[#allocation4 + $0x88] sm:$0xff] %v4425
        %4508 = vst [vmem:[#allocation4 + $0xd8] sm:$0xff] %v4437
        %4509 = vst [vmem:[#allocation4 + $0x128] sm:$0xff] %v4449
        %4510 = vst [vmem:[#allocation4 + $0x178] sm:$0xff] %v4461
        %4511 = vst [vmem:[#allocation4 + $0x1c8] sm:$0xff] %v4473
        %4512 = vst [vmem:[#allocation4 + $0x218] sm:$0xff] %v4485
        %4513 = vst [vmem:[#allocation4 + $0x268] sm:$0xff] %v4497
        %v4514 = vld [vmem:[%s4241] sm:$0xe]
        %v4515 = vld [vmem:[%s4241 + $0x4] sm:$0xf]
        %v4516 = vld [vmem:[%s4241 + $0x8] sm:$0x1]
        %v4517 = vld [vmem:[%s4241 + $0xc] sm:$0xe]
        %v4518 = vld [vmem:[%s4241 + $0x10] sm:$0xf]
        %v4519 = vld [vmem:[%s4241 + $0x14] sm:$0x1]
        %v4520 = vld [vmem:[%s4241 + $0x18] sm:$0xe]
        %v4521 = vld [vmem:[%s4241 + $0x1c] sm:$0xf]
        %v4522 = vld [vmem:[%s4241 + $0x20] sm:$0x1]
        %v4523 = vld [vmem:[%s4241 + $0x24] sm:$0xe]
        %v4524 = vld [vmem:[%s4241 + $0x28] sm:$0xf]
        %v4525 = vld [vmem:[%s4241 + $0x2c] sm:$0x1]
        %v4526 = vld [vmem:[%s4241 + $0x30] sm:$0xe]
        %v4527 = vld [vmem:[%s4241 + $0x34] sm:$0xf]
        %v4528 = vld [vmem:[%s4241 + $0x38] sm:$0x1]
        %v4529 = vld [vmem:[%s4241 + $0x3c] sm:$0xe]
        %v4530 = vld [vmem:[%s4241 + $0x40] sm:$0xf]
        %v4531 = vld [vmem:[%s4241 + $0x44] sm:$0x1]
        %v4532 = vld [vmem:[%s4241 + $0x48] sm:$0xe]
        %v4533 = vld [vmem:[%s4241 + $0x4c] sm:$0xf]
        %v4534 = vld [vmem:[%s4241 + $0x50] sm:$0x1]
        %v4535 = vld [vmem:[%s4241 + $0x54] sm:$0xe]
        %v4536 = vld [vmem:[%s4241 + $0x58] sm:$0xf]
        %v4537 = vld [vmem:[%s4241 + $0x5c] sm:$0x1]
        %v4562 = vunpack.c.l.b16 %v4514
        %v4563 = vunpack.c.l.b16 %v4515
        %v4564 = vunpack.c.l.b16 %v4516
        %v4565 = vunpack.c.l.b16 %v4517
        %v4566 = vunpack.c.l.b16 %v4518
        %v4567 = vunpack.c.l.b16 %v4519
        %v4568 = vunpack.c.l.b16 %v4520
        %v4569 = vunpack.c.l.b16 %v4521
        %v4570 = vunpack.c.l.b16 %v4522
        %v4571 = vunpack.c.l.b16 %v4523
        %v4572 = vunpack.c.l.b16 %v4524
        %v4573 = vunpack.c.l.b16 %v4525
        %v4574 = vunpack.c.l.b16 %v4526
        %v4575 = vunpack.c.l.b16 %v4527
        %v4576 = vunpack.c.l.b16 %v4528
        %v4577 = vunpack.c.l.b16 %v4529
        %v4578 = vunpack.c.l.b16 %v4530
        %v4579 = vunpack.c.l.b16 %v4531
        %v4580 = vunpack.c.l.b16 %v4532
        %v4581 = vunpack.c.l.b16 %v4533
        %v4582 = vunpack.c.l.b16 %v4534
        %v4583 = vunpack.c.l.b16 %v4535
        %v4584 = vunpack.c.l.b16 %v4536
        %v4585 = vunpack.c.l.b16 %v4537
        %v4586 = vpack.c.b16 %v4563, %v4562
        %v4587 = vpack.c.b16 %v4564, %v4564
        %v4588 = vpack.c.b16 %v4566, %v4565
        %v4589 = vpack.c.b16 %v4567, %v4567
        %v4590 = vpack.c.b16 %v4569, %v4568
        %v4591 = vpack.c.b16 %v4570, %v4570
        %v4592 = vpack.c.b16 %v4572, %v4571
        %v4593 = vpack.c.b16 %v4573, %v4573
        %v4594 = vpack.c.b16 %v4575, %v4574
        %v4595 = vpack.c.b16 %v4576, %v4576
        %v4596 = vpack.c.b16 %v4578, %v4577
        %v4597 = vpack.c.b16 %v4579, %v4579
        %v4598 = vpack.c.b16 %v4581, %v4580
        %v4599 = vpack.c.b16 %v4582, %v4582
        %v4600 = vpack.c.b16 %v4584, %v4583
        %v4601 = vpack.c.b16 %v4585, %v4585
        %v4602 = vrot.slane %v4586, 1
        %v4603 = vrot.slane %v4587, 1
        %v4604 = vsel %vm709, %v4602, %v4603
        %v4605 = vrot.slane %v4588, 1
        %v4606 = vrot.slane %v4589, 1
        %v4607 = vsel %vm709, %v4605, %v4606
        %v4608 = vrot.slane %v4590, 1
        %v4609 = vrot.slane %v4591, 1
        %v4610 = vsel %vm709, %v4608, %v4609
        %v4611 = vrot.slane %v4592, 1
        %v4612 = vrot.slane %v4593, 1
        %v4613 = vsel %vm709, %v4611, %v4612
        %v4614 = vrot.slane %v4594, 1
        %v4615 = vrot.slane %v4595, 1
        %v4616 = vsel %vm709, %v4614, %v4615
        %v4617 = vrot.slane %v4596, 1
        %v4618 = vrot.slane %v4597, 1
        %v4619 = vsel %vm709, %v4617, %v4618
        %v4620 = vrot.slane %v4598, 1
        %v4621 = vrot.slane %v4599, 1
        %v4622 = vsel %vm709, %v4620, %v4621
        %v4623 = vrot.slane %v4600, 1
        %v4624 = vrot.slane %v4601, 1
        %v4625 = vsel %vm709, %v4623, %v4624
        %4634 = vst [vmem:[#allocation4 + $0x40] sm:$0xff] %v4604
        %4635 = vst [vmem:[#allocation4 + $0x90] sm:$0xff] %v4607
        %4636 = vst [vmem:[#allocation4 + $0xe0] sm:$0xff] %v4610
        %4637 = vst [vmem:[#allocation4 + $0x130] sm:$0xff] %v4613
        %4638 = vst [vmem:[#allocation4 + $0x180] sm:$0xff] %v4616
        %4639 = vst [vmem:[#allocation4 + $0x1d0] sm:$0xff] %v4619
        %4640 = vst [vmem:[#allocation4 + $0x220] sm:$0xff] %v4622
        %4641 = vst [vmem:[#allocation4 + $0x270] sm:$0xff] %v4625
        %s4642 = scalar_lea.vmem [#allocation2], 72
        %v4643 = vld [vmem:[%s4642 + $0x20] sm:$0xff]
        %v4644 = vld [vmem:[%s4642 + $0x68] sm:$0xff]
        %v4645 = vld [vmem:[%s4642 + $0xb0] sm:$0xff]
        %v4646 = vld [vmem:[%s4642 + $0xf8] sm:$0xff]
        %v4647 = vld [vmem:[%s4642 + $0x140] sm:$0xff]
        %v4648 = vld [vmem:[%s4642 + $0x188] sm:$0xff]
        %v4649 = vld [vmem:[%s4642 + $0x1d0] sm:$0xff]
        %v4650 = vld [vmem:[%s4642 + $0x218] sm:$0xff]
        %4651 = vst [vmem:[#allocation4 + $0x48] sm:$0xff] %v4643
        %4652 = vst [vmem:[#allocation4 + $0x98] sm:$0xff] %v4644
        %4653 = vst [vmem:[#allocation4 + $0xe8] sm:$0xff] %v4645
        %4654 = vst [vmem:[#allocation4 + $0x138] sm:$0xff] %v4646
        %4655 = vst [vmem:[#allocation4 + $0x188] sm:$0xff] %v4647
        %4656 = vst [vmem:[#allocation4 + $0x1d8] sm:$0xff] %v4648
        %4657 = vst [vmem:[#allocation4 + $0x228] sm:$0xff] %v4649
        %4658 = vst [vmem:[#allocation4 + $0x278] sm:$0xff] %v4650
        %v4659 = vld [vmem:[#allocation4] sm:$0xff]
        %v4660 = vld [vmem:[#allocation4 + $0x8] sm:$0xff]
        %v4661 = vld [vmem:[#allocation4 + $0x10] sm:$0xff]
        %v4662 = vld [vmem:[#allocation4 + $0x18] sm:$0xff]
        %v4663 = vld [vmem:[#allocation4 + $0x20] sm:$0xff]
        %v4664 = vld [vmem:[#allocation4 + $0x28] sm:$0xff]
        %v4665 = vld [vmem:[#allocation4 + $0x30] sm:$0xff]
        %v4666 = vld [vmem:[#allocation4 + $0x38] sm:$0xff]
        %v4667 = vld [vmem:[#allocation4 + $0x40] sm:$0xff]
        %v4668 = vld [vmem:[#allocation4 + $0x48] sm:$0xff]
        %v4669 = vld [vmem:[#allocation4 + $0x50] sm:$0xff]
        %v4670 = vld [vmem:[#allocation4 + $0x58] sm:$0xff]
        %v4671 = vld [vmem:[#allocation4 + $0x60] sm:$0xff]
        %v4672 = vld [vmem:[#allocation4 + $0x68] sm:$0xff]
        %v4673 = vld [vmem:[#allocation4 + $0x70] sm:$0xff]
        %v4674 = vld [vmem:[#allocation4 + $0x78] sm:$0xff]
        %v4675 = vld [vmem:[#allocation4 + $0x80] sm:$0xff]
        %v4676 = vld [vmem:[#allocation4 + $0x88] sm:$0xff]
        %v4677 = vld [vmem:[#allocation4 + $0x90] sm:$0xff]
        %v4678 = vld [vmem:[#allocation4 + $0x98] sm:$0xff]
        %v4679 = vld [vmem:[#allocation4 + $0xa0] sm:$0xff]
        %v4680 = vld [vmem:[#allocation4 + $0xa8] sm:$0xff]
        %v4681 = vld [vmem:[#allocation4 + $0xb0] sm:$0xff]
        %v4682 = vld [vmem:[#allocation4 + $0xb8] sm:$0xff]
        %v4683 = vld [vmem:[#allocation4 + $0xc0] sm:$0xff]
        %v4684 = vld [vmem:[#allocation4 + $0xc8] sm:$0xff]
        %v4685 = vld [vmem:[#allocation4 + $0xd0] sm:$0xff]
        %v4686 = vld [vmem:[#allocation4 + $0xd8] sm:$0xff]
        %v4687 = vld [vmem:[#allocation4 + $0xe0] sm:$0xff]
        %v4688 = vld [vmem:[#allocation4 + $0xe8] sm:$0xff]
        %v4689 = vld [vmem:[#allocation4 + $0xf0] sm:$0xff]
        %v4690 = vld [vmem:[#allocation4 + $0xf8] sm:$0xff]
        %v4691 = vld [vmem:[#allocation4 + $0x100] sm:$0xff]
        %v4692 = vld [vmem:[#allocation4 + $0x108] sm:$0xff]
        %v4693 = vld [vmem:[#allocation4 + $0x110] sm:$0xff]
        %v4694 = vld [vmem:[#allocation4 + $0x118] sm:$0xff]
        %v4695 = vld [vmem:[#allocation4 + $0x120] sm:$0xff]
        %v4696 = vld [vmem:[#allocation4 + $0x128] sm:$0xff]
        %v4697 = vld [vmem:[#allocation4 + $0x130] sm:$0xff]
        %v4698 = vld [vmem:[#allocation4 + $0x138] sm:$0xff]
        %v4699 = vld [vmem:[#allocation4 + $0x140] sm:$0xff]
        %v4700 = vld [vmem:[#allocation4 + $0x148] sm:$0xff]
        %v4701 = vld [vmem:[#allocation4 + $0x150] sm:$0xff]
        %v4702 = vld [vmem:[#allocation4 + $0x158] sm:$0xff]
        %v4703 = vld [vmem:[#allocation4 + $0x160] sm:$0xff]
        %v4704 = vld [vmem:[#allocation4 + $0x168] sm:$0xff]
        %v4705 = vld [vmem:[#allocation4 + $0x170] sm:$0xff]
        %v4706 = vld [vmem:[#allocation4 + $0x178] sm:$0xff]
        %v4707 = vld [vmem:[#allocation4 + $0x180] sm:$0xff]
        %v4708 = vld [vmem:[#allocation4 + $0x188] sm:$0xff]
        %v4709 = vld [vmem:[#allocation4 + $0x190] sm:$0xff]
        %v4710 = vld [vmem:[#allocation4 + $0x198] sm:$0xff]
        %v4711 = vld [vmem:[#allocation4 + $0x1a0] sm:$0xff]
        %v4712 = vld [vmem:[#allocation4 + $0x1a8] sm:$0xff]
        %v4713 = vld [vmem:[#allocation4 + $0x1b0] sm:$0xff]
        %v4714 = vld [vmem:[#allocation4 + $0x1b8] sm:$0xff]
        %v4715 = vld [vmem:[#allocation4 + $0x1c0] sm:$0xff]
        %v4716 = vld [vmem:[#allocation4 + $0x1c8] sm:$0xff]
        %v4717 = vld [vmem:[#allocation4 + $0x1d0] sm:$0xff]
        %v4718 = vld [vmem:[#allocation4 + $0x1d8] sm:$0xff]
        %v4719 = vld [vmem:[#allocation4 + $0x1e0] sm:$0xff]
        %v4720 = vld [vmem:[#allocation4 + $0x1e8] sm:$0xff]
        %v4721 = vld [vmem:[#allocation4 + $0x1f0] sm:$0xff]
        %v4722 = vld [vmem:[#allocation4 + $0x1f8] sm:$0xff]
        %v4723 = vld [vmem:[#allocation4 + $0x200] sm:$0xff]
        %v4724 = vld [vmem:[#allocation4 + $0x208] sm:$0xff]
        %v4725 = vld [vmem:[#allocation4 + $0x210] sm:$0xff]
        %v4726 = vld [vmem:[#allocation4 + $0x218] sm:$0xff]
        %v4727 = vld [vmem:[#allocation4 + $0x220] sm:$0xff]
        %v4728 = vld [vmem:[#allocation4 + $0x228] sm:$0xff]
        %v4729 = vld [vmem:[#allocation4 + $0x230] sm:$0xff]
        %v4730 = vld [vmem:[#allocation4 + $0x238] sm:$0xff]
        %v4731 = vld [vmem:[#allocation4 + $0x240] sm:$0xff]
        %v4732 = vld [vmem:[#allocation4 + $0x248] sm:$0xff]
        %v4733 = vld [vmem:[#allocation4 + $0x250] sm:$0xff]
        %v4734 = vld [vmem:[#allocation4 + $0x258] sm:$0xff]
        %v4735 = vld [vmem:[#allocation4 + $0x260] sm:$0xff]
        %v4736 = vld [vmem:[#allocation4 + $0x268] sm:$0xff]
        %v4737 = vld [vmem:[#allocation4 + $0x270] sm:$0xff]
        %v4738 = vld [vmem:[#allocation4 + $0x278] sm:$0xff]
        %v4739 = vld [vmem:[%s2] sm:$0xf]
        %v4740 = vld [vmem:[%s2 + $0x4] sm:$0xf]
        %v4741 = vld [vmem:[%s2 + $0x8] sm:$0xf]
        %v4742 = vld [vmem:[%s2 + $0xc] sm:$0xf]
        %v4743 = vld [vmem:[%s2 + $0x10] sm:$0xf]
        %v4744 = vld [vmem:[%s2 + $0x14] sm:$0xf]
        %v4745 = vld [vmem:[%s2 + $0x18] sm:$0xf]
        %v4746 = vld [vmem:[%s2 + $0x1c] sm:$0xf]
        %v4747 = vld [vmem:[%s2 + $0x20] sm:$0xf]
        %v4748 = vld [vmem:[%s2 + $0x24] sm:$0xf]
        %v4749 = vld [vmem:[%s2 + $0x28] sm:$0xf]
        %v4750 = vld [vmem:[%s2 + $0x2c] sm:$0xf]
        %v4751 = vld [vmem:[%s2 + $0x30] sm:$0xf]
        %v4752 = vld [vmem:[%s2 + $0x34] sm:$0xf]
        %v4753 = vld [vmem:[%s2 + $0x38] sm:$0xf]
        %v4754 = vld [vmem:[%s2 + $0x3c] sm:$0xf]
        %v4755 = vld [vmem:[%s2 + $0x40] sm:$0xf]
        %v4756 = vld [vmem:[%s2 + $0x44] sm:$0xf]
        %v4757 = vld [vmem:[%s2 + $0x48] sm:$0xf]
        %v4758 = vld [vmem:[%s2 + $0x4c] sm:$0xf]
        %v4759 = vld [vmem:[%s2 + $0x50] sm:$0xf]
        %v4760 = vld [vmem:[%s2 + $0x54] sm:$0xf]
        %v4761 = vld [vmem:[%s2 + $0x58] sm:$0xf]
        %v4762 = vld [vmem:[%s2 + $0x5c] sm:$0xf]
        %v4763 = vld [vmem:[%s2 + $0x60] sm:$0xf]
        %v4764 = vld [vmem:[%s2 + $0x64] sm:$0xf]
        %v4765 = vld [vmem:[%s2 + $0x68] sm:$0xf]
        %v4766 = vld [vmem:[%s2 + $0x6c] sm:$0xf]
        %v4767 = vld [vmem:[%s2 + $0x70] sm:$0xf]
        %v4768 = vld [vmem:[%s2 + $0x74] sm:$0xf]
        %v4769 = vld [vmem:[%s2 + $0x78] sm:$0xf]
        %v4770 = vld [vmem:[%s2 + $0x7c] sm:$0xf]
        %v4771 = vld [vmem:[%s2 + $0x80] sm:$0xf]
        %v4772 = vld [vmem:[%s2 + $0x84] sm:$0xf]
        %v4773 = vld [vmem:[%s2 + $0x88] sm:$0xf]
        %v4774 = vld [vmem:[%s2 + $0x8c] sm:$0xf]
        %v4775 = vld [vmem:[%s2 + $0x90] sm:$0xf]
        %v4776 = vld [vmem:[%s2 + $0x94] sm:$0xf]
        %v4777 = vld [vmem:[%s2 + $0x98] sm:$0xf]
        %v4778 = vld [vmem:[%s2 + $0x9c] sm:$0xf]
        %v4779 = vld [vmem:[%s2 + $0xa0] sm:$0xf]
        %v4780 = vld [vmem:[%s2 + $0xa4] sm:$0xf]
        %v4781 = vld [vmem:[%s2 + $0xa8] sm:$0xf]
        %v4782 = vld [vmem:[%s2 + $0xac] sm:$0xf]
        %v4783 = vld [vmem:[%s2 + $0xb0] sm:$0xf]
        %v4784 = vld [vmem:[%s2 + $0xb4] sm:$0xf]
        %v4785 = vld [vmem:[%s2 + $0xb8] sm:$0xf]
        %v4786 = vld [vmem:[%s2 + $0xbc] sm:$0xf]
        %v4787 = vld [vmem:[%s2 + $0xc0] sm:$0xf]
        %v4788 = vld [vmem:[%s2 + $0xc4] sm:$0xf]
        %v4789 = vld [vmem:[%s2 + $0xc8] sm:$0xf]
        %v4790 = vld [vmem:[%s2 + $0xcc] sm:$0xf]
        %v4791 = vld [vmem:[%s2 + $0xd0] sm:$0xf]
        %v4792 = vld [vmem:[%s2 + $0xd4] sm:$0xf]
        %v4793 = vld [vmem:[%s2 + $0xd8] sm:$0xf]
        %v4794 = vld [vmem:[%s2 + $0xdc] sm:$0xf]
        %v4795 = vld [vmem:[%s2 + $0xe0] sm:$0xf]
        %v4796 = vld [vmem:[%s2 + $0xe4] sm:$0xf]
        %v4797 = vld [vmem:[%s2 + $0xe8] sm:$0xf]
        %v4798 = vld [vmem:[%s2 + $0xec] sm:$0xf]
        %v4799 = vld [vmem:[%s2 + $0xf0] sm:$0xf]
        %v4800 = vld [vmem:[%s2 + $0xf4] sm:$0xf]
        %v4801 = vld [vmem:[%s2 + $0xf8] sm:$0xf]
        %v4802 = vld [vmem:[%s2 + $0xfc] sm:$0xf]
        %v4803 = vld [vmem:[%s2 + $0x100] sm:$0xf]
        %v4804 = vld [vmem:[%s2 + $0x104] sm:$0xf]
        %v4805 = vld [vmem:[%s2 + $0x108] sm:$0xf]
        %v4806 = vld [vmem:[%s2 + $0x10c] sm:$0xf]
        %v4807 = vld [vmem:[%s2 + $0x110] sm:$0xf]
        %v4808 = vld [vmem:[%s2 + $0x114] sm:$0xf]
        %v4809 = vld [vmem:[%s2 + $0x118] sm:$0xf]
        %v4810 = vld [vmem:[%s2 + $0x11c] sm:$0xf]
        %v4811 = vld [vmem:[%s2 + $0x120] sm:$0xf]
        %v4812 = vld [vmem:[%s2 + $0x124] sm:$0xf]
        %v4813 = vld [vmem:[%s2 + $0x128] sm:$0xf]
        %v4814 = vld [vmem:[%s2 + $0x12c] sm:$0xf]
        %v4815 = vld [vmem:[%s2 + $0x130] sm:$0xf]
        %v4816 = vld [vmem:[%s2 + $0x134] sm:$0xf]
        %v4817 = vld [vmem:[%s2 + $0x138] sm:$0xf]
        %v4818 = vld [vmem:[%s2 + $0x13c] sm:$0xf]
        %v4819 = vld [vmem:[%s2 + $0x140] sm:$0xf]
        %v4820 = vld [vmem:[%s2 + $0x144] sm:$0xf]
        %v4821 = vld [vmem:[%s2 + $0x148] sm:$0xf]
        %v4822 = vld [vmem:[%s2 + $0x14c] sm:$0xf]
        %v4823 = vld [vmem:[%s2 + $0x150] sm:$0xf]
        %v4824 = vld [vmem:[%s2 + $0x154] sm:$0xf]
        %v4825 = vld [vmem:[%s2 + $0x158] sm:$0xf]
        %v4826 = vld [vmem:[%s2 + $0x15c] sm:$0xf]
        %v4827 = vld [vmem:[%s2 + $0x160] sm:$0xf]
        %v4828 = vld [vmem:[%s2 + $0x164] sm:$0xf]
        %v4829 = vld [vmem:[%s2 + $0x168] sm:$0xf]
        %v4830 = vld [vmem:[%s2 + $0x16c] sm:$0xf]
        %v4831 = vld [vmem:[%s2 + $0x170] sm:$0xf]
        %v4832 = vld [vmem:[%s2 + $0x174] sm:$0xf]
        %v4833 = vld [vmem:[%s2 + $0x178] sm:$0xf]
        %v4834 = vld [vmem:[%s2 + $0x17c] sm:$0xf]
        %v4835 = vld [vmem:[%s2 + $0x180] sm:$0xf]
        %v4836 = vld [vmem:[%s2 + $0x184] sm:$0xf]
        %v4837 = vld [vmem:[%s2 + $0x188] sm:$0xf]
        %v4838 = vld [vmem:[%s2 + $0x18c] sm:$0xf]
        %v4839 = vld [vmem:[%s2 + $0x190] sm:$0xf]
        %v4840 = vld [vmem:[%s2 + $0x194] sm:$0xf]
        %v4841 = vld [vmem:[%s2 + $0x198] sm:$0xf]
        %v4842 = vld [vmem:[%s2 + $0x19c] sm:$0xf]
        %v4843 = vld [vmem:[%s2 + $0x1a0] sm:$0xf]
        %v4844 = vld [vmem:[%s2 + $0x1a4] sm:$0xf]
        %v4845 = vld [vmem:[%s2 + $0x1a8] sm:$0xf]
        %v4846 = vld [vmem:[%s2 + $0x1ac] sm:$0xf]
        %v4847 = vld [vmem:[%s2 + $0x1b0] sm:$0xf]
        %v4848 = vld [vmem:[%s2 + $0x1b4] sm:$0xf]
        %v4849 = vld [vmem:[%s2 + $0x1b8] sm:$0xf]
        %v4850 = vld [vmem:[%s2 + $0x1bc] sm:$0xf]
        %v4851 = vld [vmem:[%s2 + $0x1c0] sm:$0xf]
        %v4852 = vld [vmem:[%s2 + $0x1c4] sm:$0xf]
        %v4853 = vld [vmem:[%s2 + $0x1c8] sm:$0xf]
        %v4854 = vld [vmem:[%s2 + $0x1cc] sm:$0xf]
        %v4855 = vld [vmem:[%s2 + $0x1d0] sm:$0xf]
        %v4856 = vld [vmem:[%s2 + $0x1d4] sm:$0xf]
        %v4857 = vld [vmem:[%s2 + $0x1d8] sm:$0xf]
        %v4858 = vld [vmem:[%s2 + $0x1dc] sm:$0xf]
        %v4859 = vld [vmem:[%s2 + $0x1e0] sm:$0xf]
        %v4860 = vld [vmem:[%s2 + $0x1e4] sm:$0xf]
        %v4861 = vld [vmem:[%s2 + $0x1e8] sm:$0xf]
        %v4862 = vld [vmem:[%s2 + $0x1ec] sm:$0xf]
        %v4863 = vld [vmem:[%s2 + $0x1f0] sm:$0xf]
        %v4864 = vld [vmem:[%s2 + $0x1f4] sm:$0xf]
        %v4865 = vld [vmem:[%s2 + $0x1f8] sm:$0xf]
        %v4866 = vld [vmem:[%s2 + $0x1fc] sm:$0xf]
        %v4867 = vld [vmem:[%s2 + $0x200] sm:$0xf]
        %v4868 = vld [vmem:[%s2 + $0x204] sm:$0xf]
        %v4869 = vld [vmem:[%s2 + $0x208] sm:$0xf]
        %v4870 = vld [vmem:[%s2 + $0x20c] sm:$0xf]
        %v4871 = vld [vmem:[%s2 + $0x210] sm:$0xf]
        %v4872 = vld [vmem:[%s2 + $0x214] sm:$0xf]
        %v4873 = vld [vmem:[%s2 + $0x218] sm:$0xf]
        %v4874 = vld [vmem:[%s2 + $0x21c] sm:$0xf]
        %v4875 = vld [vmem:[%s2 + $0x220] sm:$0xf]
        %v4876 = vld [vmem:[%s2 + $0x224] sm:$0xf]
        %v4877 = vld [vmem:[%s2 + $0x228] sm:$0xf]
        %v4878 = vld [vmem:[%s2 + $0x22c] sm:$0xf]
        %v4879 = vld [vmem:[%s2 + $0x230] sm:$0xf]
        %v4880 = vld [vmem:[%s2 + $0x234] sm:$0xf]
        %v4881 = vld [vmem:[%s2 + $0x238] sm:$0xf]
        %v4882 = vld [vmem:[%s2 + $0x23c] sm:$0xf]
        %v4883 = vld [vmem:[%s2 + $0x240] sm:$0xf]
        %v4884 = vld [vmem:[%s2 + $0x244] sm:$0xf]
        %v4885 = vld [vmem:[%s2 + $0x248] sm:$0xf]
        %v4886 = vld [vmem:[%s2 + $0x24c] sm:$0xf]
        %v4887 = vld [vmem:[%s2 + $0x250] sm:$0xf]
        %v4888 = vld [vmem:[%s2 + $0x254] sm:$0xf]
        %v4889 = vld [vmem:[%s2 + $0x258] sm:$0xf]
        %v4890 = vld [vmem:[%s2 + $0x25c] sm:$0xf]
        %v4891 = vld [vmem:[%s2 + $0x260] sm:$0xf]
        %v4892 = vld [vmem:[%s2 + $0x264] sm:$0xf]
        %v4893 = vld [vmem:[%s2 + $0x268] sm:$0xf]
        %v4894 = vld [vmem:[%s2 + $0x26c] sm:$0xf]
        %v4895 = vld [vmem:[%s2 + $0x270] sm:$0xf]
        %v4896 = vld [vmem:[%s2 + $0x274] sm:$0xf]
        %v4897 = vld [vmem:[%s2 + $0x278] sm:$0xf]
        %v4898 = vld [vmem:[%s2 + $0x27c] sm:$0xf]
        %v4899 = vld [vmem:[%s4] sm:$0x1]
        %v4901 = vlaneseq
        %v4902 = vshrl.u32 %v4901, 7
        %v4903 = vsub.s32 0, %v4902
        %v4904 = vrot.slane %v4899, %v4903
        %v5066 = vunpack.c.l.b16 %v4739
        %v5067 = vunpack.c.l.b16 %v4740
        %v5068 = vunpack.c.l.b16 %v4741
        %v5069 = vunpack.c.l.b16 %v4742
        %v5070 = vunpack.c.l.b16 %v4743
        %v5071 = vunpack.c.l.b16 %v4744
        %v5072 = vunpack.c.l.b16 %v4745
        %v5073 = vunpack.c.l.b16 %v4746
        %v5074 = vunpack.c.l.b16 %v4747
        %v5075 = vunpack.c.l.b16 %v4748
        %v5076 = vunpack.c.l.b16 %v4749
        %v5077 = vunpack.c.l.b16 %v4750
        %v5078 = vunpack.c.l.b16 %v4751
        %v5079 = vunpack.c.l.b16 %v4752
        %v5080 = vunpack.c.l.b16 %v4753
        %v5081 = vunpack.c.l.b16 %v4754
        %v5082 = vunpack.c.l.b16 %v4755
        %v5083 = vunpack.c.l.b16 %v4756
        %v5084 = vunpack.c.l.b16 %v4757
        %v5085 = vunpack.c.l.b16 %v4758
        %v5086 = vunpack.c.l.b16 %v4759
        %v5087 = vunpack.c.l.b16 %v4760
        %v5088 = vunpack.c.l.b16 %v4761
        %v5089 = vunpack.c.l.b16 %v4762
        %v5090 = vunpack.c.l.b16 %v4763
        %v5091 = vunpack.c.l.b16 %v4764
        %v5092 = vunpack.c.l.b16 %v4765
        %v5093 = vunpack.c.l.b16 %v4766
        %v5094 = vunpack.c.l.b16 %v4767
        %v5095 = vunpack.c.l.b16 %v4768
        %v5096 = vunpack.c.l.b16 %v4769
        %v5097 = vunpack.c.l.b16 %v4770
        %v5098 = vunpack.c.l.b16 %v4771
        %v5099 = vunpack.c.l.b16 %v4772
        %v5100 = vunpack.c.l.b16 %v4773
        %v5101 = vunpack.c.l.b16 %v4774
        %v5102 = vunpack.c.l.b16 %v4775
        %v5103 = vunpack.c.l.b16 %v4776
        %v5104 = vunpack.c.l.b16 %v4777
        %v5105 = vunpack.c.l.b16 %v4778
        %v5106 = vunpack.c.l.b16 %v4779
        %v5107 = vunpack.c.l.b16 %v4780
        %v5108 = vunpack.c.l.b16 %v4781
        %v5109 = vunpack.c.l.b16 %v4782
        %v5110 = vunpack.c.l.b16 %v4783
        %v5111 = vunpack.c.l.b16 %v4784
        %v5112 = vunpack.c.l.b16 %v4785
        %v5113 = vunpack.c.l.b16 %v4786
        %v5114 = vunpack.c.l.b16 %v4787
        %v5115 = vunpack.c.l.b16 %v4788
        %v5116 = vunpack.c.l.b16 %v4789
        %v5117 = vunpack.c.l.b16 %v4790
        %v5118 = vunpack.c.l.b16 %v4791
        %v5119 = vunpack.c.l.b16 %v4792
        %v5120 = vunpack.c.l.b16 %v4793
        %v5121 = vunpack.c.l.b16 %v4794
        %v5122 = vunpack.c.l.b16 %v4795
        %v5123 = vunpack.c.l.b16 %v4796
        %v5124 = vunpack.c.l.b16 %v4797
        %v5125 = vunpack.c.l.b16 %v4798
        %v5126 = vunpack.c.l.b16 %v4799
        %v5127 = vunpack.c.l.b16 %v4800
        %v5128 = vunpack.c.l.b16 %v4801
        %v5129 = vunpack.c.l.b16 %v4802
        %v5130 = vunpack.c.l.b16 %v4803
        %v5131 = vunpack.c.l.b16 %v4804
        %v5132 = vunpack.c.l.b16 %v4805
        %v5133 = vunpack.c.l.b16 %v4806
        %v5134 = vunpack.c.l.b16 %v4807
        %v5135 = vunpack.c.l.b16 %v4808
        %v5136 = vunpack.c.l.b16 %v4809
        %v5137 = vunpack.c.l.b16 %v4810
        %v5138 = vunpack.c.l.b16 %v4811
        %v5139 = vunpack.c.l.b16 %v4812
        %v5140 = vunpack.c.l.b16 %v4813
        %v5141 = vunpack.c.l.b16 %v4814
        %v5142 = vunpack.c.l.b16 %v4815
        %v5143 = vunpack.c.l.b16 %v4816
        %v5144 = vunpack.c.l.b16 %v4817
        %v5145 = vunpack.c.l.b16 %v4818
        %v5146 = vunpack.c.l.b16 %v4819
        %v5147 = vunpack.c.l.b16 %v4820
        %v5148 = vunpack.c.l.b16 %v4821
        %v5149 = vunpack.c.l.b16 %v4822
        %v5150 = vunpack.c.l.b16 %v4823
        %v5151 = vunpack.c.l.b16 %v4824
        %v5152 = vunpack.c.l.b16 %v4825
        %v5153 = vunpack.c.l.b16 %v4826
        %v5154 = vunpack.c.l.b16 %v4827
        %v5155 = vunpack.c.l.b16 %v4828
        %v5156 = vunpack.c.l.b16 %v4829
        %v5157 = vunpack.c.l.b16 %v4830
        %v5158 = vunpack.c.l.b16 %v4831
        %v5159 = vunpack.c.l.b16 %v4832
        %v5160 = vunpack.c.l.b16 %v4833
        %v5161 = vunpack.c.l.b16 %v4834
        %v5162 = vunpack.c.l.b16 %v4835
        %v5163 = vunpack.c.l.b16 %v4836
        %v5164 = vunpack.c.l.b16 %v4837
        %v5165 = vunpack.c.l.b16 %v4838
        %v5166 = vunpack.c.l.b16 %v4839
        %v5167 = vunpack.c.l.b16 %v4840
        %v5168 = vunpack.c.l.b16 %v4841
        %v5169 = vunpack.c.l.b16 %v4842
        %v5170 = vunpack.c.l.b16 %v4843
        %v5171 = vunpack.c.l.b16 %v4844
        %v5172 = vunpack.c.l.b16 %v4845
        %v5173 = vunpack.c.l.b16 %v4846
        %v5174 = vunpack.c.l.b16 %v4847
        %v5175 = vunpack.c.l.b16 %v4848
        %v5176 = vunpack.c.l.b16 %v4849
        %v5177 = vunpack.c.l.b16 %v4850
        %v5178 = vunpack.c.l.b16 %v4851
        %v5179 = vunpack.c.l.b16 %v4852
        %v5180 = vunpack.c.l.b16 %v4853
        %v5181 = vunpack.c.l.b16 %v4854
        %v5182 = vunpack.c.l.b16 %v4855
        %v5183 = vunpack.c.l.b16 %v4856
        %v5184 = vunpack.c.l.b16 %v4857
        %v5185 = vunpack.c.l.b16 %v4858
        %v5186 = vunpack.c.l.b16 %v4859
        %v5187 = vunpack.c.l.b16 %v4860
        %v5188 = vunpack.c.l.b16 %v4861
        %v5189 = vunpack.c.l.b16 %v4862
        %v5190 = vunpack.c.l.b16 %v4863
        %v5191 = vunpack.c.l.b16 %v4864
        %v5192 = vunpack.c.l.b16 %v4865
        %v5193 = vunpack.c.l.b16 %v4866
        %v5194 = vunpack.c.l.b16 %v4867
        %v5195 = vunpack.c.l.b16 %v4868
        %v5196 = vunpack.c.l.b16 %v4869
        %v5197 = vunpack.c.l.b16 %v4870
        %v5198 = vunpack.c.l.b16 %v4871
        %v5199 = vunpack.c.l.b16 %v4872
        %v5200 = vunpack.c.l.b16 %v4873
        %v5201 = vunpack.c.l.b16 %v4874
        %v5202 = vunpack.c.l.b16 %v4875
        %v5203 = vunpack.c.l.b16 %v4876
        %v5204 = vunpack.c.l.b16 %v4877
        %v5205 = vunpack.c.l.b16 %v4878
        %v5206 = vunpack.c.l.b16 %v4879
        %v5207 = vunpack.c.l.b16 %v4880
        %v5208 = vunpack.c.l.b16 %v4881
        %v5209 = vunpack.c.l.b16 %v4882
        %v5210 = vunpack.c.l.b16 %v4883
        %v5211 = vunpack.c.l.b16 %v4884
        %v5212 = vunpack.c.l.b16 %v4885
        %v5213 = vunpack.c.l.b16 %v4886
        %v5214 = vunpack.c.l.b16 %v4887
        %v5215 = vunpack.c.l.b16 %v4888
        %v5216 = vunpack.c.l.b16 %v4889
        %v5217 = vunpack.c.l.b16 %v4890
        %v5218 = vunpack.c.l.b16 %v4891
        %v5219 = vunpack.c.l.b16 %v4892
        %v5220 = vunpack.c.l.b16 %v4893
        %v5221 = vunpack.c.l.b16 %v4894
        %v5222 = vunpack.c.l.b16 %v4895
        %v5223 = vunpack.c.l.b16 %v4896
        %v5224 = vunpack.c.l.b16 %v4897
        %v5225 = vunpack.c.l.b16 %v4898
        %v5226 = vpack.c.b16 %v5067, %v5066
        %v5227 = vpack.c.b16 %v5069, %v5068
        %v5228 = vpack.c.b16 %v5071, %v5070
        %v5229 = vpack.c.b16 %v5073, %v5072
        %v5230 = vpack.c.b16 %v5075, %v5074
        %v5231 = vpack.c.b16 %v5077, %v5076
        %v5232 = vpack.c.b16 %v5079, %v5078
        %v5233 = vpack.c.b16 %v5081, %v5080
        %v5234 = vpack.c.b16 %v5083, %v5082
        %v5235 = vpack.c.b16 %v5085, %v5084
        %v5236 = vpack.c.b16 %v5087, %v5086
        %v5237 = vpack.c.b16 %v5089, %v5088
        %v5238 = vpack.c.b16 %v5091, %v5090
        %v5239 = vpack.c.b16 %v5093, %v5092
        %v5240 = vpack.c.b16 %v5095, %v5094
        %v5241 = vpack.c.b16 %v5097, %v5096
        %v5242 = vpack.c.b16 %v5099, %v5098
        %v5243 = vpack.c.b16 %v5101, %v5100
        %v5244 = vpack.c.b16 %v5103, %v5102
        %v5245 = vpack.c.b16 %v5105, %v5104
        %v5246 = vpack.c.b16 %v5107, %v5106
        %v5247 = vpack.c.b16 %v5109, %v5108
        %v5248 = vpack.c.b16 %v5111, %v5110
        %v5249 = vpack.c.b16 %v5113, %v5112
        %v5250 = vpack.c.b16 %v5115, %v5114
        %v5251 = vpack.c.b16 %v5117, %v5116
        %v5252 = vpack.c.b16 %v5119, %v5118
        %v5253 = vpack.c.b16 %v5121, %v5120
        %v5254 = vpack.c.b16 %v5123, %v5122
        %v5255 = vpack.c.b16 %v5125, %v5124
        %v5256 = vpack.c.b16 %v5127, %v5126
        %v5257 = vpack.c.b16 %v5129, %v5128
        %v5258 = vpack.c.b16 %v5131, %v5130
        %v5259 = vpack.c.b16 %v5133, %v5132
        %v5260 = vpack.c.b16 %v5135, %v5134
        %v5261 = vpack.c.b16 %v5137, %v5136
        %v5262 = vpack.c.b16 %v5139, %v5138
        %v5263 = vpack.c.b16 %v5141, %v5140
        %v5264 = vpack.c.b16 %v5143, %v5142
        %v5265 = vpack.c.b16 %v5145, %v5144
        %v5266 = vpack.c.b16 %v5147, %v5146
        %v5267 = vpack.c.b16 %v5149, %v5148
        %v5268 = vpack.c.b16 %v5151, %v5150
        %v5269 = vpack.c.b16 %v5153, %v5152
        %v5270 = vpack.c.b16 %v5155, %v5154
        %v5271 = vpack.c.b16 %v5157, %v5156
        %v5272 = vpack.c.b16 %v5159, %v5158
        %v5273 = vpack.c.b16 %v5161, %v5160
        %v5274 = vpack.c.b16 %v5163, %v5162
        %v5275 = vpack.c.b16 %v5165, %v5164
        %v5276 = vpack.c.b16 %v5167, %v5166
        %v5277 = vpack.c.b16 %v5169, %v5168
        %v5278 = vpack.c.b16 %v5171, %v5170
        %v5279 = vpack.c.b16 %v5173, %v5172
        %v5280 = vpack.c.b16 %v5175, %v5174
        %v5281 = vpack.c.b16 %v5177, %v5176
        %v5282 = vpack.c.b16 %v5179, %v5178
        %v5283 = vpack.c.b16 %v5181, %v5180
        %v5284 = vpack.c.b16 %v5183, %v5182
        %v5285 = vpack.c.b16 %v5185, %v5184
        %v5286 = vpack.c.b16 %v5187, %v5186
        %v5287 = vpack.c.b16 %v5189, %v5188
        %v5288 = vpack.c.b16 %v5191, %v5190
        %v5289 = vpack.c.b16 %v5193, %v5192
        %v5290 = vpack.c.b16 %v5195, %v5194
        %v5291 = vpack.c.b16 %v5197, %v5196
        %v5292 = vpack.c.b16 %v5199, %v5198
        %v5293 = vpack.c.b16 %v5201, %v5200
        %v5294 = vpack.c.b16 %v5203, %v5202
        %v5295 = vpack.c.b16 %v5205, %v5204
        %v5296 = vpack.c.b16 %v5207, %v5206
        %v5297 = vpack.c.b16 %v5209, %v5208
        %v5298 = vpack.c.b16 %v5211, %v5210
        %v5299 = vpack.c.b16 %v5213, %v5212
        %v5300 = vpack.c.b16 %v5215, %v5214
        %v5301 = vpack.c.b16 %v5217, %v5216
        %v5302 = vpack.c.b16 %v5219, %v5218
        %v5303 = vpack.c.b16 %v5221, %v5220
        %v5304 = vpack.c.b16 %v5223, %v5222
        %v5305 = vpack.c.b16 %v5225, %v5224
        %5386 = vmatprep.subr.bf16.mxu0 0
        %5387 = vmatpush1.bf16.msra.mxu0 %v5226
        %5388 = vmatprep.subr.bf16.mxu0 0
        %5389 = vmatpush1.bf16.msra.mxu0 %v5227
        %5390 = vmatprep.subr.bf16.mxu0 0
        %5391 = vmatpush1.bf16.msra.mxu0 %v5228
        %5392 = vmatprep.subr.bf16.mxu0 0
        %5393 = vmatpush1.bf16.msra.mxu0 %v5229
        %5394 = vmatprep.subr.bf16.mxu0 0
        %5395 = vmatpush1.bf16.msra.mxu0 %v5230
        %5396 = vmatprep.subr.bf16.mxu0 0
        %5397 = vmatpush1.bf16.msra.mxu0 %v5231
        %5398 = vmatprep.subr.bf16.mxu0 0
        %5399 = vmatpush1.bf16.msra.mxu0 %v5232
        %5400 = vmatprep.subr.bf16.mxu0 0
        %5401 = vmatpush1.bf16.msra.mxu0 %v5233
        %5402 = vmatprep.subr.bf16.mxu0 0
        %5403 = vmatpush1.bf16.msra.mxu0 %v5234
        %5404 = vmatprep.subr.bf16.mxu0 0
        %5405 = vmatpush1.bf16.msra.mxu0 %v5235
        %5406 = vmatprep.subr.bf16.mxu0 0
        %5407 = vmatpush1.bf16.msra.mxu0 %v5236
        %5408 = vmatprep.subr.bf16.mxu0 0
        %5409 = vmatpush1.bf16.msra.mxu0 %v5237
        %5410 = vmatprep.subr.bf16.mxu0 0
        %5411 = vmatpush1.bf16.msra.mxu0 %v5238
        %5412 = vmatprep.subr.bf16.mxu0 0
        %5413 = vmatpush1.bf16.msra.mxu0 %v5239
        %5414 = vmatprep.subr.bf16.mxu0 0
        %5415 = vmatpush1.bf16.msra.mxu0 %v5240
        %5416 = vmatprep.subr.bf16.mxu0 0
        %5417 = vmatpush1.bf16.msra.mxu0 %v5241
        %5418 = vmatprep.mubr.bf16.mxu0 %v4660
        %5419 = vmatmul.mubr.bf16.gmra.mrb[0].mxu0 %v4659
        %v5420 = vpop.f32.mrb[0].mxu0
        %v5421 = vadd.f32 %v4904, %v5420
        %v5422 = vpop.f32.mrb[0].mxu0
        %v5423 = vpop.f32.mrb[0].mxu0
        %v5424 = vadd.f32 %v4904, %v5423
        %v5425 = vpop.f32.mrb[0].mxu0
        %5426 = vmatprep.mubr.bf16.mxu0 %v4670
        %5427 = vmatmul.mubr.bf16.gmra.mrb[0].mxu0 %v4669
        %v5428 = vpop.f32.mrb[0].mxu0
        %v5429 = vadd.f32 %v4904, %v5428
        %v5430 = vpop.f32.mrb[0].mxu0
        %v5431 = vpop.f32.mrb[0].mxu0
        %v5432 = vadd.f32 %v4904, %v5431
        %v5433 = vpop.f32.mrb[0].mxu0
        %5434 = vmatprep.mubr.bf16.mxu0 %v4680
        %5435 = vmatmul.mubr.bf16.gmra.mrb[0].mxu0 %v4679
        %v5436 = vpop.f32.mrb[0].mxu0
        %v5437 = vadd.f32 %v4904, %v5436
        %v5438 = vpop.f32.mrb[0].mxu0
        %v5439 = vpop.f32.mrb[0].mxu0
        %v5440 = vadd.f32 %v4904, %v5439
        %v5441 = vpop.f32.mrb[0].mxu0
        %5442 = vmatprep.mubr.bf16.mxu0 %v4690
        %5443 = vmatmul.mubr.bf16.gmra.mrb[0].mxu0 %v4689
        %v5444 = vpop.f32.mrb[0].mxu0
        %v5445 = vadd.f32 %v4904, %v5444
        %v5446 = vpop.f32.mrb[0].mxu0
        %v5447 = vpop.f32.mrb[0].mxu0
        %v5448 = vadd.f32 %v4904, %v5447
        %v5449 = vpop.f32.mrb[0].mxu0
        %5450 = vmatprep.mubr.bf16.mxu0 %v4700
        %5451 = vmatmul.mubr.bf16.gmra.mrb[0].mxu0 %v4699
        %v5452 = vpop.f32.mrb[0].mxu0
        %v5453 = vadd.f32 %v4904, %v5452
        %v5454 = vpop.f32.mrb[0].mxu0
        %v5455 = vpop.f32.mrb[0].mxu0
        %v5456 = vadd.f32 %v4904, %v5455
        %v5457 = vpop.f32.mrb[0].mxu0
        %5458 = vmatprep.mubr.bf16.mxu0 %v4710
        %5459 = vmatmul.mubr.bf16.gmra.mrb[0].mxu0 %v4709
        %v5460 = vpop.f32.mrb[0].mxu0
        %v5461 = vadd.f32 %v4904, %v5460
        %v5462 = vpop.f32.mrb[0].mxu0
        %v5463 = vpop.f32.mrb[0].mxu0
        %v5464 = vadd.f32 %v4904, %v5463
        %v5465 = vpop.f32.mrb[0].mxu0
        %5466 = vmatprep.mubr.bf16.mxu0 %v4720
        %5467 = vmatmul.mubr.bf16.gmra.mrb[0].mxu0 %v4719
        %v5468 = vpop.f32.mrb[0].mxu0
        %v5469 = vadd.f32 %v4904, %v5468
        %v5470 = vpop.f32.mrb[0].mxu0
        %v5471 = vpop.f32.mrb[0].mxu0
        %v5472 = vadd.f32 %v4904, %v5471
        %v5473 = vpop.f32.mrb[0].mxu0
        %5474 = vmatprep.mubr.bf16.mxu0 %v4730
        %5475 = vmatmul.mubr.bf16.gmra.mrb[0].mxu0 %v4729
        %v5476 = vpop.f32.mrb[0].mxu0
        %v5477 = vadd.f32 %v4904, %v5476
        %v5478 = vpop.f32.mrb[0].mxu0
        %v5479 = vpop.f32.mrb[0].mxu0
        %v5480 = vadd.f32 %v4904, %v5479
        %v5481 = vpop.f32.mrb[0].mxu0
        %5482 = vdwg.mxu0
        %5483 = vmatprep.subr.bf16.mxu0 0
        %5484 = vmatpush1.bf16.msra.mxu0 %v5242
        %5485 = vmatprep.subr.bf16.mxu0 0
        %5486 = vmatpush1.bf16.msra.mxu0 %v5243
        %5487 = vmatprep.subr.bf16.mxu0 0
        %5488 = vmatpush1.bf16.msra.mxu0 %v5244
        %5489 = vmatprep.subr.bf16.mxu0 0
        %5490 = vmatpush1.bf16.msra.mxu0 %v5245
        %5491 = vmatprep.subr.bf16.mxu0 0
        %5492 = vmatpush1.bf16.msra.mxu0 %v5246
        %5493 = vmatprep.subr.bf16.mxu0 0
        %5494 = vmatpush1.bf16.msra.mxu0 %v5247
        %5495 = vmatprep.subr.bf16.mxu0 0
        %5496 = vmatpush1.bf16.msra.mxu0 %v5248
        %5497 = vmatprep.subr.bf16.mxu0 0
        %5498 = vmatpush1.bf16.msra.mxu0 %v5249
        %5499 = vmatprep.subr.bf16.mxu0 0
        %5500 = vmatpush1.bf16.msra.mxu0 %v5250
        %5501 = vmatprep.subr.bf16.mxu0 0
        %5502 = vmatpush1.bf16.msra.mxu0 %v5251
        %5503 = vmatprep.subr.bf16.mxu0 0
        %5504 = vmatpush1.bf16.msra.mxu0 %v5252
        %5505 = vmatprep.subr.bf16.mxu0 0
        %5506 = vmatpush1.bf16.msra.mxu0 %v5253
        %5507 = vmatprep.subr.bf16.mxu0 0
        %5508 = vmatpush1.bf16.msra.mxu0 %v5254
        %5509 = vmatprep.subr.bf16.mxu0 0
        %5510 = vmatpush1.bf16.msra.mxu0 %v5255
        %5511 = vmatprep.subr.bf16.mxu0 0
        %5512 = vmatpush1.bf16.msra.mxu0 %v5256
        %5513 = vmatprep.subr.bf16.mxu0 0
        %5514 = vmatpush1.bf16.msra.mxu0 %v5257
        %5515 = vmatprep.mubr.bf16.mxu0 %v4662
        %5516 = vmatmul.mubr.bf16.gmra.mrb[0].mxu0 %v4661
        %v5517 = vpop.f32.mrb[0].mxu0
        %v5518 = vadd.f32 %v5421, %v5517
        %v5519 = vpop.f32.mrb[0].mxu0
        %v5520 = vpop.f32.mrb[0].mxu0
        %v5521 = vadd.f32 %v5424, %v5520
        %v5522 = vpop.f32.mrb[0].mxu0
        %5523 = vmatprep.mubr.bf16.mxu0 %v4672
        %5524 = vmatmul.mubr.bf16.gmra.mrb[0].mxu0 %v4671
        %v5525 = vpop.f32.mrb[0].mxu0
        %v5526 = vadd.f32 %v5429, %v5525
        %v5527 = vpop.f32.mrb[0].mxu0
        %v5528 = vpop.f32.mrb[0].mxu0
        %v5529 = vadd.f32 %v5432, %v5528
        %v5530 = vpop.f32.mrb[0].mxu0
        %5531 = vmatprep.mubr.bf16.mxu0 %v4682
        %5532 = vmatmul.mubr.bf16.gmra.mrb[0].mxu0 %v4681
        %v5533 = vpop.f32.mrb[0].mxu0
        %v5534 = vadd.f32 %v5437, %v5533
        %v5535 = vpop.f32.mrb[0].mxu0
        %v5536 = vpop.f32.mrb[0].mxu0
        %v5537 = vadd.f32 %v5440, %v5536
        %v5538 = vpop.f32.mrb[0].mxu0
        %5539 = vmatprep.mubr.bf16.mxu0 %v4692
        %5540 = vmatmul.mubr.bf16.gmra.mrb[0].mxu0 %v4691
        %v5541 = vpop.f32.mrb[0].mxu0
        %v5542 = vadd.f32 %v5445, %v5541
        %v5543 = vpop.f32.mrb[0].mxu0
        %v5544 = vpop.f32.mrb[0].mxu0
        %v5545 = vadd.f32 %v5448, %v5544
        %v5546 = vpop.f32.mrb[0].mxu0
        %5547 = vmatprep.mubr.bf16.mxu0 %v4702
        %5548 = vmatmul.mubr.bf16.gmra.mrb[0].mxu0 %v4701
        %v5549 = vpop.f32.mrb[0].mxu0
        %v5550 = vadd.f32 %v5453, %v5549
        %v5551 = vpop.f32.mrb[0].mxu0
        %v5552 = vpop.f32.mrb[0].mxu0
        %v5553 = vadd.f32 %v5456, %v5552
        %v5554 = vpop.f32.mrb[0].mxu0
        %5555 = vmatprep.mubr.bf16.mxu0 %v4712
        %5556 = vmatmul.mubr.bf16.gmra.mrb[0].mxu0 %v4711
        %v5557 = vpop.f32.mrb[0].mxu0
        %v5558 = vadd.f32 %v5461, %v5557
        %v5559 = vpop.f32.mrb[0].mxu0
        %v5560 = vpop.f32.mrb[0].mxu0
        %v5561 = vadd.f32 %v5464, %v5560
        %v5562 = vpop.f32.mrb[0].mxu0
        %5563 = vmatprep.mubr.bf16.mxu0 %v4722
        %5564 = vmatmul.mubr.bf16.gmra.mrb[0].mxu0 %v4721
        %v5565 = vpop.f32.mrb[0].mxu0
        %v5566 = vadd.f32 %v5469, %v5565
        %v5567 = vpop.f32.mrb[0].mxu0
        %v5568 = vpop.f32.mrb[0].mxu0
        %v5569 = vadd.f32 %v5472, %v5568
        %v5570 = vpop.f32.mrb[0].mxu0
        %5571 = vmatprep.mubr.bf16.mxu0 %v4732
        %5572 = vmatmul.mubr.bf16.gmra.mrb[0].mxu0 %v4731
        %v5573 = vpop.f32.mrb[0].mxu0
        %v5574 = vadd.f32 %v5477, %v5573
        %v5575 = vpop.f32.mrb[0].mxu0
        %v5576 = vpop.f32.mrb[0].mxu0
        %v5577 = vadd.f32 %v5480, %v5576
        %v5578 = vpop.f32.mrb[0].mxu0
        %5579 = vdwg.mxu0
        %5580 = vmatprep.subr.bf16.mxu0 0
        %5581 = vmatpush1.bf16.msra.mxu0 %v5258
        %5582 = vmatprep.subr.bf16.mxu0 0
        %5583 = vmatpush1.bf16.msra.mxu0 %v5259
        %5584 = vmatprep.subr.bf16.mxu0 0
        %5585 = vmatpush1.bf16.msra.mxu0 %v5260
        %5586 = vmatprep.subr.bf16.mxu0 0
        %5587 = vmatpush1.bf16.msra.mxu0 %v5261
        %5588 = vmatprep.subr.bf16.mxu0 0
        %5589 = vmatpush1.bf16.msra.mxu0 %v5262
        %5590 = vmatprep.subr.bf16.mxu0 0
        %5591 = vmatpush1.bf16.msra.mxu0 %v5263
        %5592 = vmatprep.subr.bf16.mxu0 0
        %5593 = vmatpush1.bf16.msra.mxu0 %v5264
        %5594 = vmatprep.subr.bf16.mxu0 0
        %5595 = vmatpush1.bf16.msra.mxu0 %v5265
        %5596 = vmatprep.subr.bf16.mxu0 0
        %5597 = vmatpush1.bf16.msra.mxu0 %v5266
        %5598 = vmatprep.subr.bf16.mxu0 0
        %5599 = vmatpush1.bf16.msra.mxu0 %v5267
        %5600 = vmatprep.subr.bf16.mxu0 0
        %5601 = vmatpush1.bf16.msra.mxu0 %v5268
        %5602 = vmatprep.subr.bf16.mxu0 0
        %5603 = vmatpush1.bf16.msra.mxu0 %v5269
        %5604 = vmatprep.subr.bf16.mxu0 0
        %5605 = vmatpush1.bf16.msra.mxu0 %v5270
        %5606 = vmatprep.subr.bf16.mxu0 0
        %5607 = vmatpush1.bf16.msra.mxu0 %v5271
        %5608 = vmatprep.subr.bf16.mxu0 0
        %5609 = vmatpush1.bf16.msra.mxu0 %v5272
        %5610 = vmatprep.subr.bf16.mxu0 0
        %5611 = vmatpush1.bf16.msra.mxu0 %v5273
        %5612 = vmatprep.mubr.bf16.mxu0 %v4664
        %5613 = vmatmul.mubr.bf16.gmra.mrb[0].mxu0 %v4663
        %v5614 = vpop.f32.mrb[0].mxu0
        %v5615 = vadd.f32 %v5518, %v5614
        %v5616 = vpop.f32.mrb[0].mxu0
        %v5617 = vpop.f32.mrb[0].mxu0
        %v5618 = vadd.f32 %v5521, %v5617
        %v5619 = vpop.f32.mrb[0].mxu0
        %5620 = vmatprep.mubr.bf16.mxu0 %v4674
        %5621 = vmatmul.mubr.bf16.gmra.mrb[0].mxu0 %v4673
        %v5622 = vpop.f32.mrb[0].mxu0
        %v5623 = vadd.f32 %v5526, %v5622
        %v5624 = vpop.f32.mrb[0].mxu0
        %v5625 = vpop.f32.mrb[0].mxu0
        %v5626 = vadd.f32 %v5529, %v5625
        %v5627 = vpop.f32.mrb[0].mxu0
        %5628 = vmatprep.mubr.bf16.mxu0 %v4684
        %5629 = vmatmul.mubr.bf16.gmra.mrb[0].mxu0 %v4683
        %v5630 = vpop.f32.mrb[0].mxu0
        %v5631 = vadd.f32 %v5534, %v5630
        %v5632 = vpop.f32.mrb[0].mxu0
        %v5633 = vpop.f32.mrb[0].mxu0
        %v5634 = vadd.f32 %v5537, %v5633
        %v5635 = vpop.f32.mrb[0].mxu0
        %5636 = vmatprep.mubr.bf16.mxu0 %v4694
        %5637 = vmatmul.mubr.bf16.gmra.mrb[0].mxu0 %v4693
        %v5638 = vpop.f32.mrb[0].mxu0
        %v5639 = vadd.f32 %v5542, %v5638
        %v5640 = vpop.f32.mrb[0].mxu0
        %v5641 = vpop.f32.mrb[0].mxu0
        %v5642 = vadd.f32 %v5545, %v5641
        %v5643 = vpop.f32.mrb[0].mxu0
        %5644 = vmatprep.mubr.bf16.mxu0 %v4704
        %5645 = vmatmul.mubr.bf16.gmra.mrb[0].mxu0 %v4703
        %v5646 = vpop.f32.mrb[0].mxu0
        %v5647 = vadd.f32 %v5550, %v5646
        %v5648 = vpop.f32.mrb[0].mxu0
        %v5649 = vpop.f32.mrb[0].mxu0
        %v5650 = vadd.f32 %v5553, %v5649
        %v5651 = vpop.f32.mrb[0].mxu0
        %5652 = vmatprep.mubr.bf16.mxu0 %v4714
        %5653 = vmatmul.mubr.bf16.gmra.mrb[0].mxu0 %v4713
        %v5654 = vpop.f32.mrb[0].mxu0
        %v5655 = vadd.f32 %v5558, %v5654
        %v5656 = vpop.f32.mrb[0].mxu0
        %v5657 = vpop.f32.mrb[0].mxu0
        %v5658 = vadd.f32 %v5561, %v5657
        %v5659 = vpop.f32.mrb[0].mxu0
        %5660 = vmatprep.mubr.bf16.mxu0 %v4724
        %5661 = vmatmul.mubr.bf16.gmra.mrb[0].mxu0 %v4723
        %v5662 = vpop.f32.mrb[0].mxu0
        %v5663 = vadd.f32 %v5566, %v5662
        %v5664 = vpop.f32.mrb[0].mxu0
        %v5665 = vpop.f32.mrb[0].mxu0
        %v5666 = vadd.f32 %v5569, %v5665
        %v5667 = vpop.f32.mrb[0].mxu0
        %5668 = vmatprep.mubr.bf16.mxu0 %v4734
        %5669 = vmatmul.mubr.bf16.gmra.mrb[0].mxu0 %v4733
        %v5670 = vpop.f32.mrb[0].mxu0
        %v5671 = vadd.f32 %v5574, %v5670
        %v5672 = vpop.f32.mrb[0].mxu0
        %v5673 = vpop.f32.mrb[0].mxu0
        %v5674 = vadd.f32 %v5577, %v5673
        %v5675 = vpop.f32.mrb[0].mxu0
        %5676 = vdwg.mxu0
        %5677 = vmatprep.subr.bf16.mxu0 0
        %5678 = vmatpush1.bf16.msra.mxu0 %v5274
        %5679 = vmatprep.subr.bf16.mxu0 0
        %5680 = vmatpush1.bf16.msra.mxu0 %v5275
        %5681 = vmatprep.subr.bf16.mxu0 0
        %5682 = vmatpush1.bf16.msra.mxu0 %v5276
        %5683 = vmatprep.subr.bf16.mxu0 0
        %5684 = vmatpush1.bf16.msra.mxu0 %v5277
        %5685 = vmatprep.subr.bf16.mxu0 0
        %5686 = vmatpush1.bf16.msra.mxu0 %v5278
        %5687 = vmatprep.subr.bf16.mxu0 0
        %5688 = vmatpush1.bf16.msra.mxu0 %v5279
        %5689 = vmatprep.subr.bf16.mxu0 0
        %5690 = vmatpush1.bf16.msra.mxu0 %v5280
        %5691 = vmatprep.subr.bf16.mxu0 0
        %5692 = vmatpush1.bf16.msra.mxu0 %v5281
        %5693 = vmatprep.subr.bf16.mxu0 0
        %5694 = vmatpush1.bf16.msra.mxu0 %v5282
        %5695 = vmatprep.subr.bf16.mxu0 0
        %5696 = vmatpush1.bf16.msra.mxu0 %v5283
        %5697 = vmatprep.subr.bf16.mxu0 0
        %5698 = vmatpush1.bf16.msra.mxu0 %v5284
        %5699 = vmatprep.subr.bf16.mxu0 0
        %5700 = vmatpush1.bf16.msra.mxu0 %v5285
        %5701 = vmatprep.subr.bf16.mxu0 0
        %5702 = vmatpush1.bf16.msra.mxu0 %v5286
        %5703 = vmatprep.subr.bf16.mxu0 0
        %5704 = vmatpush1.bf16.msra.mxu0 %v5287
        %5705 = vmatprep.subr.bf16.mxu0 0
        %5706 = vmatpush1.bf16.msra.mxu0 %v5288
        %5707 = vmatprep.subr.bf16.mxu0 0
        %5708 = vmatpush1.bf16.msra.mxu0 %v5289
        %5709 = vmatprep.mubr.bf16.mxu0 %v4666
        %5710 = vmatmul.mubr.bf16.gmra.mrb[0].mxu0 %v4665
        %v5711 = vpop.f32.mrb[0].mxu0
        %v5712 = vadd.f32 %v5615, %v5711
        %v5713 = vpop.f32.mrb[0].mxu0
        %v5714 = vpop.f32.mrb[0].mxu0
        %v5715 = vadd.f32 %v5618, %v5714
        %v5716 = vpop.f32.mrb[0].mxu0
        %5717 = vmatprep.mubr.bf16.mxu0 %v4676
        %5718 = vmatmul.mubr.bf16.gmra.mrb[0].mxu0 %v4675
        %v5719 = vpop.f32.mrb[0].mxu0
        %v5720 = vadd.f32 %v5623, %v5719
        %v5721 = vpop.f32.mrb[0].mxu0
        %v5722 = vpop.f32.mrb[0].mxu0
        %v5723 = vadd.f32 %v5626, %v5722
        %v5724 = vpop.f32.mrb[0].mxu0
        %5725 = vmatprep.mubr.bf16.mxu0 %v4686
        %5726 = vmatmul.mubr.bf16.gmra.mrb[0].mxu0 %v4685
        %v5727 = vpop.f32.mrb[0].mxu0
        %v5728 = vadd.f32 %v5631, %v5727
        %v5729 = vpop.f32.mrb[0].mxu0
        %v5730 = vpop.f32.mrb[0].mxu0
        %v5731 = vadd.f32 %v5634, %v5730
        %v5732 = vpop.f32.mrb[0].mxu0
        %5733 = vmatprep.mubr.bf16.mxu0 %v4696
        %5734 = vmatmul.mubr.bf16.gmra.mrb[0].mxu0 %v4695
        %v5735 = vpop.f32.mrb[0].mxu0
        %v5736 = vadd.f32 %v5639, %v5735
        %v5737 = vpop.f32.mrb[0].mxu0
        %v5738 = vpop.f32.mrb[0].mxu0
        %v5739 = vadd.f32 %v5642, %v5738
        %v5740 = vpop.f32.mrb[0].mxu0
        %5741 = vmatprep.mubr.bf16.mxu0 %v4706
        %5742 = vmatmul.mubr.bf16.gmra.mrb[0].mxu0 %v4705
        %v5743 = vpop.f32.mrb[0].mxu0
        %v5744 = vadd.f32 %v5647, %v5743
        %v5745 = vpop.f32.mrb[0].mxu0
        %v5746 = vpop.f32.mrb[0].mxu0
        %v5747 = vadd.f32 %v5650, %v5746
        %v5748 = vpop.f32.mrb[0].mxu0
        %5749 = vmatprep.mubr.bf16.mxu0 %v4716
        %5750 = vmatmul.mubr.bf16.gmra.mrb[0].mxu0 %v4715
        %v5751 = vpop.f32.mrb[0].mxu0
        %v5752 = vadd.f32 %v5655, %v5751
        %v5753 = vpop.f32.mrb[0].mxu0
        %v5754 = vpop.f32.mrb[0].mxu0
        %v5755 = vadd.f32 %v5658, %v5754
        %v5756 = vpop.f32.mrb[0].mxu0
        %5757 = vmatprep.mubr.bf16.mxu0 %v4726
        %5758 = vmatmul.mubr.bf16.gmra.mrb[0].mxu0 %v4725
        %v5759 = vpop.f32.mrb[0].mxu0
        %v5760 = vadd.f32 %v5663, %v5759
        %v5761 = vpop.f32.mrb[0].mxu0
        %v5762 = vpop.f32.mrb[0].mxu0
        %v5763 = vadd.f32 %v5666, %v5762
        %v5764 = vpop.f32.mrb[0].mxu0
        %5765 = vmatprep.mubr.bf16.mxu0 %v4736
        %5766 = vmatmul.mubr.bf16.gmra.mrb[0].mxu0 %v4735
        %v5767 = vpop.f32.mrb[0].mxu0
        %v5768 = vadd.f32 %v5671, %v5767
        %v5769 = vpop.f32.mrb[0].mxu0
        %v5770 = vpop.f32.mrb[0].mxu0
        %v5771 = vadd.f32 %v5674, %v5770
        %v5772 = vpop.f32.mrb[0].mxu0
        %5773 = vdwg.mxu0
        %5774 = vmatprep.subr.bf16.mxu0 0
        %5775 = vmatpush1.bf16.msra.mxu0 %v5290
        %5776 = vmatprep.subr.bf16.mxu0 0
        %5777 = vmatpush1.bf16.msra.mxu0 %v5291
        %5778 = vmatprep.subr.bf16.mxu0 0
        %5779 = vmatpush1.bf16.msra.mxu0 %v5292
        %5780 = vmatprep.subr.bf16.mxu0 0
        %5781 = vmatpush1.bf16.msra.mxu0 %v5293
        %5782 = vmatprep.subr.bf16.mxu0 0
        %5783 = vmatpush1.bf16.msra.mxu0 %v5294
        %5784 = vmatprep.subr.bf16.mxu0 0
        %5785 = vmatpush1.bf16.msra.mxu0 %v5295
        %5786 = vmatprep.subr.bf16.mxu0 0
        %5787 = vmatpush1.bf16.msra.mxu0 %v5296
        %5788 = vmatprep.subr.bf16.mxu0 0
        %5789 = vmatpush1.bf16.msra.mxu0 %v5297
        %5790 = vmatprep.subr.bf16.mxu0 0
        %5791 = vmatpush1.bf16.msra.mxu0 %v5298
        %5792 = vmatprep.subr.bf16.mxu0 0
        %5793 = vmatpush1.bf16.msra.mxu0 %v5299
        %5794 = vmatprep.subr.bf16.mxu0 0
        %5795 = vmatpush1.bf16.msra.mxu0 %v5300
        %5796 = vmatprep.subr.bf16.mxu0 0
        %5797 = vmatpush1.bf16.msra.mxu0 %v5301
        %5798 = vmatprep.subr.bf16.mxu0 0
        %5799 = vmatpush1.bf16.msra.mxu0 %v5302
        %5800 = vmatprep.subr.bf16.mxu0 0
        %5801 = vmatpush1.bf16.msra.mxu0 %v5303
        %5802 = vmatprep.subr.bf16.mxu0 0
        %5803 = vmatpush1.bf16.msra.mxu0 %v5304
        %5804 = vmatprep.subr.bf16.mxu0 0
        %5805 = vmatpush1.bf16.msra.mxu0 %v5305
        %5806 = vmatprep.mubr.bf16.mxu0 %v4668
        %5807 = vmatmul.mubr.bf16.gmra.mrb[0].mxu0 %v4667
        %v5808 = vpop.f32.mrb[0].mxu0
        %v5809 = vadd.f32 %v5712, %v5808
        %v5810 = vpop.f32.mrb[0].mxu0
        %v5811 = vpop.f32.mrb[0].mxu0
        %v5812 = vadd.f32 %v5715, %v5811
        %v5813 = vpop.f32.mrb[0].mxu0
        %5814 = vmatprep.mubr.bf16.mxu0 %v4678
        %5815 = vmatmul.mubr.bf16.gmra.mrb[0].mxu0 %v4677
        %v5816 = vpop.f32.mrb[0].mxu0
        %v5817 = vadd.f32 %v5720, %v5816
        %v5818 = vpop.f32.mrb[0].mxu0
        %v5819 = vpop.f32.mrb[0].mxu0
        %v5820 = vadd.f32 %v5723, %v5819
        %v5821 = vpop.f32.mrb[0].mxu0
        %5822 = vmatprep.mubr.bf16.mxu0 %v4688
        %5823 = vmatmul.mubr.bf16.gmra.mrb[0].mxu0 %v4687
        %v5824 = vpop.f32.mrb[0].mxu0
        %v5825 = vadd.f32 %v5728, %v5824
        %v5826 = vpop.f32.mrb[0].mxu0
        %v5827 = vpop.f32.mrb[0].mxu0
        %v5828 = vadd.f32 %v5731, %v5827
        %v5829 = vpop.f32.mrb[0].mxu0
        %5830 = vmatprep.mubr.bf16.mxu0 %v4698
        %5831 = vmatmul.mubr.bf16.gmra.mrb[0].mxu0 %v4697
        %v5832 = vpop.f32.mrb[0].mxu0
        %v5833 = vadd.f32 %v5736, %v5832
        %v5834 = vpop.f32.mrb[0].mxu0
        %v5835 = vpop.f32.mrb[0].mxu0
        %v5836 = vadd.f32 %v5739, %v5835
        %v5837 = vpop.f32.mrb[0].mxu0
        %5838 = vmatprep.mubr.bf16.mxu0 %v4708
        %5839 = vmatmul.mubr.bf16.gmra.mrb[0].mxu0 %v4707
        %v5840 = vpop.f32.mrb[0].mxu0
        %v5841 = vadd.f32 %v5744, %v5840
        %v5842 = vpop.f32.mrb[0].mxu0
        %v5843 = vpop.f32.mrb[0].mxu0
        %v5844 = vadd.f32 %v5747, %v5843
        %v5845 = vpop.f32.mrb[0].mxu0
        %5846 = vmatprep.mubr.bf16.mxu0 %v4718
        %5847 = vmatmul.mubr.bf16.gmra.mrb[0].mxu0 %v4717
        %v5848 = vpop.f32.mrb[0].mxu0
        %v5849 = vadd.f32 %v5752, %v5848
        %v5850 = vpop.f32.mrb[0].mxu0
        %v5851 = vpop.f32.mrb[0].mxu0
        %v5852 = vadd.f32 %v5755, %v5851
        %v5853 = vpop.f32.mrb[0].mxu0
        %5854 = vmatprep.mubr.bf16.mxu0 %v4728
        %5855 = vmatmul.mubr.bf16.gmra.mrb[0].mxu0 %v4727
        %v5856 = vpop.f32.mrb[0].mxu0
        %v5857 = vadd.f32 %v5760, %v5856
        %v5858 = vpop.f32.mrb[0].mxu0
        %v5859 = vpop.f32.mrb[0].mxu0
        %v5860 = vadd.f32 %v5763, %v5859
        %v5861 = vpop.f32.mrb[0].mxu0
        %5862 = vmatprep.mubr.bf16.mxu0 %v4738
        %5863 = vmatmul.mubr.bf16.gmra.mrb[0].mxu0 %v4737
        %v5864 = vpop.f32.mrb[0].mxu0
        %v5865 = vadd.f32 %v5768, %v5864
        %v5866 = vpop.f32.mrb[0].mxu0
        %v5867 = vpop.f32.mrb[0].mxu0
        %v5868 = vadd.f32 %v5771, %v5867
        %v5869 = vpop.f32.mrb[0].mxu0
        %5870 = vdwg.mxu0
        %v5871 = vmax.f32 %v5809, 0.0
        %v5872 = vmax.f32 %v5812, 0.0
        %v5873 = vmax.f32 %v5817, 0.0
        %v5874 = vmax.f32 %v5820, 0.0
        %v5875 = vmax.f32 %v5825, 0.0
        %v5876 = vmax.f32 %v5828, 0.0
        %v5877 = vmax.f32 %v5833, 0.0
        %v5878 = vmax.f32 %v5836, 0.0
        %v5879 = vmax.f32 %v5841, 0.0
        %v5880 = vmax.f32 %v5844, 0.0
        %v5881 = vmax.f32 %v5849, 0.0
        %v5882 = vmax.f32 %v5852, 0.0
        %v5883 = vmax.f32 %v5857, 0.0
        %v5884 = vmax.f32 %v5860, 0.0
        %v5885 = vmax.f32 %v5865, 0.0
        %v5886 = vmax.f32 %v5868, 0.0
        %5887 = vst [vmem:[%s246] sm:$0xff] %v5871
        %5888 = vst [vmem:[%s246 + $0x8] sm:$0xff] %v5872
        %5889 = vst [vmem:[%s246 + $0x10] sm:$0xff] %v5873
        %5890 = vst [vmem:[%s246 + $0x18] sm:$0xff] %v5874
        %5891 = vst [vmem:[%s246 + $0x20] sm:$0xff] %v5875
        %5892 = vst [vmem:[%s246 + $0x28] sm:$0xff] %v5876
        %5893 = vst [vmem:[%s246 + $0x30] sm:$0xff] %v5877
        %5894 = vst [vmem:[%s246 + $0x38] sm:$0xff] %v5878
        %5895 = vst [vmem:[%s246 + $0x40] sm:$0xff] %v5879
        %5896 = vst [vmem:[%s246 + $0x48] sm:$0xff] %v5880
        %5897 = vst [vmem:[%s246 + $0x50] sm:$0xff] %v5881
        %5898 = vst [vmem:[%s246 + $0x58] sm:$0xff] %v5882
        %5899 = vst [vmem:[%s246 + $0x60] sm:$0xff] %v5883
        %5900 = vst [vmem:[%s246 + $0x68] sm:$0xff] %v5884
        %5901 = vst [vmem:[%s246 + $0x70] sm:$0xff] %v5885
        %5902 = vst [vmem:[%s246 + $0x78] sm:$0xff] %v5886
        %s5903 = sand.u32 %s152, 1
        %s5904 = scalar_lea.sflag [#allocation7], %s5903
        %s5905 = sand.u32 %s152, 1
        %s5906 = smul.addr %s5905, 128
        %s5907 = scalar_lea.vmem [#allocation8], %s5906
        // Predicated region
        $region53: #{tpu_custom_call.1} parent=39 // pred_check
          %p5908 = pneg %p162
        $region54: #{tpu_custom_call.1} parent=39 // pred_check_branch
          %5910 = sbr.rel (%p5908) target = $region56
        $region55: #{tpu_custom_call.1} parent=39 // pred_region
          %s5911 = smul.u32 8, %s25
          %s5913 = ssub.s32 2048, 2048
          %5914 = vsyncadd %s5904, %s5913
          %s5915 = smul.addr %s5911, 2
          %s5916 = smul.addr %s24, 32
          %s5917 = sadd.s32 %s5915, %s5916
          %s5918 = smul.addr %s5917, 128
          %s5919 = scalar_lea.hbm %s5, %s5918
          %s5920 = sshll.u32 %s5907, 4
          %s5921 = int_to_ptr.vmem [resolvable:$true] %s5920
          %5926 = dma.vmem_to_hbm [thread:$0]  %s5921, 2048, %s5919, %s5904, 128, 128, 8
        $region56: #{tpu_custom_call.1} parent=39 // pred_fallthru
          _
      $region40: #{tpu_custom_call.1} parent=5 // pred_fallthru
        _
      %p5927 = scmp.le.s32.totalorder 2, %s15
      // Predicated region
      $region57: #{tpu_custom_call.1} parent=5 // pred_check
        %p5928 = pneg %p5927
      $region58: #{tpu_custom_call.1} parent=5 // pred_check_branch
        %5930 = sbr.rel (%p5928) target = $region60
      $region59: #{tpu_custom_call.1} parent=5 // pred_region
        %s5931 = ssub.s32 %s15, 2
        // Predicated region
        $region61: #{tpu_custom_call.1} parent=59 // pred_check
          %p5932 = pneg %p168
        $region62: #{tpu_custom_call.1} parent=59 // pred_check_branch
          %5934 = sbr.rel (%p5932) target = $region64
        $region63: #{tpu_custom_call.1} parent=59 // pred_region
          %s5935 = sand.u32 %s153, 1
          %s5936 = scalar_lea.sflag [#allocation7], %s5935
          %s5937 = sand.u32 %s153, 1
          %s5938 = smul.addr %s5937, 128
          %s5939 = scalar_lea.vmem [#allocation8], %s5938
          %5940 = dma.done %s5936, 2048
        $region64: #{tpu_custom_call.1} parent=59 // pred_fallthru
          _
      $region60: #{tpu_custom_call.1} parent=5 // pred_fallthru
        _
    $region6: #{tpu_custom_call.1} parent=1 // loop_footer
      %s19 = sadd.s32 1, %s15
    $region7: #{tpu_custom_call.1} parent=1 // loop_footer_branch
      %14 = sbr.rel target = $region3
    $region8: #{tpu_custom_call.1} parent=1 // loop_exit
      _
    %5941 = vsyncpa [#allocation6], 1
    %s5942 = scalar_lea.sflag [#allocation6], 1
    %5943 = vsyncpa %s5942, 1
    %5944 = vsyncpa [#allocation7], 1
    %s5945 = scalar_lea.sflag [#allocation7], 1
    %5946 = vsyncpa %s5945, 1

// kernel: tpu_custom_call.1
$region0: #{tpu_custom_call.1}
  #allocation0 [shape = 'u32[]', space=smem, size = 0x4, offset = 0x4, fixed_abs, tag = 'smem constant byte address 0x4 - core index']
  #allocation1 [shape = 'u32[144,128]{1,0:T(1,128)}', space=vmem, size = 0x12000, scoped, tag = 'internal scratch']
  #allocation2 [shape = 'bf16[10,16,1152]{2,1,0:T(16,128)(2,1)}', space=vmem, size = 0x5a000, scoped, tag = 'scratch operand']
  #allocation3 [shape = 'bf16[10,18,128]{2,1,0:T(8,128)(2,1)}', space=vmem, size = 0xf000, scoped, tag = 'scratch operand']
  #allocation4 [shape = 'bf16[8,16,1280]{2,1,0:T(16,128)(2,1)}', space=vmem, size = 0x50000, scoped, tag = 'scratch operand']
  %s0 = inlined_call_operand.vmem [shape: bf16[2,20,18,128], index: 0, kind: input, shape index: {}]
  %s1 = inlined_call_operand.hbm [shape: bf16[1152,128], index: 1, kind: input, shape index: {}]
  %s2 = inlined_call_operand.vmem [shape: bf16[1280,128], index: 2, kind: input, shape index: {}]
  %s3 = inlined_call_operand.vmem [shape: f32[1,128], index: 3, kind: input, shape index: {}]
  %s4 = inlined_call_operand.vmem [shape: f32[1,128], index: 4, kind: input, shape index: {}]
  %s5 = inlined_call_operand.hbm [shape: f32[2,16,16,128], index: 5, kind: output, shape index: {}]
  %s6 = sld [smem:[#allocation0]]
  $region65: #{tpu_custom_call.1} parent=0
    _
  %s8 = ssub.s32 1, %s6
  %s9 = scalar_select 0, %s8, %s6
  $region1: #{tpu_custom_call.1} parent=0
    #allocation5 [shape = 'u8[294912]{0}', space=vmem, size = 0x48000, scoped, tag = 'input window, operand 1, single buffered']
    #allocation6 [shape = 's32[2]{0}', space=sflag, size = 0x8, scoped, tag = 'scoped memory for tpu_custom_call.1']
    #allocation7 [shape = 's32[2]{0}', space=sflag, size = 0x8, scoped, tag = 'scoped memory for tpu_custom_call.1']
    #allocation8 [shape = 'u8[131072]{0}', space=vmem, size = 0x20000, scoped, tag = 'output window, operand 0']
    %10 = vsyncpa [#allocation6], 0
    %11 = vsyncpa [#allocation7], 0
    %s12 = scalar_lea.sflag [#allocation7], 1
    %13 = vsyncpa %s12, 0
    loop: start=0, step=1, limit=6
    $region2: #{tpu_custom_call.1} parent=1 // loop_pre_header
      _
    $region3: #{tpu_custom_call.1} parent=1 // loop_header
      %s15 = sphi 0, %s19
      %p16 = scmp.ge.s32.totalorder %s15, 6
      %s22 = sphi 0, %s34
      %s23 = sphi 0, %s30
      %s24 = sphi 0, %s22
      %s25 = sphi 0, %s23
      %s26 = sphi 0, %s24
      %s27 = sphi 0, %s25
      %s37 = sphi 0, %s39
      %s40 = sphi 0, %s37
      %s41 = sphi 0, %s40
      %s57 = sphi 0, %s41
      %s61 = sphi 0, %s61
      %s63 = sphi 0, %s61
      %s64 = sphi 0, %s63
      %s78 = sphi 0, %s64
      %s82 = sphi 0, %s82
      %s84 = sphi 0, %s82
      %s85 = sphi 0, %s84
      %s99 = sphi 0, %s85
      %s103 = sphi 0, %s103
      %s105 = sphi 0, %s103
      %s106 = sphi 0, %s105
      %s120 = sphi 0, %s106
      %s124 = sphi 0, %s124
      %s126 = sphi 0, %s124
      %s127 = sphi 0, %s126
      %s141 = sphi 0, %s127
      %s149 = sphi 0, %s151
      %s152 = sphi 0, %s149
      %s153 = sphi 0, %s152
      %s169 = sphi 0, %s153
    $region4: #{tpu_custom_call.1} parent=1 // loop_header_branch
      %18 = sbr.rel (%p16) target = $region8
    $region5: #{tpu_custom_call.1} parent=1 // loop_body
      %s20 = ssub.s32 %s15, 1
      %s21 = ssub.s32 %s15, 2
      %s28 = sadd.s32 1, %s23
      %p29 = scmp.ge.s32.totalorder %s28, 2
      %s30 = scalar_select %p29, 0, %s28
      %s31 = sadd.s32 1, %s22
      %s32 = scalar_select %p29, %s31, %s22
      %p33 = scmp.ge.s32.totalorder %s32, 2
      %s34 = scalar_select %p33, 0, %s32
      %s35 = ssub.s32 %s22, %s34
      %p36 = scmp.eq.s32.totalorder %s35, 0
      %s38 = sadd.s32 %s37, 1
      %s39 = scalar_select %p36, %s37, %s38
      %p42 = pneg %p36
      %p43 = scmp.eq.s32.totalorder %s15, 3
      %p44 = por %p42, %p43
      %p45 = scmp.ne.s32.totalorder %s37, %s40
      %p46 = scmp.eq.s32.totalorder %s15, 0
      %p47 = por %p45, %p46
      %p48 = scmp.ne.s32.totalorder %s37, %s40
      %p49 = scmp.eq.s32.totalorder %s20, 3
      %p50 = por %p48, %p49
      %p51 = scmp.ne.s32.totalorder %s40, %s41
      %p52 = scmp.eq.s32.totalorder %s20, 0
      %p53 = por %p51, %p52
      %p54 = scmp.ne.s32.totalorder %s40, %s41
      %p55 = scmp.eq.s32.totalorder %s21, 3
      %p56 = por %p54, %p55
      %p58 = scmp.ne.s32.totalorder %s41, %s57
      %p59 = scmp.eq.s32.totalorder %s21, 0
      %p60 = por %p58, %p59
      %s62 = sadd.s32 %s61, 1
      %p65 = scmp.eq.s32.totalorder %s15, 3
      %p66 = scmp.ne.s32.totalorder %s61, %s63
      %p67 = scmp.eq.s32.totalorder %s15, 0
      %p68 = por %p66, %p67
      %p69 = scmp.ne.s32.totalorder %s61, %s63
      %p70 = scmp.eq.s32.totalorder %s20, 3
      %p71 = por %p69, %p70
      %p72 = scmp.ne.s32.totalorder %s63, %s64
      %p73 = scmp.eq.s32.totalorder %s20, 0
      %p74 = por %p72, %p73
      %p75 = scmp.ne.s32.totalorder %s63, %s64
      %p76 = scmp.eq.s32.totalorder %s21, 3
      %p77 = por %p75, %p76
      %p79 = scmp.ne.s32.totalorder %s64, %s78
      %p80 = scmp.eq.s32.totalorder %s21, 0
      %p81 = por %p79, %p80
      %s83 = sadd.s32 %s82, 1
      %p86 = scmp.eq.s32.totalorder %s15, 3
      %p87 = scmp.ne.s32.totalorder %s82, %s84
      %p88 = scmp.eq.s32.totalorder %s15, 0
      %p89 = por %p87, %p88
      %p90 = scmp.ne.s32.totalorder %s82, %s84
      %p91 = scmp.eq.s32.totalorder %s20, 3
      %p92 = por %p90, %p91
      %p93 = scmp.ne.s32.totalorder %s84, %s85
      %p94 = scmp.eq.s32.totalorder %s20, 0
      %p95 = por %p93, %p94
      %p96 = scmp.ne.s32.totalorder %s84, %s85
      %p97 = scmp.eq.s32.totalorder %s21, 3
      %p98 = por %p96, %p97
      %p100 = scmp.ne.s32.totalorder %s85, %s99
      %p101 = scmp.eq.s32.totalorder %s21, 0
      %p102 = por %p100, %p101
      %s104 = sadd.s32 %s103, 1
      %p107 = scmp.eq.s32.totalorder %s15, 3
      %p108 = scmp.ne.s32.totalorder %s103, %s105
      %p109 = scmp.eq.s32.totalorder %s15, 0
      %p110 = por %p108, %p109
      %p111 = scmp.ne.s32.totalorder %s103, %s105
      %p112 = scmp.eq.s32.totalorder %s20, 3
      %p113 = por %p111, %p112
      %p114 = scmp.ne.s32.totalorder %s105, %s106
      %p115 = scmp.eq.s32.totalorder %s20, 0
      %p116 = por %p114, %p115
      %p117 = scmp.ne.s32.totalorder %s105, %s106
      %p118 = scmp.eq.s32.totalorder %s21, 3
      %p119 = por %p117, %p118
      %p121 = scmp.ne.s32.totalorder %s106, %s120
      %p122 = scmp.eq.s32.totalorder %s21, 0
      %p123 = por %p121, %p122
      %s125 = sadd.s32 %s124, 1
      %p128 = scmp.eq.s32.totalorder %s15, 3
      %p129 = scmp.ne.s32.totalorder %s124, %s126
      %p130 = scmp.eq.s32.totalorder %s15, 0
      %p131 = por %p129, %p130
      %p132 = scmp.ne.s32.totalorder %s124, %s126
      %p133 = scmp.eq.s32.totalorder %s20, 3
      %p134 = por %p132, %p133
      %p135 = scmp.ne.s32.totalorder %s126, %s127
      %p136 = scmp.eq.s32.totalorder %s20, 0
      %p137 = por %p135, %p136
      %p138 = scmp.ne.s32.totalorder %s126, %s127
      %p139 = scmp.eq.s32.totalorder %s21, 3
      %p140 = por %p138, %p139
      %p142 = scmp.ne.s32.totalorder %s127, %s141
      %p143 = scmp.eq.s32.totalorder %s21, 0
      %p144 = por %p142, %p143
      %s145 = ssub.s32 %s22, %s34
      %s146 = ssub.s32 %s23, %s30
      %s147 = sor.u32 %s145, %s146
      %p148 = scmp.eq.s32.totalorder %s147, 0
      %s150 = sadd.s32 %s149, 1
      %s151 = scalar_select %p148, %s149, %s150
      %p154 = pneg %p148
      %p155 = scmp.eq.s32.totalorder %s15, 3
      %p156 = por %p154, %p155
      %p157 = scmp.ne.s32.totalorder %s149, %s152
      %p158 = scmp.eq.s32.totalorder %s15, 0
      %p159 = por %p157, %p158
      %p160 = scmp.ne.s32.totalorder %s149, %s152
      %p161 = scmp.eq.s32.totalorder %s20, 3
      %p162 = por %p160, %p161
      %p163 = scmp.ne.s32.totalorder %s152, %s153
      %p164 = scmp.eq.s32.totalorder %s20, 0
      %p165 = por %p163, %p164
      %p166 = scmp.ne.s32.totalorder %s152, %s153
      %p167 = scmp.eq.s32.totalorder %s21, 3
      %p168 = por %p166, %p167
      %p170 = scmp.ne.s32.totalorder %s153, %s169
      %p171 = scmp.eq.s32.totalorder %s21, 0
      %p172 = por %p170, %p171
      %p173 = scmp.le.s32.totalorder 1, %s15
      %p174 = scmp.lt.s32.totalorder %s15, 5
      %p175 = pnand %p173, %p174
      %p176 = pneg %p175
      // Predicated region
      $region9: #{tpu_custom_call.1} parent=5 // pred_check
        _
      $region10: #{tpu_custom_call.1} parent=5 // pred_check_branch
        %178 = sbr.rel (%p175) target = $region12
      $region11: #{tpu_custom_call.1} parent=5 // pred_region
        %s179 = ssub.s32 %s15, 1
        // Predicated region
        $region13: #{tpu_custom_call.1} parent=11 // pred_check
          %p180 = pneg %p74
        $region14: #{tpu_custom_call.1} parent=11 // pred_check_branch
          %182 = sbr.rel (%p180) target = $region16
        $region15: #{tpu_custom_call.1} parent=11 // pred_region
          %s184 = ssub.s32 9216, 9216
          %185 = vsyncadd [#allocation6], %s184
          %s186 = sshll.u32 [#allocation5], 4
          %s187 = int_to_ptr.vmem [resolvable:$true] %s186
          %192 = dma.hbm_to_vmem [thread:$0]  %s1, 9216, %s187, [#allocation6], 64, 64, 4
        $region16: #{tpu_custom_call.1} parent=11 // pred_fallthru
          _
        // Predicated region
        $region17: #{tpu_custom_call.1} parent=11 // pred_check
          %p193 = pneg %p95
        $region18: #{tpu_custom_call.1} parent=11 // pred_check_branch
          %195 = sbr.rel (%p193) target = $region20
        $region19: #{tpu_custom_call.1} parent=11 // pred_region
          _
        $region20: #{tpu_custom_call.1} parent=11 // pred_fallthru
          _
        // Predicated region
        $region21: #{tpu_custom_call.1} parent=11 // pred_check
          %p196 = pneg %p116
        $region22: #{tpu_custom_call.1} parent=11 // pred_check_branch
          %198 = sbr.rel (%p196) target = $region24
        $region23: #{tpu_custom_call.1} parent=11 // pred_region
          _
        $region24: #{tpu_custom_call.1} parent=11 // pred_fallthru
          _
        // Predicated region
        $region25: #{tpu_custom_call.1} parent=11 // pred_check
          %p199 = pneg %p137
        $region26: #{tpu_custom_call.1} parent=11 // pred_check_branch
          %201 = sbr.rel (%p199) target = $region28
        $region27: #{tpu_custom_call.1} parent=11 // pred_region
          _
        $region28: #{tpu_custom_call.1} parent=11 // pred_fallthru
          _
      $region12: #{tpu_custom_call.1} parent=5 // pred_fallthru
        _
      %p202 = scmp.lt.s32.totalorder %s15, 4
      // Predicated region
      $region29: #{tpu_custom_call.1} parent=5 // pred_check
        %p203 = pneg %p202
      $region30: #{tpu_custom_call.1} parent=5 // pred_check_branch
        %205 = sbr.rel (%p203) target = $region32
      $region31: #{tpu_custom_call.1} parent=5 // pred_region
        // Predicated region
        $region33: #{tpu_custom_call.1} parent=31 // pred_check
          %p206 = pneg %p47
        $region34: #{tpu_custom_call.1} parent=31 // pred_check_branch
          %208 = sbr.rel (%p206) target = $region36
        $region35: #{tpu_custom_call.1} parent=31 // pred_region
          %p209 = scmp.lt.s32.totalorder %s22, 1
          %s210 = scalar_select %p209, %s22, 1
          %s211 = smul.addr %s210, 60
          %s212 = smul.addr %s211, 4
          %s213 = scalar_lea.vmem %s0, %s212
        $region36: #{tpu_custom_call.1} parent=31 // pred_fallthru
          _
      $region32: #{tpu_custom_call.1} parent=5 // pred_fallthru
        _
      %p214 = scmp.le.s32.totalorder 1, %s15
      %p215 = scmp.lt.s32.totalorder %s15, 5
      %p216 = pnand %p214, %p215
      %p217 = pneg %p216
      // Predicated region
      $region37: #{tpu_custom_call.1} parent=5 // pred_check
        _
      $region38: #{tpu_custom_call.1} parent=5 // pred_check_branch
        %219 = sbr.rel (%p216) target = $region40
      $region39: #{tpu_custom_call.1} parent=5 // pred_region
        %s220 = ssub.s32 %s15, 1
        // Predicated region
        $region41: #{tpu_custom_call.1} parent=39 // pred_check
          %p221 = pneg %p74
        $region42: #{tpu_custom_call.1} parent=39 // pred_check_branch
          %223 = sbr.rel (%p221) target = $region44
        $region43: #{tpu_custom_call.1} parent=39 // pred_region
          %224 = dma.done [#allocation6], 9216
        $region44: #{tpu_custom_call.1} parent=39 // pred_fallthru
          _
        %p225 = scmp.lt.s32.totalorder %s24, 1
        %s226 = scalar_select %p225, %s24, 1
        %s227 = smul.addr %s226, 60
        %s228 = smul.addr %s227, 4
        %s229 = scalar_lea.vmem %s0, %s228
        %p230 = pneg %p53
        %p231 = pneg %p50
        %p232 = pneg %p74
        %p233 = pneg %p71
        %p234 = pneg %p95
        %p235 = pneg %p92
        %p236 = pneg %p116
        %p237 = pneg %p113
        %p238 = pneg %p137
        %p239 = pneg %p134
        %p240 = pneg %p165
        %p241 = pneg %p162
        %s242 = sand.u32 %s152, 1
        %s243 = scalar_lea.sflag [#allocation7], %s242
        %s244 = sand.u32 %s152, 1
        %s245 = smul.addr %s244, 128
        %s246 = scalar_lea.vmem [#allocation8], %s245
        %p247 = scmp.lt.s32.totalorder %s24, 1
        %s248 = scalar_select %p247, %s24, 1
        %s249 = smul.addr %s248, 60
        %s250 = smul.addr %s249, 4
        %s251 = scalar_lea.vmem %s0, %s250
        %s252 = smul.u32 8, %s25
        %s254 = smul.u32 %s25, 8
        %s255 = smul.u32 %s254, 3
        %s256 = smul.addr %s255, 4
        %s257 = scalar_lea.vmem %s251, %s256
        %v258 = vld [vmem:[%s257] sm:$0xf]
        %v259 = vld [vmem:[%s257 + $0x4] sm:$0xf]
        %v260 = vld [vmem:[%s257 + $0xc] sm:$0xf]
        %v261 = vld [vmem:[%s257 + $0x10] sm:$0xf]
        %v262 = vld [vmem:[%s257 + $0x18] sm:$0xf]
        %v263 = vld [vmem:[%s257 + $0x1c] sm:$0xf]
        %v264 = vld [vmem:[%s257 + $0x24] sm:$0xf]
        %v265 = vld [vmem:[%s257 + $0x28] sm:$0xf]
        %v266 = vld [vmem:[%s257 + $0x30] sm:$0xf]
        %v267 = vld [vmem:[%s257 + $0x34] sm:$0xf]
        %v268 = vld [vmem:[%s257 + $0x3c] sm:$0xf]
        %v269 = vld [vmem:[%s257 + $0x40] sm:$0xf]
        %v270 = vld [vmem:[%s257 + $0x48] sm:$0xf]
        %v271 = vld [vmem:[%s257 + $0x4c] sm:$0xf]
        %v272 = vld [vmem:[%s257 + $0x54] sm:$0xf]
        %v273 = vld [vmem:[%s257 + $0x58] sm:$0xf]
        %v274 = vld [vmem:[%s257 + $0x60] sm:$0xf]
        %v275 = vld [vmem:[%s257 + $0x64] sm:$0xf]
        %v276 = vld [vmem:[%s257 + $0x6c] sm:$0xf]
        %v277 = vld [vmem:[%s257 + $0x70] sm:$0xf]
        %v298 = vunpack.c.l.b16 %v258
        %v299 = vunpack.c.l.b16 %v259
        %v300 = vunpack.c.l.b16 %v260
        %v301 = vunpack.c.l.b16 %v261
        %v302 = vunpack.c.l.b16 %v262
        %v303 = vunpack.c.l.b16 %v263
        %v304 = vunpack.c.l.b16 %v264
        %v305 = vunpack.c.l.b16 %v265
        %v306 = vunpack.c.l.b16 %v266
        %v307 = vunpack.c.l.b16 %v267
        %v308 = vunpack.c.l.b16 %v268
        %v309 = vunpack.c.l.b16 %v269
        %v310 = vunpack.c.l.b16 %v270
        %v311 = vunpack.c.l.b16 %v271
        %v312 = vunpack.c.l.b16 %v272
        %v313 = vunpack.c.l.b16 %v273
        %v314 = vunpack.c.l.b16 %v274
        %v315 = vunpack.c.l.b16 %v275
        %v316 = vunpack.c.l.b16 %v276
        %v317 = vunpack.c.l.b16 %v277
        %v318 = vpack.c.b16 %v299, %v298
        %v319 = vpack.c.b16 %v301, %v300
        %v320 = vpack.c.b16 %v303, %v302
        %v321 = vpack.c.b16 %v305, %v304
        %v322 = vpack.c.b16 %v307, %v306
        %v323 = vpack.c.b16 %v309, %v308
        %v324 = vpack.c.b16 %v311, %v310
        %v325 = vpack.c.b16 %v313, %v312
        %v326 = vpack.c.b16 %v315, %v314
        %v327 = vpack.c.b16 %v317, %v316
        %338 = vst [vmem:[#allocation2] sm:$0xff] %v318
        %339 = vst [vmem:[#allocation2 + $0x48] sm:$0xff] %v319
        %340 = vst [vmem:[#allocation2 + $0x90] sm:$0xff] %v320
        %341 = vst [vmem:[#allocation2 + $0xd8] sm:$0xff] %v321
        %342 = vst [vmem:[#allocation2 + $0x120] sm:$0xff] %v322
        %343 = vst [vmem:[#allocation2 + $0x168] sm:$0xff] %v323
        %344 = vst [vmem:[#allocation2 + $0x1b0] sm:$0xff] %v324
        %345 = vst [vmem:[#allocation2 + $0x1f8] sm:$0xff] %v325
        %346 = vst [vmem:[#allocation2 + $0x240] sm:$0xff] %v326
        %347 = vst [vmem:[#allocation2 + $0x288] sm:$0xff] %v327
        %v348 = vld [vmem:[%s257] sm:$0xf]
        %v349 = vld [vmem:[%s257 + $0x4] sm:$0xf]
        %v350 = vld [vmem:[%s257 + $0x8] sm:$0x1]
        %v351 = vld [vmem:[%s257 + $0xc] sm:$0xf]
        %v352 = vld [vmem:[%s257 + $0x10] sm:$0xf]
        %v353 = vld [vmem:[%s257 + $0x14] sm:$0x1]
        %v354 = vld [vmem:[%s257 + $0x18] sm:$0xf]
        %v355 = vld [vmem:[%s257 + $0x1c] sm:$0xf]
        %v356 = vld [vmem:[%s257 + $0x20] sm:$0x1]
        %v357 = vld [vmem:[%s257 + $0x24] sm:$0xf]
        %v358 = vld [vmem:[%s257 + $0x28] sm:$0xf]
        %v359 = vld [vmem:[%s257 + $0x2c] sm:$0x1]
        %v360 = vld [vmem:[%s257 + $0x30] sm:$0xf]
        %v361 = vld [vmem:[%s257 + $0x34] sm:$0xf]
        %v362 = vld [vmem:[%s257 + $0x38] sm:$0x1]
        %v363 = vld [vmem:[%s257 + $0x3c] sm:$0xf]
        %v364 = vld [vmem:[%s257 + $0x40] sm:$0xf]
        %v365 = vld [vmem:[%s257 + $0x44] sm:$0x1]
        %v366 = vld [vmem:[%s257 + $0x48] sm:$0xf]
        %v367 = vld [vmem:[%s257 + $0x4c] sm:$0xf]
        %v368 = vld [vmem:[%s257 + $0x50] sm:$0x1]
        %v369 = vld [vmem:[%s257 + $0x54] sm:$0xf]
        %v370 = vld [vmem:[%s257 + $0x58] sm:$0xf]
        %v371 = vld [vmem:[%s257 + $0x5c] sm:$0x1]
        %v372 = vld [vmem:[%s257 + $0x60] sm:$0xf]
        %v373 = vld [vmem:[%s257 + $0x64] sm:$0xf]
        %v374 = vld [vmem:[%s257 + $0x68] sm:$0x1]
        %v375 = vld [vmem:[%s257 + $0x6c] sm:$0xf]
        %v376 = vld [vmem:[%s257 + $0x70] sm:$0xf]
        %v377 = vld [vmem:[%s257 + $0x74] sm:$0x1]
        %v408 = vunpack.c.l.b16 %v348
        %v409 = vunpack.c.l.b16 %v349
        %v410 = vunpack.c.l.b16 %v350
        %v411 = vunpack.c.l.b16 %v351
        %v412 = vunpack.c.l.b16 %v352
        %v413 = vunpack.c.l.b16 %v353
        %v414 = vunpack.c.l.b16 %v354
        %v415 = vunpack.c.l.b16 %v355
        %v416 = vunpack.c.l.b16 %v356
        %v417 = vunpack.c.l.b16 %v357
        %v418 = vunpack.c.l.b16 %v358
        %v419 = vunpack.c.l.b16 %v359
        %v420 = vunpack.c.l.b16 %v360
        %v421 = vunpack.c.l.b16 %v361
        %v422 = vunpack.c.l.b16 %v362
        %v423 = vunpack.c.l.b16 %v363
        %v424 = vunpack.c.l.b16 %v364
        %v425 = vunpack.c.l.b16 %v365
        %v426 = vunpack.c.l.b16 %v366
        %v427 = vunpack.c.l.b16 %v367
        %v428 = vunpack.c.l.b16 %v368
        %v429 = vunpack.c.l.b16 %v369
        %v430 = vunpack.c.l.b16 %v370
        %v431 = vunpack.c.l.b16 %v371
        %v432 = vunpack.c.l.b16 %v372
        %v433 = vunpack.c.l.b16 %v373
        %v434 = vunpack.c.l.b16 %v374
        %v435 = vunpack.c.l.b16 %v375
        %v436 = vunpack.c.l.b16 %v376
        %v437 = vunpack.c.l.b16 %v377
        %v438 = vpack.c.b16 %v409, %v408
        %v439 = vpack.c.b16 %v410, %v410
        %v440 = vpack.c.b16 %v412, %v411
        %v441 = vpack.c.b16 %v413, %v413
        %v442 = vpack.c.b16 %v415, %v414
        %v443 = vpack.c.b16 %v416, %v416
        %v444 = vpack.c.b16 %v418, %v417
        %v445 = vpack.c.b16 %v419, %v419
        %v446 = vpack.c.b16 %v421, %v420
        %v447 = vpack.c.b16 %v422, %v422
        %v448 = vpack.c.b16 %v424, %v423
        %v449 = vpack.c.b16 %v425, %v425
        %v450 = vpack.c.b16 %v427, %v426
        %v451 = vpack.c.b16 %v428, %v428
        %v452 = vpack.c.b16 %v430, %v429
        %v453 = vpack.c.b16 %v431, %v431
        %v454 = vpack.c.b16 %v433, %v432
        %v455 = vpack.c.b16 %v434, %v434
        %v456 = vpack.c.b16 %v436, %v435
        %v457 = vpack.c.b16 %v437, %v437
        %vm458 = vsmask.f32 7424
        %v460 = vshrl.u32 %v438, 16
        %v462 = vshll.u32 %v438, 16
        %v464 = vrot.slane %v462, 1
        %v465 = vor.u32 %v460, %v464
        %v467 = vshll.u32 %v439, 16
        %v469 = vrot.slane %v467, 1
        %v470 = vsel %vm458, %v465, %v469
        %v472 = vshrl.u32 %v440, 16
        %v474 = vshll.u32 %v440, 16
        %v476 = vrot.slane %v474, 1
        %v477 = vor.u32 %v472, %v476
        %v479 = vshll.u32 %v441, 16
        %v481 = vrot.slane %v479, 1
        %v482 = vsel %vm458, %v477, %v481
        %v484 = vshrl.u32 %v442, 16
        %v486 = vshll.u32 %v442, 16
        %v488 = vrot.slane %v486, 1
        %v489 = vor.u32 %v484, %v488
        %v491 = vshll.u32 %v443, 16
        %v493 = vrot.slane %v491, 1
        %v494 = vsel %vm458, %v489, %v493
        %v496 = vshrl.u32 %v444, 16
        %v498 = vshll.u32 %v444, 16
        %v500 = vrot.slane %v498, 1
        %v501 = vor.u32 %v496, %v500
        %v503 = vshll.u32 %v445, 16
        %v505 = vrot.slane %v503, 1
        %v506 = vsel %vm458, %v501, %v505
        %v508 = vshrl.u32 %v446, 16
        %v510 = vshll.u32 %v446, 16
        %v512 = vrot.slane %v510, 1
        %v513 = vor.u32 %v508, %v512
        %v515 = vshll.u32 %v447, 16
        %v517 = vrot.slane %v515, 1
        %v518 = vsel %vm458, %v513, %v517
        %v520 = vshrl.u32 %v448, 16
        %v522 = vshll.u32 %v448, 16
        %v524 = vrot.slane %v522, 1
        %v525 = vor.u32 %v520, %v524
        %v527 = vshll.u32 %v449, 16
        %v529 = vrot.slane %v527, 1
        %v530 = vsel %vm458, %v525, %v529
        %v532 = vshrl.u32 %v450, 16
        %v534 = vshll.u32 %v450, 16
        %v536 = vrot.slane %v534, 1
        %v537 = vor.u32 %v532, %v536
        %v539 = vshll.u32 %v451, 16
        %v541 = vrot.slane %v539, 1
        %v542 = vsel %vm458, %v537, %v541
        %v544 = vshrl.u32 %v452, 16
        %v546 = vshll.u32 %v452, 16
        %v548 = vrot.slane %v546, 1
        %v549 = vor.u32 %v544, %v548
        %v551 = vshll.u32 %v453, 16
        %v553 = vrot.slane %v551, 1
        %v554 = vsel %vm458, %v549, %v553
        %v556 = vshrl.u32 %v454, 16
        %v558 = vshll.u32 %v454, 16
        %v560 = vrot.slane %v558, 1
        %v561 = vor.u32 %v556, %v560
        %v563 = vshll.u32 %v455, 16
        %v565 = vrot.slane %v563, 1
        %v566 = vsel %vm458, %v561, %v565
        %v568 = vshrl.u32 %v456, 16
        %v570 = vshll.u32 %v456, 16
        %v572 = vrot.slane %v570, 1
        %v573 = vor.u32 %v568, %v572
        %v575 = vshll.u32 %v457, 16
        %v577 = vrot.slane %v575, 1
        %v578 = vsel %vm458, %v573, %v577
        %589 = vst [vmem:[#allocation2 + $0x8] sm:$0xff] %v470
        %590 = vst [vmem:[#allocation2 + $0x50] sm:$0xff] %v482
        %591 = vst [vmem:[#allocation2 + $0x98] sm:$0xff] %v494
        %592 = vst [vmem:[#allocation2 + $0xe0] sm:$0xff] %v506
        %593 = vst [vmem:[#allocation2 + $0x128] sm:$0xff] %v518
        %594 = vst [vmem:[#allocation2 + $0x170] sm:$0xff] %v530
        %595 = vst [vmem:[#allocation2 + $0x1b8] sm:$0xff] %v542
        %596 = vst [vmem:[#allocation2 + $0x200] sm:$0xff] %v554
        %597 = vst [vmem:[#allocation2 + $0x248] sm:$0xff] %v566
        %598 = vst [vmem:[#allocation2 + $0x290] sm:$0xff] %v578
        %v599 = vld [vmem:[%s257] sm:$0xe]
        %v600 = vld [vmem:[%s257 + $0x4] sm:$0xf]
        %v601 = vld [vmem:[%s257 + $0x8] sm:$0x1]
        %v602 = vld [vmem:[%s257 + $0xc] sm:$0xe]
        %v603 = vld [vmem:[%s257 + $0x10] sm:$0xf]
        %v604 = vld [vmem:[%s257 + $0x14] sm:$0x1]
        %v605 = vld [vmem:[%s257 + $0x18] sm:$0xe]
        %v606 = vld [vmem:[%s257 + $0x1c] sm:$0xf]
        %v607 = vld [vmem:[%s257 + $0x20] sm:$0x1]
        %v608 = vld [vmem:[%s257 + $0x24] sm:$0xe]
        %v609 = vld [vmem:[%s257 + $0x28] sm:$0xf]
        %v610 = vld [vmem:[%s257 + $0x2c] sm:$0x1]
        %v611 = vld [vmem:[%s257 + $0x30] sm:$0xe]
        %v612 = vld [vmem:[%s257 + $0x34] sm:$0xf]
        %v613 = vld [vmem:[%s257 + $0x38] sm:$0x1]
        %v614 = vld [vmem:[%s257 + $0x3c] sm:$0xe]
        %v615 = vld [vmem:[%s257 + $0x40] sm:$0xf]
        %v616 = vld [vmem:[%s257 + $0x44] sm:$0x1]
        %v617 = vld [vmem:[%s257 + $0x48] sm:$0xe]
        %v618 = vld [vmem:[%s257 + $0x4c] sm:$0xf]
        %v619 = vld [vmem:[%s257 + $0x50] sm:$0x1]
        %v620 = vld [vmem:[%s257 + $0x54] sm:$0xe]
        %v621 = vld [vmem:[%s257 + $0x58] sm:$0xf]
        %v622 = vld [vmem:[%s257 + $0x5c] sm:$0x1]
        %v623 = vld [vmem:[%s257 + $0x60] sm:$0xe]
        %v624 = vld [vmem:[%s257 + $0x64] sm:$0xf]
        %v625 = vld [vmem:[%s257 + $0x68] sm:$0x1]
        %v626 = vld [vmem:[%s257 + $0x6c] sm:$0xe]
        %v627 = vld [vmem:[%s257 + $0x70] sm:$0xf]
        %v628 = vld [vmem:[%s257 + $0x74] sm:$0x1]
        %v659 = vunpack.c.l.b16 %v599
        %v660 = vunpack.c.l.b16 %v600
        %v661 = vunpack.c.l.b16 %v601
        %v662 = vunpack.c.l.b16 %v602
        %v663 = vunpack.c.l.b16 %v603
        %v664 = vunpack.c.l.b16 %v604
        %v665 = vunpack.c.l.b16 %v605
        %v666 = vunpack.c.l.b16 %v606
        %v667 = vunpack.c.l.b16 %v607
        %v668 = vunpack.c.l.b16 %v608
        %v669 = vunpack.c.l.b16 %v609
        %v670 = vunpack.c.l.b16 %v610
        %v671 = vunpack.c.l.b16 %v611
        %v672 = vunpack.c.l.b16 %v612
        %v673 = vunpack.c.l.b16 %v613
        %v674 = vunpack.c.l.b16 %v614
        %v675 = vunpack.c.l.b16 %v615
        %v676 = vunpack.c.l.b16 %v616
        %v677 = vunpack.c.l.b16 %v617
        %v678 = vunpack.c.l.b16 %v618
        %v679 = vunpack.c.l.b16 %v619
        %v680 = vunpack.c.l.b16 %v620
        %v681 = vunpack.c.l.b16 %v621
        %v682 = vunpack.c.l.b16 %v622
        %v683 = vunpack.c.l.b16 %v623
        %v684 = vunpack.c.l.b16 %v624
        %v685 = vunpack.c.l.b16 %v625
        %v686 = vunpack.c.l.b16 %v626
        %v687 = vunpack.c.l.b16 %v627
        %v688 = vunpack.c.l.b16 %v628
        %v689 = vpack.c.b16 %v660, %v659
        %v690 = vpack.c.b16 %v661, %v661
        %v691 = vpack.c.b16 %v663, %v662
        %v692 = vpack.c.b16 %v664, %v664
        %v693 = vpack.c.b16 %v666, %v665
        %v694 = vpack.c.b16 %v667, %v667
        %v695 = vpack.c.b16 %v669, %v668
        %v696 = vpack.c.b16 %v670, %v670
        %v697 = vpack.c.b16 %v672, %v671
        %v698 = vpack.c.b16 %v673, %v673
        %v699 = vpack.c.b16 %v675, %v674
        %v700 = vpack.c.b16 %v676, %v676
        %v701 = vpack.c.b16 %v678, %v677
        %v702 = vpack.c.b16 %v679, %v679
        %v703 = vpack.c.b16 %v681, %v680
        %v704 = vpack.c.b16 %v682, %v682
        %v705 = vpack.c.b16 %v684, %v683
        %v706 = vpack.c.b16 %v685, %v685
        %v707 = vpack.c.b16 %v687, %v686
        %v708 = vpack.c.b16 %v688, %v688
        %vm709 = vcmask 1046528
        %v710 = vrot.slane %v689, 1
        %v711 = vrot.slane %v690, 1
        %v712 = vsel %vm709, %v710, %v711
        %v713 = vrot.slane %v691, 1
        %v714 = vrot.slane %v692, 1
        %v715 = vsel %vm709, %v713, %v714
        %v716 = vrot.slane %v693, 1
        %v717 = vrot.slane %v694, 1
        %v718 = vsel %vm709, %v716, %v717
        %v719 = vrot.slane %v695, 1
        %v720 = vrot.slane %v696, 1
        %v721 = vsel %vm709, %v719, %v720
        %v722 = vrot.slane %v697, 1
        %v723 = vrot.slane %v698, 1
        %v724 = vsel %vm709, %v722, %v723
        %v725 = vrot.slane %v699, 1
        %v726 = vrot.slane %v700, 1
        %v727 = vsel %vm709, %v725, %v726
        %v728 = vrot.slane %v701, 1
        %v729 = vrot.slane %v702, 1
        %v730 = vsel %vm709, %v728, %v729
        %v731 = vrot.slane %v703, 1
        %v732 = vrot.slane %v704, 1
        %v733 = vsel %vm709, %v731, %v732
        %v734 = vrot.slane %v705, 1
        %v735 = vrot.slane %v706, 1
        %v736 = vsel %vm709, %v734, %v735
        %v737 = vrot.slane %v707, 1
        %v738 = vrot.slane %v708, 1
        %v739 = vsel %vm709, %v737, %v738
        %750 = vst [vmem:[#allocation2 + $0x10] sm:$0xff] %v712
        %751 = vst [vmem:[#allocation2 + $0x58] sm:$0xff] %v715
        %752 = vst [vmem:[#allocation2 + $0xa0] sm:$0xff] %v718
        %753 = vst [vmem:[#allocation2 + $0xe8] sm:$0xff] %v721
        %754 = vst [vmem:[#allocation2 + $0x130] sm:$0xff] %v724
        %755 = vst [vmem:[#allocation2 + $0x178] sm:$0xff] %v727
        %756 = vst [vmem:[#allocation2 + $0x1c0] sm:$0xff] %v730
        %757 = vst [vmem:[#allocation2 + $0x208] sm:$0xff] %v733
        %758 = vst [vmem:[#allocation2 + $0x250] sm:$0xff] %v736
        %759 = vst [vmem:[#allocation2 + $0x298] sm:$0xff] %v739
        %s760 = sadd.s32 %s254, 1
        %s761 = smul.u32 %s760, 3
        %s762 = smul.addr %s761, 4
        %s763 = scalar_lea.vmem %s251, %s762
        %v764 = vld [vmem:[%s763] sm:$0xf]
        %v765 = vld [vmem:[%s763 + $0x4] sm:$0xf]
        %v766 = vld [vmem:[%s763 + $0xc] sm:$0xf]
        %v767 = vld [vmem:[%s763 + $0x10] sm:$0xf]
        %v768 = vld [vmem:[%s763 + $0x18] sm:$0xf]
        %v769 = vld [vmem:[%s763 + $0x1c] sm:$0xf]
        %v770 = vld [vmem:[%s763 + $0x24] sm:$0xf]
        %v771 = vld [vmem:[%s763 + $0x28] sm:$0xf]
        %v772 = vld [vmem:[%s763 + $0x30] sm:$0xf]
        %v773 = vld [vmem:[%s763 + $0x34] sm:$0xf]
        %v774 = vld [vmem:[%s763 + $0x3c] sm:$0xf]
        %v775 = vld [vmem:[%s763 + $0x40] sm:$0xf]
        %v776 = vld [vmem:[%s763 + $0x48] sm:$0xf]
        %v777 = vld [vmem:[%s763 + $0x4c] sm:$0xf]
        %v778 = vld [vmem:[%s763 + $0x54] sm:$0xf]
        %v779 = vld [vmem:[%s763 + $0x58] sm:$0xf]
        %v780 = vld [vmem:[%s763 + $0x60] sm:$0xf]
        %v781 = vld [vmem:[%s763 + $0x64] sm:$0xf]
        %v782 = vld [vmem:[%s763 + $0x6c] sm:$0xf]
        %v783 = vld [vmem:[%s763 + $0x70] sm:$0xf]
        %v804 = vunpack.c.l.b16 %v764
        %v805 = vunpack.c.l.b16 %v765
        %v806 = vunpack.c.l.b16 %v766
        %v807 = vunpack.c.l.b16 %v767
        %v808 = vunpack.c.l.b16 %v768
        %v809 = vunpack.c.l.b16 %v769
        %v810 = vunpack.c.l.b16 %v770
        %v811 = vunpack.c.l.b16 %v771
        %v812 = vunpack.c.l.b16 %v772
        %v813 = vunpack.c.l.b16 %v773
        %v814 = vunpack.c.l.b16 %v774
        %v815 = vunpack.c.l.b16 %v775
        %v816 = vunpack.c.l.b16 %v776
        %v817 = vunpack.c.l.b16 %v777
        %v818 = vunpack.c.l.b16 %v778
        %v819 = vunpack.c.l.b16 %v779
        %v820 = vunpack.c.l.b16 %v780
        %v821 = vunpack.c.l.b16 %v781
        %v822 = vunpack.c.l.b16 %v782
        %v823 = vunpack.c.l.b16 %v783
        %v824 = vpack.c.b16 %v805, %v804
        %v825 = vpack.c.b16 %v807, %v806
        %v826 = vpack.c.b16 %v809, %v808
        %v827 = vpack.c.b16 %v811, %v810
        %v828 = vpack.c.b16 %v813, %v812
        %v829 = vpack.c.b16 %v815, %v814
        %v830 = vpack.c.b16 %v817, %v816
        %v831 = vpack.c.b16 %v819, %v818
        %v832 = vpack.c.b16 %v821, %v820
        %v833 = vpack.c.b16 %v823, %v822
        %844 = vst [vmem:[#allocation2 + $0x18] sm:$0xff] %v824
        %845 = vst [vmem:[#allocation2 + $0x60] sm:$0xff] %v825
        %846 = vst [vmem:[#allocation2 + $0xa8] sm:$0xff] %v826
        %847 = vst [vmem:[#allocation2 + $0xf0] sm:$0xff] %v827
        %848 = vst [vmem:[#allocation2 + $0x138] sm:$0xff] %v828
        %849 = vst [vmem:[#allocation2 + $0x180] sm:$0xff] %v829
        %850 = vst [vmem:[#allocation2 + $0x1c8] sm:$0xff] %v830
        %851 = vst [vmem:[#allocation2 + $0x210] sm:$0xff] %v831
        %852 = vst [vmem:[#allocation2 + $0x258] sm:$0xff] %v832
        %853 = vst [vmem:[#allocation2 + $0x2a0] sm:$0xff] %v833
        %v854 = vld [vmem:[%s763] sm:$0xf]
        %v855 = vld [vmem:[%s763 + $0x4] sm:$0xf]
        %v856 = vld [vmem:[%s763 + $0x8] sm:$0x1]
        %v857 = vld [vmem:[%s763 + $0xc] sm:$0xf]
        %v858 = vld [vmem:[%s763 + $0x10] sm:$0xf]
        %v859 = vld [vmem:[%s763 + $0x14] sm:$0x1]
        %v860 = vld [vmem:[%s763 + $0x18] sm:$0xf]
        %v861 = vld [vmem:[%s763 + $0x1c] sm:$0xf]
        %v862 = vld [vmem:[%s763 + $0x20] sm:$0x1]
        %v863 = vld [vmem:[%s763 + $0x24] sm:$0xf]
        %v864 = vld [vmem:[%s763 + $0x28] sm:$0xf]
        %v865 = vld [vmem:[%s763 + $0x2c] sm:$0x1]
        %v866 = vld [vmem:[%s763 + $0x30] sm:$0xf]
        %v867 = vld [vmem:[%s763 + $0x34] sm:$0xf]
        %v868 = vld [vmem:[%s763 + $0x38] sm:$0x1]
        %v869 = vld [vmem:[%s763 + $0x3c] sm:$0xf]
        %v870 = vld [vmem:[%s763 + $0x40] sm:$0xf]
        %v871 = vld [vmem:[%s763 + $0x44] sm:$0x1]
        %v872 = vld [vmem:[%s763 + $0x48] sm:$0xf]
        %v873 = vld [vmem:[%s763 + $0x4c] sm:$0xf]
        %v874 = vld [vmem:[%s763 + $0x50] sm:$0x1]
        %v875 = vld [vmem:[%s763 + $0x54] sm:$0xf]
        %v876 = vld [vmem:[%s763 + $0x58] sm:$0xf]
        %v877 = vld [vmem:[%s763 + $0x5c] sm:$0x1]
        %v878 = vld [vmem:[%s763 + $0x60] sm:$0xf]
        %v879 = vld [vmem:[%s763 + $0x64] sm:$0xf]
        %v880 = vld [vmem:[%s763 + $0x68] sm:$0x1]
        %v881 = vld [vmem:[%s763 + $0x6c] sm:$0xf]
        %v882 = vld [vmem:[%s763 + $0x70] sm:$0xf]
        %v883 = vld [vmem:[%s763 + $0x74] sm:$0x1]
        %v914 = vunpack.c.l.b16 %v854
        %v915 = vunpack.c.l.b16 %v855
        %v916 = vunpack.c.l.b16 %v856
        %v917 = vunpack.c.l.b16 %v857
        %v918 = vunpack.c.l.b16 %v858
        %v919 = vunpack.c.l.b16 %v859
        %v920 = vunpack.c.l.b16 %v860
        %v921 = vunpack.c.l.b16 %v861
        %v922 = vunpack.c.l.b16 %v862
        %v923 = vunpack.c.l.b16 %v863
        %v924 = vunpack.c.l.b16 %v864
        %v925 = vunpack.c.l.b16 %v865
        %v926 = vunpack.c.l.b16 %v866
        %v927 = vunpack.c.l.b16 %v867
        %v928 = vunpack.c.l.b16 %v868
        %v929 = vunpack.c.l.b16 %v869
        %v930 = vunpack.c.l.b16 %v870
        %v931 = vunpack.c.l.b16 %v871
        %v932 = vunpack.c.l.b16 %v872
        %v933 = vunpack.c.l.b16 %v873
        %v934 = vunpack.c.l.b16 %v874
        %v935 = vunpack.c.l.b16 %v875
        %v936 = vunpack.c.l.b16 %v876
        %v937 = vunpack.c.l.b16 %v877
        %v938 = vunpack.c.l.b16 %v878
        %v939 = vunpack.c.l.b16 %v879
        %v940 = vunpack.c.l.b16 %v880
        %v941 = vunpack.c.l.b16 %v881
        %v942 = vunpack.c.l.b16 %v882
        %v943 = vunpack.c.l.b16 %v883
        %v944 = vpack.c.b16 %v915, %v914
        %v945 = vpack.c.b16 %v916, %v916
        %v946 = vpack.c.b16 %v918, %v917
        %v947 = vpack.c.b16 %v919, %v919
        %v948 = vpack.c.b16 %v921, %v920
        %v949 = vpack.c.b16 %v922, %v922
        %v950 = vpack.c.b16 %v924, %v923
        %v951 = vpack.c.b16 %v925, %v925
        %v952 = vpack.c.b16 %v927, %v926
        %v953 = vpack.c.b16 %v928, %v928
        %v954 = vpack.c.b16 %v930, %v929
        %v955 = vpack.c.b16 %v931, %v931
        %v956 = vpack.c.b16 %v933, %v932
        %v957 = vpack.c.b16 %v934, %v934
        %v958 = vpack.c.b16 %v936, %v935
        %v959 = vpack.c.b16 %v937, %v937
        %v960 = vpack.c.b16 %v939, %v938
        %v961 = vpack.c.b16 %v940, %v940
        %v962 = vpack.c.b16 %v942, %v941
        %v963 = vpack.c.b16 %v943, %v943
        %v965 = vshrl.u32 %v944, 16
        %v967 = vshll.u32 %v944, 16
        %v969 = vrot.slane %v967, 1
        %v970 = vor.u32 %v965, %v969
        %v972 = vshll.u32 %v945, 16
        %v974 = vrot.slane %v972, 1
        %v975 = vsel %vm458, %v970, %v974
        %v977 = vshrl.u32 %v946, 16
        %v979 = vshll.u32 %v946, 16
        %v981 = vrot.slane %v979, 1
        %v982 = vor.u32 %v977, %v981
        %v984 = vshll.u32 %v947, 16
        %v986 = vrot.slane %v984, 1
        %v987 = vsel %vm458, %v982, %v986
        %v989 = vshrl.u32 %v948, 16
        %v991 = vshll.u32 %v948, 16
        %v993 = vrot.slane %v991, 1
        %v994 = vor.u32 %v989, %v993
        %v996 = vshll.u32 %v949, 16
        %v998 = vrot.slane %v996, 1
        %v999 = vsel %vm458, %v994, %v998
        %v1001 = vshrl.u32 %v950, 16
        %v1003 = vshll.u32 %v950, 16
        %v1005 = vrot.slane %v1003, 1
        %v1006 = vor.u32 %v1001, %v1005
        %v1008 = vshll.u32 %v951, 16
        %v1010 = vrot.slane %v1008, 1
        %v1011 = vsel %vm458, %v1006, %v1010
        %v1013 = vshrl.u32 %v952, 16
        %v1015 = vshll.u32 %v952, 16
        %v1017 = vrot.slane %v1015, 1
        %v1018 = vor.u32 %v1013, %v1017
        %v1020 = vshll.u32 %v953, 16
        %v1022 = vrot.slane %v1020, 1
        %v1023 = vsel %vm458, %v1018, %v1022
        %v1025 = vshrl.u32 %v954, 16
        %v1027 = vshll.u32 %v954, 16
        %v1029 = vrot.slane %v1027, 1
        %v1030 = vor.u32 %v1025, %v1029
        %v1032 = vshll.u32 %v955, 16
        %v1034 = vrot.slane %v1032, 1
        %v1035 = vsel %vm458, %v1030, %v1034
        %v1037 = vshrl.u32 %v956, 16
        %v1039 = vshll.u32 %v956, 16
        %v1041 = vrot.slane %v1039, 1
        %v1042 = vor.u32 %v1037, %v1041
        %v1044 = vshll.u32 %v957, 16
        %v1046 = vrot.slane %v1044, 1
        %v1047 = vsel %vm458, %v1042, %v1046
        %v1049 = vshrl.u32 %v958, 16
        %v1051 = vshll.u32 %v958, 16
        %v1053 = vrot.slane %v1051, 1
        %v1054 = vor.u32 %v1049, %v1053
        %v1056 = vshll.u32 %v959, 16
        %v1058 = vrot.slane %v1056, 1
        %v1059 = vsel %vm458, %v1054, %v1058
        %v1061 = vshrl.u32 %v960, 16
        %v1063 = vshll.u32 %v960, 16
        %v1065 = vrot.slane %v1063, 1
        %v1066 = vor.u32 %v1061, %v1065
        %v1068 = vshll.u32 %v961, 16
        %v1070 = vrot.slane %v1068, 1
        %v1071 = vsel %vm458, %v1066, %v1070
        %v1073 = vshrl.u32 %v962, 16
        %v1075 = vshll.u32 %v962, 16
        %v1077 = vrot.slane %v1075, 1
        %v1078 = vor.u32 %v1073, %v1077
        %v1080 = vshll.u32 %v963, 16
        %v1082 = vrot.slane %v1080, 1
        %v1083 = vsel %vm458, %v1078, %v1082
        %1094 = vst [vmem:[#allocation2 + $0x20] sm:$0xff] %v975
        %1095 = vst [vmem:[#allocation2 + $0x68] sm:$0xff] %v987
        %1096 = vst [vmem:[#allocation2 + $0xb0] sm:$0xff] %v999
        %1097 = vst [vmem:[#allocation2 + $0xf8] sm:$0xff] %v1011
        %1098 = vst [vmem:[#allocation2 + $0x140] sm:$0xff] %v1023
        %1099 = vst [vmem:[#allocation2 + $0x188] sm:$0xff] %v1035
        %1100 = vst [vmem:[#allocation2 + $0x1d0] sm:$0xff] %v1047
        %1101 = vst [vmem:[#allocation2 + $0x218] sm:$0xff] %v1059
        %1102 = vst [vmem:[#allocation2 + $0x260] sm:$0xff] %v1071
        %1103 = vst [vmem:[#allocation2 + $0x2a8] sm:$0xff] %v1083
        %v1104 = vld [vmem:[%s763] sm:$0xe]
        %v1105 = vld [vmem:[%s763 + $0x4] sm:$0xf]
        %v1106 = vld [vmem:[%s763 + $0x8] sm:$0x1]
        %v1107 = vld [vmem:[%s763 + $0xc] sm:$0xe]
        %v1108 = vld [vmem:[%s763 + $0x10] sm:$0xf]
        %v1109 = vld [vmem:[%s763 + $0x14] sm:$0x1]
        %v1110 = vld [vmem:[%s763 + $0x18] sm:$0xe]
        %v1111 = vld [vmem:[%s763 + $0x1c] sm:$0xf]
        %v1112 = vld [vmem:[%s763 + $0x20] sm:$0x1]
        %v1113 = vld [vmem:[%s763 + $0x24] sm:$0xe]
        %v1114 = vld [vmem:[%s763 + $0x28] sm:$0xf]
        %v1115 = vld [vmem:[%s763 + $0x2c] sm:$0x1]
        %v1116 = vld [vmem:[%s763 + $0x30] sm:$0xe]
        %v1117 = vld [vmem:[%s763 + $0x34] sm:$0xf]
        %v1118 = vld [vmem:[%s763 + $0x38] sm:$0x1]
        %v1119 = vld [vmem:[%s763 + $0x3c] sm:$0xe]
        %v1120 = vld [vmem:[%s763 + $0x40] sm:$0xf]
        %v1121 = vld [vmem:[%s763 + $0x44] sm:$0x1]
        %v1122 = vld [vmem:[%s763 + $0x48] sm:$0xe]
        %v1123 = vld [vmem:[%s763 + $0x4c] sm:$0xf]
        %v1124 = vld [vmem:[%s763 + $0x50] sm:$0x1]
        %v1125 = vld [vmem:[%s763 + $0x54] sm:$0xe]
        %v1126 = vld [vmem:[%s763 + $0x58] sm:$0xf]
        %v1127 = vld [vmem:[%s763 + $0x5c] sm:$0x1]
        %v1128 = vld [vmem:[%s763 + $0x60] sm:$0xe]
        %v1129 = vld [vmem:[%s763 + $0x64] sm:$0xf]
        %v1130 = vld [vmem:[%s763 + $0x68] sm:$0x1]
        %v1131 = vld [vmem:[%s763 + $0x6c] sm:$0xe]
        %v1132 = vld [vmem:[%s763 + $0x70] sm:$0xf]
        %v1133 = vld [vmem:[%s763 + $0x74] sm:$0x1]
        %v1164 = vunpack.c.l.b16 %v1104
        %v1165 = vunpack.c.l.b16 %v1105
        %v1166 = vunpack.c.l.b16 %v1106
        %v1167 = vunpack.c.l.b16 %v1107
        %v1168 = vunpack.c.l.b16 %v1108
        %v1169 = vunpack.c.l.b16 %v1109
        %v1170 = vunpack.c.l.b16 %v1110
        %v1171 = vunpack.c.l.b16 %v1111
        %v1172 = vunpack.c.l.b16 %v1112
        %v1173 = vunpack.c.l.b16 %v1113
        %v1174 = vunpack.c.l.b16 %v1114
        %v1175 = vunpack.c.l.b16 %v1115
        %v1176 = vunpack.c.l.b16 %v1116
        %v1177 = vunpack.c.l.b16 %v1117
        %v1178 = vunpack.c.l.b16 %v1118
        %v1179 = vunpack.c.l.b16 %v1119
        %v1180 = vunpack.c.l.b16 %v1120
        %v1181 = vunpack.c.l.b16 %v1121
        %v1182 = vunpack.c.l.b16 %v1122
        %v1183 = vunpack.c.l.b16 %v1123
        %v1184 = vunpack.c.l.b16 %v1124
        %v1185 = vunpack.c.l.b16 %v1125
        %v1186 = vunpack.c.l.b16 %v1126
        %v1187 = vunpack.c.l.b16 %v1127
        %v1188 = vunpack.c.l.b16 %v1128
        %v1189 = vunpack.c.l.b16 %v1129
        %v1190 = vunpack.c.l.b16 %v1130
        %v1191 = vunpack.c.l.b16 %v1131
        %v1192 = vunpack.c.l.b16 %v1132
        %v1193 = vunpack.c.l.b16 %v1133
        %v1194 = vpack.c.b16 %v1165, %v1164
        %v1195 = vpack.c.b16 %v1166, %v1166
        %v1196 = vpack.c.b16 %v1168, %v1167
        %v1197 = vpack.c.b16 %v1169, %v1169
        %v1198 = vpack.c.b16 %v1171, %v1170
        %v1199 = vpack.c.b16 %v1172, %v1172
        %v1200 = vpack.c.b16 %v1174, %v1173
        %v1201 = vpack.c.b16 %v1175, %v1175
        %v1202 = vpack.c.b16 %v1177, %v1176
        %v1203 = vpack.c.b16 %v1178, %v1178
        %v1204 = vpack.c.b16 %v1180, %v1179
        %v1205 = vpack.c.b16 %v1181, %v1181
        %v1206 = vpack.c.b16 %v1183, %v1182
        %v1207 = vpack.c.b16 %v1184, %v1184
        %v1208 = vpack.c.b16 %v1186, %v1185
        %v1209 = vpack.c.b16 %v1187, %v1187
        %v1210 = vpack.c.b16 %v1189, %v1188
        %v1211 = vpack.c.b16 %v1190, %v1190
        %v1212 = vpack.c.b16 %v1192, %v1191
        %v1213 = vpack.c.b16 %v1193, %v1193
        %v1214 = vrot.slane %v1194, 1
        %v1215 = vrot.slane %v1195, 1
        %v1216 = vsel %vm709, %v1214, %v1215
        %v1217 = vrot.slane %v1196, 1
        %v1218 = vrot.slane %v1197, 1
        %v1219 = vsel %vm709, %v1217, %v1218
        %v1220 = vrot.slane %v1198, 1
        %v1221 = vrot.slane %v1199, 1
        %v1222 = vsel %vm709, %v1220, %v1221
        %v1223 = vrot.slane %v1200, 1
        %v1224 = vrot.slane %v1201, 1
        %v1225 = vsel %vm709, %v1223, %v1224
        %v1226 = vrot.slane %v1202, 1
        %v1227 = vrot.slane %v1203, 1
        %v1228 = vsel %vm709, %v1226, %v1227
        %v1229 = vrot.slane %v1204, 1
        %v1230 = vrot.slane %v1205, 1
        %v1231 = vsel %vm709, %v1229, %v1230
        %v1232 = vrot.slane %v1206, 1
        %v1233 = vrot.slane %v1207, 1
        %v1234 = vsel %vm709, %v1232, %v1233
        %v1235 = vrot.slane %v1208, 1
        %v1236 = vrot.slane %v1209, 1
        %v1237 = vsel %vm709, %v1235, %v1236
        %v1238 = vrot.slane %v1210, 1
        %v1239 = vrot.slane %v1211, 1
        %v1240 = vsel %vm709, %v1238, %v1239
        %v1241 = vrot.slane %v1212, 1
        %v1242 = vrot.slane %v1213, 1
        %v1243 = vsel %vm709, %v1241, %v1242
        %1254 = vst [vmem:[#allocation2 + $0x28] sm:$0xff] %v1216
        %1255 = vst [vmem:[#allocation2 + $0x70] sm:$0xff] %v1219
        %1256 = vst [vmem:[#allocation2 + $0xb8] sm:$0xff] %v1222
        %1257 = vst [vmem:[#allocation2 + $0x100] sm:$0xff] %v1225
        %1258 = vst [vmem:[#allocation2 + $0x148] sm:$0xff] %v1228
        %1259 = vst [vmem:[#allocation2 + $0x190] sm:$0xff] %v1231
        %1260 = vst [vmem:[#allocation2 + $0x1d8] sm:$0xff] %v1234
        %1261 = vst [vmem:[#allocation2 + $0x220] sm:$0xff] %v1237
        %1262 = vst [vmem:[#allocation2 + $0x268] sm:$0xff] %v1240
        %1263 = vst [vmem:[#allocation2 + $0x2b0] sm:$0xff] %v1243
        %s1264 = sadd.s32 %s254, 2
        %s1265 = smul.u32 %s1264, 3
        %s1266 = smul.addr %s1265, 4
        %s1267 = scalar_lea.vmem %s251, %s1266
        %v1268 = vld [vmem:[%s1267] sm:$0xf]
        %v1269 = vld [vmem:[%s1267 + $0x4] sm:$0xf]
        %v1270 = vld [vmem:[%s1267 + $0xc] sm:$0xf]
        %v1271 = vld [vmem:[%s1267 + $0x10] sm:$0xf]
        %v1272 = vld [vmem:[%s1267 + $0x18] sm:$0xf]
        %v1273 = vld [vmem:[%s1267 + $0x1c] sm:$0xf]
        %v1274 = vld [vmem:[%s1267 + $0x24] sm:$0xf]
        %v1275 = vld [vmem:[%s1267 + $0x28] sm:$0xf]
        %v1276 = vld [vmem:[%s1267 + $0x30] sm:$0xf]
        %v1277 = vld [vmem:[%s1267 + $0x34] sm:$0xf]
        %v1278 = vld [vmem:[%s1267 + $0x3c] sm:$0xf]
        %v1279 = vld [vmem:[%s1267 + $0x40] sm:$0xf]
        %v1280 = vld [vmem:[%s1267 + $0x48] sm:$0xf]
        %v1281 = vld [vmem:[%s1267 + $0x4c] sm:$0xf]
        %v1282 = vld [vmem:[%s1267 + $0x54] sm:$0xf]
        %v1283 = vld [vmem:[%s1267 + $0x58] sm:$0xf]
        %v1284 = vld [vmem:[%s1267 + $0x60] sm:$0xf]
        %v1285 = vld [vmem:[%s1267 + $0x64] sm:$0xf]
        %v1286 = vld [vmem:[%s1267 + $0x6c] sm:$0xf]
        %v1287 = vld [vmem:[%s1267 + $0x70] sm:$0xf]
        %v1308 = vunpack.c.l.b16 %v1268
        %v1309 = vunpack.c.l.b16 %v1269
        %v1310 = vunpack.c.l.b16 %v1270
        %v1311 = vunpack.c.l.b16 %v1271
        %v1312 = vunpack.c.l.b16 %v1272
        %v1313 = vunpack.c.l.b16 %v1273
        %v1314 = vunpack.c.l.b16 %v1274
        %v1315 = vunpack.c.l.b16 %v1275
        %v1316 = vunpack.c.l.b16 %v1276
        %v1317 = vunpack.c.l.b16 %v1277
        %v1318 = vunpack.c.l.b16 %v1278
        %v1319 = vunpack.c.l.b16 %v1279
        %v1320 = vunpack.c.l.b16 %v1280
        %v1321 = vunpack.c.l.b16 %v1281
        %v1322 = vunpack.c.l.b16 %v1282
        %v1323 = vunpack.c.l.b16 %v1283
        %v1324 = vunpack.c.l.b16 %v1284
        %v1325 = vunpack.c.l.b16 %v1285
        %v1326 = vunpack.c.l.b16 %v1286
        %v1327 = vunpack.c.l.b16 %v1287
        %v1328 = vpack.c.b16 %v1309, %v1308
        %v1329 = vpack.c.b16 %v1311, %v1310
        %v1330 = vpack.c.b16 %v1313, %v1312
        %v1331 = vpack.c.b16 %v1315, %v1314
        %v1332 = vpack.c.b16 %v1317, %v1316
        %v1333 = vpack.c.b16 %v1319, %v1318
        %v1334 = vpack.c.b16 %v1321, %v1320
        %v1335 = vpack.c.b16 %v1323, %v1322
        %v1336 = vpack.c.b16 %v1325, %v1324
        %v1337 = vpack.c.b16 %v1327, %v1326
        %1348 = vst [vmem:[#allocation2 + $0x30] sm:$0xff] %v1328
        %1349 = vst [vmem:[#allocation2 + $0x78] sm:$0xff] %v1329
        %1350 = vst [vmem:[#allocation2 + $0xc0] sm:$0xff] %v1330
        %1351 = vst [vmem:[#allocation2 + $0x108] sm:$0xff] %v1331
        %1352 = vst [vmem:[#allocation2 + $0x150] sm:$0xff] %v1332
        %1353 = vst [vmem:[#allocation2 + $0x198] sm:$0xff] %v1333
        %1354 = vst [vmem:[#allocation2 + $0x1e0] sm:$0xff] %v1334
        %1355 = vst [vmem:[#allocation2 + $0x228] sm:$0xff] %v1335
        %1356 = vst [vmem:[#allocation2 + $0x270] sm:$0xff] %v1336
        %1357 = vst [vmem:[#allocation2 + $0x2b8] sm:$0xff] %v1337
        %v1358 = vld [vmem:[%s1267] sm:$0xf]
        %v1359 = vld [vmem:[%s1267 + $0x4] sm:$0xf]
        %v1360 = vld [vmem:[%s1267 + $0x8] sm:$0x1]
        %v1361 = vld [vmem:[%s1267 + $0xc] sm:$0xf]
        %v1362 = vld [vmem:[%s1267 + $0x10] sm:$0xf]
        %v1363 = vld [vmem:[%s1267 + $0x14] sm:$0x1]
        %v1364 = vld [vmem:[%s1267 + $0x18] sm:$0xf]
        %v1365 = vld [vmem:[%s1267 + $0x1c] sm:$0xf]
        %v1366 = vld [vmem:[%s1267 + $0x20] sm:$0x1]
        %v1367 = vld [vmem:[%s1267 + $0x24] sm:$0xf]
        %v1368 = vld [vmem:[%s1267 + $0x28] sm:$0xf]
        %v1369 = vld [vmem:[%s1267 + $0x2c] sm:$0x1]
        %v1370 = vld [vmem:[%s1267 + $0x30] sm:$0xf]
        %v1371 = vld [vmem:[%s1267 + $0x34] sm:$0xf]
        %v1372 = vld [vmem:[%s1267 + $0x38] sm:$0x1]
        %v1373 = vld [vmem:[%s1267 + $0x3c] sm:$0xf]
        %v1374 = vld [vmem:[%s1267 + $0x40] sm:$0xf]
        %v1375 = vld [vmem:[%s1267 + $0x44] sm:$0x1]
        %v1376 = vld [vmem:[%s1267 + $0x48] sm:$0xf]
        %v1377 = vld [vmem:[%s1267 + $0x4c] sm:$0xf]
        %v1378 = vld [vmem:[%s1267 + $0x50] sm:$0x1]
        %v1379 = vld [vmem:[%s1267 + $0x54] sm:$0xf]
        %v1380 = vld [vmem:[%s1267 + $0x58] sm:$0xf]
        %v1381 = vld [vmem:[%s1267 + $0x5c] sm:$0x1]
        %v1382 = vld [vmem:[%s1267 + $0x60] sm:$0xf]
        %v1383 = vld [vmem:[%s1267 + $0x64] sm:$0xf]
        %v1384 = vld [vmem:[%s1267 + $0x68] sm:$0x1]
        %v1385 = vld [vmem:[%s1267 + $0x6c] sm:$0xf]
        %v1386 = vld [vmem:[%s1267 + $0x70] sm:$0xf]
        %v1387 = vld [vmem:[%s1267 + $0x74] sm:$0x1]
        %v1418 = vunpack.c.l.b16 %v1358
        %v1419 = vunpack.c.l.b16 %v1359
        %v1420 = vunpack.c.l.b16 %v1360
        %v1421 = vunpack.c.l.b16 %v1361
        %v1422 = vunpack.c.l.b16 %v1362
        %v1423 = vunpack.c.l.b16 %v1363
        %v1424 = vunpack.c.l.b16 %v1364
        %v1425 = vunpack.c.l.b16 %v1365
        %v1426 = vunpack.c.l.b16 %v1366
        %v1427 = vunpack.c.l.b16 %v1367
        %v1428 = vunpack.c.l.b16 %v1368
        %v1429 = vunpack.c.l.b16 %v1369
        %v1430 = vunpack.c.l.b16 %v1370
        %v1431 = vunpack.c.l.b16 %v1371
        %v1432 = vunpack.c.l.b16 %v1372
        %v1433 = vunpack.c.l.b16 %v1373
        %v1434 = vunpack.c.l.b16 %v1374
        %v1435 = vunpack.c.l.b16 %v1375
        %v1436 = vunpack.c.l.b16 %v1376
        %v1437 = vunpack.c.l.b16 %v1377
        %v1438 = vunpack.c.l.b16 %v1378
        %v1439 = vunpack.c.l.b16 %v1379
        %v1440 = vunpack.c.l.b16 %v1380
        %v1441 = vunpack.c.l.b16 %v1381
        %v1442 = vunpack.c.l.b16 %v1382
        %v1443 = vunpack.c.l.b16 %v1383
        %v1444 = vunpack.c.l.b16 %v1384
        %v1445 = vunpack.c.l.b16 %v1385
        %v1446 = vunpack.c.l.b16 %v1386
        %v1447 = vunpack.c.l.b16 %v1387
        %v1448 = vpack.c.b16 %v1419, %v1418
        %v1449 = vpack.c.b16 %v1420, %v1420
        %v1450 = vpack.c.b16 %v1422, %v1421
        %v1451 = vpack.c.b16 %v1423, %v1423
        %v1452 = vpack.c.b16 %v1425, %v1424
        %v1453 = vpack.c.b16 %v1426, %v1426
        %v1454 = vpack.c.b16 %v1428, %v1427
        %v1455 = vpack.c.b16 %v1429, %v1429
        %v1456 = vpack.c.b16 %v1431, %v1430
        %v1457 = vpack.c.b16 %v1432, %v1432
        %v1458 = vpack.c.b16 %v1434, %v1433
        %v1459 = vpack.c.b16 %v1435, %v1435
        %v1460 = vpack.c.b16 %v1437, %v1436
        %v1461 = vpack.c.b16 %v1438, %v1438
        %v1462 = vpack.c.b16 %v1440, %v1439
        %v1463 = vpack.c.b16 %v1441, %v1441
        %v1464 = vpack.c.b16 %v1443, %v1442
        %v1465 = vpack.c.b16 %v1444, %v1444
        %v1466 = vpack.c.b16 %v1446, %v1445
        %v1467 = vpack.c.b16 %v1447, %v1447
        %v1469 = vshrl.u32 %v1448, 16
        %v1471 = vshll.u32 %v1448, 16
        %v1473 = vrot.slane %v1471, 1
        %v1474 = vor.u32 %v1469, %v1473
        %v1476 = vshll.u32 %v1449, 16
        %v1478 = vrot.slane %v1476, 1
        %v1479 = vsel %vm458, %v1474, %v1478
        %v1481 = vshrl.u32 %v1450, 16
        %v1483 = vshll.u32 %v1450, 16
        %v1485 = vrot.slane %v1483, 1
        %v1486 = vor.u32 %v1481, %v1485
        %v1488 = vshll.u32 %v1451, 16
        %v1490 = vrot.slane %v1488, 1
        %v1491 = vsel %vm458, %v1486, %v1490
        %v1493 = vshrl.u32 %v1452, 16
        %v1495 = vshll.u32 %v1452, 16
        %v1497 = vrot.slane %v1495, 1
        %v1498 = vor.u32 %v1493, %v1497
        %v1500 = vshll.u32 %v1453, 16
        %v1502 = vrot.slane %v1500, 1
        %v1503 = vsel %vm458, %v1498, %v1502
        %v1505 = vshrl.u32 %v1454, 16
        %v1507 = vshll.u32 %v1454, 16
        %v1509 = vrot.slane %v1507, 1
        %v1510 = vor.u32 %v1505, %v1509
        %v1512 = vshll.u32 %v1455, 16
        %v1514 = vrot.slane %v1512, 1
        %v1515 = vsel %vm458, %v1510, %v1514
        %v1517 = vshrl.u32 %v1456, 16
        %v1519 = vshll.u32 %v1456, 16
        %v1521 = vrot.slane %v1519, 1
        %v1522 = vor.u32 %v1517, %v1521
        %v1524 = vshll.u32 %v1457, 16
        %v1526 = vrot.slane %v1524, 1
        %v1527 = vsel %vm458, %v1522, %v1526
        %v1529 = vshrl.u32 %v1458, 16
        %v1531 = vshll.u32 %v1458, 16
        %v1533 = vrot.slane %v1531, 1
        %v1534 = vor.u32 %v1529, %v1533
        %v1536 = vshll.u32 %v1459, 16
        %v1538 = vrot.slane %v1536, 1
        %v1539 = vsel %vm458, %v1534, %v1538
        %v1541 = vshrl.u32 %v1460, 16
        %v1543 = vshll.u32 %v1460, 16
        %v1545 = vrot.slane %v1543, 1
        %v1546 = vor.u32 %v1541, %v1545
        %v1548 = vshll.u32 %v1461, 16
        %v1550 = vrot.slane %v1548, 1
        %v1551 = vsel %vm458, %v1546, %v1550
        %v1553 = vshrl.u32 %v1462, 16
        %v1555 = vshll.u32 %v1462, 16
        %v1557 = vrot.slane %v1555, 1
        %v1558 = vor.u32 %v1553, %v1557
        %v1560 = vshll.u32 %v1463, 16
        %v1562 = vrot.slane %v1560, 1
        %v1563 = vsel %vm458, %v1558, %v1562
        %v1565 = vshrl.u32 %v1464, 16
        %v1567 = vshll.u32 %v1464, 16
        %v1569 = vrot.slane %v1567, 1
        %v1570 = vor.u32 %v1565, %v1569
        %v1572 = vshll.u32 %v1465, 16
        %v1574 = vrot.slane %v1572, 1
        %v1575 = vsel %vm458, %v1570, %v1574
        %v1577 = vshrl.u32 %v1466, 16
        %v1579 = vshll.u32 %v1466, 16
        %v1581 = vrot.slane %v1579, 1
        %v1582 = vor.u32 %v1577, %v1581
        %v1584 = vshll.u32 %v1467, 16
        %v1586 = vrot.slane %v1584, 1
        %v1587 = vsel %vm458, %v1582, %v1586
        %1598 = vst [vmem:[#allocation2 + $0x38] sm:$0xff] %v1479
        %1599 = vst [vmem:[#allocation2 + $0x80] sm:$0xff] %v1491
        %1600 = vst [vmem:[#allocation2 + $0xc8] sm:$0xff] %v1503
        %1601 = vst [vmem:[#allocation2 + $0x110] sm:$0xff] %v1515
        %1602 = vst [vmem:[#allocation2 + $0x158] sm:$0xff] %v1527
        %1603 = vst [vmem:[#allocation2 + $0x1a0] sm:$0xff] %v1539
        %1604 = vst [vmem:[#allocation2 + $0x1e8] sm:$0xff] %v1551
        %1605 = vst [vmem:[#allocation2 + $0x230] sm:$0xff] %v1563
        %1606 = vst [vmem:[#allocation2 + $0x278] sm:$0xff] %v1575
        %1607 = vst [vmem:[#allocation2 + $0x2c0] sm:$0xff] %v1587
        %v1608 = vld [vmem:[%s1267] sm:$0xe]
        %v1609 = vld [vmem:[%s1267 + $0x4] sm:$0xf]
        %v1610 = vld [vmem:[%s1267 + $0x8] sm:$0x1]
        %v1611 = vld [vmem:[%s1267 + $0xc] sm:$0xe]
        %v1612 = vld [vmem:[%s1267 + $0x10] sm:$0xf]
        %v1613 = vld [vmem:[%s1267 + $0x14] sm:$0x1]
        %v1614 = vld [vmem:[%s1267 + $0x18] sm:$0xe]
        %v1615 = vld [vmem:[%s1267 + $0x1c] sm:$0xf]
        %v1616 = vld [vmem:[%s1267 + $0x20] sm:$0x1]
        %v1617 = vld [vmem:[%s1267 + $0x24] sm:$0xe]
        %v1618 = vld [vmem:[%s1267 + $0x28] sm:$0xf]
        %v1619 = vld [vmem:[%s1267 + $0x2c] sm:$0x1]
        %v1620 = vld [vmem:[%s1267 + $0x30] sm:$0xe]
        %v1621 = vld [vmem:[%s1267 + $0x34] sm:$0xf]
        %v1622 = vld [vmem:[%s1267 + $0x38] sm:$0x1]
        %v1623 = vld [vmem:[%s1267 + $0x3c] sm:$0xe]
        %v1624 = vld [vmem:[%s1267 + $0x40] sm:$0xf]
        %v1625 = vld [vmem:[%s1267 + $0x44] sm:$0x1]
        %v1626 = vld [vmem:[%s1267 + $0x48] sm:$0xe]
        %v1627 = vld [vmem:[%s1267 + $0x4c] sm:$0xf]
        %v1628 = vld [vmem:[%s1267 + $0x50] sm:$0x1]
        %v1629 = vld [vmem:[%s1267 + $0x54] sm:$0xe]
        %v1630 = vld [vmem:[%s1267 + $0x58] sm:$0xf]
        %v1631 = vld [vmem:[%s1267 + $0x5c] sm:$0x1]
        %v1632 = vld [vmem:[%s1267 + $0x60] sm:$0xe]
        %v1633 = vld [vmem:[%s1267 + $0x64] sm:$0xf]
        %v1634 = vld [vmem:[%s1267 + $0x68] sm:$0x1]
        %v1635 = vld [vmem:[%s1267 + $0x6c] sm:$0xe]
        %v1636 = vld [vmem:[%s1267 + $0x70] sm:$0xf]
        %v1637 = vld [vmem:[%s1267 + $0x74] sm:$0x1]
        %v1668 = vunpack.c.l.b16 %v1608
        %v1669 = vunpack.c.l.b16 %v1609
        %v1670 = vunpack.c.l.b16 %v1610
        %v1671 = vunpack.c.l.b16 %v1611
        %v1672 = vunpack.c.l.b16 %v1612
        %v1673 = vunpack.c.l.b16 %v1613
        %v1674 = vunpack.c.l.b16 %v1614
        %v1675 = vunpack.c.l.b16 %v1615
        %v1676 = vunpack.c.l.b16 %v1616
        %v1677 = vunpack.c.l.b16 %v1617
        %v1678 = vunpack.c.l.b16 %v1618
        %v1679 = vunpack.c.l.b16 %v1619
        %v1680 = vunpack.c.l.b16 %v1620
        %v1681 = vunpack.c.l.b16 %v1621
        %v1682 = vunpack.c.l.b16 %v1622
        %v1683 = vunpack.c.l.b16 %v1623
        %v1684 = vunpack.c.l.b16 %v1624
        %v1685 = vunpack.c.l.b16 %v1625
        %v1686 = vunpack.c.l.b16 %v1626
        %v1687 = vunpack.c.l.b16 %v1627
        %v1688 = vunpack.c.l.b16 %v1628
        %v1689 = vunpack.c.l.b16 %v1629
        %v1690 = vunpack.c.l.b16 %v1630
        %v1691 = vunpack.c.l.b16 %v1631
        %v1692 = vunpack.c.l.b16 %v1632
        %v1693 = vunpack.c.l.b16 %v1633
        %v1694 = vunpack.c.l.b16 %v1634
        %v1695 = vunpack.c.l.b16 %v1635
        %v1696 = vunpack.c.l.b16 %v1636
        %v1697 = vunpack.c.l.b16 %v1637
        %v1698 = vpack.c.b16 %v1669, %v1668
        %v1699 = vpack.c.b16 %v1670, %v1670
        %v1700 = vpack.c.b16 %v1672, %v1671
        %v1701 = vpack.c.b16 %v1673, %v1673
        %v1702 = vpack.c.b16 %v1675, %v1674
        %v1703 = vpack.c.b16 %v1676, %v1676
        %v1704 = vpack.c.b16 %v1678, %v1677
        %v1705 = vpack.c.b16 %v1679, %v1679
        %v1706 = vpack.c.b16 %v1681, %v1680
        %v1707 = vpack.c.b16 %v1682, %v1682
        %v1708 = vpack.c.b16 %v1684, %v1683
        %v1709 = vpack.c.b16 %v1685, %v1685
        %v1710 = vpack.c.b16 %v1687, %v1686
        %v1711 = vpack.c.b16 %v1688, %v1688
        %v1712 = vpack.c.b16 %v1690, %v1689
        %v1713 = vpack.c.b16 %v1691, %v1691
        %v1714 = vpack.c.b16 %v1693, %v1692
        %v1715 = vpack.c.b16 %v1694, %v1694
        %v1716 = vpack.c.b16 %v1696, %v1695
        %v1717 = vpack.c.b16 %v1697, %v1697
        %v1718 = vrot.slane %v1698, 1
        %v1719 = vrot.slane %v1699, 1
        %v1720 = vsel %vm709, %v1718, %v1719
        %v1721 = vrot.slane %v1700, 1
        %v1722 = vrot.slane %v1701, 1
        %v1723 = vsel %vm709, %v1721, %v1722
        %v1724 = vrot.slane %v1702, 1
        %v1725 = vrot.slane %v1703, 1
        %v1726 = vsel %vm709, %v1724, %v1725
        %v1727 = vrot.slane %v1704, 1
        %v1728 = vrot.slane %v1705, 1
        %v1729 = vsel %vm709, %v1727, %v1728
        %v1730 = vrot.slane %v1706, 1
        %v1731 = vrot.slane %v1707, 1
        %v1732 = vsel %vm709, %v1730, %v1731
        %v1733 = vrot.slane %v1708, 1
        %v1734 = vrot.slane %v1709, 1
        %v1735 = vsel %vm709, %v1733, %v1734
        %v1736 = vrot.slane %v1710, 1
        %v1737 = vrot.slane %v1711, 1
        %v1738 = vsel %vm709, %v1736, %v1737
        %v1739 = vrot.slane %v1712, 1
        %v1740 = vrot.slane %v1713, 1
        %v1741 = vsel %vm709, %v1739, %v1740
        %v1742 = vrot.slane %v1714, 1
        %v1743 = vrot.slane %v1715, 1
        %v1744 = vsel %vm709, %v1742, %v1743
        %v1745 = vrot.slane %v1716, 1
        %v1746 = vrot.slane %v1717, 1
        %v1747 = vsel %vm709, %v1745, %v1746
        %1758 = vst [vmem:[#allocation2 + $0x40] sm:$0xff] %v1720
        %1759 = vst [vmem:[#allocation2 + $0x88] sm:$0xff] %v1723
        %1760 = vst [vmem:[#allocation2 + $0xd0] sm:$0xff] %v1726
        %1761 = vst [vmem:[#allocation2 + $0x118] sm:$0xff] %v1729
        %1762 = vst [vmem:[#allocation2 + $0x160] sm:$0xff] %v1732
        %1763 = vst [vmem:[#allocation2 + $0x1a8] sm:$0xff] %v1735
        %1764 = vst [vmem:[#allocation2 + $0x1f0] sm:$0xff] %v1738
        %1765 = vst [vmem:[#allocation2 + $0x238] sm:$0xff] %v1741
        %1766 = vst [vmem:[#allocation2 + $0x280] sm:$0xff] %v1744
        %1767 = vst [vmem:[#allocation2 + $0x2c8] sm:$0xff] %v1747
        %v1768 = vld [vmem:[#allocation2] sm:$0xff]
        %v1769 = vld [vmem:[#allocation2 + $0x8] sm:$0xff]
        %v1770 = vld [vmem:[#allocation2 + $0x10] sm:$0xff]
        %v1771 = vld [vmem:[#allocation2 + $0x18] sm:$0xff]
        %v1772 = vld [vmem:[#allocation2 + $0x20] sm:$0xff]
        %v1773 = vld [vmem:[#allocation2 + $0x28] sm:$0xff]
        %v1774 = vld [vmem:[#allocation2 + $0x30] sm:$0xff]
        %v1775 = vld [vmem:[#allocation2 + $0x38] sm:$0xff]
        %v1776 = vld [vmem:[#allocation2 + $0x40] sm:$0xff]
        %v1777 = vld [vmem:[#allocation2 + $0x48] sm:$0xff]
        %v1778 = vld [vmem:[#allocation2 + $0x50] sm:$0xff]
        %v1779 = vld [vmem:[#allocation2 + $0x58] sm:$0xff]
        %v1780 = vld [vmem:[#allocation2 + $0x60] sm:$0xff]
        %v1781 = vld [vmem:[#allocation2 + $0x68] sm:$0xff]
        %v1782 = vld [vmem:[#allocation2 + $0x70] sm:$0xff]
        %v1783 = vld [vmem:[#allocation2 + $0x78] sm:$0xff]
        %v1784 = vld [vmem:[#allocation2 + $0x80] sm:$0xff]
        %v1785 = vld [vmem:[#allocation2 + $0x88] sm:$0xff]
        %v1786 = vld [vmem:[#allocation2 + $0x90] sm:$0xff]
        %v1787 = vld [vmem:[#allocation2 + $0x98] sm:$0xff]
        %v1788 = vld [vmem:[#allocation2 + $0xa0] sm:$0xff]
        %v1789 = vld [vmem:[#allocation2 + $0xa8] sm:$0xff]
        %v1790 = vld [vmem:[#allocation2 + $0xb0] sm:$0xff]
        %v1791 = vld [vmem:[#allocation2 + $0xb8] sm:$0xff]
        %v1792 = vld [vmem:[#allocation2 + $0xc0] sm:$0xff]
        %v1793 = vld [vmem:[#allocation2 + $0xc8] sm:$0xff]
        %v1794 = vld [vmem:[#allocation2 + $0xd0] sm:$0xff]
        %v1795 = vld [vmem:[#allocation2 + $0xd8] sm:$0xff]
        %v1796 = vld [vmem:[#allocation2 + $0xe0] sm:$0xff]
        %v1797 = vld [vmem:[#allocation2 + $0xe8] sm:$0xff]
        %v1798 = vld [vmem:[#allocation2 + $0xf0] sm:$0xff]
        %v1799 = vld [vmem:[#allocation2 + $0xf8] sm:$0xff]
        %v1800 = vld [vmem:[#allocation2 + $0x100] sm:$0xff]
        %v1801 = vld [vmem:[#allocation2 + $0x108] sm:$0xff]
        %v1802 = vld [vmem:[#allocation2 + $0x110] sm:$0xff]
        %v1803 = vld [vmem:[#allocation2 + $0x118] sm:$0xff]
        %v1804 = vld [vmem:[#allocation2 + $0x120] sm:$0xff]
        %v1805 = vld [vmem:[#allocation2 + $0x128] sm:$0xff]
        %v1806 = vld [vmem:[#allocation2 + $0x130] sm:$0xff]
        %v1807 = vld [vmem:[#allocation2 + $0x138] sm:$0xff]
        %v1808 = vld [vmem:[#allocation2 + $0x140] sm:$0xff]
        %v1809 = vld [vmem:[#allocation2 + $0x148] sm:$0xff]
        %v1810 = vld [vmem:[#allocation2 + $0x150] sm:$0xff]
        %v1811 = vld [vmem:[#allocation2 + $0x158] sm:$0xff]
        %v1812 = vld [vmem:[#allocation2 + $0x160] sm:$0xff]
        %v1813 = vld [vmem:[#allocation2 + $0x168] sm:$0xff]
        %v1814 = vld [vmem:[#allocation2 + $0x170] sm:$0xff]
        %v1815 = vld [vmem:[#allocation2 + $0x178] sm:$0xff]
        %v1816 = vld [vmem:[#allocation2 + $0x180] sm:$0xff]
        %v1817 = vld [vmem:[#allocation2 + $0x188] sm:$0xff]
        %v1818 = vld [vmem:[#allocation2 + $0x190] sm:$0xff]
        %v1819 = vld [vmem:[#allocation2 + $0x198] sm:$0xff]
        %v1820 = vld [vmem:[#allocation2 + $0x1a0] sm:$0xff]
        %v1821 = vld [vmem:[#allocation2 + $0x1a8] sm:$0xff]
        %v1822 = vld [vmem:[#allocation2 + $0x1b0] sm:$0xff]
        %v1823 = vld [vmem:[#allocation2 + $0x1b8] sm:$0xff]
        %v1824 = vld [vmem:[#allocation2 + $0x1c0] sm:$0xff]
        %v1825 = vld [vmem:[#allocation2 + $0x1c8] sm:$0xff]
        %v1826 = vld [vmem:[#allocation2 + $0x1d0] sm:$0xff]
        %v1827 = vld [vmem:[#allocation2 + $0x1d8] sm:$0xff]
        %v1828 = vld [vmem:[#allocation2 + $0x1e0] sm:$0xff]
        %v1829 = vld [vmem:[#allocation2 + $0x1e8] sm:$0xff]
        %v1830 = vld [vmem:[#allocation2 + $0x1f0] sm:$0xff]
        %v1831 = vld [vmem:[#allocation2 + $0x1f8] sm:$0xff]
        %v1832 = vld [vmem:[#allocation2 + $0x200] sm:$0xff]
        %v1833 = vld [vmem:[#allocation2 + $0x208] sm:$0xff]
        %v1834 = vld [vmem:[#allocation2 + $0x210] sm:$0xff]
        %v1835 = vld [vmem:[#allocation2 + $0x218] sm:$0xff]
        %v1836 = vld [vmem:[#allocation2 + $0x220] sm:$0xff]
        %v1837 = vld [vmem:[#allocation2 + $0x228] sm:$0xff]
        %v1838 = vld [vmem:[#allocation2 + $0x230] sm:$0xff]
        %v1839 = vld [vmem:[#allocation2 + $0x238] sm:$0xff]
        %v1840 = vld [vmem:[#allocation2 + $0x240] sm:$0xff]
        %v1841 = vld [vmem:[#allocation2 + $0x248] sm:$0xff]
        %v1842 = vld [vmem:[#allocation2 + $0x250] sm:$0xff]
        %v1843 = vld [vmem:[#allocation2 + $0x258] sm:$0xff]
        %v1844 = vld [vmem:[#allocation2 + $0x260] sm:$0xff]
        %v1845 = vld [vmem:[#allocation2 + $0x268] sm:$0xff]
        %v1846 = vld [vmem:[#allocation2 + $0x270] sm:$0xff]
        %v1847 = vld [vmem:[#allocation2 + $0x278] sm:$0xff]
        %v1848 = vld [vmem:[#allocation2 + $0x280] sm:$0xff]
        %v1849 = vld [vmem:[#allocation2 + $0x288] sm:$0xff]
        %v1850 = vld [vmem:[#allocation2 + $0x290] sm:$0xff]
        %v1851 = vld [vmem:[#allocation2 + $0x298] sm:$0xff]
        %v1852 = vld [vmem:[#allocation2 + $0x2a0] sm:$0xff]
        %v1853 = vld [vmem:[#allocation2 + $0x2a8] sm:$0xff]
        %v1854 = vld [vmem:[#allocation2 + $0x2b0] sm:$0xff]
        %v1855 = vld [vmem:[#allocation2 + $0x2b8] sm:$0xff]
        %v1856 = vld [vmem:[#allocation2 + $0x2c0] sm:$0xff]
        %v1857 = vld [vmem:[#allocation2 + $0x2c8] sm:$0xff]
        %v1858 = vld [vmem:[#allocation5] sm:$0xf]
        %v1859 = vld [vmem:[#allocation5 + $0x4] sm:$0xf]
        %v1860 = vld [vmem:[#allocation5 + $0x8] sm:$0xf]
        %v1861 = vld [vmem:[#allocation5 + $0xc] sm:$0xf]
        %v1862 = vld [vmem:[#allocation5 + $0x10] sm:$0xf]
        %v1863 = vld [vmem:[#allocation5 + $0x14] sm:$0xf]
        %v1864 = vld [vmem:[#allocation5 + $0x18] sm:$0xf]
        %v1865 = vld [vmem:[#allocation5 + $0x1c] sm:$0xf]
        %v1866 = vld [vmem:[#allocation5 + $0x20] sm:$0xf]
        %v1867 = vld [vmem:[#allocation5 + $0x24] sm:$0xf]
        %v1868 = vld [vmem:[#allocation5 + $0x28] sm:$0xf]
        %v1869 = vld [vmem:[#allocation5 + $0x2c] sm:$0xf]
        %v1870 = vld [vmem:[#allocation5 + $0x30] sm:$0xf]
        %v1871 = vld [vmem:[#allocation5 + $0x34] sm:$0xf]
        %v1872 = vld [vmem:[#allocation5 + $0x38] sm:$0xf]
        %v1873 = vld [vmem:[#allocation5 + $0x3c] sm:$0xf]
        %v1874 = vld [vmem:[#allocation5 + $0x40] sm:$0xf]
        %v1875 = vld [vmem:[#allocation5 + $0x44] sm:$0xf]
        %v1876 = vld [vmem:[#allocation5 + $0x48] sm:$0xf]
        %v1877 = vld [vmem:[#allocation5 + $0x4c] sm:$0xf]
        %v1878 = vld [vmem:[#allocation5 + $0x50] sm:$0xf]
        %v1879 = vld [vmem:[#allocation5 + $0x54] sm:$0xf]
        %v1880 = vld [vmem:[#allocation5 + $0x58] sm:$0xf]
        %v1881 = vld [vmem:[#allocation5 + $0x5c] sm:$0xf]
        %v1882 = vld [vmem:[#allocation5 + $0x60] sm:$0xf]
        %v1883 = vld [vmem:[#allocation5 + $0x64] sm:$0xf]
        %v1884 = vld [vmem:[#allocation5 + $0x68] sm:$0xf]
        %v1885 = vld [vmem:[#allocation5 + $0x6c] sm:$0xf]
        %v1886 = vld [vmem:[#allocation5 + $0x70] sm:$0xf]
        %v1887 = vld [vmem:[#allocation5 + $0x74] sm:$0xf]
        %v1888 = vld [vmem:[#allocation5 + $0x78] sm:$0xf]
        %v1889 = vld [vmem:[#allocation5 + $0x7c] sm:$0xf]
        %v1890 = vld [vmem:[#allocation5 + $0x80] sm:$0xf]
        %v1891 = vld [vmem:[#allocation5 + $0x84] sm:$0xf]
        %v1892 = vld [vmem:[#allocation5 + $0x88] sm:$0xf]
        %v1893 = vld [vmem:[#allocation5 + $0x8c] sm:$0xf]
        %v1894 = vld [vmem:[#allocation5 + $0x90] sm:$0xf]
        %v1895 = vld [vmem:[#allocation5 + $0x94] sm:$0xf]
        %v1896 = vld [vmem:[#allocation5 + $0x98] sm:$0xf]
        %v1897 = vld [vmem:[#allocation5 + $0x9c] sm:$0xf]
        %v1898 = vld [vmem:[#allocation5 + $0xa0] sm:$0xf]
        %v1899 = vld [vmem:[#allocation5 + $0xa4] sm:$0xf]
        %v1900 = vld [vmem:[#allocation5 + $0xa8] sm:$0xf]
        %v1901 = vld [vmem:[#allocation5 + $0xac] sm:$0xf]
        %v1902 = vld [vmem:[#allocation5 + $0xb0] sm:$0xf]
        %v1903 = vld [vmem:[#allocation5 + $0xb4] sm:$0xf]
        %v1904 = vld [vmem:[#allocation5 + $0xb8] sm:$0xf]
        %v1905 = vld [vmem:[#allocation5 + $0xbc] sm:$0xf]
        %v1906 = vld [vmem:[#allocation5 + $0xc0] sm:$0xf]
        %v1907 = vld [vmem:[#allocation5 + $0xc4] sm:$0xf]
        %v1908 = vld [vmem:[#allocation5 + $0xc8] sm:$0xf]
        %v1909 = vld [vmem:[#allocation5 + $0xcc] sm:$0xf]
        %v1910 = vld [vmem:[#allocation5 + $0xd0] sm:$0xf]
        %v1911 = vld [vmem:[#allocation5 + $0xd4] sm:$0xf]
        %v1912 = vld [vmem:[#allocation5 + $0xd8] sm:$0xf]
        %v1913 = vld [vmem:[#allocation5 + $0xdc] sm:$0xf]
        %v1914 = vld [vmem:[#allocation5 + $0xe0] sm:$0xf]
        %v1915 = vld [vmem:[#allocation5 + $0xe4] sm:$0xf]
        %v1916 = vld [vmem:[#allocation5 + $0xe8] sm:$0xf]
        %v1917 = vld [vmem:[#allocation5 + $0xec] sm:$0xf]
        %v1918 = vld [vmem:[#allocation5 + $0xf0] sm:$0xf]
        %v1919 = vld [vmem:[#allocation5 + $0xf4] sm:$0xf]
        %v1920 = vld [vmem:[#allocation5 + $0xf8] sm:$0xf]
        %v1921 = vld [vmem:[#allocation5 + $0xfc] sm:$0xf]
        %v1922 = vld [vmem:[#allocation5 + $0x100] sm:$0xf]
        %v1923 = vld [vmem:[#allocation5 + $0x104] sm:$0xf]
        %v1924 = vld [vmem:[#allocation5 + $0x108] sm:$0xf]
        %v1925 = vld [vmem:[#allocation5 + $0x10c] sm:$0xf]
        %v1926 = vld [vmem:[#allocation5 + $0x110] sm:$0xf]
        %v1927 = vld [vmem:[#allocation5 + $0x114] sm:$0xf]
        %v1928 = vld [vmem:[#allocation5 + $0x118] sm:$0xf]
        %v1929 = vld [vmem:[#allocation5 + $0x11c] sm:$0xf]
        %v1930 = vld [vmem:[#allocation5 + $0x120] sm:$0xf]
        %v1931 = vld [vmem:[#allocation5 + $0x124] sm:$0xf]
        %v1932 = vld [vmem:[#allocation5 + $0x128] sm:$0xf]
        %v1933 = vld [vmem:[#allocation5 + $0x12c] sm:$0xf]
        %v1934 = vld [vmem:[#allocation5 + $0x130] sm:$0xf]
        %v1935 = vld [vmem:[#allocation5 + $0x134] sm:$0xf]
        %v1936 = vld [vmem:[#allocation5 + $0x138] sm:$0xf]
        %v1937 = vld [vmem:[#allocation5 + $0x13c] sm:$0xf]
        %v1938 = vld [vmem:[#allocation5 + $0x140] sm:$0xf]
        %v1939 = vld [vmem:[#allocation5 + $0x144] sm:$0xf]
        %v1940 = vld [vmem:[#allocation5 + $0x148] sm:$0xf]
        %v1941 = vld [vmem:[#allocation5 + $0x14c] sm:$0xf]
        %v1942 = vld [vmem:[#allocation5 + $0x150] sm:$0xf]
        %v1943 = vld [vmem:[#allocation5 + $0x154] sm:$0xf]
        %v1944 = vld [vmem:[#allocation5 + $0x158] sm:$0xf]
        %v1945 = vld [vmem:[#allocation5 + $0x15c] sm:$0xf]
        %v1946 = vld [vmem:[#allocation5 + $0x160] sm:$0xf]
        %v1947 = vld [vmem:[#allocation5 + $0x164] sm:$0xf]
        %v1948 = vld [vmem:[#allocation5 + $0x168] sm:$0xf]
        %v1949 = vld [vmem:[#allocation5 + $0x16c] sm:$0xf]
        %v1950 = vld [vmem:[#allocation5 + $0x170] sm:$0xf]
        %v1951 = vld [vmem:[#allocation5 + $0x174] sm:$0xf]
        %v1952 = vld [vmem:[#allocation5 + $0x178] sm:$0xf]
        %v1953 = vld [vmem:[#allocation5 + $0x17c] sm:$0xf]
        %v1954 = vld [vmem:[#allocation5 + $0x180] sm:$0xf]
        %v1955 = vld [vmem:[#allocation5 + $0x184] sm:$0xf]
        %v1956 = vld [vmem:[#allocation5 + $0x188] sm:$0xf]
        %v1957 = vld [vmem:[#allocation5 + $0x18c] sm:$0xf]
        %v1958 = vld [vmem:[#allocation5 + $0x190] sm:$0xf]
        %v1959 = vld [vmem:[#allocation5 + $0x194] sm:$0xf]
        %v1960 = vld [vmem:[#allocation5 + $0x198] sm:$0xf]
        %v1961 = vld [vmem:[#allocation5 + $0x19c] sm:$0xf]
        %v1962 = vld [vmem:[#allocation5 + $0x1a0] sm:$0xf]
        %v1963 = vld [vmem:[#allocation5 + $0x1a4] sm:$0xf]
        %v1964 = vld [vmem:[#allocation5 + $0x1a8] sm:$0xf]
        %v1965 = vld [vmem:[#allocation5 + $0x1ac] sm:$0xf]
        %v1966 = vld [vmem:[#allocation5 + $0x1b0] sm:$0xf]
        %v1967 = vld [vmem:[#allocation5 + $0x1b4] sm:$0xf]
        %v1968 = vld [vmem:[#allocation5 + $0x1b8] sm:$0xf]
        %v1969 = vld [vmem:[#allocation5 + $0x1bc] sm:$0xf]
        %v1970 = vld [vmem:[#allocation5 + $0x1c0] sm:$0xf]
        %v1971 = vld [vmem:[#allocation5 + $0x1c4] sm:$0xf]
        %v1972 = vld [vmem:[#allocation5 + $0x1c8] sm:$0xf]
        %v1973 = vld [vmem:[#allocation5 + $0x1cc] sm:$0xf]
        %v1974 = vld [vmem:[#allocation5 + $0x1d0] sm:$0xf]
        %v1975 = vld [vmem:[#allocation5 + $0x1d4] sm:$0xf]
        %v1976 = vld [vmem:[#allocation5 + $0x1d8] sm:$0xf]
        %v1977 = vld [vmem:[#allocation5 + $0x1dc] sm:$0xf]
        %v1978 = vld [vmem:[#allocation5 + $0x1e0] sm:$0xf]
        %v1979 = vld [vmem:[#allocation5 + $0x1e4] sm:$0xf]
        %v1980 = vld [vmem:[#allocation5 + $0x1e8] sm:$0xf]
        %v1981 = vld [vmem:[#allocation5 + $0x1ec] sm:$0xf]
        %v1982 = vld [vmem:[#allocation5 + $0x1f0] sm:$0xf]
        %v1983 = vld [vmem:[#allocation5 + $0x1f4] sm:$0xf]
        %v1984 = vld [vmem:[#allocation5 + $0x1f8] sm:$0xf]
        %v1985 = vld [vmem:[#allocation5 + $0x1fc] sm:$0xf]
        %v1986 = vld [vmem:[#allocation5 + $0x200] sm:$0xf]
        %v1987 = vld [vmem:[#allocation5 + $0x204] sm:$0xf]
        %v1988 = vld [vmem:[#allocation5 + $0x208] sm:$0xf]
        %v1989 = vld [vmem:[#allocation5 + $0x20c] sm:$0xf]
        %v1990 = vld [vmem:[#allocation5 + $0x210] sm:$0xf]
        %v1991 = vld [vmem:[#allocation5 + $0x214] sm:$0xf]
        %v1992 = vld [vmem:[#allocation5 + $0x218] sm:$0xf]
        %v1993 = vld [vmem:[#allocation5 + $0x21c] sm:$0xf]
        %v1994 = vld [vmem:[#allocation5 + $0x220] sm:$0xf]
        %v1995 = vld [vmem:[#allocation5 + $0x224] sm:$0xf]
        %v1996 = vld [vmem:[#allocation5 + $0x228] sm:$0xf]
        %v1997 = vld [vmem:[#allocation5 + $0x22c] sm:$0xf]
        %v1998 = vld [vmem:[#allocation5 + $0x230] sm:$0xf]
        %v1999 = vld [vmem:[#allocation5 + $0x234] sm:$0xf]
        %v2000 = vld [vmem:[#allocation5 + $0x238] sm:$0xf]
        %v2001 = vld [vmem:[#allocation5 + $0x23c] sm:$0xf]
        %v2002 = vld [vmem:[%s3] sm:$0x1]
        %v2004 = vlaneseq
        %v2005 = vshrl.u32 %v2004, 7
        %v2006 = vsub.s32 0, %v2005
        %v2007 = vrot.slane %v2002, %v2006
        %v2153 = vunpack.c.l.b16 %v1858
        %v2154 = vunpack.c.l.b16 %v1859
        %v2155 = vunpack.c.l.b16 %v1860
        %v2156 = vunpack.c.l.b16 %v1861
        %v2157 = vunpack.c.l.b16 %v1862
        %v2158 = vunpack.c.l.b16 %v1863
        %v2159 = vunpack.c.l.b16 %v1864
        %v2160 = vunpack.c.l.b16 %v1865
        %v2161 = vunpack.c.l.b16 %v1866
        %v2162 = vunpack.c.l.b16 %v1867
        %v2163 = vunpack.c.l.b16 %v1868
        %v2164 = vunpack.c.l.b16 %v1869
        %v2165 = vunpack.c.l.b16 %v1870
        %v2166 = vunpack.c.l.b16 %v1871
        %v2167 = vunpack.c.l.b16 %v1872
        %v2168 = vunpack.c.l.b16 %v1873
        %v2169 = vunpack.c.l.b16 %v1874
        %v2170 = vunpack.c.l.b16 %v1875
        %v2171 = vunpack.c.l.b16 %v1876
        %v2172 = vunpack.c.l.b16 %v1877
        %v2173 = vunpack.c.l.b16 %v1878
        %v2174 = vunpack.c.l.b16 %v1879
        %v2175 = vunpack.c.l.b16 %v1880
        %v2176 = vunpack.c.l.b16 %v1881
        %v2177 = vunpack.c.l.b16 %v1882
        %v2178 = vunpack.c.l.b16 %v1883
        %v2179 = vunpack.c.l.b16 %v1884
        %v2180 = vunpack.c.l.b16 %v1885
        %v2181 = vunpack.c.l.b16 %v1886
        %v2182 = vunpack.c.l.b16 %v1887
        %v2183 = vunpack.c.l.b16 %v1888
        %v2184 = vunpack.c.l.b16 %v1889
        %v2185 = vunpack.c.l.b16 %v1890
        %v2186 = vunpack.c.l.b16 %v1891
        %v2187 = vunpack.c.l.b16 %v1892
        %v2188 = vunpack.c.l.b16 %v1893
        %v2189 = vunpack.c.l.b16 %v1894
        %v2190 = vunpack.c.l.b16 %v1895
        %v2191 = vunpack.c.l.b16 %v1896
        %v2192 = vunpack.c.l.b16 %v1897
        %v2193 = vunpack.c.l.b16 %v1898
        %v2194 = vunpack.c.l.b16 %v1899
        %v2195 = vunpack.c.l.b16 %v1900
        %v2196 = vunpack.c.l.b16 %v1901
        %v2197 = vunpack.c.l.b16 %v1902
        %v2198 = vunpack.c.l.b16 %v1903
        %v2199 = vunpack.c.l.b16 %v1904
        %v2200 = vunpack.c.l.b16 %v1905
        %v2201 = vunpack.c.l.b16 %v1906
        %v2202 = vunpack.c.l.b16 %v1907
        %v2203 = vunpack.c.l.b16 %v1908
        %v2204 = vunpack.c.l.b16 %v1909
        %v2205 = vunpack.c.l.b16 %v1910
        %v2206 = vunpack.c.l.b16 %v1911
        %v2207 = vunpack.c.l.b16 %v1912
        %v2208 = vunpack.c.l.b16 %v1913
        %v2209 = vunpack.c.l.b16 %v1914
        %v2210 = vunpack.c.l.b16 %v1915
        %v2211 = vunpack.c.l.b16 %v1916
        %v2212 = vunpack.c.l.b16 %v1917
        %v2213 = vunpack.c.l.b16 %v1918
        %v2214 = vunpack.c.l.b16 %v1919
        %v2215 = vunpack.c.l.b16 %v1920
        %v2216 = vunpack.c.l.b16 %v1921
        %v2217 = vunpack.c.l.b16 %v1922
        %v2218 = vunpack.c.l.b16 %v1923
        %v2219 = vunpack.c.l.b16 %v1924
        %v2220 = vunpack.c.l.b16 %v1925
        %v2221 = vunpack.c.l.b16 %v1926
        %v2222 = vunpack.c.l.b16 %v1927
        %v2223 = vunpack.c.l.b16 %v1928
        %v2224 = vunpack.c.l.b16 %v1929
        %v2225 = vunpack.c.l.b16 %v1930
        %v2226 = vunpack.c.l.b16 %v1931
        %v2227 = vunpack.c.l.b16 %v1932
        %v2228 = vunpack.c.l.b16 %v1933
        %v2229 = vunpack.c.l.b16 %v1934
        %v2230 = vunpack.c.l.b16 %v1935
        %v2231 = vunpack.c.l.b16 %v1936
        %v2232 = vunpack.c.l.b16 %v1937
        %v2233 = vunpack.c.l.b16 %v1938
        %v2234 = vunpack.c.l.b16 %v1939
        %v2235 = vunpack.c.l.b16 %v1940
        %v2236 = vunpack.c.l.b16 %v1941
        %v2237 = vunpack.c.l.b16 %v1942
        %v2238 = vunpack.c.l.b16 %v1943
        %v2239 = vunpack.c.l.b16 %v1944
        %v2240 = vunpack.c.l.b16 %v1945
        %v2241 = vunpack.c.l.b16 %v1946
        %v2242 = vunpack.c.l.b16 %v1947
        %v2243 = vunpack.c.l.b16 %v1948
        %v2244 = vunpack.c.l.b16 %v1949
        %v2245 = vunpack.c.l.b16 %v1950
        %v2246 = vunpack.c.l.b16 %v1951
        %v2247 = vunpack.c.l.b16 %v1952
        %v2248 = vunpack.c.l.b16 %v1953
        %v2249 = vunpack.c.l.b16 %v1954
        %v2250 = vunpack.c.l.b16 %v1955
        %v2251 = vunpack.c.l.b16 %v1956
        %v2252 = vunpack.c.l.b16 %v1957
        %v2253 = vunpack.c.l.b16 %v1958
        %v2254 = vunpack.c.l.b16 %v1959
        %v2255 = vunpack.c.l.b16 %v1960
        %v2256 = vunpack.c.l.b16 %v1961
        %v2257 = vunpack.c.l.b16 %v1962
        %v2258 = vunpack.c.l.b16 %v1963
        %v2259 = vunpack.c.l.b16 %v1964
        %v2260 = vunpack.c.l.b16 %v1965
        %v2261 = vunpack.c.l.b16 %v1966
        %v2262 = vunpack.c.l.b16 %v1967
        %v2263 = vunpack.c.l.b16 %v1968
        %v2264 = vunpack.c.l.b16 %v1969
        %v2265 = vunpack.c.l.b16 %v1970
        %v2266 = vunpack.c.l.b16 %v1971
        %v2267 = vunpack.c.l.b16 %v1972
        %v2268 = vunpack.c.l.b16 %v1973
        %v2269 = vunpack.c.l.b16 %v1974
        %v2270 = vunpack.c.l.b16 %v1975
        %v2271 = vunpack.c.l.b16 %v1976
        %v2272 = vunpack.c.l.b16 %v1977
        %v2273 = vunpack.c.l.b16 %v1978
        %v2274 = vunpack.c.l.b16 %v1979
        %v2275 = vunpack.c.l.b16 %v1980
        %v2276 = vunpack.c.l.b16 %v1981
        %v2277 = vunpack.c.l.b16 %v1982
        %v2278 = vunpack.c.l.b16 %v1983
        %v2279 = vunpack.c.l.b16 %v1984
        %v2280 = vunpack.c.l.b16 %v1985
        %v2281 = vunpack.c.l.b16 %v1986
        %v2282 = vunpack.c.l.b16 %v1987
        %v2283 = vunpack.c.l.b16 %v1988
        %v2284 = vunpack.c.l.b16 %v1989
        %v2285 = vunpack.c.l.b16 %v1990
        %v2286 = vunpack.c.l.b16 %v1991
        %v2287 = vunpack.c.l.b16 %v1992
        %v2288 = vunpack.c.l.b16 %v1993
        %v2289 = vunpack.c.l.b16 %v1994
        %v2290 = vunpack.c.l.b16 %v1995
        %v2291 = vunpack.c.l.b16 %v1996
        %v2292 = vunpack.c.l.b16 %v1997
        %v2293 = vunpack.c.l.b16 %v1998
        %v2294 = vunpack.c.l.b16 %v1999
        %v2295 = vunpack.c.l.b16 %v2000
        %v2296 = vunpack.c.l.b16 %v2001
        %v2297 = vpack.c.b16 %v2154, %v2153
        %v2298 = vpack.c.b16 %v2156, %v2155
        %v2299 = vpack.c.b16 %v2158, %v2157
        %v2300 = vpack.c.b16 %v2160, %v2159
        %v2301 = vpack.c.b16 %v2162, %v2161
        %v2302 = vpack.c.b16 %v2164, %v2163
        %v2303 = vpack.c.b16 %v2166, %v2165
        %v2304 = vpack.c.b16 %v2168, %v2167
        %v2305 = vpack.c.b16 %v2170, %v2169
        %v2306 = vpack.c.b16 %v2172, %v2171
        %v2307 = vpack.c.b16 %v2174, %v2173
        %v2308 = vpack.c.b16 %v2176, %v2175
        %v2309 = vpack.c.b16 %v2178, %v2177
        %v2310 = vpack.c.b16 %v2180, %v2179
        %v2311 = vpack.c.b16 %v2182, %v2181
        %v2312 = vpack.c.b16 %v2184, %v2183
        %v2313 = vpack.c.b16 %v2186, %v2185
        %v2314 = vpack.c.b16 %v2188, %v2187
        %v2315 = vpack.c.b16 %v2190, %v2189
        %v2316 = vpack.c.b16 %v2192, %v2191
        %v2317 = vpack.c.b16 %v2194, %v2193
        %v2318 = vpack.c.b16 %v2196, %v2195
        %v2319 = vpack.c.b16 %v2198, %v2197
        %v2320 = vpack.c.b16 %v2200, %v2199
        %v2321 = vpack.c.b16 %v2202, %v2201
        %v2322 = vpack.c.b16 %v2204, %v2203
        %v2323 = vpack.c.b16 %v2206, %v2205
        %v2324 = vpack.c.b16 %v2208, %v2207
        %v2325 = vpack.c.b16 %v2210, %v2209
        %v2326 = vpack.c.b16 %v2212, %v2211
        %v2327 = vpack.c.b16 %v2214, %v2213
        %v2328 = vpack.c.b16 %v2216, %v2215
        %v2329 = vpack.c.b16 %v2218, %v2217
        %v2330 = vpack.c.b16 %v2220, %v2219
        %v2331 = vpack.c.b16 %v2222, %v2221
        %v2332 = vpack.c.b16 %v2224, %v2223
        %v2333 = vpack.c.b16 %v2226, %v2225
        %v2334 = vpack.c.b16 %v2228, %v2227
        %v2335 = vpack.c.b16 %v2230, %v2229
        %v2336 = vpack.c.b16 %v2232, %v2231
        %v2337 = vpack.c.b16 %v2234, %v2233
        %v2338 = vpack.c.b16 %v2236, %v2235
        %v2339 = vpack.c.b16 %v2238, %v2237
        %v2340 = vpack.c.b16 %v2240, %v2239
        %v2341 = vpack.c.b16 %v2242, %v2241
        %v2342 = vpack.c.b16 %v2244, %v2243
        %v2343 = vpack.c.b16 %v2246, %v2245
        %v2344 = vpack.c.b16 %v2248, %v2247
        %v2345 = vpack.c.b16 %v2250, %v2249
        %v2346 = vpack.c.b16 %v2252, %v2251
        %v2347 = vpack.c.b16 %v2254, %v2253
        %v2348 = vpack.c.b16 %v2256, %v2255
        %v2349 = vpack.c.b16 %v2258, %v2257
        %v2350 = vpack.c.b16 %v2260, %v2259
        %v2351 = vpack.c.b16 %v2262, %v2261
        %v2352 = vpack.c.b16 %v2264, %v2263
        %v2353 = vpack.c.b16 %v2266, %v2265
        %v2354 = vpack.c.b16 %v2268, %v2267
        %v2355 = vpack.c.b16 %v2270, %v2269
        %v2356 = vpack.c.b16 %v2272, %v2271
        %v2357 = vpack.c.b16 %v2274, %v2273
        %v2358 = vpack.c.b16 %v2276, %v2275
        %v2359 = vpack.c.b16 %v2278, %v2277
        %v2360 = vpack.c.b16 %v2280, %v2279
        %v2361 = vpack.c.b16 %v2282, %v2281
        %v2362 = vpack.c.b16 %v2284, %v2283
        %v2363 = vpack.c.b16 %v2286, %v2285
        %v2364 = vpack.c.b16 %v2288, %v2287
        %v2365 = vpack.c.b16 %v2290, %v2289
        %v2366 = vpack.c.b16 %v2292, %v2291
        %v2367 = vpack.c.b16 %v2294, %v2293
        %v2368 = vpack.c.b16 %v2296, %v2295
        %2441 = vmatprep.subr.bf16.mxu0 0
        %2442 = vmatpush1.bf16.msra.mxu0 %v2297
        %2443 = vmatprep.subr.bf16.mxu0 0
        %2444 = vmatpush1.bf16.msra.mxu0 %v2298
        %2445 = vmatprep.subr.bf16.mxu0 0
        %2446 = vmatpush1.bf16.msra.mxu0 %v2299
        %2447 = vmatprep.subr.bf16.mxu0 0
        %2448 = vmatpush1.bf16.msra.mxu0 %v2300
        %2449 = vmatprep.subr.bf16.mxu0 0
        %2450 = vmatpush1.bf16.msra.mxu0 %v2301
        %2451 = vmatprep.subr.bf16.mxu0 0
        %2452 = vmatpush1.bf16.msra.mxu0 %v2302
        %2453 = vmatprep.subr.bf16.mxu0 0
        %2454 = vmatpush1.bf16.msra.mxu0 %v2303
        %2455 = vmatprep.subr.bf16.mxu0 0
        %2456 = vmatpush1.bf16.msra.mxu0 %v2304
        %2457 = vmatprep.subr.bf16.mxu0 0
        %2458 = vmatpush1.bf16.msra.mxu0 %v2305
        %2459 = vmatprep.subr.bf16.mxu0 0
        %2460 = vmatpush1.bf16.msra.mxu0 %v2306
        %2461 = vmatprep.subr.bf16.mxu0 0
        %2462 = vmatpush1.bf16.msra.mxu0 %v2307
        %2463 = vmatprep.subr.bf16.mxu0 0
        %2464 = vmatpush1.bf16.msra.mxu0 %v2308
        %2465 = vmatprep.subr.bf16.mxu0 0
        %2466 = vmatpush1.bf16.msra.mxu0 %v2309
        %2467 = vmatprep.subr.bf16.mxu0 0
        %2468 = vmatpush1.bf16.msra.mxu0 %v2310
        %2469 = vmatprep.subr.bf16.mxu0 0
        %2470 = vmatpush1.bf16.msra.mxu0 %v2311
        %2471 = vmatprep.subr.bf16.mxu0 0
        %2472 = vmatpush1.bf16.msra.mxu0 %v2312
        %2473 = vmatprep.mubr.bf16.mxu0 %v1769
        %2474 = vmatmul.mubr.bf16.gmra.mrb[0].mxu0 %v1768
        %v2475 = vpop.f32.mrb[0].mxu0
        %v2476 = vadd.f32 %v2007, %v2475
        %v2477 = vpop.f32.mrb[0].mxu0
        %v2478 = vpop.f32.mrb[0].mxu0
        %v2479 = vadd.f32 %v2007, %v2478
        %v2480 = vpop.f32.mrb[0].mxu0
        %2481 = vmatprep.mubr.bf16.mxu0 %v1778
        %2482 = vmatmul.mubr.bf16.gmra.mrb[0].mxu0 %v1777
        %v2483 = vpop.f32.mrb[0].mxu0
        %v2484 = vadd.f32 %v2007, %v2483
        %v2485 = vpop.f32.mrb[0].mxu0
        %v2486 = vpop.f32.mrb[0].mxu0
        %v2487 = vadd.f32 %v2007, %v2486
        %v2488 = vpop.f32.mrb[0].mxu0
        %2489 = vmatprep.mubr.bf16.mxu0 %v1787
        %2490 = vmatmul.mubr.bf16.gmra.mrb[0].mxu0 %v1786
        %v2491 = vpop.f32.mrb[0].mxu0
        %v2492 = vadd.f32 %v2007, %v2491
        %v2493 = vpop.f32.mrb[0].mxu0
        %v2494 = vpop.f32.mrb[0].mxu0
        %v2495 = vadd.f32 %v2007, %v2494
        %v2496 = vpop.f32.mrb[0].mxu0
        %2497 = vmatprep.mubr.bf16.mxu0 %v1796
        %2498 = vmatmul.mubr.bf16.gmra.mrb[0].mxu0 %v1795
        %v2499 = vpop.f32.mrb[0].mxu0
        %v2500 = vadd.f32 %v2007, %v2499
        %v2501 = vpop.f32.mrb[0].mxu0
        %v2502 = vpop.f32.mrb[0].mxu0
        %v2503 = vadd.f32 %v2007, %v2502
        %v2504 = vpop.f32.mrb[0].mxu0
        %2505 = vmatprep.mubr.bf16.mxu0 %v1805
        %2506 = vmatmul.mubr.bf16.gmra.mrb[0].mxu0 %v1804
        %v2507 = vpop.f32.mrb[0].mxu0
        %v2508 = vadd.f32 %v2007, %v2507
        %v2509 = vpop.f32.mrb[0].mxu0
        %v2510 = vpop.f32.mrb[0].mxu0
        %v2511 = vadd.f32 %v2007, %v2510
        %v2512 = vpop.f32.mrb[0].mxu0
        %2513 = vmatprep.mubr.bf16.mxu0 %v1814
        %2514 = vmatmul.mubr.bf16.gmra.mrb[0].mxu0 %v1813
        %v2515 = vpop.f32.mrb[0].mxu0
        %v2516 = vadd.f32 %v2007, %v2515
        %v2517 = vpop.f32.mrb[0].mxu0
        %v2518 = vpop.f32.mrb[0].mxu0
        %v2519 = vadd.f32 %v2007, %v2518
        %v2520 = vpop.f32.mrb[0].mxu0
        %2521 = vmatprep.mubr.bf16.mxu0 %v1823
        %2522 = vmatmul.mubr.bf16.gmra.mrb[0].mxu0 %v1822
        %v2523 = vpop.f32.mrb[0].mxu0
        %v2524 = vadd.f32 %v2007, %v2523
        %v2525 = vpop.f32.mrb[0].mxu0
        %v2526 = vpop.f32.mrb[0].mxu0
        %v2527 = vadd.f32 %v2007, %v2526
        %v2528 = vpop.f32.mrb[0].mxu0
        %2529 = vmatprep.mubr.bf16.mxu0 %v1832
        %2530 = vmatmul.mubr.bf16.gmra.mrb[0].mxu0 %v1831
        %v2531 = vpop.f32.mrb[0].mxu0
        %v2532 = vadd.f32 %v2007, %v2531
        %v2533 = vpop.f32.mrb[0].mxu0
        %v2534 = vpop.f32.mrb[0].mxu0
        %v2535 = vadd.f32 %v2007, %v2534
        %v2536 = vpop.f32.mrb[0].mxu0
        %2537 = vmatprep.mubr.bf16.mxu0 %v1841
        %2538 = vmatmul.mubr.bf16.gmra.mrb[0].mxu0 %v1840
        %v2539 = vpop.f32.mrb[0].mxu0
        %v2540 = vadd.f32 %v2007, %v2539
        %v2541 = vpop.f32.mrb[0].mxu0
        %v2542 = vpop.f32.mrb[0].mxu0
        %v2543 = vadd.f32 %v2007, %v2542
        %v2544 = vpop.f32.mrb[0].mxu0
        %2545 = vmatprep.mubr.bf16.mxu0 %v1850
        %2546 = vmatmul.mubr.bf16.gmra.mrb[0].mxu0 %v1849
        %v2547 = vpop.f32.mrb[0].mxu0
        %v2548 = vadd.f32 %v2007, %v2547
        %v2549 = vpop.f32.mrb[0].mxu0
        %v2550 = vpop.f32.mrb[0].mxu0
        %v2551 = vadd.f32 %v2007, %v2550
        %v2552 = vpop.f32.mrb[0].mxu0
        %2553 = vdwg.mxu0
        %2554 = vmatprep.subr.bf16.mxu0 0
        %2555 = vmatpush1.bf16.msra.mxu0 %v2313
        %2556 = vmatprep.subr.bf16.mxu0 0
        %2557 = vmatpush1.bf16.msra.mxu0 %v2314
        %2558 = vmatprep.subr.bf16.mxu0 0
        %2559 = vmatpush1.bf16.msra.mxu0 %v2315
        %2560 = vmatprep.subr.bf16.mxu0 0
        %2561 = vmatpush1.bf16.msra.mxu0 %v2316
        %2562 = vmatprep.subr.bf16.mxu0 0
        %2563 = vmatpush1.bf16.msra.mxu0 %v2317
        %2564 = vmatprep.subr.bf16.mxu0 0
        %2565 = vmatpush1.bf16.msra.mxu0 %v2318
        %2566 = vmatprep.subr.bf16.mxu0 0
        %2567 = vmatpush1.bf16.msra.mxu0 %v2319
        %2568 = vmatprep.subr.bf16.mxu0 0
        %2569 = vmatpush1.bf16.msra.mxu0 %v2320
        %2570 = vmatprep.subr.bf16.mxu0 0
        %2571 = vmatpush1.bf16.msra.mxu0 %v2321
        %2572 = vmatprep.subr.bf16.mxu0 0
        %2573 = vmatpush1.bf16.msra.mxu0 %v2322
        %2574 = vmatprep.subr.bf16.mxu0 0
        %2575 = vmatpush1.bf16.msra.mxu0 %v2323
        %2576 = vmatprep.subr.bf16.mxu0 0
        %2577 = vmatpush1.bf16.msra.mxu0 %v2324
        %2578 = vmatprep.subr.bf16.mxu0 0
        %2579 = vmatpush1.bf16.msra.mxu0 %v2325
        %2580 = vmatprep.subr.bf16.mxu0 0
        %2581 = vmatpush1.bf16.msra.mxu0 %v2326
        %2582 = vmatprep.subr.bf16.mxu0 0
        %2583 = vmatpush1.bf16.msra.mxu0 %v2327
        %2584 = vmatprep.subr.bf16.mxu0 0
        %2585 = vmatpush1.bf16.msra.mxu0 %v2328
        %2586 = vmatprep.mubr.bf16.mxu0 %v1771
        %2587 = vmatmul.mubr.bf16.gmra.mrb[0].mxu0 %v1770
        %v2588 = vpop.f32.mrb[0].mxu0
        %v2589 = vadd.f32 %v2476, %v2588
        %v2590 = vpop.f32.mrb[0].mxu0
        %v2591 = vpop.f32.mrb[0].mxu0
        %v2592 = vadd.f32 %v2479, %v2591
        %v2593 = vpop.f32.mrb[0].mxu0
        %2594 = vmatprep.mubr.bf16.mxu0 %v1780
        %2595 = vmatmul.mubr.bf16.gmra.mrb[0].mxu0 %v1779
        %v2596 = vpop.f32.mrb[0].mxu0
        %v2597 = vadd.f32 %v2484, %v2596
        %v2598 = vpop.f32.mrb[0].mxu0
        %v2599 = vpop.f32.mrb[0].mxu0
        %v2600 = vadd.f32 %v2487, %v2599
        %v2601 = vpop.f32.mrb[0].mxu0
        %2602 = vmatprep.mubr.bf16.mxu0 %v1789
        %2603 = vmatmul.mubr.bf16.gmra.mrb[0].mxu0 %v1788
        %v2604 = vpop.f32.mrb[0].mxu0
        %v2605 = vadd.f32 %v2492, %v2604
        %v2606 = vpop.f32.mrb[0].mxu0
        %v2607 = vpop.f32.mrb[0].mxu0
        %v2608 = vadd.f32 %v2495, %v2607
        %v2609 = vpop.f32.mrb[0].mxu0
        %2610 = vmatprep.mubr.bf16.mxu0 %v1798
        %2611 = vmatmul.mubr.bf16.gmra.mrb[0].mxu0 %v1797
        %v2612 = vpop.f32.mrb[0].mxu0
        %v2613 = vadd.f32 %v2500, %v2612
        %v2614 = vpop.f32.mrb[0].mxu0
        %v2615 = vpop.f32.mrb[0].mxu0
        %v2616 = vadd.f32 %v2503, %v2615
        %v2617 = vpop.f32.mrb[0].mxu0
        %2618 = vmatprep.mubr.bf16.mxu0 %v1807
        %2619 = vmatmul.mubr.bf16.gmra.mrb[0].mxu0 %v1806
        %v2620 = vpop.f32.mrb[0].mxu0
        %v2621 = vadd.f32 %v2508, %v2620
        %v2622 = vpop.f32.mrb[0].mxu0
        %v2623 = vpop.f32.mrb[0].mxu0
        %v2624 = vadd.f32 %v2511, %v2623
        %v2625 = vpop.f32.mrb[0].mxu0
        %2626 = vmatprep.mubr.bf16.mxu0 %v1816
        %2627 = vmatmul.mubr.bf16.gmra.mrb[0].mxu0 %v1815
        %v2628 = vpop.f32.mrb[0].mxu0
        %v2629 = vadd.f32 %v2516, %v2628
        %v2630 = vpop.f32.mrb[0].mxu0
        %v2631 = vpop.f32.mrb[0].mxu0
        %v2632 = vadd.f32 %v2519, %v2631
        %v2633 = vpop.f32.mrb[0].mxu0
        %2634 = vmatprep.mubr.bf16.mxu0 %v1825
        %2635 = vmatmul.mubr.bf16.gmra.mrb[0].mxu0 %v1824
        %v2636 = vpop.f32.mrb[0].mxu0
        %v2637 = vadd.f32 %v2524, %v2636
        %v2638 = vpop.f32.mrb[0].mxu0
        %v2639 = vpop.f32.mrb[0].mxu0
        %v2640 = vadd.f32 %v2527, %v2639
        %v2641 = vpop.f32.mrb[0].mxu0
        %2642 = vmatprep.mubr.bf16.mxu0 %v1834
        %2643 = vmatmul.mubr.bf16.gmra.mrb[0].mxu0 %v1833
        %v2644 = vpop.f32.mrb[0].mxu0
        %v2645 = vadd.f32 %v2532, %v2644
        %v2646 = vpop.f32.mrb[0].mxu0
        %v2647 = vpop.f32.mrb[0].mxu0
        %v2648 = vadd.f32 %v2535, %v2647
        %v2649 = vpop.f32.mrb[0].mxu0
        %2650 = vmatprep.mubr.bf16.mxu0 %v1843
        %2651 = vmatmul.mubr.bf16.gmra.mrb[0].mxu0 %v1842
        %v2652 = vpop.f32.mrb[0].mxu0
        %v2653 = vadd.f32 %v2540, %v2652
        %v2654 = vpop.f32.mrb[0].mxu0
        %v2655 = vpop.f32.mrb[0].mxu0
        %v2656 = vadd.f32 %v2543, %v2655
        %v2657 = vpop.f32.mrb[0].mxu0
        %2658 = vmatprep.mubr.bf16.mxu0 %v1852
        %2659 = vmatmul.mubr.bf16.gmra.mrb[0].mxu0 %v1851
        %v2660 = vpop.f32.mrb[0].mxu0
        %v2661 = vadd.f32 %v2548, %v2660
        %v2662 = vpop.f32.mrb[0].mxu0
        %v2663 = vpop.f32.mrb[0].mxu0
        %v2664 = vadd.f32 %v2551, %v2663
        %v2665 = vpop.f32.mrb[0].mxu0
        %2666 = vdwg.mxu0
        %2667 = vmatprep.subr.bf16.mxu0 0
        %2668 = vmatpush1.bf16.msra.mxu0 %v2329
        %2669 = vmatprep.subr.bf16.mxu0 0
        %2670 = vmatpush1.bf16.msra.mxu0 %v2330
        %2671 = vmatprep.subr.bf16.mxu0 0
        %2672 = vmatpush1.bf16.msra.mxu0 %v2331
        %2673 = vmatprep.subr.bf16.mxu0 0
        %2674 = vmatpush1.bf16.msra.mxu0 %v2332
        %2675 = vmatprep.subr.bf16.mxu0 0
        %2676 = vmatpush1.bf16.msra.mxu0 %v2333
        %2677 = vmatprep.subr.bf16.mxu0 0
        %2678 = vmatpush1.bf16.msra.mxu0 %v2334
        %2679 = vmatprep.subr.bf16.mxu0 0
        %2680 = vmatpush1.bf16.msra.mxu0 %v2335
        %2681 = vmatprep.subr.bf16.mxu0 0
        %2682 = vmatpush1.bf16.msra.mxu0 %v2336
        %2683 = vmatprep.subr.bf16.mxu0 0
        %2684 = vmatpush1.bf16.msra.mxu0 %v2337
        %2685 = vmatprep.subr.bf16.mxu0 0
        %2686 = vmatpush1.bf16.msra.mxu0 %v2338
        %2687 = vmatprep.subr.bf16.mxu0 0
        %2688 = vmatpush1.bf16.msra.mxu0 %v2339
        %2689 = vmatprep.subr.bf16.mxu0 0
        %2690 = vmatpush1.bf16.msra.mxu0 %v2340
        %2691 = vmatprep.subr.bf16.mxu0 0
        %2692 = vmatpush1.bf16.msra.mxu0 %v2341
        %2693 = vmatprep.subr.bf16.mxu0 0
        %2694 = vmatpush1.bf16.msra.mxu0 %v2342
        %2695 = vmatprep.subr.bf16.mxu0 0
        %2696 = vmatpush1.bf16.msra.mxu0 %v2343
        %2697 = vmatprep.subr.bf16.mxu0 0
        %2698 = vmatpush1.bf16.msra.mxu0 %v2344
        %2699 = vmatprep.mubr.bf16.mxu0 %v1773
        %2700 = vmatmul.mubr.bf16.gmra.mrb[0].mxu0 %v1772
        %v2701 = vpop.f32.mrb[0].mxu0
        %v2702 = vadd.f32 %v2589, %v2701
        %v2703 = vpop.f32.mrb[0].mxu0
        %v2704 = vpop.f32.mrb[0].mxu0
        %v2705 = vadd.f32 %v2592, %v2704
        %v2706 = vpop.f32.mrb[0].mxu0
        %2707 = vmatprep.mubr.bf16.mxu0 %v1782
        %2708 = vmatmul.mubr.bf16.gmra.mrb[0].mxu0 %v1781
        %v2709 = vpop.f32.mrb[0].mxu0
        %v2710 = vadd.f32 %v2597, %v2709
        %v2711 = vpop.f32.mrb[0].mxu0
        %v2712 = vpop.f32.mrb[0].mxu0
        %v2713 = vadd.f32 %v2600, %v2712
        %v2714 = vpop.f32.mrb[0].mxu0
        %2715 = vmatprep.mubr.bf16.mxu0 %v1791
        %2716 = vmatmul.mubr.bf16.gmra.mrb[0].mxu0 %v1790
        %v2717 = vpop.f32.mrb[0].mxu0
        %v2718 = vadd.f32 %v2605, %v2717
        %v2719 = vpop.f32.mrb[0].mxu0
        %v2720 = vpop.f32.mrb[0].mxu0
        %v2721 = vadd.f32 %v2608, %v2720
        %v2722 = vpop.f32.mrb[0].mxu0
        %2723 = vmatprep.mubr.bf16.mxu0 %v1800
        %2724 = vmatmul.mubr.bf16.gmra.mrb[0].mxu0 %v1799
        %v2725 = vpop.f32.mrb[0].mxu0
        %v2726 = vadd.f32 %v2613, %v2725
        %v2727 = vpop.f32.mrb[0].mxu0
        %v2728 = vpop.f32.mrb[0].mxu0
        %v2729 = vadd.f32 %v2616, %v2728
        %v2730 = vpop.f32.mrb[0].mxu0
        %2731 = vmatprep.mubr.bf16.mxu0 %v1809
        %2732 = vmatmul.mubr.bf16.gmra.mrb[0].mxu0 %v1808
        %v2733 = vpop.f32.mrb[0].mxu0
        %v2734 = vadd.f32 %v2621, %v2733
        %v2735 = vpop.f32.mrb[0].mxu0
        %v2736 = vpop.f32.mrb[0].mxu0
        %v2737 = vadd.f32 %v2624, %v2736
        %v2738 = vpop.f32.mrb[0].mxu0
        %2739 = vmatprep.mubr.bf16.mxu0 %v1818
        %2740 = vmatmul.mubr.bf16.gmra.mrb[0].mxu0 %v1817
        %v2741 = vpop.f32.mrb[0].mxu0
        %v2742 = vadd.f32 %v2629, %v2741
        %v2743 = vpop.f32.mrb[0].mxu0
        %v2744 = vpop.f32.mrb[0].mxu0
        %v2745 = vadd.f32 %v2632, %v2744
        %v2746 = vpop.f32.mrb[0].mxu0
        %2747 = vmatprep.mubr.bf16.mxu0 %v1827
        %2748 = vmatmul.mubr.bf16.gmra.mrb[0].mxu0 %v1826
        %v2749 = vpop.f32.mrb[0].mxu0
        %v2750 = vadd.f32 %v2637, %v2749
        %v2751 = vpop.f32.mrb[0].mxu0
        %v2752 = vpop.f32.mrb[0].mxu0
        %v2753 = vadd.f32 %v2640, %v2752
        %v2754 = vpop.f32.mrb[0].mxu0
        %2755 = vmatprep.mubr.bf16.mxu0 %v1836
        %2756 = vmatmul.mubr.bf16.gmra.mrb[0].mxu0 %v1835
        %v2757 = vpop.f32.mrb[0].mxu0
        %v2758 = vadd.f32 %v2645, %v2757
        %v2759 = vpop.f32.mrb[0].mxu0
        %v2760 = vpop.f32.mrb[0].mxu0
        %v2761 = vadd.f32 %v2648, %v2760
        %v2762 = vpop.f32.mrb[0].mxu0
        %2763 = vmatprep.mubr.bf16.mxu0 %v1845
        %2764 = vmatmul.mubr.bf16.gmra.mrb[0].mxu0 %v1844
        %v2765 = vpop.f32.mrb[0].mxu0
        %v2766 = vadd.f32 %v2653, %v2765
        %v2767 = vpop.f32.mrb[0].mxu0
        %v2768 = vpop.f32.mrb[0].mxu0
        %v2769 = vadd.f32 %v2656, %v2768
        %v2770 = vpop.f32.mrb[0].mxu0
        %2771 = vmatprep.mubr.bf16.mxu0 %v1854
        %2772 = vmatmul.mubr.bf16.gmra.mrb[0].mxu0 %v1853
        %v2773 = vpop.f32.mrb[0].mxu0
        %v2774 = vadd.f32 %v2661, %v2773
        %v2775 = vpop.f32.mrb[0].mxu0
        %v2776 = vpop.f32.mrb[0].mxu0
        %v2777 = vadd.f32 %v2664, %v2776
        %v2778 = vpop.f32.mrb[0].mxu0
        %2779 = vdwg.mxu0
        %2780 = vmatprep.subr.bf16.mxu0 0
        %2781 = vmatpush1.bf16.msra.mxu0 %v2345
        %2782 = vmatprep.subr.bf16.mxu0 0
        %2783 = vmatpush1.bf16.msra.mxu0 %v2346
        %2784 = vmatprep.subr.bf16.mxu0 0
        %2785 = vmatpush1.bf16.msra.mxu0 %v2347
        %2786 = vmatprep.subr.bf16.mxu0 0
        %2787 = vmatpush1.bf16.msra.mxu0 %v2348
        %2788 = vmatprep.subr.bf16.mxu0 0
        %2789 = vmatpush1.bf16.msra.mxu0 %v2349
        %2790 = vmatprep.subr.bf16.mxu0 0
        %2791 = vmatpush1.bf16.msra.mxu0 %v2350
        %2792 = vmatprep.subr.bf16.mxu0 0
        %2793 = vmatpush1.bf16.msra.mxu0 %v2351
        %2794 = vmatprep.subr.bf16.mxu0 0
        %2795 = vmatpush1.bf16.msra.mxu0 %v2352
        %2796 = vmatprep.subr.bf16.mxu0 0
        %2797 = vmatpush1.bf16.msra.mxu0 %v2353
        %2798 = vmatprep.subr.bf16.mxu0 0
        %2799 = vmatpush1.bf16.msra.mxu0 %v2354
        %2800 = vmatprep.subr.bf16.mxu0 0
        %2801 = vmatpush1.bf16.msra.mxu0 %v2355
        %2802 = vmatprep.subr.bf16.mxu0 0
        %2803 = vmatpush1.bf16.msra.mxu0 %v2356
        %2804 = vmatprep.subr.bf16.mxu0 0
        %2805 = vmatpush1.bf16.msra.mxu0 %v2357
        %2806 = vmatprep.subr.bf16.mxu0 0
        %2807 = vmatpush1.bf16.msra.mxu0 %v2358
        %2808 = vmatprep.subr.bf16.mxu0 0
        %2809 = vmatpush1.bf16.msra.mxu0 %v2359
        %2810 = vmatprep.subr.bf16.mxu0 0
        %2811 = vmatpush1.bf16.msra.mxu0 %v2360
        %2812 = vmatprep.mubr.bf16.mxu0 %v1775
        %2813 = vmatmul.mubr.bf16.gmra.mrb[0].mxu0 %v1774
        %v2814 = vpop.f32.mrb[0].mxu0
        %v2815 = vadd.f32 %v2702, %v2814
        %v2816 = vpop.f32.mrb[0].mxu0
        %v2817 = vpop.f32.mrb[0].mxu0
        %v2818 = vadd.f32 %v2705, %v2817
        %v2819 = vpop.f32.mrb[0].mxu0
        %2820 = vmatprep.mubr.bf16.mxu0 %v1784
        %2821 = vmatmul.mubr.bf16.gmra.mrb[0].mxu0 %v1783
        %v2822 = vpop.f32.mrb[0].mxu0
        %v2823 = vadd.f32 %v2710, %v2822
        %v2824 = vpop.f32.mrb[0].mxu0
        %v2825 = vpop.f32.mrb[0].mxu0
        %v2826 = vadd.f32 %v2713, %v2825
        %v2827 = vpop.f32.mrb[0].mxu0
        %2828 = vmatprep.mubr.bf16.mxu0 %v1793
        %2829 = vmatmul.mubr.bf16.gmra.mrb[0].mxu0 %v1792
        %v2830 = vpop.f32.mrb[0].mxu0
        %v2831 = vadd.f32 %v2718, %v2830
        %v2832 = vpop.f32.mrb[0].mxu0
        %v2833 = vpop.f32.mrb[0].mxu0
        %v2834 = vadd.f32 %v2721, %v2833
        %v2835 = vpop.f32.mrb[0].mxu0
        %2836 = vmatprep.mubr.bf16.mxu0 %v1802
        %2837 = vmatmul.mubr.bf16.gmra.mrb[0].mxu0 %v1801
        %v2838 = vpop.f32.mrb[0].mxu0
        %v2839 = vadd.f32 %v2726, %v2838
        %v2840 = vpop.f32.mrb[0].mxu0
        %v2841 = vpop.f32.mrb[0].mxu0
        %v2842 = vadd.f32 %v2729, %v2841
        %v2843 = vpop.f32.mrb[0].mxu0
        %2844 = vmatprep.mubr.bf16.mxu0 %v1811
        %2845 = vmatmul.mubr.bf16.gmra.mrb[0].mxu0 %v1810
        %v2846 = vpop.f32.mrb[0].mxu0
        %v2847 = vadd.f32 %v2734, %v2846
        %v2848 = vpop.f32.mrb[0].mxu0
        %v2849 = vpop.f32.mrb[0].mxu0
        %v2850 = vadd.f32 %v2737, %v2849
        %v2851 = vpop.f32.mrb[0].mxu0
        %2852 = vmatprep.mubr.bf16.mxu0 %v1820
        %2853 = vmatmul.mubr.bf16.gmra.mrb[0].mxu0 %v1819
        %v2854 = vpop.f32.mrb[0].mxu0
        %v2855 = vadd.f32 %v2742, %v2854
        %v2856 = vpop.f32.mrb[0].mxu0
        %v2857 = vpop.f32.mrb[0].mxu0
        %v2858 = vadd.f32 %v2745, %v2857
        %v2859 = vpop.f32.mrb[0].mxu0
        %2860 = vmatprep.mubr.bf16.mxu0 %v1829
        %2861 = vmatmul.mubr.bf16.gmra.mrb[0].mxu0 %v1828
        %v2862 = vpop.f32.mrb[0].mxu0
        %v2863 = vadd.f32 %v2750, %v2862
        %v2864 = vpop.f32.mrb[0].mxu0
        %v2865 = vpop.f32.mrb[0].mxu0
        %v2866 = vadd.f32 %v2753, %v2865
        %v2867 = vpop.f32.mrb[0].mxu0
        %2868 = vmatprep.mubr.bf16.mxu0 %v1838
        %2869 = vmatmul.mubr.bf16.gmra.mrb[0].mxu0 %v1837
        %v2870 = vpop.f32.mrb[0].mxu0
        %v2871 = vadd.f32 %v2758, %v2870
        %v2872 = vpop.f32.mrb[0].mxu0
        %v2873 = vpop.f32.mrb[0].mxu0
        %v2874 = vadd.f32 %v2761, %v2873
        %v2875 = vpop.f32.mrb[0].mxu0
        %2876 = vmatprep.mubr.bf16.mxu0 %v1847
        %2877 = vmatmul.mubr.bf16.gmra.mrb[0].mxu0 %v1846
        %v2878 = vpop.f32.mrb[0].mxu0
        %v2879 = vadd.f32 %v2766, %v2878
        %v2880 = vpop.f32.mrb[0].mxu0
        %v2881 = vpop.f32.mrb[0].mxu0
        %v2882 = vadd.f32 %v2769, %v2881
        %v2883 = vpop.f32.mrb[0].mxu0
        %2884 = vmatprep.mubr.bf16.mxu0 %v1856
        %2885 = vmatmul.mubr.bf16.gmra.mrb[0].mxu0 %v1855
        %v2886 = vpop.f32.mrb[0].mxu0
        %v2887 = vadd.f32 %v2774, %v2886
        %v2888 = vpop.f32.mrb[0].mxu0
        %v2889 = vpop.f32.mrb[0].mxu0
        %v2890 = vadd.f32 %v2777, %v2889
        %v2891 = vpop.f32.mrb[0].mxu0
        %2892 = vdwg.mxu0
        %2893 = vmatprep.subr.bf16.mxu0 0
        %2894 = vmatpush1.bf16.msra.mxu0 %v2361
        %2895 = vmatprep.subr.bf16.mxu0 0
        %2896 = vmatpush1.bf16.msra.mxu0 %v2362
        %2897 = vmatprep.subr.bf16.mxu0 0
        %2898 = vmatpush1.bf16.msra.mxu0 %v2363
        %2899 = vmatprep.subr.bf16.mxu0 0
        %2900 = vmatpush1.bf16.msra.mxu0 %v2364
        %2901 = vmatprep.subr.bf16.mxu0 0
        %2902 = vmatpush1.bf16.msra.mxu0 %v2365
        %2903 = vmatprep.subr.bf16.mxu0 0
        %2904 = vmatpush1.bf16.msra.mxu0 %v2366
        %2905 = vmatprep.subr.bf16.mxu0 0
        %2906 = vmatpush1.bf16.msra.mxu0 %v2367
        %2907 = vmatprep.subr.bf16.mxu0 0
        %2908 = vmatpush1.bf16.msra.mxu0 %v2368
        %2909 = vmatprep.subr.bf16.mxu0 0
        %2910 = vmatpush1.bf16.msra.mxu0 0
        %2911 = vmatprep.subr.bf16.mxu0 0
        %2912 = vmatpush1.bf16.msra.mxu0 0
        %2913 = vmatprep.subr.bf16.mxu0 0
        %2914 = vmatpush1.bf16.msra.mxu0 0
        %2915 = vmatprep.subr.bf16.mxu0 0
        %2916 = vmatpush1.bf16.msra.mxu0 0
        %2917 = vmatprep.subr.bf16.mxu0 0
        %2918 = vmatpush1.bf16.msra.mxu0 0
        %2919 = vmatprep.subr.bf16.mxu0 0
        %2920 = vmatpush1.bf16.msra.mxu0 0
        %2921 = vmatprep.subr.bf16.mxu0 0
        %2922 = vmatpush1.bf16.msra.mxu0 0
        %2923 = vmatprep.subr.bf16.mxu0 0
        %2924 = vmatpush1.bf16.msra.mxu0 0
        %2925 = vmatprep.mubr.bf16.mxu0 0
        %2926 = vmatmul.mubr.bf16.gmra.mrb[0].mxu0 %v1776
        %v2927 = vpop.f32.mrb[0].mxu0
        %v2928 = vadd.f32 %v2815, %v2927
        %v2929 = vpop.f32.mrb[0].mxu0
        %v2930 = vpop.f32.mrb[0].mxu0
        %v2931 = vadd.f32 %v2818, %v2930
        %v2932 = vpop.f32.mrb[0].mxu0
        %2933 = vmatprep.mubr.bf16.mxu0 0
        %2934 = vmatmul.mubr.bf16.gmra.mrb[0].mxu0 %v1785
        %v2935 = vpop.f32.mrb[0].mxu0
        %v2936 = vadd.f32 %v2823, %v2935
        %v2937 = vpop.f32.mrb[0].mxu0
        %v2938 = vpop.f32.mrb[0].mxu0
        %v2939 = vadd.f32 %v2826, %v2938
        %v2940 = vpop.f32.mrb[0].mxu0
        %2941 = vmatprep.mubr.bf16.mxu0 0
        %2942 = vmatmul.mubr.bf16.gmra.mrb[0].mxu0 %v1794
        %v2943 = vpop.f32.mrb[0].mxu0
        %v2944 = vadd.f32 %v2831, %v2943
        %v2945 = vpop.f32.mrb[0].mxu0
        %v2946 = vpop.f32.mrb[0].mxu0
        %v2947 = vadd.f32 %v2834, %v2946
        %v2948 = vpop.f32.mrb[0].mxu0
        %2949 = vmatprep.mubr.bf16.mxu0 0
        %2950 = vmatmul.mubr.bf16.gmra.mrb[0].mxu0 %v1803
        %v2951 = vpop.f32.mrb[0].mxu0
        %v2952 = vadd.f32 %v2839, %v2951
        %v2953 = vpop.f32.mrb[0].mxu0
        %v2954 = vpop.f32.mrb[0].mxu0
        %v2955 = vadd.f32 %v2842, %v2954
        %v2956 = vpop.f32.mrb[0].mxu0
        %2957 = vmatprep.mubr.bf16.mxu0 0
        %2958 = vmatmul.mubr.bf16.gmra.mrb[0].mxu0 %v1812
        %v2959 = vpop.f32.mrb[0].mxu0
        %v2960 = vadd.f32 %v2847, %v2959
        %v2961 = vpop.f32.mrb[0].mxu0
        %v2962 = vpop.f32.mrb[0].mxu0
        %v2963 = vadd.f32 %v2850, %v2962
        %v2964 = vpop.f32.mrb[0].mxu0
        %2965 = vmatprep.mubr.bf16.mxu0 0
        %2966 = vmatmul.mubr.bf16.gmra.mrb[0].mxu0 %v1821
        %v2967 = vpop.f32.mrb[0].mxu0
        %v2968 = vadd.f32 %v2855, %v2967
        %v2969 = vpop.f32.mrb[0].mxu0
        %v2970 = vpop.f32.mrb[0].mxu0
        %v2971 = vadd.f32 %v2858, %v2970
        %v2972 = vpop.f32.mrb[0].mxu0
        %2973 = vmatprep.mubr.bf16.mxu0 0
        %2974 = vmatmul.mubr.bf16.gmra.mrb[0].mxu0 %v1830
        %v2975 = vpop.f32.mrb[0].mxu0
        %v2976 = vadd.f32 %v2863, %v2975
        %v2977 = vpop.f32.mrb[0].mxu0
        %v2978 = vpop.f32.mrb[0].mxu0
        %v2979 = vadd.f32 %v2866, %v2978
        %v2980 = vpop.f32.mrb[0].mxu0
        %2981 = vmatprep.mubr.bf16.mxu0 0
        %2982 = vmatmul.mubr.bf16.gmra.mrb[0].mxu0 %v1839
        %v2983 = vpop.f32.mrb[0].mxu0
        %v2984 = vadd.f32 %v2871, %v2983
        %v2985 = vpop.f32.mrb[0].mxu0
        %v2986 = vpop.f32.mrb[0].mxu0
        %v2987 = vadd.f32 %v2874, %v2986
        %v2988 = vpop.f32.mrb[0].mxu0
        %2989 = vmatprep.mubr.bf16.mxu0 0
        %2990 = vmatmul.mubr.bf16.gmra.mrb[0].mxu0 %v1848
        %v2991 = vpop.f32.mrb[0].mxu0
        %v2992 = vadd.f32 %v2879, %v2991
        %v2993 = vpop.f32.mrb[0].mxu0
        %v2994 = vpop.f32.mrb[0].mxu0
        %v2995 = vadd.f32 %v2882, %v2994
        %v2996 = vpop.f32.mrb[0].mxu0
        %2997 = vmatprep.mubr.bf16.mxu0 0
        %2998 = vmatmul.mubr.bf16.gmra.mrb[0].mxu0 %v1857
        %v2999 = vpop.f32.mrb[0].mxu0
        %v3000 = vadd.f32 %v2887, %v2999
        %v3001 = vpop.f32.mrb[0].mxu0
        %v3002 = vpop.f32.mrb[0].mxu0
        %v3003 = vadd.f32 %v2890, %v3002
        %v3004 = vpop.f32.mrb[0].mxu0
        %3005 = vdwg.mxu0
        %v3006 = vmax.f32 %v2928, 0.0
        %v3007 = vmax.f32 %v2931, 0.0
        %v3008 = vmax.f32 %v2936, 0.0
        %v3009 = vmax.f32 %v2939, 0.0
        %v3010 = vmax.f32 %v2944, 0.0
        %v3011 = vmax.f32 %v2947, 0.0
        %v3012 = vmax.f32 %v2952, 0.0
        %v3013 = vmax.f32 %v2955, 0.0
        %v3014 = vmax.f32 %v2960, 0.0
        %v3015 = vmax.f32 %v2963, 0.0
        %v3016 = vmax.f32 %v2968, 0.0
        %v3017 = vmax.f32 %v2971, 0.0
        %v3018 = vmax.f32 %v2976, 0.0
        %v3019 = vmax.f32 %v2979, 0.0
        %v3020 = vmax.f32 %v2984, 0.0
        %v3021 = vmax.f32 %v2987, 0.0
        %v3022 = vmax.f32 %v2992, 0.0
        %v3023 = vmax.f32 %v2995, 0.0
        %v3024 = vmax.f32 %v3000, 0.0
        %v3025 = vmax.f32 %v3003, 0.0
        %v3026 = vpack.c.bf16 %v3007, %v3006
        %v3027 = vpack.c.bf16 %v3009, %v3008
        %v3028 = vpack.c.bf16 %v3011, %v3010
        %v3029 = vpack.c.bf16 %v3013, %v3012
        %v3030 = vpack.c.bf16 %v3015, %v3014
        %v3031 = vpack.c.bf16 %v3017, %v3016
        %v3032 = vpack.c.bf16 %v3019, %v3018
        %v3033 = vpack.c.bf16 %v3021, %v3020
        %v3034 = vpack.c.bf16 %v3023, %v3022
        %v3035 = vpack.c.bf16 %v3025, %v3024
        %v3046 = vunpack.c.l.b16 %v3026
        %v3047 = vunpack.c.h.b16 %v3026
        %v3048 = vunpack.c.l.b16 %v3027
        %v3049 = vunpack.c.h.b16 %v3027
        %v3050 = vunpack.c.l.b16 %v3028
        %v3051 = vunpack.c.h.b16 %v3028
        %v3052 = vunpack.c.l.b16 %v3029
        %v3053 = vunpack.c.h.b16 %v3029
        %v3054 = vunpack.c.l.b16 %v3030
        %v3055 = vunpack.c.h.b16 %v3030
        %v3056 = vunpack.c.l.b16 %v3031
        %v3057 = vunpack.c.h.b16 %v3031
        %v3058 = vunpack.c.l.b16 %v3032
        %v3059 = vunpack.c.h.b16 %v3032
        %v3060 = vunpack.c.l.b16 %v3033
        %v3061 = vunpack.c.h.b16 %v3033
        %v3062 = vunpack.c.l.b16 %v3034
        %v3063 = vunpack.c.h.b16 %v3034
        %v3064 = vunpack.c.l.b16 %v3035
        %v3065 = vunpack.c.h.b16 %v3035
        %v3066 = vpack.c.b16 %v3046, %v3046
        %v3067 = vpack.c.b16 %v3047, %v3047
        %v3068 = vpack.c.b16 %v3048, %v3048
        %v3069 = vpack.c.b16 %v3049, %v3049
        %v3070 = vpack.c.b16 %v3050, %v3050
        %v3071 = vpack.c.b16 %v3051, %v3051
        %v3072 = vpack.c.b16 %v3052, %v3052
        %v3073 = vpack.c.b16 %v3053, %v3053
        %v3074 = vpack.c.b16 %v3054, %v3054
        %v3075 = vpack.c.b16 %v3055, %v3055
        %v3076 = vpack.c.b16 %v3056, %v3056
        %v3077 = vpack.c.b16 %v3057, %v3057
        %v3078 = vpack.c.b16 %v3058, %v3058
        %v3079 = vpack.c.b16 %v3059, %v3059
        %v3080 = vpack.c.b16 %v3060, %v3060
        %v3081 = vpack.c.b16 %v3061, %v3061
        %v3082 = vpack.c.b16 %v3062, %v3062
        %v3083 = vpack.c.b16 %v3063, %v3063
        %v3084 = vpack.c.b16 %v3064, %v3064
        %v3085 = vpack.c.b16 %v3065, %v3065
        %vm3086 = vsmask.f32 256
        %vm3087 = vsmask.f32 4368
        %vm3088 = vmor %vm3086, %vm3087
        %v3090 = vshrl.u32 %v3066, 16
        %v3092 = vrot.slane %v3090, 7
        %v3093 = vshll.u32 %v3066, 16
        %v3095 = vor.u32 %v3092, %v3093
        %v3096 = vrot.slane %v3092, 4
        %v3098 = vshrl.u32 %v3067, 16
        %v3100 = vrot.slane %v3098, 7
        %v3101 = vshll.u32 %v3067, 16
        %v3103 = vor.u32 %v3100, %v3101
        %v3104 = vsel %vm3088, %v3096, %v3103
        %v3105 = vrot.slane %v3100, 4
        %v3107 = vshrl.u32 %v3068, 16
        %v3109 = vrot.slane %v3107, 7
        %v3110 = vshll.u32 %v3068, 16
        %v3112 = vor.u32 %v3109, %v3110
        %v3113 = vrot.slane %v3109, 4
        %v3115 = vshrl.u32 %v3069, 16
        %v3117 = vrot.slane %v3115, 7
        %v3118 = vshll.u32 %v3069, 16
        %v3120 = vor.u32 %v3117, %v3118
        %v3121 = vsel %vm3088, %v3113, %v3120
        %v3122 = vrot.slane %v3117, 4
        %v3124 = vshrl.u32 %v3070, 16
        %v3126 = vrot.slane %v3124, 7
        %v3127 = vshll.u32 %v3070, 16
        %v3129 = vor.u32 %v3126, %v3127
        %v3130 = vrot.slane %v3126, 4
        %v3132 = vshrl.u32 %v3071, 16
        %v3134 = vrot.slane %v3132, 7
        %v3135 = vshll.u32 %v3071, 16
        %v3137 = vor.u32 %v3134, %v3135
        %v3138 = vsel %vm3088, %v3130, %v3137
        %v3139 = vrot.slane %v3134, 4
        %v3141 = vshrl.u32 %v3072, 16
        %v3143 = vrot.slane %v3141, 7
        %v3144 = vshll.u32 %v3072, 16
        %v3146 = vor.u32 %v3143, %v3144
        %v3147 = vrot.slane %v3143, 4
        %v3149 = vshrl.u32 %v3073, 16
        %v3151 = vrot.slane %v3149, 7
        %v3152 = vshll.u32 %v3073, 16
        %v3154 = vor.u32 %v3151, %v3152
        %v3155 = vsel %vm3088, %v3147, %v3154
        %v3156 = vrot.slane %v3151, 4
        %v3158 = vshrl.u32 %v3074, 16
        %v3160 = vrot.slane %v3158, 7
        %v3161 = vshll.u32 %v3074, 16
        %v3163 = vor.u32 %v3160, %v3161
        %v3164 = vrot.slane %v3160, 4
        %v3166 = vshrl.u32 %v3075, 16
        %v3168 = vrot.slane %v3166, 7
        %v3169 = vshll.u32 %v3075, 16
        %v3171 = vor.u32 %v3168, %v3169
        %v3172 = vsel %vm3088, %v3164, %v3171
        %v3173 = vrot.slane %v3168, 4
        %v3175 = vshrl.u32 %v3076, 16
        %v3177 = vrot.slane %v3175, 7
        %v3178 = vshll.u32 %v3076, 16
        %v3180 = vor.u32 %v3177, %v3178
        %v3181 = vrot.slane %v3177, 4
        %v3183 = vshrl.u32 %v3077, 16
        %v3185 = vrot.slane %v3183, 7
        %v3186 = vshll.u32 %v3077, 16
        %v3188 = vor.u32 %v3185, %v3186
        %v3189 = vsel %vm3088, %v3181, %v3188
        %v3190 = vrot.slane %v3185, 4
        %v3192 = vshrl.u32 %v3078, 16
        %v3194 = vrot.slane %v3192, 7
        %v3195 = vshll.u32 %v3078, 16
        %v3197 = vor.u32 %v3194, %v3195
        %v3198 = vrot.slane %v3194, 4
        %v3200 = vshrl.u32 %v3079, 16
        %v3202 = vrot.slane %v3200, 7
        %v3203 = vshll.u32 %v3079, 16
        %v3205 = vor.u32 %v3202, %v3203
        %v3206 = vsel %vm3088, %v3198, %v3205
        %v3207 = vrot.slane %v3202, 4
        %v3209 = vshrl.u32 %v3080, 16
        %v3211 = vrot.slane %v3209, 7
        %v3212 = vshll.u32 %v3080, 16
        %v3214 = vor.u32 %v3211, %v3212
        %v3215 = vrot.slane %v3211, 4
        %v3217 = vshrl.u32 %v3081, 16
        %v3219 = vrot.slane %v3217, 7
        %v3220 = vshll.u32 %v3081, 16
        %v3222 = vor.u32 %v3219, %v3220
        %v3223 = vsel %vm3088, %v3215, %v3222
        %v3224 = vrot.slane %v3219, 4
        %v3226 = vshrl.u32 %v3082, 16
        %v3228 = vrot.slane %v3226, 7
        %v3229 = vshll.u32 %v3082, 16
        %v3231 = vor.u32 %v3228, %v3229
        %v3232 = vrot.slane %v3228, 4
        %v3234 = vshrl.u32 %v3083, 16
        %v3236 = vrot.slane %v3234, 7
        %v3237 = vshll.u32 %v3083, 16
        %v3239 = vor.u32 %v3236, %v3237
        %v3240 = vsel %vm3088, %v3232, %v3239
        %v3241 = vrot.slane %v3236, 4
        %v3243 = vshrl.u32 %v3084, 16
        %v3245 = vrot.slane %v3243, 7
        %v3246 = vshll.u32 %v3084, 16
        %v3248 = vor.u32 %v3245, %v3246
        %v3249 = vrot.slane %v3245, 4
        %v3251 = vshrl.u32 %v3085, 16
        %v3253 = vrot.slane %v3251, 7
        %v3254 = vshll.u32 %v3085, 16
        %v3256 = vor.u32 %v3253, %v3254
        %v3257 = vsel %vm3088, %v3249, %v3256
        %v3258 = vrot.slane %v3253, 4
        %vm3289 = vcmask 1043456
        %vm3290 = vsmask.f32 7938
        %vm3291 = vmand %vm3289, %vm3290
        %v3292 = vld [vmem:[#allocation3] sm:$0xf]
        %v3293 = vsel %vm3291, %v3095, %v3292
        %3294 = vst [vmem:[#allocation3] sm:$0xf] %v3293
        %3295 = vst [vmem:[#allocation3 + $0x4] sm:$0xf] %v3104
        %vm3296 = vcmask 1040384
        %vm3297 = vmand %vm3296, %vm3086
        %v3298 = vld [vmem:[#allocation3 + $0x8] sm:$0x1]
        %v3299 = vsel %vm3297, %v3105, %v3298
        %3300 = vst [vmem:[#allocation3 + $0x8] sm:$0x1] %v3299
        %v3301 = vld [vmem:[#allocation3 + $0xc] sm:$0xf]
        %v3302 = vsel %vm3291, %v3112, %v3301
        %3303 = vst [vmem:[#allocation3 + $0xc] sm:$0xf] %v3302
        %3304 = vst [vmem:[#allocation3 + $0x10] sm:$0xf] %v3121
        %v3305 = vld [vmem:[#allocation3 + $0x14] sm:$0x1]
        %v3306 = vsel %vm3297, %v3122, %v3305
        %3307 = vst [vmem:[#allocation3 + $0x14] sm:$0x1] %v3306
        %v3308 = vld [vmem:[#allocation3 + $0x18] sm:$0xf]
        %v3309 = vsel %vm3291, %v3129, %v3308
        %3310 = vst [vmem:[#allocation3 + $0x18] sm:$0xf] %v3309
        %3311 = vst [vmem:[#allocation3 + $0x1c] sm:$0xf] %v3138
        %v3312 = vld [vmem:[#allocation3 + $0x20] sm:$0x1]
        %v3313 = vsel %vm3297, %v3139, %v3312
        %3314 = vst [vmem:[#allocation3 + $0x20] sm:$0x1] %v3313
        %v3315 = vld [vmem:[#allocation3 + $0x24] sm:$0xf]
        %v3316 = vsel %vm3291, %v3146, %v3315
        %3317 = vst [vmem:[#allocation3 + $0x24] sm:$0xf] %v3316
        %3318 = vst [vmem:[#allocation3 + $0x28] sm:$0xf] %v3155
        %v3319 = vld [vmem:[#allocation3 + $0x2c] sm:$0x1]
        %v3320 = vsel %vm3297, %v3156, %v3319
        %3321 = vst [vmem:[#allocation3 + $0x2c] sm:$0x1] %v3320
        %v3322 = vld [vmem:[#allocation3 + $0x30] sm:$0xf]
        %v3323 = vsel %vm3291, %v3163, %v3322
        %3324 = vst [vmem:[#allocation3 + $0x30] sm:$0xf] %v3323
        %3325 = vst [vmem:[#allocation3 + $0x34] sm:$0xf] %v3172
        %v3326 = vld [vmem:[#allocation3 + $0x38] sm:$0x1]
        %v3327 = vsel %vm3297, %v3173, %v3326
        %3328 = vst [vmem:[#allocation3 + $0x38] sm:$0x1] %v3327
        %v3329 = vld [vmem:[#allocation3 + $0x3c] sm:$0xf]
        %v3330 = vsel %vm3291, %v3180, %v3329
        %3331 = vst [vmem:[#allocation3 + $0x3c] sm:$0xf] %v3330
        %3332 = vst [vmem:[#allocation3 + $0x40] sm:$0xf] %v3189
        %v3333 = vld [vmem:[#allocation3 + $0x44] sm:$0x1]
        %v3334 = vsel %vm3297, %v3190, %v3333
        %3335 = vst [vmem:[#allocation3 + $0x44] sm:$0x1] %v3334
        %v3336 = vld [vmem:[#allocation3 + $0x48] sm:$0xf]
        %v3337 = vsel %vm3291, %v3197, %v3336
        %3338 = vst [vmem:[#allocation3 + $0x48] sm:$0xf] %v3337
        %3339 = vst [vmem:[#allocation3 + $0x4c] sm:$0xf] %v3206
        %v3340 = vld [vmem:[#allocation3 + $0x50] sm:$0x1]
        %v3341 = vsel %vm3297, %v3207, %v3340
        %3342 = vst [vmem:[#allocation3 + $0x50] sm:$0x1] %v3341
        %v3343 = vld [vmem:[#allocation3 + $0x54] sm:$0xf]
        %v3344 = vsel %vm3291, %v3214, %v3343
        %3345 = vst [vmem:[#allocation3 + $0x54] sm:$0xf] %v3344
        %3346 = vst [vmem:[#allocation3 + $0x58] sm:$0xf] %v3223
        %v3347 = vld [vmem:[#allocation3 + $0x5c] sm:$0x1]
        %v3348 = vsel %vm3297, %v3224, %v3347
        %3349 = vst [vmem:[#allocation3 + $0x5c] sm:$0x1] %v3348
        %v3350 = vld [vmem:[#allocation3 + $0x60] sm:$0xf]
        %v3351 = vsel %vm3291, %v3231, %v3350
        %3352 = vst [vmem:[#allocation3 + $0x60] sm:$0xf] %v3351
        %3353 = vst [vmem:[#allocation3 + $0x64] sm:$0xf] %v3240
        %v3354 = vld [vmem:[#allocation3 + $0x68] sm:$0x1]
        %v3355 = vsel %vm3297, %v3241, %v3354
        %3356 = vst [vmem:[#allocation3 + $0x68] sm:$0x1] %v3355
        %v3357 = vld [vmem:[#allocation3 + $0x6c] sm:$0xf]
        %v3358 = vsel %vm3291, %v3248, %v3357
        %3359 = vst [vmem:[#allocation3 + $0x6c] sm:$0xf] %v3358
        %3360 = vst [vmem:[#allocation3 + $0x70] sm:$0xf] %v3257
        %v3361 = vld [vmem:[#allocation3 + $0x74] sm:$0x1]
        %v3362 = vsel %vm3297, %v3258, %v3361
        %3363 = vst [vmem:[#allocation3 + $0x74] sm:$0x1] %v3362
        %v3364 = vld [vmem:[#allocation3] sm:$0x1]
        %v3365 = vsel %vm3297, 0, %v3364
        %3366 = vst [vmem:[#allocation3] sm:$0x1] %v3365
        %v3367 = vld [vmem:[#allocation3 + $0xc] sm:$0x1]
        %v3368 = vsel %vm3297, 0, %v3367
        %3369 = vst [vmem:[#allocation3 + $0xc] sm:$0x1] %v3368
        %v3370 = vld [vmem:[#allocation3 + $0x18] sm:$0x1]
        %v3371 = vsel %vm3297, 0, %v3370
        %3372 = vst [vmem:[#allocation3 + $0x18] sm:$0x1] %v3371
        %v3373 = vld [vmem:[#allocation3 + $0x24] sm:$0x1]
        %v3374 = vsel %vm3297, 0, %v3373
        %3375 = vst [vmem:[#allocation3 + $0x24] sm:$0x1] %v3374
        %v3376 = vld [vmem:[#allocation3 + $0x30] sm:$0x1]
        %v3377 = vsel %vm3297, 0, %v3376
        %3378 = vst [vmem:[#allocation3 + $0x30] sm:$0x1] %v3377
        %v3379 = vld [vmem:[#allocation3 + $0x3c] sm:$0x1]
        %v3380 = vsel %vm3297, 0, %v3379
        %3381 = vst [vmem:[#allocation3 + $0x3c] sm:$0x1] %v3380
        %v3382 = vld [vmem:[#allocation3 + $0x48] sm:$0x1]
        %v3383 = vsel %vm3297, 0, %v3382
        %3384 = vst [vmem:[#allocation3 + $0x48] sm:$0x1] %v3383
        %v3385 = vld [vmem:[#allocation3 + $0x54] sm:$0x1]
        %v3386 = vsel %vm3297, 0, %v3385
        %3387 = vst [vmem:[#allocation3 + $0x54] sm:$0x1] %v3386
        %v3388 = vld [vmem:[#allocation3 + $0x60] sm:$0x1]
        %v3389 = vsel %vm3297, 0, %v3388
        %3390 = vst [vmem:[#allocation3 + $0x60] sm:$0x1] %v3389
        %v3391 = vld [vmem:[#allocation3 + $0x6c] sm:$0x1]
        %v3392 = vsel %vm3297, 0, %v3391
        %3393 = vst [vmem:[#allocation3 + $0x6c] sm:$0x1] %v3392
        %vm3394 = vmand %vm3296, %vm3290
        %v3395 = vld [vmem:[#allocation3 + $0x8] sm:$0x1]
        %v3396 = vsel %vm3394, 0, %v3395
        %3397 = vst [vmem:[#allocation3 + $0x8] sm:$0x1] %v3396
        %v3398 = vld [vmem:[#allocation3 + $0x14] sm:$0x1]
        %v3399 = vsel %vm3394, 0, %v3398
        %3400 = vst [vmem:[#allocation3 + $0x14] sm:$0x1] %v3399
        %v3401 = vld [vmem:[#allocation3 + $0x20] sm:$0x1]
        %v3402 = vsel %vm3394, 0, %v3401
        %3403 = vst [vmem:[#allocation3 + $0x20] sm:$0x1] %v3402
        %v3404 = vld [vmem:[#allocation3 + $0x2c] sm:$0x1]
        %v3405 = vsel %vm3394, 0, %v3404
        %3406 = vst [vmem:[#allocation3 + $0x2c] sm:$0x1] %v3405
        %v3407 = vld [vmem:[#allocation3 + $0x38] sm:$0x1]
        %v3408 = vsel %vm3394, 0, %v3407
        %3409 = vst [vmem:[#allocation3 + $0x38] sm:$0x1] %v3408
        %v3410 = vld [vmem:[#allocation3 + $0x44] sm:$0x1]
        %v3411 = vsel %vm3394, 0, %v3410
        %3412 = vst [vmem:[#allocation3 + $0x44] sm:$0x1] %v3411
        %v3413 = vld [vmem:[#allocation3 + $0x50] sm:$0x1]
        %v3414 = vsel %vm3394, 0, %v3413
        %3415 = vst [vmem:[#allocation3 + $0x50] sm:$0x1] %v3414
        %v3416 = vld [vmem:[#allocation3 + $0x5c] sm:$0x1]
        %v3417 = vsel %vm3394, 0, %v3416
        %3418 = vst [vmem:[#allocation3 + $0x5c] sm:$0x1] %v3417
        %v3419 = vld [vmem:[#allocation3 + $0x68] sm:$0x1]
        %v3420 = vsel %vm3394, 0, %v3419
        %3421 = vst [vmem:[#allocation3 + $0x68] sm:$0x1] %v3420
        %v3422 = vld [vmem:[#allocation3 + $0x74] sm:$0x1]
        %v3423 = vsel %vm3394, 0, %v3422
        %3424 = vst [vmem:[#allocation3 + $0x74] sm:$0x1] %v3423
        %p3425 = scmp.eq.s32.totalorder %s25, 0
        // Predicated region
        $region45: #{tpu_custom_call.1} parent=39 // pred_check
          %p3426 = pneg %p3425
        $region46: #{tpu_custom_call.1} parent=39 // pred_check_branch
          %3428 = sbr.rel (%p3426) target = $region48
        $region47: #{tpu_custom_call.1} parent=39 // pred_region
          %3429 = vst [vmem:[#allocation3] sm:$0xf] 0
          %3430 = vst [vmem:[#allocation3 + $0x4] sm:$0xf] 0
          %3431 = vst [vmem:[#allocation3 + $0x8] sm:$0x1] 0
        $region48: #{tpu_custom_call.1} parent=39 // pred_fallthru
          _
        %p3432 = scmp.eq.s32.totalorder %s25, 1
        // Predicated region
        $region49: #{tpu_custom_call.1} parent=39 // pred_check
          %p3433 = pneg %p3432
        $region50: #{tpu_custom_call.1} parent=39 // pred_check_branch
          %3435 = sbr.rel (%p3433) target = $region52
        $region51: #{tpu_custom_call.1} parent=39 // pred_region
          %s3436 = scalar_lea.vmem [#allocation3], 108
          %3437 = vst [vmem:[%s3436] sm:$0xf] 0
          %3438 = vst [vmem:[%s3436 + $0x4] sm:$0xf] 0
          %3439 = vst [vmem:[%s3436 + $0x8] sm:$0x1] 0
        $region52: #{tpu_custom_call.1} parent=39 // pred_fallthru
          _
        %v3440 = vld [vmem:[#allocation3] sm:$0xf]
        %v3441 = vld [vmem:[#allocation3 + $0x4] sm:$0xf]
        %v3442 = vld [vmem:[#allocation3 + $0xc] sm:$0xf]
        %v3443 = vld [vmem:[#allocation3 + $0x10] sm:$0xf]
        %v3444 = vld [vmem:[#allocation3 + $0x18] sm:$0xf]
        %v3445 = vld [vmem:[#allocation3 + $0x1c] sm:$0xf]
        %v3446 = vld [vmem:[#allocation3 + $0x24] sm:$0xf]
        %v3447 = vld [vmem:[#allocation3 + $0x28] sm:$0xf]
        %v3448 = vld [vmem:[#allocation3 + $0x30] sm:$0xf]
        %v3449 = vld [vmem:[#allocation3 + $0x34] sm:$0xf]
        %v3450 = vld [vmem:[#allocation3 + $0x3c] sm:$0xf]
        %v3451 = vld [vmem:[#allocation3 + $0x40] sm:$0xf]
        %v3452 = vld [vmem:[#allocation3 + $0x48] sm:$0xf]
        %v3453 = vld [vmem:[#allocation3 + $0x4c] sm:$0xf]
        %v3454 = vld [vmem:[#allocation3 + $0x54] sm:$0xf]
        %v3455 = vld [vmem:[#allocation3 + $0x58] sm:$0xf]
        %v3472 = vunpack.c.l.b16 %v3440
        %v3473 = vunpack.c.l.b16 %v3441
        %v3474 = vunpack.c.l.b16 %v3442
        %v3475 = vunpack.c.l.b16 %v3443
        %v3476 = vunpack.c.l.b16 %v3444
        %v3477 = vunpack.c.l.b16 %v3445
        %v3478 = vunpack.c.l.b16 %v3446
        %v3479 = vunpack.c.l.b16 %v3447
        %v3480 = vunpack.c.l.b16 %v3448
        %v3481 = vunpack.c.l.b16 %v3449
        %v3482 = vunpack.c.l.b16 %v3450
        %v3483 = vunpack.c.l.b16 %v3451
        %v3484 = vunpack.c.l.b16 %v3452
        %v3485 = vunpack.c.l.b16 %v3453
        %v3486 = vunpack.c.l.b16 %v3454
        %v3487 = vunpack.c.l.b16 %v3455
        %v3488 = vpack.c.b16 %v3473, %v3472
        %v3489 = vpack.c.b16 %v3475, %v3474
        %v3490 = vpack.c.b16 %v3477, %v3476
        %v3491 = vpack.c.b16 %v3479, %v3478
        %v3492 = vpack.c.b16 %v3481, %v3480
        %v3493 = vpack.c.b16 %v3483, %v3482
        %v3494 = vpack.c.b16 %v3485, %v3484
        %v3495 = vpack.c.b16 %v3487, %v3486
        %3504 = vst [vmem:[#allocation4] sm:$0xff] %v3488
        %3505 = vst [vmem:[#allocation4 + $0x50] sm:$0xff] %v3489
        %3506 = vst [vmem:[#allocation4 + $0xa0] sm:$0xff] %v3490
        %3507 = vst [vmem:[#allocation4 + $0xf0] sm:$0xff] %v3491
        %3508 = vst [vmem:[#allocation4 + $0x140] sm:$0xff] %v3492
        %3509 = vst [vmem:[#allocation4 + $0x190] sm:$0xff] %v3493
        %3510 = vst [vmem:[#allocation4 + $0x1e0] sm:$0xff] %v3494
        %3511 = vst [vmem:[#allocation4 + $0x230] sm:$0xff] %v3495
        %v3512 = vld [vmem:[#allocation3] sm:$0xf]
        %v3513 = vld [vmem:[#allocation3 + $0x4] sm:$0xf]
        %v3514 = vld [vmem:[#allocation3 + $0x8] sm:$0x1]
        %v3515 = vld [vmem:[#allocation3 + $0xc] sm:$0xf]
        %v3516 = vld [vmem:[#allocation3 + $0x10] sm:$0xf]
        %v3517 = vld [vmem:[#allocation3 + $0x14] sm:$0x1]
        %v3518 = vld [vmem:[#allocation3 + $0x18] sm:$0xf]
        %v3519 = vld [vmem:[#allocation3 + $0x1c] sm:$0xf]
        %v3520 = vld [vmem:[#allocation3 + $0x20] sm:$0x1]
        %v3521 = vld [vmem:[#allocation3 + $0x24] sm:$0xf]
        %v3522 = vld [vmem:[#allocation3 + $0x28] sm:$0xf]
        %v3523 = vld [vmem:[#allocation3 + $0x2c] sm:$0x1]
        %v3524 = vld [vmem:[#allocation3 + $0x30] sm:$0xf]
        %v3525 = vld [vmem:[#allocation3 + $0x34] sm:$0xf]
        %v3526 = vld [vmem:[#allocation3 + $0x38] sm:$0x1]
        %v3527 = vld [vmem:[#allocation3 + $0x3c] sm:$0xf]
        %v3528 = vld [vmem:[#allocation3 + $0x40] sm:$0xf]
        %v3529 = vld [vmem:[#allocation3 + $0x44] sm:$0x1]
        %v3530 = vld [vmem:[#allocation3 + $0x48] sm:$0xf]
        %v3531 = vld [vmem:[#allocation3 + $0x4c] sm:$0xf]
        %v3532 = vld [vmem:[#allocation3 + $0x50] sm:$0x1]
        %v3533 = vld [vmem:[#allocation3 + $0x54] sm:$0xf]
        %v3534 = vld [vmem:[#allocation3 + $0x58] sm:$0xf]
        %v3535 = vld [vmem:[#allocation3 + $0x5c] sm:$0x1]
        %v3560 = vunpack.c.l.b16 %v3512
        %v3561 = vunpack.c.l.b16 %v3513
        %v3562 = vunpack.c.l.b16 %v3514
        %v3563 = vunpack.c.l.b16 %v3515
        %v3564 = vunpack.c.l.b16 %v3516
        %v3565 = vunpack.c.l.b16 %v3517
        %v3566 = vunpack.c.l.b16 %v3518
        %v3567 = vunpack.c.l.b16 %v3519
        %v3568 = vunpack.c.l.b16 %v3520
        %v3569 = vunpack.c.l.b16 %v3521
        %v3570 = vunpack.c.l.b16 %v3522
        %v3571 = vunpack.c.l.b16 %v3523
        %v3572 = vunpack.c.l.b16 %v3524
        %v3573 = vunpack.c.l.b16 %v3525
        %v3574 = vunpack.c.l.b16 %v3526
        %v3575 = vunpack.c.l.b16 %v3527
        %v3576 = vunpack.c.l.b16 %v3528
        %v3577 = vunpack.c.l.b16 %v3529
        %v3578 = vunpack.c.l.b16 %v3530
        %v3579 = vunpack.c.l.b16 %v3531
        %v3580 = vunpack.c.l.b16 %v3532
        %v3581 = vunpack.c.l.b16 %v3533
        %v3582 = vunpack.c.l.b16 %v3534
        %v3583 = vunpack.c.l.b16 %v3535
        %v3584 = vpack.c.b16 %v3561, %v3560
        %v3585 = vpack.c.b16 %v3562, %v3562
        %v3586 = vpack.c.b16 %v3564, %v3563
        %v3587 = vpack.c.b16 %v3565, %v3565
        %v3588 = vpack.c.b16 %v3567, %v3566
        %v3589 = vpack.c.b16 %v3568, %v3568
        %v3590 = vpack.c.b16 %v3570, %v3569
        %v3591 = vpack.c.b16 %v3571, %v3571
        %v3592 = vpack.c.b16 %v3573, %v3572
        %v3593 = vpack.c.b16 %v3574, %v3574
        %v3594 = vpack.c.b16 %v3576, %v3575
        %v3595 = vpack.c.b16 %v3577, %v3577
        %v3596 = vpack.c.b16 %v3579, %v3578
        %v3597 = vpack.c.b16 %v3580, %v3580
        %v3598 = vpack.c.b16 %v3582, %v3581
        %v3599 = vpack.c.b16 %v3583, %v3583
        %v3601 = vshrl.u32 %v3584, 16
        %v3603 = vshll.u32 %v3584, 16
        %v3605 = vrot.slane %v3603, 1
        %v3606 = vor.u32 %v3601, %v3605
        %v3608 = vshll.u32 %v3585, 16
        %v3610 = vrot.slane %v3608, 1
        %v3611 = vsel %vm458, %v3606, %v3610
        %v3613 = vshrl.u32 %v3586, 16
        %v3615 = vshll.u32 %v3586, 16
        %v3617 = vrot.slane %v3615, 1
        %v3618 = vor.u32 %v3613, %v3617
        %v3620 = vshll.u32 %v3587, 16
        %v3622 = vrot.slane %v3620, 1
        %v3623 = vsel %vm458, %v3618, %v3622
        %v3625 = vshrl.u32 %v3588, 16
        %v3627 = vshll.u32 %v3588, 16
        %v3629 = vrot.slane %v3627, 1
        %v3630 = vor.u32 %v3625, %v3629
        %v3632 = vshll.u32 %v3589, 16
        %v3634 = vrot.slane %v3632, 1
        %v3635 = vsel %vm458, %v3630, %v3634
        %v3637 = vshrl.u32 %v3590, 16
        %v3639 = vshll.u32 %v3590, 16
        %v3641 = vrot.slane %v3639, 1
        %v3642 = vor.u32 %v3637, %v3641
        %v3644 = vshll.u32 %v3591, 16
        %v3646 = vrot.slane %v3644, 1
        %v3647 = vsel %vm458, %v3642, %v3646
        %v3649 = vshrl.u32 %v3592, 16
        %v3651 = vshll.u32 %v3592, 16
        %v3653 = vrot.slane %v3651, 1
        %v3654 = vor.u32 %v3649, %v3653
        %v3656 = vshll.u32 %v3593, 16
        %v3658 = vrot.slane %v3656, 1
        %v3659 = vsel %vm458, %v3654, %v3658
        %v3661 = vshrl.u32 %v3594, 16
        %v3663 = vshll.u32 %v3594, 16
        %v3665 = vrot.slane %v3663, 1
        %v3666 = vor.u32 %v3661, %v3665
        %v3668 = vshll.u32 %v3595, 16
        %v3670 = vrot.slane %v3668, 1
        %v3671 = vsel %vm458, %v3666, %v3670
        %v3673 = vshrl.u32 %v3596, 16
        %v3675 = vshll.u32 %v3596, 16
        %v3677 = vrot.slane %v3675, 1
        %v3678 = vor.u32 %v3673, %v3677
        %v3680 = vshll.u32 %v3597, 16
        %v3682 = vrot.slane %v3680, 1
        %v3683 = vsel %vm458, %v3678, %v3682
        %v3685 = vshrl.u32 %v3598, 16
        %v3687 = vshll.u32 %v3598, 16
        %v3689 = vrot.slane %v3687, 1
        %v3690 = vor.u32 %v3685, %v3689
        %v3692 = vshll.u32 %v3599, 16
        %v3694 = vrot.slane %v3692, 1
        %v3695 = vsel %vm458, %v3690, %v3694
        %3704 = vst [vmem:[#allocation4 + $0x8] sm:$0xff] %v3611
        %3705 = vst [vmem:[#allocation4 + $0x58] sm:$0xff] %v3623
        %3706 = vst [vmem:[#allocation4 + $0xa8] sm:$0xff] %v3635
        %3707 = vst [vmem:[#allocation4 + $0xf8] sm:$0xff] %v3647
        %3708 = vst [vmem:[#allocation4 + $0x148] sm:$0xff] %v3659
        %3709 = vst [vmem:[#allocation4 + $0x198] sm:$0xff] %v3671
        %3710 = vst [vmem:[#allocation4 + $0x1e8] sm:$0xff] %v3683
        %3711 = vst [vmem:[#allocation4 + $0x238] sm:$0xff] %v3695
        %v3712 = vld [vmem:[#allocation3] sm:$0xe]
        %v3713 = vld [vmem:[#allocation3 + $0x4] sm:$0xf]
        %v3714 = vld [vmem:[#allocation3 + $0x8] sm:$0x1]
        %v3715 = vld [vmem:[#allocation3 + $0xc] sm:$0xe]
        %v3716 = vld [vmem:[#allocation3 + $0x10] sm:$0xf]
        %v3717 = vld [vmem:[#allocation3 + $0x14] sm:$0x1]
        %v3718 = vld [vmem:[#allocation3 + $0x18] sm:$0xe]
        %v3719 = vld [vmem:[#allocation3 + $0x1c] sm:$0xf]
        %v3720 = vld [vmem:[#allocation3 + $0x20] sm:$0x1]
        %v3721 = vld [vmem:[#allocation3 + $0x24] sm:$0xe]
        %v3722 = vld [vmem:[#allocation3 + $0x28] sm:$0xf]
        %v3723 = vld [vmem:[#allocation3 + $0x2c] sm:$0x1]
        %v3724 = vld [vmem:[#allocation3 + $0x30] sm:$0xe]
        %v3725 = vld [vmem:[#allocation3 + $0x34] sm:$0xf]
        %v3726 = vld [vmem:[#allocation3 + $0x38] sm:$0x1]
        %v3727 = vld [vmem:[#allocation3 + $0x3c] sm:$0xe]
        %v3728 = vld [vmem:[#allocation3 + $0x40] sm:$0xf]
        %v3729 = vld [vmem:[#allocation3 + $0x44] sm:$0x1]
        %v3730 = vld [vmem:[#allocation3 + $0x48] sm:$0xe]
        %v3731 = vld [vmem:[#allocation3 + $0x4c] sm:$0xf]
        %v3732 = vld [vmem:[#allocation3 + $0x50] sm:$0x1]
        %v3733 = vld [vmem:[#allocation3 + $0x54] sm:$0xe]
        %v3734 = vld [vmem:[#allocation3 + $0x58] sm:$0xf]
        %v3735 = vld [vmem:[#allocation3 + $0x5c] sm:$0x1]
        %v3760 = vunpack.c.l.b16 %v3712
        %v3761 = vunpack.c.l.b16 %v3713
        %v3762 = vunpack.c.l.b16 %v3714
        %v3763 = vunpack.c.l.b16 %v3715
        %v3764 = vunpack.c.l.b16 %v3716
        %v3765 = vunpack.c.l.b16 %v3717
        %v3766 = vunpack.c.l.b16 %v3718
        %v3767 = vunpack.c.l.b16 %v3719
        %v3768 = vunpack.c.l.b16 %v3720
        %v3769 = vunpack.c.l.b16 %v3721
        %v3770 = vunpack.c.l.b16 %v3722
        %v3771 = vunpack.c.l.b16 %v3723
        %v3772 = vunpack.c.l.b16 %v3724
        %v3773 = vunpack.c.l.b16 %v3725
        %v3774 = vunpack.c.l.b16 %v3726
        %v3775 = vunpack.c.l.b16 %v3727
        %v3776 = vunpack.c.l.b16 %v3728
        %v3777 = vunpack.c.l.b16 %v3729
        %v3778 = vunpack.c.l.b16 %v3730
        %v3779 = vunpack.c.l.b16 %v3731
        %v3780 = vunpack.c.l.b16 %v3732
        %v3781 = vunpack.c.l.b16 %v3733
        %v3782 = vunpack.c.l.b16 %v3734
        %v3783 = vunpack.c.l.b16 %v3735
        %v3784 = vpack.c.b16 %v3761, %v3760
        %v3785 = vpack.c.b16 %v3762, %v3762
        %v3786 = vpack.c.b16 %v3764, %v3763
        %v3787 = vpack.c.b16 %v3765, %v3765
        %v3788 = vpack.c.b16 %v3767, %v3766
        %v3789 = vpack.c.b16 %v3768, %v3768
        %v3790 = vpack.c.b16 %v3770, %v3769
        %v3791 = vpack.c.b16 %v3771, %v3771
        %v3792 = vpack.c.b16 %v3773, %v3772
        %v3793 = vpack.c.b16 %v3774, %v3774
        %v3794 = vpack.c.b16 %v3776, %v3775
        %v3795 = vpack.c.b16 %v3777, %v3777
        %v3796 = vpack.c.b16 %v3779, %v3778
        %v3797 = vpack.c.b16 %v3780, %v3780
        %v3798 = vpack.c.b16 %v3782, %v3781
        %v3799 = vpack.c.b16 %v3783, %v3783
        %v3800 = vrot.slane %v3784, 1
        %v3801 = vrot.slane %v3785, 1
        %v3802 = vsel %vm709, %v3800, %v3801
        %v3803 = vrot.slane %v3786, 1
        %v3804 = vrot.slane %v3787, 1
        %v3805 = vsel %vm709, %v3803, %v3804
        %v3806 = vrot.slane %v3788, 1
        %v3807 = vrot.slane %v3789, 1
        %v3808 = vsel %vm709, %v3806, %v3807
        %v3809 = vrot.slane %v3790, 1
        %v3810 = vrot.slane %v3791, 1
        %v3811 = vsel %vm709, %v3809, %v3810
        %v3812 = vrot.slane %v3792, 1
        %v3813 = vrot.slane %v3793, 1
        %v3814 = vsel %vm709, %v3812, %v3813
        %v3815 = vrot.slane %v3794, 1
        %v3816 = vrot.slane %v3795, 1
        %v3817 = vsel %vm709, %v3815, %v3816
        %v3818 = vrot.slane %v3796, 1
        %v3819 = vrot.slane %v3797, 1
        %v3820 = vsel %vm709, %v3818, %v3819
        %v3821 = vrot.slane %v3798, 1
        %v3822 = vrot.slane %v3799, 1
        %v3823 = vsel %vm709, %v3821, %v3822
        %3832 = vst [vmem:[#allocation4 + $0x10] sm:$0xff] %v3802
        %3833 = vst [vmem:[#allocation4 + $0x60] sm:$0xff] %v3805
        %3834 = vst [vmem:[#allocation4 + $0xb0] sm:$0xff] %v3808
        %3835 = vst [vmem:[#allocation4 + $0x100] sm:$0xff] %v3811
        %3836 = vst [vmem:[#allocation4 + $0x150] sm:$0xff] %v3814
        %3837 = vst [vmem:[#allocation4 + $0x1a0] sm:$0xff] %v3817
        %3838 = vst [vmem:[#allocation4 + $0x1f0] sm:$0xff] %v3820
        %3839 = vst [vmem:[#allocation4 + $0x240] sm:$0xff] %v3823
        %s3840 = scalar_lea.vmem [#allocation3], 12
        %v3841 = vld [vmem:[%s3840] sm:$0xf]
        %v3842 = vld [vmem:[%s3840 + $0x4] sm:$0xf]
        %v3843 = vld [vmem:[%s3840 + $0xc] sm:$0xf]
        %v3844 = vld [vmem:[%s3840 + $0x10] sm:$0xf]
        %v3845 = vld [vmem:[%s3840 + $0x18] sm:$0xf]
        %v3846 = vld [vmem:[%s3840 + $0x1c] sm:$0xf]
        %v3847 = vld [vmem:[%s3840 + $0x24] sm:$0xf]
        %v3848 = vld [vmem:[%s3840 + $0x28] sm:$0xf]
        %v3849 = vld [vmem:[%s3840 + $0x30] sm:$0xf]
        %v3850 = vld [vmem:[%s3840 + $0x34] sm:$0xf]
        %v3851 = vld [vmem:[%s3840 + $0x3c] sm:$0xf]
        %v3852 = vld [vmem:[%s3840 + $0x40] sm:$0xf]
        %v3853 = vld [vmem:[%s3840 + $0x48] sm:$0xf]
        %v3854 = vld [vmem:[%s3840 + $0x4c] sm:$0xf]
        %v3855 = vld [vmem:[%s3840 + $0x54] sm:$0xf]
        %v3856 = vld [vmem:[%s3840 + $0x58] sm:$0xf]
        %v3873 = vunpack.c.l.b16 %v3841
        %v3874 = vunpack.c.l.b16 %v3842
        %v3875 = vunpack.c.l.b16 %v3843
        %v3876 = vunpack.c.l.b16 %v3844
        %v3877 = vunpack.c.l.b16 %v3845
        %v3878 = vunpack.c.l.b16 %v3846
        %v3879 = vunpack.c.l.b16 %v3847
        %v3880 = vunpack.c.l.b16 %v3848
        %v3881 = vunpack.c.l.b16 %v3849
        %v3882 = vunpack.c.l.b16 %v3850
        %v3883 = vunpack.c.l.b16 %v3851
        %v3884 = vunpack.c.l.b16 %v3852
        %v3885 = vunpack.c.l.b16 %v3853
        %v3886 = vunpack.c.l.b16 %v3854
        %v3887 = vunpack.c.l.b16 %v3855
        %v3888 = vunpack.c.l.b16 %v3856
        %v3889 = vpack.c.b16 %v3874, %v3873
        %v3890 = vpack.c.b16 %v3876, %v3875
        %v3891 = vpack.c.b16 %v3878, %v3877
        %v3892 = vpack.c.b16 %v3880, %v3879
        %v3893 = vpack.c.b16 %v3882, %v3881
        %v3894 = vpack.c.b16 %v3884, %v3883
        %v3895 = vpack.c.b16 %v3886, %v3885
        %v3896 = vpack.c.b16 %v3888, %v3887
        %3905 = vst [vmem:[#allocation4 + $0x18] sm:$0xff] %v3889
        %3906 = vst [vmem:[#allocation4 + $0x68] sm:$0xff] %v3890
        %3907 = vst [vmem:[#allocation4 + $0xb8] sm:$0xff] %v3891
        %3908 = vst [vmem:[#allocation4 + $0x108] sm:$0xff] %v3892
        %3909 = vst [vmem:[#allocation4 + $0x158] sm:$0xff] %v3893
        %3910 = vst [vmem:[#allocation4 + $0x1a8] sm:$0xff] %v3894
        %3911 = vst [vmem:[#allocation4 + $0x1f8] sm:$0xff] %v3895
        %3912 = vst [vmem:[#allocation4 + $0x248] sm:$0xff] %v3896
        %v3913 = vld [vmem:[%s3840] sm:$0xf]
        %v3914 = vld [vmem:[%s3840 + $0x4] sm:$0xf]
        %v3915 = vld [vmem:[%s3840 + $0x8] sm:$0x1]
        %v3916 = vld [vmem:[%s3840 + $0xc] sm:$0xf]
        %v3917 = vld [vmem:[%s3840 + $0x10] sm:$0xf]
        %v3918 = vld [vmem:[%s3840 + $0x14] sm:$0x1]
        %v3919 = vld [vmem:[%s3840 + $0x18] sm:$0xf]
        %v3920 = vld [vmem:[%s3840 + $0x1c] sm:$0xf]
        %v3921 = vld [vmem:[%s3840 + $0x20] sm:$0x1]
        %v3922 = vld [vmem:[%s3840 + $0x24] sm:$0xf]
        %v3923 = vld [vmem:[%s3840 + $0x28] sm:$0xf]
        %v3924 = vld [vmem:[%s3840 + $0x2c] sm:$0x1]
        %v3925 = vld [vmem:[%s3840 + $0x30] sm:$0xf]
        %v3926 = vld [vmem:[%s3840 + $0x34] sm:$0xf]
        %v3927 = vld [vmem:[%s3840 + $0x38] sm:$0x1]
        %v3928 = vld [vmem:[%s3840 + $0x3c] sm:$0xf]
        %v3929 = vld [vmem:[%s3840 + $0x40] sm:$0xf]
        %v3930 = vld [vmem:[%s3840 + $0x44] sm:$0x1]
        %v3931 = vld [vmem:[%s3840 + $0x48] sm:$0xf]
        %v3932 = vld [vmem:[%s3840 + $0x4c] sm:$0xf]
        %v3933 = vld [vmem:[%s3840 + $0x50] sm:$0x1]
        %v3934 = vld [vmem:[%s3840 + $0x54] sm:$0xf]
        %v3935 = vld [vmem:[%s3840 + $0x58] sm:$0xf]
        %v3936 = vld [vmem:[%s3840 + $0x5c] sm:$0x1]
        %v3961 = vunpack.c.l.b16 %v3913
        %v3962 = vunpack.c.l.b16 %v3914
        %v3963 = vunpack.c.l.b16 %v3915
        %v3964 = vunpack.c.l.b16 %v3916
        %v3965 = vunpack.c.l.b16 %v3917
        %v3966 = vunpack.c.l.b16 %v3918
        %v3967 = vunpack.c.l.b16 %v3919
        %v3968 = vunpack.c.l.b16 %v3920
        %v3969 = vunpack.c.l.b16 %v3921
        %v3970 = vunpack.c.l.b16 %v3922
        %v3971 = vunpack.c.l.b16 %v3923
        %v3972 = vunpack.c.l.b16 %v3924
        %v3973 = vunpack.c.l.b16 %v3925
        %v3974 = vunpack.c.l.b16 %v3926
        %v3975 = vunpack.c.l.b16 %v3927
        %v3976 = vunpack.c.l.b16 %v3928
        %v3977 = vunpack.c.l.b16 %v3929
        %v3978 = vunpack.c.l.b16 %v3930
        %v3979 = vunpack.c.l.b16 %v3931
        %v3980 = vunpack.c.l.b16 %v3932
        %v3981 = vunpack.c.l.b16 %v3933
        %v3982 = vunpack.c.l.b16 %v3934
        %v3983 = vunpack.c.l.b16 %v3935
        %v3984 = vunpack.c.l.b16 %v3936
        %v3985 = vpack.c.b16 %v3962, %v3961
        %v3986 = vpack.c.b16 %v3963, %v3963
        %v3987 = vpack.c.b16 %v3965, %v3964
        %v3988 = vpack.c.b16 %v3966, %v3966
        %v3989 = vpack.c.b16 %v3968, %v3967
        %v3990 = vpack.c.b16 %v3969, %v3969
        %v3991 = vpack.c.b16 %v3971, %v3970
        %v3992 = vpack.c.b16 %v3972, %v3972
        %v3993 = vpack.c.b16 %v3974, %v3973
        %v3994 = vpack.c.b16 %v3975, %v3975
        %v3995 = vpack.c.b16 %v3977, %v3976
        %v3996 = vpack.c.b16 %v3978, %v3978
        %v3997 = vpack.c.b16 %v3980, %v3979
        %v3998 = vpack.c.b16 %v3981, %v3981
        %v3999 = vpack.c.b16 %v3983, %v3982
        %v4000 = vpack.c.b16 %v3984, %v3984
        %v4002 = vshrl.u32 %v3985, 16
        %v4004 = vshll.u32 %v3985, 16
        %v4006 = vrot.slane %v4004, 1
        %v4007 = vor.u32 %v4002, %v4006
        %v4009 = vshll.u32 %v3986, 16
        %v4011 = vrot.slane %v4009, 1
        %v4012 = vsel %vm458, %v4007, %v4011
        %v4014 = vshrl.u32 %v3987, 16
        %v4016 = vshll.u32 %v3987, 16
        %v4018 = vrot.slane %v4016, 1
        %v4019 = vor.u32 %v4014, %v4018
        %v4021 = vshll.u32 %v3988, 16
        %v4023 = vrot.slane %v4021, 1
        %v4024 = vsel %vm458, %v4019, %v4023
        %v4026 = vshrl.u32 %v3989, 16
        %v4028 = vshll.u32 %v3989, 16
        %v4030 = vrot.slane %v4028, 1
        %v4031 = vor.u32 %v4026, %v4030
        %v4033 = vshll.u32 %v3990, 16
        %v4035 = vrot.slane %v4033, 1
        %v4036 = vsel %vm458, %v4031, %v4035
        %v4038 = vshrl.u32 %v3991, 16
        %v4040 = vshll.u32 %v3991, 16
        %v4042 = vrot.slane %v4040, 1
        %v4043 = vor.u32 %v4038, %v4042
        %v4045 = vshll.u32 %v3992, 16
        %v4047 = vrot.slane %v4045, 1
        %v4048 = vsel %vm458, %v4043, %v4047
        %v4050 = vshrl.u32 %v3993, 16
        %v4052 = vshll.u32 %v3993, 16
        %v4054 = vrot.slane %v4052, 1
        %v4055 = vor.u32 %v4050, %v4054
        %v4057 = vshll.u32 %v3994, 16
        %v4059 = vrot.slane %v4057, 1
        %v4060 = vsel %vm458, %v4055, %v4059
        %v4062 = vshrl.u32 %v3995, 16
        %v4064 = vshll.u32 %v3995, 16
        %v4066 = vrot.slane %v4064, 1
        %v4067 = vor.u32 %v4062, %v4066
        %v4069 = vshll.u32 %v3996, 16
        %v4071 = vrot.slane %v4069, 1
        %v4072 = vsel %vm458, %v4067, %v4071
        %v4074 = vshrl.u32 %v3997, 16
        %v4076 = vshll.u32 %v3997, 16
        %v4078 = vrot.slane %v4076, 1
        %v4079 = vor.u32 %v4074, %v4078
        %v4081 = vshll.u32 %v3998, 16
        %v4083 = vrot.slane %v4081, 1
        %v4084 = vsel %vm458, %v4079, %v4083
        %v4086 = vshrl.u32 %v3999, 16
        %v4088 = vshll.u32 %v3999, 16
        %v4090 = vrot.slane %v4088, 1
        %v4091 = vor.u32 %v4086, %v4090
        %v4093 = vshll.u32 %v4000, 16
        %v4095 = vrot.slane %v4093, 1
        %v4096 = vsel %vm458, %v4091, %v4095
        %4105 = vst [vmem:[#allocation4 + $0x20] sm:$0xff] %v4012
        %4106 = vst [vmem:[#allocation4 + $0x70] sm:$0xff] %v4024
        %4107 = vst [vmem:[#allocation4 + $0xc0] sm:$0xff] %v4036
        %4108 = vst [vmem:[#allocation4 + $0x110] sm:$0xff] %v4048
        %4109 = vst [vmem:[#allocation4 + $0x160] sm:$0xff] %v4060
        %4110 = vst [vmem:[#allocation4 + $0x1b0] sm:$0xff] %v4072
        %4111 = vst [vmem:[#allocation4 + $0x200] sm:$0xff] %v4084
        %4112 = vst [vmem:[#allocation4 + $0x250] sm:$0xff] %v4096
        %v4113 = vld [vmem:[%s3840] sm:$0xe]
        %v4114 = vld [vmem:[%s3840 + $0x4] sm:$0xf]
        %v4115 = vld [vmem:[%s3840 + $0x8] sm:$0x1]
        %v4116 = vld [vmem:[%s3840 + $0xc] sm:$0xe]
        %v4117 = vld [vmem:[%s3840 + $0x10] sm:$0xf]
        %v4118 = vld [vmem:[%s3840 + $0x14] sm:$0x1]
        %v4119 = vld [vmem:[%s3840 + $0x18] sm:$0xe]
        %v4120 = vld [vmem:[%s3840 + $0x1c] sm:$0xf]
        %v4121 = vld [vmem:[%s3840 + $0x20] sm:$0x1]
        %v4122 = vld [vmem:[%s3840 + $0x24] sm:$0xe]
        %v4123 = vld [vmem:[%s3840 + $0x28] sm:$0xf]
        %v4124 = vld [vmem:[%s3840 + $0x2c] sm:$0x1]
        %v4125 = vld [vmem:[%s3840 + $0x30] sm:$0xe]
        %v4126 = vld [vmem:[%s3840 + $0x34] sm:$0xf]
        %v4127 = vld [vmem:[%s3840 + $0x38] sm:$0x1]
        %v4128 = vld [vmem:[%s3840 + $0x3c] sm:$0xe]
        %v4129 = vld [vmem:[%s3840 + $0x40] sm:$0xf]
        %v4130 = vld [vmem:[%s3840 + $0x44] sm:$0x1]
        %v4131 = vld [vmem:[%s3840 + $0x48] sm:$0xe]
        %v4132 = vld [vmem:[%s3840 + $0x4c] sm:$0xf]
        %v4133 = vld [vmem:[%s3840 + $0x50] sm:$0x1]
        %v4134 = vld [vmem:[%s3840 + $0x54] sm:$0xe]
        %v4135 = vld [vmem:[%s3840 + $0x58] sm:$0xf]
        %v4136 = vld [vmem:[%s3840 + $0x5c] sm:$0x1]
        %v4161 = vunpack.c.l.b16 %v4113
        %v4162 = vunpack.c.l.b16 %v4114
        %v4163 = vunpack.c.l.b16 %v4115
        %v4164 = vunpack.c.l.b16 %v4116
        %v4165 = vunpack.c.l.b16 %v4117
        %v4166 = vunpack.c.l.b16 %v4118
        %v4167 = vunpack.c.l.b16 %v4119
        %v4168 = vunpack.c.l.b16 %v4120
        %v4169 = vunpack.c.l.b16 %v4121
        %v4170 = vunpack.c.l.b16 %v4122
        %v4171 = vunpack.c.l.b16 %v4123
        %v4172 = vunpack.c.l.b16 %v4124
        %v4173 = vunpack.c.l.b16 %v4125
        %v4174 = vunpack.c.l.b16 %v4126
        %v4175 = vunpack.c.l.b16 %v4127
        %v4176 = vunpack.c.l.b16 %v4128
        %v4177 = vunpack.c.l.b16 %v4129
        %v4178 = vunpack.c.l.b16 %v4130
        %v4179 = vunpack.c.l.b16 %v4131
        %v4180 = vunpack.c.l.b16 %v4132
        %v4181 = vunpack.c.l.b16 %v4133
        %v4182 = vunpack.c.l.b16 %v4134
        %v4183 = vunpack.c.l.b16 %v4135
        %v4184 = vunpack.c.l.b16 %v4136
        %v4185 = vpack.c.b16 %v4162, %v4161
        %v4186 = vpack.c.b16 %v4163, %v4163
        %v4187 = vpack.c.b16 %v4165, %v4164
        %v4188 = vpack.c.b16 %v4166, %v4166
        %v4189 = vpack.c.b16 %v4168, %v4167
        %v4190 = vpack.c.b16 %v4169, %v4169
        %v4191 = vpack.c.b16 %v4171, %v4170
        %v4192 = vpack.c.b16 %v4172, %v4172
        %v4193 = vpack.c.b16 %v4174, %v4173
        %v4194 = vpack.c.b16 %v4175, %v4175
        %v4195 = vpack.c.b16 %v4177, %v4176
        %v4196 = vpack.c.b16 %v4178, %v4178
        %v4197 = vpack.c.b16 %v4180, %v4179
        %v4198 = vpack.c.b16 %v4181, %v4181
        %v4199 = vpack.c.b16 %v4183, %v4182
        %v4200 = vpack.c.b16 %v4184, %v4184
        %v4201 = vrot.slane %v4185, 1
        %v4202 = vrot.slane %v4186, 1
        %v4203 = vsel %vm709, %v4201, %v4202
        %v4204 = vrot.slane %v4187, 1
        %v4205 = vrot.slane %v4188, 1
        %v4206 = vsel %vm709, %v4204, %v4205
        %v4207 = vrot.slane %v4189, 1
        %v4208 = vrot.slane %v4190, 1
        %v4209 = vsel %vm709, %v4207, %v4208
        %v4210 = vrot.slane %v4191, 1
        %v4211 = vrot.slane %v4192, 1
        %v4212 = vsel %vm709, %v4210, %v4211
        %v4213 = vrot.slane %v4193, 1
        %v4214 = vrot.slane %v4194, 1
        %v4215 = vsel %vm709, %v4213, %v4214
        %v4216 = vrot.slane %v4195, 1
        %v4217 = vrot.slane %v4196, 1
        %v4218 = vsel %vm709, %v4216, %v4217
        %v4219 = vrot.slane %v4197, 1
        %v4220 = vrot.slane %v4198, 1
        %v4221 = vsel %vm709, %v4219, %v4220
        %v4222 = vrot.slane %v4199, 1
        %v4223 = vrot.slane %v4200, 1
        %v4224 = vsel %vm709, %v4222, %v4223
        %4233 = vst [vmem:[#allocation4 + $0x28] sm:$0xff] %v4203
        %4234 = vst [vmem:[#allocation4 + $0x78] sm:$0xff] %v4206
        %4235 = vst [vmem:[#allocation4 + $0xc8] sm:$0xff] %v4209
        %4236 = vst [vmem:[#allocation4 + $0x118] sm:$0xff] %v4212
        %4237 = vst [vmem:[#allocation4 + $0x168] sm:$0xff] %v4215
        %4238 = vst [vmem:[#allocation4 + $0x1b8] sm:$0xff] %v4218
        %4239 = vst [vmem:[#allocation4 + $0x208] sm:$0xff] %v4221
        %4240 = vst [vmem:[#allocation4 + $0x258] sm:$0xff] %v4224
        %s4241 = scalar_lea.vmem [#allocation3], 24
        %v4242 = vld [vmem:[%s4241] sm:$0xf]
        %v4243 = vld [vmem:[%s4241 + $0x4] sm:$0xf]
        %v4244 = vld [vmem:[%s4241 + $0xc] sm:$0xf]
        %v4245 = vld [vmem:[%s4241 + $0x10] sm:$0xf]
        %v4246 = vld [vmem:[%s4241 + $0x18] sm:$0xf]
        %v4247 = vld [vmem:[%s4241 + $0x1c] sm:$0xf]
        %v4248 = vld [vmem:[%s4241 + $0x24] sm:$0xf]
        %v4249 = vld [vmem:[%s4241 + $0x28] sm:$0xf]
        %v4250 = vld [vmem:[%s4241 + $0x30] sm:$0xf]
        %v4251 = vld [vmem:[%s4241 + $0x34] sm:$0xf]
        %v4252 = vld [vmem:[%s4241 + $0x3c] sm:$0xf]
        %v4253 = vld [vmem:[%s4241 + $0x40] sm:$0xf]
        %v4254 = vld [vmem:[%s4241 + $0x48] sm:$0xf]
        %v4255 = vld [vmem:[%s4241 + $0x4c] sm:$0xf]
        %v4256 = vld [vmem:[%s4241 + $0x54] sm:$0xf]
        %v4257 = vld [vmem:[%s4241 + $0x58] sm:$0xf]
        %v4274 = vunpack.c.l.b16 %v4242
        %v4275 = vunpack.c.l.b16 %v4243
        %v4276 = vunpack.c.l.b16 %v4244
        %v4277 = vunpack.c.l.b16 %v4245
        %v4278 = vunpack.c.l.b16 %v4246
        %v4279 = vunpack.c.l.b16 %v4247
        %v4280 = vunpack.c.l.b16 %v4248
        %v4281 = vunpack.c.l.b16 %v4249
        %v4282 = vunpack.c.l.b16 %v4250
        %v4283 = vunpack.c.l.b16 %v4251
        %v4284 = vunpack.c.l.b16 %v4252
        %v4285 = vunpack.c.l.b16 %v4253
        %v4286 = vunpack.c.l.b16 %v4254
        %v4287 = vunpack.c.l.b16 %v4255
        %v4288 = vunpack.c.l.b16 %v4256
        %v4289 = vunpack.c.l.b16 %v4257
        %v4290 = vpack.c.b16 %v4275, %v4274
        %v4291 = vpack.c.b16 %v4277, %v4276
        %v4292 = vpack.c.b16 %v4279, %v4278
        %v4293 = vpack.c.b16 %v4281, %v4280
        %v4294 = vpack.c.b16 %v4283, %v4282
        %v4295 = vpack.c.b16 %v4285, %v4284
        %v4296 = vpack.c.b16 %v4287, %v4286
        %v4297 = vpack.c.b16 %v4289, %v4288
        %4306 = vst [vmem:[#allocation4 + $0x30] sm:$0xff] %v4290
        %4307 = vst [vmem:[#allocation4 + $0x80] sm:$0xff] %v4291
        %4308 = vst [vmem:[#allocation4 + $0xd0] sm:$0xff] %v4292
        %4309 = vst [vmem:[#allocation4 + $0x120] sm:$0xff] %v4293
        %4310 = vst [vmem:[#allocation4 + $0x170] sm:$0xff] %v4294
        %4311 = vst [vmem:[#allocation4 + $0x1c0] sm:$0xff] %v4295
        %4312 = vst [vmem:[#allocation4 + $0x210] sm:$0xff] %v4296
        %4313 = vst [vmem:[#allocation4 + $0x260] sm:$0xff] %v4297
        %v4314 = vld [vmem:[%s4241] sm:$0xf]
        %v4315 = vld [vmem:[%s4241 + $0x4] sm:$0xf]
        %v4316 = vld [vmem:[%s4241 + $0x8] sm:$0x1]
        %v4317 = vld [vmem:[%s4241 + $0xc] sm:$0xf]
        %v4318 = vld [vmem:[%s4241 + $0x10] sm:$0xf]
        %v4319 = vld [vmem:[%s4241 + $0x14] sm:$0x1]
        %v4320 = vld [vmem:[%s4241 + $0x18] sm:$0xf]
        %v4321 = vld [vmem:[%s4241 + $0x1c] sm:$0xf]
        %v4322 = vld [vmem:[%s4241 + $0x20] sm:$0x1]
        %v4323 = vld [vmem:[%s4241 + $0x24] sm:$0xf]
        %v4324 = vld [vmem:[%s4241 + $0x28] sm:$0xf]
        %v4325 = vld [vmem:[%s4241 + $0x2c] sm:$0x1]
        %v4326 = vld [vmem:[%s4241 + $0x30] sm:$0xf]
        %v4327 = vld [vmem:[%s4241 + $0x34] sm:$0xf]
        %v4328 = vld [vmem:[%s4241 + $0x38] sm:$0x1]
        %v4329 = vld [vmem:[%s4241 + $0x3c] sm:$0xf]
        %v4330 = vld [vmem:[%s4241 + $0x40] sm:$0xf]
        %v4331 = vld [vmem:[%s4241 + $0x44] sm:$0x1]
        %v4332 = vld [vmem:[%s4241 + $0x48] sm:$0xf]
        %v4333 = vld [vmem:[%s4241 + $0x4c] sm:$0xf]
        %v4334 = vld [vmem:[%s4241 + $0x50] sm:$0x1]
        %v4335 = vld [vmem:[%s4241 + $0x54] sm:$0xf]
        %v4336 = vld [vmem:[%s4241 + $0x58] sm:$0xf]
        %v4337 = vld [vmem:[%s4241 + $0x5c] sm:$0x1]
        %v4362 = vunpack.c.l.b16 %v4314
        %v4363 = vunpack.c.l.b16 %v4315
        %v4364 = vunpack.c.l.b16 %v4316
        %v4365 = vunpack.c.l.b16 %v4317
        %v4366 = vunpack.c.l.b16 %v4318
        %v4367 = vunpack.c.l.b16 %v4319
        %v4368 = vunpack.c.l.b16 %v4320
        %v4369 = vunpack.c.l.b16 %v4321
        %v4370 = vunpack.c.l.b16 %v4322
        %v4371 = vunpack.c.l.b16 %v4323
        %v4372 = vunpack.c.l.b16 %v4324
        %v4373 = vunpack.c.l.b16 %v4325
        %v4374 = vunpack.c.l.b16 %v4326
        %v4375 = vunpack.c.l.b16 %v4327
        %v4376 = vunpack.c.l.b16 %v4328
        %v4377 = vunpack.c.l.b16 %v4329
        %v4378 = vunpack.c.l.b16 %v4330
        %v4379 = vunpack.c.l.b16 %v4331
        %v4380 = vunpack.c.l.b16 %v4332
        %v4381 = vunpack.c.l.b16 %v4333
        %v4382 = vunpack.c.l.b16 %v4334
        %v4383 = vunpack.c.l.b16 %v4335
        %v4384 = vunpack.c.l.b16 %v4336
        %v4385 = vunpack.c.l.b16 %v4337
        %v4386 = vpack.c.b16 %v4363, %v4362
        %v4387 = vpack.c.b16 %v4364, %v4364
        %v4388 = vpack.c.b16 %v4366, %v4365
        %v4389 = vpack.c.b16 %v4367, %v4367
        %v4390 = vpack.c.b16 %v4369, %v4368
        %v4391 = vpack.c.b16 %v4370, %v4370
        %v4392 = vpack.c.b16 %v4372, %v4371
        %v4393 = vpack.c.b16 %v4373, %v4373
        %v4394 = vpack.c.b16 %v4375, %v4374
        %v4395 = vpack.c.b16 %v4376, %v4376
        %v4396 = vpack.c.b16 %v4378, %v4377
        %v4397 = vpack.c.b16 %v4379, %v4379
        %v4398 = vpack.c.b16 %v4381, %v4380
        %v4399 = vpack.c.b16 %v4382, %v4382
        %v4400 = vpack.c.b16 %v4384, %v4383
        %v4401 = vpack.c.b16 %v4385, %v4385
        %v4403 = vshrl.u32 %v4386, 16
        %v4405 = vshll.u32 %v4386, 16
        %v4407 = vrot.slane %v4405, 1
        %v4408 = vor.u32 %v4403, %v4407
        %v4410 = vshll.u32 %v4387, 16
        %v4412 = vrot.slane %v4410, 1
        %v4413 = vsel %vm458, %v4408, %v4412
        %v4415 = vshrl.u32 %v4388, 16
        %v4417 = vshll.u32 %v4388, 16
        %v4419 = vrot.slane %v4417, 1
        %v4420 = vor.u32 %v4415, %v4419
        %v4422 = vshll.u32 %v4389, 16
        %v4424 = vrot.slane %v4422, 1
        %v4425 = vsel %vm458, %v4420, %v4424
        %v4427 = vshrl.u32 %v4390, 16
        %v4429 = vshll.u32 %v4390, 16
        %v4431 = vrot.slane %v4429, 1
        %v4432 = vor.u32 %v4427, %v4431
        %v4434 = vshll.u32 %v4391, 16
        %v4436 = vrot.slane %v4434, 1
        %v4437 = vsel %vm458, %v4432, %v4436
        %v4439 = vshrl.u32 %v4392, 16
        %v4441 = vshll.u32 %v4392, 16
        %v4443 = vrot.slane %v4441, 1
        %v4444 = vor.u32 %v4439, %v4443
        %v4446 = vshll.u32 %v4393, 16
        %v4448 = vrot.slane %v4446, 1
        %v4449 = vsel %vm458, %v4444, %v4448
        %v4451 = vshrl.u32 %v4394, 16
        %v4453 = vshll.u32 %v4394, 16
        %v4455 = vrot.slane %v4453, 1
        %v4456 = vor.u32 %v4451, %v4455
        %v4458 = vshll.u32 %v4395, 16
        %v4460 = vrot.slane %v4458, 1
        %v4461 = vsel %vm458, %v4456, %v4460
        %v4463 = vshrl.u32 %v4396, 16
        %v4465 = vshll.u32 %v4396, 16
        %v4467 = vrot.slane %v4465, 1
        %v4468 = vor.u32 %v4463, %v4467
        %v4470 = vshll.u32 %v4397, 16
        %v4472 = vrot.slane %v4470, 1
        %v4473 = vsel %vm458, %v4468, %v4472
        %v4475 = vshrl.u32 %v4398, 16
        %v4477 = vshll.u32 %v4398, 16
        %v4479 = vrot.slane %v4477, 1
        %v4480 = vor.u32 %v4475, %v4479
        %v4482 = vshll.u32 %v4399, 16
        %v4484 = vrot.slane %v4482, 1
        %v4485 = vsel %vm458, %v4480, %v4484
        %v4487 = vshrl.u32 %v4400, 16
        %v4489 = vshll.u32 %v4400, 16
        %v4491 = vrot.slane %v4489, 1
        %v4492 = vor.u32 %v4487, %v4491
        %v4494 = vshll.u32 %v4401, 16
        %v4496 = vrot.slane %v4494, 1
        %v4497 = vsel %vm458, %v4492, %v4496
        %4506 = vst [vmem:[#allocation4 + $0x38] sm:$0xff] %v4413
        %4507 = vst [vmem:[#allocation4 + $0x88] sm:$0xff] %v4425
        %4508 = vst [vmem:[#allocation4 + $0xd8] sm:$0xff] %v4437
        %4509 = vst [vmem:[#allocation4 + $0x128] sm:$0xff] %v4449
        %4510 = vst [vmem:[#allocation4 + $0x178] sm:$0xff] %v4461
        %4511 = vst [vmem:[#allocation4 + $0x1c8] sm:$0xff] %v4473
        %4512 = vst [vmem:[#allocation4 + $0x218] sm:$0xff] %v4485
        %4513 = vst [vmem:[#allocation4 + $0x268] sm:$0xff] %v4497
        %v4514 = vld [vmem:[%s4241] sm:$0xe]
        %v4515 = vld [vmem:[%s4241 + $0x4] sm:$0xf]
        %v4516 = vld [vmem:[%s4241 + $0x8] sm:$0x1]
        %v4517 = vld [vmem:[%s4241 + $0xc] sm:$0xe]
        %v4518 = vld [vmem:[%s4241 + $0x10] sm:$0xf]
        %v4519 = vld [vmem:[%s4241 + $0x14] sm:$0x1]
        %v4520 = vld [vmem:[%s4241 + $0x18] sm:$0xe]
        %v4521 = vld [vmem:[%s4241 + $0x1c] sm:$0xf]
        %v4522 = vld [vmem:[%s4241 + $0x20] sm:$0x1]
        %v4523 = vld [vmem:[%s4241 + $0x24] sm:$0xe]
        %v4524 = vld [vmem:[%s4241 + $0x28] sm:$0xf]
        %v4525 = vld [vmem:[%s4241 + $0x2c] sm:$0x1]
        %v4526 = vld [vmem:[%s4241 + $0x30] sm:$0xe]
        %v4527 = vld [vmem:[%s4241 + $0x34] sm:$0xf]
        %v4528 = vld [vmem:[%s4241 + $0x38] sm:$0x1]
        %v4529 = vld [vmem:[%s4241 + $0x3c] sm:$0xe]
        %v4530 = vld [vmem:[%s4241 + $0x40] sm:$0xf]
        %v4531 = vld [vmem:[%s4241 + $0x44] sm:$0x1]
        %v4532 = vld [vmem:[%s4241 + $0x48] sm:$0xe]
        %v4533 = vld [vmem:[%s4241 + $0x4c] sm:$0xf]
        %v4534 = vld [vmem:[%s4241 + $0x50] sm:$0x1]
        %v4535 = vld [vmem:[%s4241 + $0x54] sm:$0xe]
        %v4536 = vld [vmem:[%s4241 + $0x58] sm:$0xf]
        %v4537 = vld [vmem:[%s4241 + $0x5c] sm:$0x1]
        %v4562 = vunpack.c.l.b16 %v4514
        %v4563 = vunpack.c.l.b16 %v4515
        %v4564 = vunpack.c.l.b16 %v4516
        %v4565 = vunpack.c.l.b16 %v4517
        %v4566 = vunpack.c.l.b16 %v4518
        %v4567 = vunpack.c.l.b16 %v4519
        %v4568 = vunpack.c.l.b16 %v4520
        %v4569 = vunpack.c.l.b16 %v4521
        %v4570 = vunpack.c.l.b16 %v4522
        %v4571 = vunpack.c.l.b16 %v4523
        %v4572 = vunpack.c.l.b16 %v4524
        %v4573 = vunpack.c.l.b16 %v4525
        %v4574 = vunpack.c.l.b16 %v4526
        %v4575 = vunpack.c.l.b16 %v4527
        %v4576 = vunpack.c.l.b16 %v4528
        %v4577 = vunpack.c.l.b16 %v4529
        %v4578 = vunpack.c.l.b16 %v4530
        %v4579 = vunpack.c.l.b16 %v4531
        %v4580 = vunpack.c.l.b16 %v4532
        %v4581 = vunpack.c.l.b16 %v4533
        %v4582 = vunpack.c.l.b16 %v4534
        %v4583 = vunpack.c.l.b16 %v4535
        %v4584 = vunpack.c.l.b16 %v4536
        %v4585 = vunpack.c.l.b16 %v4537
        %v4586 = vpack.c.b16 %v4563, %v4562
        %v4587 = vpack.c.b16 %v4564, %v4564
        %v4588 = vpack.c.b16 %v4566, %v4565
        %v4589 = vpack.c.b16 %v4567, %v4567
        %v4590 = vpack.c.b16 %v4569, %v4568
        %v4591 = vpack.c.b16 %v4570, %v4570
        %v4592 = vpack.c.b16 %v4572, %v4571
        %v4593 = vpack.c.b16 %v4573, %v4573
        %v4594 = vpack.c.b16 %v4575, %v4574
        %v4595 = vpack.c.b16 %v4576, %v4576
        %v4596 = vpack.c.b16 %v4578, %v4577
        %v4597 = vpack.c.b16 %v4579, %v4579
        %v4598 = vpack.c.b16 %v4581, %v4580
        %v4599 = vpack.c.b16 %v4582, %v4582
        %v4600 = vpack.c.b16 %v4584, %v4583
        %v4601 = vpack.c.b16 %v4585, %v4585
        %v4602 = vrot.slane %v4586, 1
        %v4603 = vrot.slane %v4587, 1
        %v4604 = vsel %vm709, %v4602, %v4603
        %v4605 = vrot.slane %v4588, 1
        %v4606 = vrot.slane %v4589, 1
        %v4607 = vsel %vm709, %v4605, %v4606
        %v4608 = vrot.slane %v4590, 1
        %v4609 = vrot.slane %v4591, 1
        %v4610 = vsel %vm709, %v4608, %v4609
        %v4611 = vrot.slane %v4592, 1
        %v4612 = vrot.slane %v4593, 1
        %v4613 = vsel %vm709, %v4611, %v4612
        %v4614 = vrot.slane %v4594, 1
        %v4615 = vrot.slane %v4595, 1
        %v4616 = vsel %vm709, %v4614, %v4615
        %v4617 = vrot.slane %v4596, 1
        %v4618 = vrot.slane %v4597, 1
        %v4619 = vsel %vm709, %v4617, %v4618
        %v4620 = vrot.slane %v4598, 1
        %v4621 = vrot.slane %v4599, 1
        %v4622 = vsel %vm709, %v4620, %v4621
        %v4623 = vrot.slane %v4600, 1
        %v4624 = vrot.slane %v4601, 1
        %v4625 = vsel %vm709, %v4623, %v4624
        %4634 = vst [vmem:[#allocation4 + $0x40] sm:$0xff] %v4604
        %4635 = vst [vmem:[#allocation4 + $0x90] sm:$0xff] %v4607
        %4636 = vst [vmem:[#allocation4 + $0xe0] sm:$0xff] %v4610
        %4637 = vst [vmem:[#allocation4 + $0x130] sm:$0xff] %v4613
        %4638 = vst [vmem:[#allocation4 + $0x180] sm:$0xff] %v4616
        %4639 = vst [vmem:[#allocation4 + $0x1d0] sm:$0xff] %v4619
        %4640 = vst [vmem:[#allocation4 + $0x220] sm:$0xff] %v4622
        %4641 = vst [vmem:[#allocation4 + $0x270] sm:$0xff] %v4625
        %s4642 = scalar_lea.vmem [#allocation2], 72
        %v4643 = vld [vmem:[%s4642 + $0x20] sm:$0xff]
        %v4644 = vld [vmem:[%s4642 + $0x68] sm:$0xff]
        %v4645 = vld [vmem:[%s4642 + $0xb0] sm:$0xff]
        %v4646 = vld [vmem:[%s4642 + $0xf8] sm:$0xff]
        %v4647 = vld [vmem:[%s4642 + $0x140] sm:$0xff]
        %v4648 = vld [vmem:[%s4642 + $0x188] sm:$0xff]
        %v4649 = vld [vmem:[%s4642 + $0x1d0] sm:$0xff]
        %v4650 = vld [vmem:[%s4642 + $0x218] sm:$0xff]
        %4651 = vst [vmem:[#allocation4 + $0x48] sm:$0xff] %v4643
        %4652 = vst [vmem:[#allocation4 + $0x98] sm:$0xff] %v4644
        %4653 = vst [vmem:[#allocation4 + $0xe8] sm:$0xff] %v4645
        %4654 = vst [vmem:[#allocation4 + $0x138] sm:$0xff] %v4646
        %4655 = vst [vmem:[#allocation4 + $0x188] sm:$0xff] %v4647
        %4656 = vst [vmem:[#allocation4 + $0x1d8] sm:$0xff] %v4648
        %4657 = vst [vmem:[#allocation4 + $0x228] sm:$0xff] %v4649
        %4658 = vst [vmem:[#allocation4 + $0x278] sm:$0xff] %v4650
        %v4659 = vld [vmem:[#allocation4] sm:$0xff]
        %v4660 = vld [vmem:[#allocation4 + $0x8] sm:$0xff]
        %v4661 = vld [vmem:[#allocation4 + $0x10] sm:$0xff]
        %v4662 = vld [vmem:[#allocation4 + $0x18] sm:$0xff]
        %v4663 = vld [vmem:[#allocation4 + $0x20] sm:$0xff]
        %v4664 = vld [vmem:[#allocation4 + $0x28] sm:$0xff]
        %v4665 = vld [vmem:[#allocation4 + $0x30] sm:$0xff]
        %v4666 = vld [vmem:[#allocation4 + $0x38] sm:$0xff]
        %v4667 = vld [vmem:[#allocation4 + $0x40] sm:$0xff]
        %v4668 = vld [vmem:[#allocation4 + $0x48] sm:$0xff]
        %v4669 = vld [vmem:[#allocation4 + $0x50] sm:$0xff]
        %v4670 = vld [vmem:[#allocation4 + $0x58] sm:$0xff]
        %v4671 = vld [vmem:[#allocation4 + $0x60] sm:$0xff]
        %v4672 = vld [vmem:[#allocation4 + $0x68] sm:$0xff]
        %v4673 = vld [vmem:[#allocation4 + $0x70] sm:$0xff]
        %v4674 = vld [vmem:[#allocation4 + $0x78] sm:$0xff]
        %v4675 = vld [vmem:[#allocation4 + $0x80] sm:$0xff]
        %v4676 = vld [vmem:[#allocation4 + $0x88] sm:$0xff]
        %v4677 = vld [vmem:[#allocation4 + $0x90] sm:$0xff]
        %v4678 = vld [vmem:[#allocation4 + $0x98] sm:$0xff]
        %v4679 = vld [vmem:[#allocation4 + $0xa0] sm:$0xff]
        %v4680 = vld [vmem:[#allocation4 + $0xa8] sm:$0xff]
        %v4681 = vld [vmem:[#allocation4 + $0xb0] sm:$0xff]
        %v4682 = vld [vmem:[#allocation4 + $0xb8] sm:$0xff]
        %v4683 = vld [vmem:[#allocation4 + $0xc0] sm:$0xff]
        %v4684 = vld [vmem:[#allocation4 + $0xc8] sm:$0xff]
        %v4685 = vld [vmem:[#allocation4 + $0xd0] sm:$0xff]
        %v4686 = vld [vmem:[#allocation4 + $0xd8] sm:$0xff]
        %v4687 = vld [vmem:[#allocation4 + $0xe0] sm:$0xff]
        %v4688 = vld [vmem:[#allocation4 + $0xe8] sm:$0xff]
        %v4689 = vld [vmem:[#allocation4 + $0xf0] sm:$0xff]
        %v4690 = vld [vmem:[#allocation4 + $0xf8] sm:$0xff]
        %v4691 = vld [vmem:[#allocation4 + $0x100] sm:$0xff]
        %v4692 = vld [vmem:[#allocation4 + $0x108] sm:$0xff]
        %v4693 = vld [vmem:[#allocation4 + $0x110] sm:$0xff]
        %v4694 = vld [vmem:[#allocation4 + $0x118] sm:$0xff]
        %v4695 = vld [vmem:[#allocation4 + $0x120] sm:$0xff]
        %v4696 = vld [vmem:[#allocation4 + $0x128] sm:$0xff]
        %v4697 = vld [vmem:[#allocation4 + $0x130] sm:$0xff]
        %v4698 = vld [vmem:[#allocation4 + $0x138] sm:$0xff]
        %v4699 = vld [vmem:[#allocation4 + $0x140] sm:$0xff]
        %v4700 = vld [vmem:[#allocation4 + $0x148] sm:$0xff]
        %v4701 = vld [vmem:[#allocation4 + $0x150] sm:$0xff]
        %v4702 = vld [vmem:[#allocation4 + $0x158] sm:$0xff]
        %v4703 = vld [vmem:[#allocation4 + $0x160] sm:$0xff]
        %v4704 = vld [vmem:[#allocation4 + $0x168] sm:$0xff]
        %v4705 = vld [vmem:[#allocation4 + $0x170] sm:$0xff]
        %v4706 = vld [vmem:[#allocation4 + $0x178] sm:$0xff]
        %v4707 = vld [vmem:[#allocation4 + $0x180] sm:$0xff]
        %v4708 = vld [vmem:[#allocation4 + $0x188] sm:$0xff]
        %v4709 = vld [vmem:[#allocation4 + $0x190] sm:$0xff]
        %v4710 = vld [vmem:[#allocation4 + $0x198] sm:$0xff]
        %v4711 = vld [vmem:[#allocation4 + $0x1a0] sm:$0xff]
        %v4712 = vld [vmem:[#allocation4 + $0x1a8] sm:$0xff]
        %v4713 = vld [vmem:[#allocation4 + $0x1b0] sm:$0xff]
        %v4714 = vld [vmem:[#allocation4 + $0x1b8] sm:$0xff]
        %v4715 = vld [vmem:[#allocation4 + $0x1c0] sm:$0xff]
        %v4716 = vld [vmem:[#allocation4 + $0x1c8] sm:$0xff]
        %v4717 = vld [vmem:[#allocation4 + $0x1d0] sm:$0xff]
        %v4718 = vld [vmem:[#allocation4 + $0x1d8] sm:$0xff]
        %v4719 = vld [vmem:[#allocation4 + $0x1e0] sm:$0xff]
        %v4720 = vld [vmem:[#allocation4 + $0x1e8] sm:$0xff]
        %v4721 = vld [vmem:[#allocation4 + $0x1f0] sm:$0xff]
        %v4722 = vld [vmem:[#allocation4 + $0x1f8] sm:$0xff]
        %v4723 = vld [vmem:[#allocation4 + $0x200] sm:$0xff]
        %v4724 = vld [vmem:[#allocation4 + $0x208] sm:$0xff]
        %v4725 = vld [vmem:[#allocation4 + $0x210] sm:$0xff]
        %v4726 = vld [vmem:[#allocation4 + $0x218] sm:$0xff]
        %v4727 = vld [vmem:[#allocation4 + $0x220] sm:$0xff]
        %v4728 = vld [vmem:[#allocation4 + $0x228] sm:$0xff]
        %v4729 = vld [vmem:[#allocation4 + $0x230] sm:$0xff]
        %v4730 = vld [vmem:[#allocation4 + $0x238] sm:$0xff]
        %v4731 = vld [vmem:[#allocation4 + $0x240] sm:$0xff]
        %v4732 = vld [vmem:[#allocation4 + $0x248] sm:$0xff]
        %v4733 = vld [vmem:[#allocation4 + $0x250] sm:$0xff]
        %v4734 = vld [vmem:[#allocation4 + $0x258] sm:$0xff]
        %v4735 = vld [vmem:[#allocation4 + $0x260] sm:$0xff]
        %v4736 = vld [vmem:[#allocation4 + $0x268] sm:$0xff]
        %v4737 = vld [vmem:[#allocation4 + $0x270] sm:$0xff]
        %v4738 = vld [vmem:[#allocation4 + $0x278] sm:$0xff]
        %v4739 = vld [vmem:[%s2] sm:$0xf]
        %v4740 = vld [vmem:[%s2 + $0x4] sm:$0xf]
        %v4741 = vld [vmem:[%s2 + $0x8] sm:$0xf]
        %v4742 = vld [vmem:[%s2 + $0xc] sm:$0xf]
        %v4743 = vld [vmem:[%s2 + $0x10] sm:$0xf]
        %v4744 = vld [vmem:[%s2 + $0x14] sm:$0xf]
        %v4745 = vld [vmem:[%s2 + $0x18] sm:$0xf]
        %v4746 = vld [vmem:[%s2 + $0x1c] sm:$0xf]
        %v4747 = vld [vmem:[%s2 + $0x20] sm:$0xf]
        %v4748 = vld [vmem:[%s2 + $0x24] sm:$0xf]
        %v4749 = vld [vmem:[%s2 + $0x28] sm:$0xf]
        %v4750 = vld [vmem:[%s2 + $0x2c] sm:$0xf]
        %v4751 = vld [vmem:[%s2 + $0x30] sm:$0xf]
        %v4752 = vld [vmem:[%s2 + $0x34] sm:$0xf]
        %v4753 = vld [vmem:[%s2 + $0x38] sm:$0xf]
        %v4754 = vld [vmem:[%s2 + $0x3c] sm:$0xf]
        %v4755 = vld [vmem:[%s2 + $0x40] sm:$0xf]
        %v4756 = vld [vmem:[%s2 + $0x44] sm:$0xf]
        %v4757 = vld [vmem:[%s2 + $0x48] sm:$0xf]
        %v4758 = vld [vmem:[%s2 + $0x4c] sm:$0xf]
        %v4759 = vld [vmem:[%s2 + $0x50] sm:$0xf]
        %v4760 = vld [vmem:[%s2 + $0x54] sm:$0xf]
        %v4761 = vld [vmem:[%s2 + $0x58] sm:$0xf]
        %v4762 = vld [vmem:[%s2 + $0x5c] sm:$0xf]
        %v4763 = vld [vmem:[%s2 + $0x60] sm:$0xf]
        %v4764 = vld [vmem:[%s2 + $0x64] sm:$0xf]
        %v4765 = vld [vmem:[%s2 + $0x68] sm:$0xf]
        %v4766 = vld [vmem:[%s2 + $0x6c] sm:$0xf]
        %v4767 = vld [vmem:[%s2 + $0x70] sm:$0xf]
        %v4768 = vld [vmem:[%s2 + $0x74] sm:$0xf]
        %v4769 = vld [vmem:[%s2 + $0x78] sm:$0xf]
        %v4770 = vld [vmem:[%s2 + $0x7c] sm:$0xf]
        %v4771 = vld [vmem:[%s2 + $0x80] sm:$0xf]
        %v4772 = vld [vmem:[%s2 + $0x84] sm:$0xf]
        %v4773 = vld [vmem:[%s2 + $0x88] sm:$0xf]
        %v4774 = vld [vmem:[%s2 + $0x8c] sm:$0xf]
        %v4775 = vld [vmem:[%s2 + $0x90] sm:$0xf]
        %v4776 = vld [vmem:[%s2 + $0x94] sm:$0xf]
        %v4777 = vld [vmem:[%s2 + $0x98] sm:$0xf]
        %v4778 = vld [vmem:[%s2 + $0x9c] sm:$0xf]
        %v4779 = vld [vmem:[%s2 + $0xa0] sm:$0xf]
        %v4780 = vld [vmem:[%s2 + $0xa4] sm:$0xf]
        %v4781 = vld [vmem:[%s2 + $0xa8] sm:$0xf]
        %v4782 = vld [vmem:[%s2 + $0xac] sm:$0xf]
        %v4783 = vld [vmem:[%s2 + $0xb0] sm:$0xf]
        %v4784 = vld [vmem:[%s2 + $0xb4] sm:$0xf]
        %v4785 = vld [vmem:[%s2 + $0xb8] sm:$0xf]
        %v4786 = vld [vmem:[%s2 + $0xbc] sm:$0xf]
        %v4787 = vld [vmem:[%s2 + $0xc0] sm:$0xf]
        %v4788 = vld [vmem:[%s2 + $0xc4] sm:$0xf]
        %v4789 = vld [vmem:[%s2 + $0xc8] sm:$0xf]
        %v4790 = vld [vmem:[%s2 + $0xcc] sm:$0xf]
        %v4791 = vld [vmem:[%s2 + $0xd0] sm:$0xf]
        %v4792 = vld [vmem:[%s2 + $0xd4] sm:$0xf]
        %v4793 = vld [vmem:[%s2 + $0xd8] sm:$0xf]
        %v4794 = vld [vmem:[%s2 + $0xdc] sm:$0xf]
        %v4795 = vld [vmem:[%s2 + $0xe0] sm:$0xf]
        %v4796 = vld [vmem:[%s2 + $0xe4] sm:$0xf]
        %v4797 = vld [vmem:[%s2 + $0xe8] sm:$0xf]
        %v4798 = vld [vmem:[%s2 + $0xec] sm:$0xf]
        %v4799 = vld [vmem:[%s2 + $0xf0] sm:$0xf]
        %v4800 = vld [vmem:[%s2 + $0xf4] sm:$0xf]
        %v4801 = vld [vmem:[%s2 + $0xf8] sm:$0xf]
        %v4802 = vld [vmem:[%s2 + $0xfc] sm:$0xf]
        %v4803 = vld [vmem:[%s2 + $0x100] sm:$0xf]
        %v4804 = vld [vmem:[%s2 + $0x104] sm:$0xf]
        %v4805 = vld [vmem:[%s2 + $0x108] sm:$0xf]
        %v4806 = vld [vmem:[%s2 + $0x10c] sm:$0xf]
        %v4807 = vld [vmem:[%s2 + $0x110] sm:$0xf]
        %v4808 = vld [vmem:[%s2 + $0x114] sm:$0xf]
        %v4809 = vld [vmem:[%s2 + $0x118] sm:$0xf]
        %v4810 = vld [vmem:[%s2 + $0x11c] sm:$0xf]
        %v4811 = vld [vmem:[%s2 + $0x120] sm:$0xf]
        %v4812 = vld [vmem:[%s2 + $0x124] sm:$0xf]
        %v4813 = vld [vmem:[%s2 + $0x128] sm:$0xf]
        %v4814 = vld [vmem:[%s2 + $0x12c] sm:$0xf]
        %v4815 = vld [vmem:[%s2 + $0x130] sm:$0xf]
        %v4816 = vld [vmem:[%s2 + $0x134] sm:$0xf]
        %v4817 = vld [vmem:[%s2 + $0x138] sm:$0xf]
        %v4818 = vld [vmem:[%s2 + $0x13c] sm:$0xf]
        %v4819 = vld [vmem:[%s2 + $0x140] sm:$0xf]
        %v4820 = vld [vmem:[%s2 + $0x144] sm:$0xf]
        %v4821 = vld [vmem:[%s2 + $0x148] sm:$0xf]
        %v4822 = vld [vmem:[%s2 + $0x14c] sm:$0xf]
        %v4823 = vld [vmem:[%s2 + $0x150] sm:$0xf]
        %v4824 = vld [vmem:[%s2 + $0x154] sm:$0xf]
        %v4825 = vld [vmem:[%s2 + $0x158] sm:$0xf]
        %v4826 = vld [vmem:[%s2 + $0x15c] sm:$0xf]
        %v4827 = vld [vmem:[%s2 + $0x160] sm:$0xf]
        %v4828 = vld [vmem:[%s2 + $0x164] sm:$0xf]
        %v4829 = vld [vmem:[%s2 + $0x168] sm:$0xf]
        %v4830 = vld [vmem:[%s2 + $0x16c] sm:$0xf]
        %v4831 = vld [vmem:[%s2 + $0x170] sm:$0xf]
        %v4832 = vld [vmem:[%s2 + $0x174] sm:$0xf]
        %v4833 = vld [vmem:[%s2 + $0x178] sm:$0xf]
        %v4834 = vld [vmem:[%s2 + $0x17c] sm:$0xf]
        %v4835 = vld [vmem:[%s2 + $0x180] sm:$0xf]
        %v4836 = vld [vmem:[%s2 + $0x184] sm:$0xf]
        %v4837 = vld [vmem:[%s2 + $0x188] sm:$0xf]
        %v4838 = vld [vmem:[%s2 + $0x18c] sm:$0xf]
        %v4839 = vld [vmem:[%s2 + $0x190] sm:$0xf]
        %v4840 = vld [vmem:[%s2 + $0x194] sm:$0xf]
        %v4841 = vld [vmem:[%s2 + $0x198] sm:$0xf]
        %v4842 = vld [vmem:[%s2 + $0x19c] sm:$0xf]
        %v4843 = vld [vmem:[%s2 + $0x1a0] sm:$0xf]
        %v4844 = vld [vmem:[%s2 + $0x1a4] sm:$0xf]
        %v4845 = vld [vmem:[%s2 + $0x1a8] sm:$0xf]
        %v4846 = vld [vmem:[%s2 + $0x1ac] sm:$0xf]
        %v4847 = vld [vmem:[%s2 + $0x1b0] sm:$0xf]
        %v4848 = vld [vmem:[%s2 + $0x1b4] sm:$0xf]
        %v4849 = vld [vmem:[%s2 + $0x1b8] sm:$0xf]
        %v4850 = vld [vmem:[%s2 + $0x1bc] sm:$0xf]
        %v4851 = vld [vmem:[%s2 + $0x1c0] sm:$0xf]
        %v4852 = vld [vmem:[%s2 + $0x1c4] sm:$0xf]
        %v4853 = vld [vmem:[%s2 + $0x1c8] sm:$0xf]
        %v4854 = vld [vmem:[%s2 + $0x1cc] sm:$0xf]
        %v4855 = vld [vmem:[%s2 + $0x1d0] sm:$0xf]
        %v4856 = vld [vmem:[%s2 + $0x1d4] sm:$0xf]
        %v4857 = vld [vmem:[%s2 + $0x1d8] sm:$0xf]
        %v4858 = vld [vmem:[%s2 + $0x1dc] sm:$0xf]
        %v4859 = vld [vmem:[%s2 + $0x1e0] sm:$0xf]
        %v4860 = vld [vmem:[%s2 + $0x1e4] sm:$0xf]
        %v4861 = vld [vmem:[%s2 + $0x1e8] sm:$0xf]
        %v4862 = vld [vmem:[%s2 + $0x1ec] sm:$0xf]
        %v4863 = vld [vmem:[%s2 + $0x1f0] sm:$0xf]
        %v4864 = vld [vmem:[%s2 + $0x1f4] sm:$0xf]
        %v4865 = vld [vmem:[%s2 + $0x1f8] sm:$0xf]
        %v4866 = vld [vmem:[%s2 + $0x1fc] sm:$0xf]
        %v4867 = vld [vmem:[%s2 + $0x200] sm:$0xf]
        %v4868 = vld [vmem:[%s2 + $0x204] sm:$0xf]
        %v4869 = vld [vmem:[%s2 + $0x208] sm:$0xf]
        %v4870 = vld [vmem:[%s2 + $0x20c] sm:$0xf]
        %v4871 = vld [vmem:[%s2 + $0x210] sm:$0xf]
        %v4872 = vld [vmem:[%s2 + $0x214] sm:$0xf]
        %v4873 = vld [vmem:[%s2 + $0x218] sm:$0xf]
        %v4874 = vld [vmem:[%s2 + $0x21c] sm:$0xf]
        %v4875 = vld [vmem:[%s2 + $0x220] sm:$0xf]
        %v4876 = vld [vmem:[%s2 + $0x224] sm:$0xf]
        %v4877 = vld [vmem:[%s2 + $0x228] sm:$0xf]
        %v4878 = vld [vmem:[%s2 + $0x22c] sm:$0xf]
        %v4879 = vld [vmem:[%s2 + $0x230] sm:$0xf]
        %v4880 = vld [vmem:[%s2 + $0x234] sm:$0xf]
        %v4881 = vld [vmem:[%s2 + $0x238] sm:$0xf]
        %v4882 = vld [vmem:[%s2 + $0x23c] sm:$0xf]
        %v4883 = vld [vmem:[%s2 + $0x240] sm:$0xf]
        %v4884 = vld [vmem:[%s2 + $0x244] sm:$0xf]
        %v4885 = vld [vmem:[%s2 + $0x248] sm:$0xf]
        %v4886 = vld [vmem:[%s2 + $0x24c] sm:$0xf]
        %v4887 = vld [vmem:[%s2 + $0x250] sm:$0xf]
        %v4888 = vld [vmem:[%s2 + $0x254] sm:$0xf]
        %v4889 = vld [vmem:[%s2 + $0x258] sm:$0xf]
        %v4890 = vld [vmem:[%s2 + $0x25c] sm:$0xf]
        %v4891 = vld [vmem:[%s2 + $0x260] sm:$0xf]
        %v4892 = vld [vmem:[%s2 + $0x264] sm:$0xf]
        %v4893 = vld [vmem:[%s2 + $0x268] sm:$0xf]
        %v4894 = vld [vmem:[%s2 + $0x26c] sm:$0xf]
        %v4895 = vld [vmem:[%s2 + $0x270] sm:$0xf]
        %v4896 = vld [vmem:[%s2 + $0x274] sm:$0xf]
        %v4897 = vld [vmem:[%s2 + $0x278] sm:$0xf]
        %v4898 = vld [vmem:[%s2 + $0x27c] sm:$0xf]
        %v4899 = vld [vmem:[%s4] sm:$0x1]
        %v4901 = vlaneseq
        %v4902 = vshrl.u32 %v4901, 7
        %v4903 = vsub.s32 0, %v4902
        %v4904 = vrot.slane %v4899, %v4903
        %v5066 = vunpack.c.l.b16 %v4739
        %v5067 = vunpack.c.l.b16 %v4740
        %v5068 = vunpack.c.l.b16 %v4741
        %v5069 = vunpack.c.l.b16 %v4742
        %v5070 = vunpack.c.l.b16 %v4743
        %v5071 = vunpack.c.l.b16 %v4744
        %v5072 = vunpack.c.l.b16 %v4745
        %v5073 = vunpack.c.l.b16 %v4746
        %v5074 = vunpack.c.l.b16 %v4747
        %v5075 = vunpack.c.l.b16 %v4748
        %v5076 = vunpack.c.l.b16 %v4749
        %v5077 = vunpack.c.l.b16 %v4750
        %v5078 = vunpack.c.l.b16 %v4751
        %v5079 = vunpack.c.l.b16 %v4752
        %v5080 = vunpack.c.l.b16 %v4753
        %v5081 = vunpack.c.l.b16 %v4754
        %v5082 = vunpack.c.l.b16 %v4755
        %v5083 = vunpack.c.l.b16 %v4756
        %v5084 = vunpack.c.l.b16 %v4757
        %v5085 = vunpack.c.l.b16 %v4758
        %v5086 = vunpack.c.l.b16 %v4759
        %v5087 = vunpack.c.l.b16 %v4760
        %v5088 = vunpack.c.l.b16 %v4761
        %v5089 = vunpack.c.l.b16 %v4762
        %v5090 = vunpack.c.l.b16 %v4763
        %v5091 = vunpack.c.l.b16 %v4764
        %v5092 = vunpack.c.l.b16 %v4765
        %v5093 = vunpack.c.l.b16 %v4766
        %v5094 = vunpack.c.l.b16 %v4767
        %v5095 = vunpack.c.l.b16 %v4768
        %v5096 = vunpack.c.l.b16 %v4769
        %v5097 = vunpack.c.l.b16 %v4770
        %v5098 = vunpack.c.l.b16 %v4771
        %v5099 = vunpack.c.l.b16 %v4772
        %v5100 = vunpack.c.l.b16 %v4773
        %v5101 = vunpack.c.l.b16 %v4774
        %v5102 = vunpack.c.l.b16 %v4775
        %v5103 = vunpack.c.l.b16 %v4776
        %v5104 = vunpack.c.l.b16 %v4777
        %v5105 = vunpack.c.l.b16 %v4778
        %v5106 = vunpack.c.l.b16 %v4779
        %v5107 = vunpack.c.l.b16 %v4780
        %v5108 = vunpack.c.l.b16 %v4781
        %v5109 = vunpack.c.l.b16 %v4782
        %v5110 = vunpack.c.l.b16 %v4783
        %v5111 = vunpack.c.l.b16 %v4784
        %v5112 = vunpack.c.l.b16 %v4785
        %v5113 = vunpack.c.l.b16 %v4786
        %v5114 = vunpack.c.l.b16 %v4787
        %v5115 = vunpack.c.l.b16 %v4788
        %v5116 = vunpack.c.l.b16 %v4789
        %v5117 = vunpack.c.l.b16 %v4790
        %v5118 = vunpack.c.l.b16 %v4791
        %v5119 = vunpack.c.l.b16 %v4792
        %v5120 = vunpack.c.l.b16 %v4793
        %v5121 = vunpack.c.l.b16 %v4794
        %v5122 = vunpack.c.l.b16 %v4795
        %v5123 = vunpack.c.l.b16 %v4796
        %v5124 = vunpack.c.l.b16 %v4797
        %v5125 = vunpack.c.l.b16 %v4798
        %v5126 = vunpack.c.l.b16 %v4799
        %v5127 = vunpack.c.l.b16 %v4800
        %v5128 = vunpack.c.l.b16 %v4801
        %v5129 = vunpack.c.l.b16 %v4802
        %v5130 = vunpack.c.l.b16 %v4803
        %v5131 = vunpack.c.l.b16 %v4804
        %v5132 = vunpack.c.l.b16 %v4805
        %v5133 = vunpack.c.l.b16 %v4806
        %v5134 = vunpack.c.l.b16 %v4807
        %v5135 = vunpack.c.l.b16 %v4808
        %v5136 = vunpack.c.l.b16 %v4809
        %v5137 = vunpack.c.l.b16 %v4810
        %v5138 = vunpack.c.l.b16 %v4811
        %v5139 = vunpack.c.l.b16 %v4812
        %v5140 = vunpack.c.l.b16 %v4813
        %v5141 = vunpack.c.l.b16 %v4814
        %v5142 = vunpack.c.l.b16 %v4815
        %v5143 = vunpack.c.l.b16 %v4816
        %v5144 = vunpack.c.l.b16 %v4817
        %v5145 = vunpack.c.l.b16 %v4818
        %v5146 = vunpack.c.l.b16 %v4819
        %v5147 = vunpack.c.l.b16 %v4820
        %v5148 = vunpack.c.l.b16 %v4821
        %v5149 = vunpack.c.l.b16 %v4822
        %v5150 = vunpack.c.l.b16 %v4823
        %v5151 = vunpack.c.l.b16 %v4824
        %v5152 = vunpack.c.l.b16 %v4825
        %v5153 = vunpack.c.l.b16 %v4826
        %v5154 = vunpack.c.l.b16 %v4827
        %v5155 = vunpack.c.l.b16 %v4828
        %v5156 = vunpack.c.l.b16 %v4829
        %v5157 = vunpack.c.l.b16 %v4830
        %v5158 = vunpack.c.l.b16 %v4831
        %v5159 = vunpack.c.l.b16 %v4832
        %v5160 = vunpack.c.l.b16 %v4833
        %v5161 = vunpack.c.l.b16 %v4834
        %v5162 = vunpack.c.l.b16 %v4835
        %v5163 = vunpack.c.l.b16 %v4836
        %v5164 = vunpack.c.l.b16 %v4837
        %v5165 = vunpack.c.l.b16 %v4838
        %v5166 = vunpack.c.l.b16 %v4839
        %v5167 = vunpack.c.l.b16 %v4840
        %v5168 = vunpack.c.l.b16 %v4841
        %v5169 = vunpack.c.l.b16 %v4842
        %v5170 = vunpack.c.l.b16 %v4843
        %v5171 = vunpack.c.l.b16 %v4844
        %v5172 = vunpack.c.l.b16 %v4845
        %v5173 = vunpack.c.l.b16 %v4846
        %v5174 = vunpack.c.l.b16 %v4847
        %v5175 = vunpack.c.l.b16 %v4848
        %v5176 = vunpack.c.l.b16 %v4849
        %v5177 = vunpack.c.l.b16 %v4850
        %v5178 = vunpack.c.l.b16 %v4851
        %v5179 = vunpack.c.l.b16 %v4852
        %v5180 = vunpack.c.l.b16 %v4853
        %v5181 = vunpack.c.l.b16 %v4854
        %v5182 = vunpack.c.l.b16 %v4855
        %v5183 = vunpack.c.l.b16 %v4856
        %v5184 = vunpack.c.l.b16 %v4857
        %v5185 = vunpack.c.l.b16 %v4858
        %v5186 = vunpack.c.l.b16 %v4859
        %v5187 = vunpack.c.l.b16 %v4860
        %v5188 = vunpack.c.l.b16 %v4861
        %v5189 = vunpack.c.l.b16 %v4862
        %v5190 = vunpack.c.l.b16 %v4863
        %v5191 = vunpack.c.l.b16 %v4864
        %v5192 = vunpack.c.l.b16 %v4865
        %v5193 = vunpack.c.l.b16 %v4866
        %v5194 = vunpack.c.l.b16 %v4867
        %v5195 = vunpack.c.l.b16 %v4868
        %v5196 = vunpack.c.l.b16 %v4869
        %v5197 = vunpack.c.l.b16 %v4870
        %v5198 = vunpack.c.l.b16 %v4871
        %v5199 = vunpack.c.l.b16 %v4872
        %v5200 = vunpack.c.l.b16 %v4873
        %v5201 = vunpack.c.l.b16 %v4874
        %v5202 = vunpack.c.l.b16 %v4875
        %v5203 = vunpack.c.l.b16 %v4876
        %v5204 = vunpack.c.l.b16 %v4877
        %v5205 = vunpack.c.l.b16 %v4878
        %v5206 = vunpack.c.l.b16 %v4879
        %v5207 = vunpack.c.l.b16 %v4880
        %v5208 = vunpack.c.l.b16 %v4881
        %v5209 = vunpack.c.l.b16 %v4882
        %v5210 = vunpack.c.l.b16 %v4883
        %v5211 = vunpack.c.l.b16 %v4884
        %v5212 = vunpack.c.l.b16 %v4885
        %v5213 = vunpack.c.l.b16 %v4886
        %v5214 = vunpack.c.l.b16 %v4887
        %v5215 = vunpack.c.l.b16 %v4888
        %v5216 = vunpack.c.l.b16 %v4889
        %v5217 = vunpack.c.l.b16 %v4890
        %v5218 = vunpack.c.l.b16 %v4891
        %v5219 = vunpack.c.l.b16 %v4892
        %v5220 = vunpack.c.l.b16 %v4893
        %v5221 = vunpack.c.l.b16 %v4894
        %v5222 = vunpack.c.l.b16 %v4895
        %v5223 = vunpack.c.l.b16 %v4896
        %v5224 = vunpack.c.l.b16 %v4897
        %v5225 = vunpack.c.l.b16 %v4898
        %v5226 = vpack.c.b16 %v5067, %v5066
        %v5227 = vpack.c.b16 %v5069, %v5068
        %v5228 = vpack.c.b16 %v5071, %v5070
        %v5229 = vpack.c.b16 %v5073, %v5072
        %v5230 = vpack.c.b16 %v5075, %v5074
        %v5231 = vpack.c.b16 %v5077, %v5076
        %v5232 = vpack.c.b16 %v5079, %v5078
        %v5233 = vpack.c.b16 %v5081, %v5080
        %v5234 = vpack.c.b16 %v5083, %v5082
        %v5235 = vpack.c.b16 %v5085, %v5084
        %v5236 = vpack.c.b16 %v5087, %v5086
        %v5237 = vpack.c.b16 %v5089, %v5088
        %v5238 = vpack.c.b16 %v5091, %v5090
        %v5239 = vpack.c.b16 %v5093, %v5092
        %v5240 = vpack.c.b16 %v5095, %v5094
        %v5241 = vpack.c.b16 %v5097, %v5096
        %v5242 = vpack.c.b16 %v5099, %v5098
        %v5243 = vpack.c.b16 %v5101, %v5100
        %v5244 = vpack.c.b16 %v5103, %v5102
        %v5245 = vpack.c.b16 %v5105, %v5104
        %v5246 = vpack.c.b16 %v5107, %v5106
        %v5247 = vpack.c.b16 %v5109, %v5108
        %v5248 = vpack.c.b16 %v5111, %v5110
        %v5249 = vpack.c.b16 %v5113, %v5112
        %v5250 = vpack.c.b16 %v5115, %v5114
        %v5251 = vpack.c.b16 %v5117, %v5116
        %v5252 = vpack.c.b16 %v5119, %v5118
        %v5253 = vpack.c.b16 %v5121, %v5120
        %v5254 = vpack.c.b16 %v5123, %v5122
        %v5255 = vpack.c.b16 %v5125, %v5124
        %v5256 = vpack.c.b16 %v5127, %v5126
        %v5257 = vpack.c.b16 %v5129, %v5128
        %v5258 = vpack.c.b16 %v5131, %v5130
        %v5259 = vpack.c.b16 %v5133, %v5132
        %v5260 = vpack.c.b16 %v5135, %v5134
        %v5261 = vpack.c.b16 %v5137, %v5136
        %v5262 = vpack.c.b16 %v5139, %v5138
        %v5263 = vpack.c.b16 %v5141, %v5140
        %v5264 = vpack.c.b16 %v5143, %v5142
        %v5265 = vpack.c.b16 %v5145, %v5144
        %v5266 = vpack.c.b16 %v5147, %v5146
        %v5267 = vpack.c.b16 %v5149, %v5148
        %v5268 = vpack.c.b16 %v5151, %v5150
        %v5269 = vpack.c.b16 %v5153, %v5152
        %v5270 = vpack.c.b16 %v5155, %v5154
        %v5271 = vpack.c.b16 %v5157, %v5156
        %v5272 = vpack.c.b16 %v5159, %v5158
        %v5273 = vpack.c.b16 %v5161, %v5160
        %v5274 = vpack.c.b16 %v5163, %v5162
        %v5275 = vpack.c.b16 %v5165, %v5164
        %v5276 = vpack.c.b16 %v5167, %v5166
        %v5277 = vpack.c.b16 %v5169, %v5168
        %v5278 = vpack.c.b16 %v5171, %v5170
        %v5279 = vpack.c.b16 %v5173, %v5172
        %v5280 = vpack.c.b16 %v5175, %v5174
        %v5281 = vpack.c.b16 %v5177, %v5176
        %v5282 = vpack.c.b16 %v5179, %v5178
        %v5283 = vpack.c.b16 %v5181, %v5180
        %v5284 = vpack.c.b16 %v5183, %v5182
        %v5285 = vpack.c.b16 %v5185, %v5184
        %v5286 = vpack.c.b16 %v5187, %v5186
        %v5287 = vpack.c.b16 %v5189, %v5188
        %v5288 = vpack.c.b16 %v5191, %v5190
        %v5289 = vpack.c.b16 %v5193, %v5192
        %v5290 = vpack.c.b16 %v5195, %v5194
        %v5291 = vpack.c.b16 %v5197, %v5196
        %v5292 = vpack.c.b16 %v5199, %v5198
        %v5293 = vpack.c.b16 %v5201, %v5200
        %v5294 = vpack.c.b16 %v5203, %v5202
        %v5295 = vpack.c.b16 %v5205, %v5204
        %v5296 = vpack.c.b16 %v5207, %v5206
        %v5297 = vpack.c.b16 %v5209, %v5208
        %v5298 = vpack.c.b16 %v5211, %v5210
        %v5299 = vpack.c.b16 %v5213, %v5212
        %v5300 = vpack.c.b16 %v5215, %v5214
        %v5301 = vpack.c.b16 %v5217, %v5216
        %v5302 = vpack.c.b16 %v5219, %v5218
        %v5303 = vpack.c.b16 %v5221, %v5220
        %v5304 = vpack.c.b16 %v5223, %v5222
        %v5305 = vpack.c.b16 %v5225, %v5224
        %5386 = vmatprep.subr.bf16.mxu0 0
        %5387 = vmatpush1.bf16.msra.mxu0 %v5226
        %5388 = vmatprep.subr.bf16.mxu0 0
        %5389 = vmatpush1.bf16.msra.mxu0 %v5227
        %5390 = vmatprep.subr.bf16.mxu0 0
        %5391 = vmatpush1.bf16.msra.mxu0 %v5228
        %5392 = vmatprep.subr.bf16.mxu0 0
        %5393 = vmatpush1.bf16.msra.mxu0 %v5229
        %5394 = vmatprep.subr.bf16.mxu0 0
        %5395 = vmatpush1.bf16.msra.mxu0 %v5230
        %5396 = vmatprep.subr.bf16.mxu0 0
        %5397 = vmatpush1.bf16.msra.mxu0 %v5231
        %5398 = vmatprep.subr.bf16.mxu0 0
        %5399 = vmatpush1.bf16.msra.mxu0 %v5232
        %5400 = vmatprep.subr.bf16.mxu0 0
        %5401 = vmatpush1.bf16.msra.mxu0 %v5233
        %5402 = vmatprep.subr.bf16.mxu0 0
        %5403 = vmatpush1.bf16.msra.mxu0 %v5234
        %5404 = vmatprep.subr.bf16.mxu0 0
        %5405 = vmatpush1.bf16.msra.mxu0 %v5235
        %5406 = vmatprep.subr.bf16.mxu0 0
        %5407 = vmatpush1.bf16.msra.mxu0 %v5236
        %5408 = vmatprep.subr.bf16.mxu0 0
        %5409 = vmatpush1.bf16.msra.mxu0 %v5237
        %5410 = vmatprep.subr.bf16.mxu0 0
        %5411 = vmatpush1.bf16.msra.mxu0 %v5238
        %5412 = vmatprep.subr.bf16.mxu0 0
        %5413 = vmatpush1.bf16.msra.mxu0 %v5239
        %5414 = vmatprep.subr.bf16.mxu0 0
        %5415 = vmatpush1.bf16.msra.mxu0 %v5240
        %5416 = vmatprep.subr.bf16.mxu0 0
        %5417 = vmatpush1.bf16.msra.mxu0 %v5241
        %5418 = vmatprep.mubr.bf16.mxu0 %v4660
        %5419 = vmatmul.mubr.bf16.gmra.mrb[0].mxu0 %v4659
        %v5420 = vpop.f32.mrb[0].mxu0
        %v5421 = vadd.f32 %v4904, %v5420
        %v5422 = vpop.f32.mrb[0].mxu0
        %v5423 = vpop.f32.mrb[0].mxu0
        %v5424 = vadd.f32 %v4904, %v5423
        %v5425 = vpop.f32.mrb[0].mxu0
        %5426 = vmatprep.mubr.bf16.mxu0 %v4670
        %5427 = vmatmul.mubr.bf16.gmra.mrb[0].mxu0 %v4669
        %v5428 = vpop.f32.mrb[0].mxu0
        %v5429 = vadd.f32 %v4904, %v5428
        %v5430 = vpop.f32.mrb[0].mxu0
        %v5431 = vpop.f32.mrb[0].mxu0
        %v5432 = vadd.f32 %v4904, %v5431
        %v5433 = vpop.f32.mrb[0].mxu0
        %5434 = vmatprep.mubr.bf16.mxu0 %v4680
        %5435 = vmatmul.mubr.bf16.gmra.mrb[0].mxu0 %v4679
        %v5436 = vpop.f32.mrb[0].mxu0
        %v5437 = vadd.f32 %v4904, %v5436
        %v5438 = vpop.f32.mrb[0].mxu0
        %v5439 = vpop.f32.mrb[0].mxu0
        %v5440 = vadd.f32 %v4904, %v5439
        %v5441 = vpop.f32.mrb[0].mxu0
        %5442 = vmatprep.mubr.bf16.mxu0 %v4690
        %5443 = vmatmul.mubr.bf16.gmra.mrb[0].mxu0 %v4689
        %v5444 = vpop.f32.mrb[0].mxu0
        %v5445 = vadd.f32 %v4904, %v5444
        %v5446 = vpop.f32.mrb[0].mxu0
        %v5447 = vpop.f32.mrb[0].mxu0
        %v5448 = vadd.f32 %v4904, %v5447
        %v5449 = vpop.f32.mrb[0].mxu0
        %5450 = vmatprep.mubr.bf16.mxu0 %v4700
        %5451 = vmatmul.mubr.bf16.gmra.mrb[0].mxu0 %v4699
        %v5452 = vpop.f32.mrb[0].mxu0
        %v5453 = vadd.f32 %v4904, %v5452
        %v5454 = vpop.f32.mrb[0].mxu0
        %v5455 = vpop.f32.mrb[0].mxu0
        %v5456 = vadd.f32 %v4904, %v5455
        %v5457 = vpop.f32.mrb[0].mxu0
        %5458 = vmatprep.mubr.bf16.mxu0 %v4710
        %5459 = vmatmul.mubr.bf16.gmra.mrb[0].mxu0 %v4709
        %v5460 = vpop.f32.mrb[0].mxu0
        %v5461 = vadd.f32 %v4904, %v5460
        %v5462 = vpop.f32.mrb[0].mxu0
        %v5463 = vpop.f32.mrb[0].mxu0
        %v5464 = vadd.f32 %v4904, %v5463
        %v5465 = vpop.f32.mrb[0].mxu0
        %5466 = vmatprep.mubr.bf16.mxu0 %v4720
        %5467 = vmatmul.mubr.bf16.gmra.mrb[0].mxu0 %v4719
        %v5468 = vpop.f32.mrb[0].mxu0
        %v5469 = vadd.f32 %v4904, %v5468
        %v5470 = vpop.f32.mrb[0].mxu0
        %v5471 = vpop.f32.mrb[0].mxu0
        %v5472 = vadd.f32 %v4904, %v5471
        %v5473 = vpop.f32.mrb[0].mxu0
        %5474 = vmatprep.mubr.bf16.mxu0 %v4730
        %5475 = vmatmul.mubr.bf16.gmra.mrb[0].mxu0 %v4729
        %v5476 = vpop.f32.mrb[0].mxu0
        %v5477 = vadd.f32 %v4904, %v5476
        %v5478 = vpop.f32.mrb[0].mxu0
        %v5479 = vpop.f32.mrb[0].mxu0
        %v5480 = vadd.f32 %v4904, %v5479
        %v5481 = vpop.f32.mrb[0].mxu0
        %5482 = vdwg.mxu0
        %5483 = vmatprep.subr.bf16.mxu0 0
        %5484 = vmatpush1.bf16.msra.mxu0 %v5242
        %5485 = vmatprep.subr.bf16.mxu0 0
        %5486 = vmatpush1.bf16.msra.mxu0 %v5243
        %5487 = vmatprep.subr.bf16.mxu0 0
        %5488 = vmatpush1.bf16.msra.mxu0 %v5244
        %5489 = vmatprep.subr.bf16.mxu0 0
        %5490 = vmatpush1.bf16.msra.mxu0 %v5245
        %5491 = vmatprep.subr.bf16.mxu0 0
        %5492 = vmatpush1.bf16.msra.mxu0 %v5246
        %5493 = vmatprep.subr.bf16.mxu0 0
        %5494 = vmatpush1.bf16.msra.mxu0 %v5247
        %5495 = vmatprep.subr.bf16.mxu0 0
        %5496 = vmatpush1.bf16.msra.mxu0 %v5248
        %5497 = vmatprep.subr.bf16.mxu0 0
        %5498 = vmatpush1.bf16.msra.mxu0 %v5249
        %5499 = vmatprep.subr.bf16.mxu0 0
        %5500 = vmatpush1.bf16.msra.mxu0 %v5250
        %5501 = vmatprep.subr.bf16.mxu0 0
        %5502 = vmatpush1.bf16.msra.mxu0 %v5251
        %5503 = vmatprep.subr.bf16.mxu0 0
        %5504 = vmatpush1.bf16.msra.mxu0 %v5252
        %5505 = vmatprep.subr.bf16.mxu0 0
        %5506 = vmatpush1.bf16.msra.mxu0 %v5253
        %5507 = vmatprep.subr.bf16.mxu0 0
        %5508 = vmatpush1.bf16.msra.mxu0 %v5254
        %5509 = vmatprep.subr.bf16.mxu0 0
        %5510 = vmatpush1.bf16.msra.mxu0 %v5255
        %5511 = vmatprep.subr.bf16.mxu0 0
        %5512 = vmatpush1.bf16.msra.mxu0 %v5256
        %5513 = vmatprep.subr.bf16.mxu0 0
        %5514 = vmatpush1.bf16.msra.mxu0 %v5257
        %5515 = vmatprep.mubr.bf16.mxu0 %v4662
        %5516 = vmatmul.mubr.bf16.gmra.mrb[0].mxu0 %v4661
        %v5517 = vpop.f32.mrb[0].mxu0
        %v5518 = vadd.f32 %v5421, %v5517
        %v5519 = vpop.f32.mrb[0].mxu0
        %v5520 = vpop.f32.mrb[0].mxu0
        %v5521 = vadd.f32 %v5424, %v5520
        %v5522 = vpop.f32.mrb[0].mxu0
        %5523 = vmatprep.mubr.bf16.mxu0 %v4672
        %5524 = vmatmul.mubr.bf16.gmra.mrb[0].mxu0 %v4671
        %v5525 = vpop.f32.mrb[0].mxu0
        %v5526 = vadd.f32 %v5429, %v5525
        %v5527 = vpop.f32.mrb[0].mxu0
        %v5528 = vpop.f32.mrb[0].mxu0
        %v5529 = vadd.f32 %v5432, %v5528
        %v5530 = vpop.f32.mrb[0].mxu0
        %5531 = vmatprep.mubr.bf16.mxu0 %v4682
        %5532 = vmatmul.mubr.bf16.gmra.mrb[0].mxu0 %v4681
        %v5533 = vpop.f32.mrb[0].mxu0
        %v5534 = vadd.f32 %v5437, %v5533
        %v5535 = vpop.f32.mrb[0].mxu0
        %v5536 = vpop.f32.mrb[0].mxu0
        %v5537 = vadd.f32 %v5440, %v5536
        %v5538 = vpop.f32.mrb[0].mxu0
        %5539 = vmatprep.mubr.bf16.mxu0 %v4692
        %5540 = vmatmul.mubr.bf16.gmra.mrb[0].mxu0 %v4691
        %v5541 = vpop.f32.mrb[0].mxu0
        %v5542 = vadd.f32 %v5445, %v5541
        %v5543 = vpop.f32.mrb[0].mxu0
        %v5544 = vpop.f32.mrb[0].mxu0
        %v5545 = vadd.f32 %v5448, %v5544
        %v5546 = vpop.f32.mrb[0].mxu0
        %5547 = vmatprep.mubr.bf16.mxu0 %v4702
        %5548 = vmatmul.mubr.bf16.gmra.mrb[0].mxu0 %v4701
        %v5549 = vpop.f32.mrb[0].mxu0
        %v5550 = vadd.f32 %v5453, %v5549
        %v5551 = vpop.f32.mrb[0].mxu0
        %v5552 = vpop.f32.mrb[0].mxu0
        %v5553 = vadd.f32 %v5456, %v5552
        %v5554 = vpop.f32.mrb[0].mxu0
        %5555 = vmatprep.mubr.bf16.mxu0 %v4712
        %5556 = vmatmul.mubr.bf16.gmra.mrb[0].mxu0 %v4711
        %v5557 = vpop.f32.mrb[0].mxu0
        %v5558 = vadd.f32 %v5461, %v5557
        %v5559 = vpop.f32.mrb[0].mxu0
        %v5560 = vpop.f32.mrb[0].mxu0
        %v5561 = vadd.f32 %v5464, %v5560
        %v5562 = vpop.f32.mrb[0].mxu0
        %5563 = vmatprep.mubr.bf16.mxu0 %v4722
        %5564 = vmatmul.mubr.bf16.gmra.mrb[0].mxu0 %v4721
        %v5565 = vpop.f32.mrb[0].mxu0
        %v5566 = vadd.f32 %v5469, %v5565
        %v5567 = vpop.f32.mrb[0].mxu0
        %v5568 = vpop.f32.mrb[0].mxu0
        %v5569 = vadd.f32 %v5472, %v5568
        %v5570 = vpop.f32.mrb[0].mxu0
        %5571 = vmatprep.mubr.bf16.mxu0 %v4732
        %5572 = vmatmul.mubr.bf16.gmra.mrb[0].mxu0 %v4731
        %v5573 = vpop.f32.mrb[0].mxu0
        %v5574 = vadd.f32 %v5477, %v5573
        %v5575 = vpop.f32.mrb[0].mxu0
        %v5576 = vpop.f32.mrb[0].mxu0
        %v5577 = vadd.f32 %v5480, %v5576
        %v5578 = vpop.f32.mrb[0].mxu0
        %5579 = vdwg.mxu0
        %5580 = vmatprep.subr.bf16.mxu0 0
        %5581 = vmatpush1.bf16.msra.mxu0 %v5258
        %5582 = vmatprep.subr.bf16.mxu0 0
        %5583 = vmatpush1.bf16.msra.mxu0 %v5259
        %5584 = vmatprep.subr.bf16.mxu0 0
        %5585 = vmatpush1.bf16.msra.mxu0 %v5260
        %5586 = vmatprep.subr.bf16.mxu0 0
        %5587 = vmatpush1.bf16.msra.mxu0 %v5261
        %5588 = vmatprep.subr.bf16.mxu0 0
        %5589 = vmatpush1.bf16.msra.mxu0 %v5262
        %5590 = vmatprep.subr.bf16.mxu0 0
        %5591 = vmatpush1.bf16.msra.mxu0 %v5263
        %5592 = vmatprep.subr.bf16.mxu0 0
        %5593 = vmatpush1.bf16.msra.mxu0 %v5264
        %5594 = vmatprep.subr.bf16.mxu0 0
        %5595 = vmatpush1.bf16.msra.mxu0 %v5265
        %5596 = vmatprep.subr.bf16.mxu0 0
        %5597 = vmatpush1.bf16.msra.mxu0 %v5266
        %5598 = vmatprep.subr.bf16.mxu0 0
        %5599 = vmatpush1.bf16.msra.mxu0 %v5267
        %5600 = vmatprep.subr.bf16.mxu0 0
        %5601 = vmatpush1.bf16.msra.mxu0 %v5268
        %5602 = vmatprep.subr.bf16.mxu0 0
        %5603 = vmatpush1.bf16.msra.mxu0 %v5269
        %5604 = vmatprep.subr.bf16.mxu0 0
        %5605 = vmatpush1.bf16.msra.mxu0 %v5270
        %5606 = vmatprep.subr.bf16.mxu0 0
        %5607 = vmatpush1.bf16.msra.mxu0 %v5271
        %5608 = vmatprep.subr.bf16.mxu0 0
        %5609 = vmatpush1.bf16.msra.mxu0 %v5272
        %5610 = vmatprep.subr.bf16.mxu0 0
        %5611 = vmatpush1.bf16.msra.mxu0 %v5273
        %5612 = vmatprep.mubr.bf16.mxu0 %v4664
        %5613 = vmatmul.mubr.bf16.gmra.mrb[0].mxu0 %v4663
        %v5614 = vpop.f32.mrb[0].mxu0
        %v5615 = vadd.f32 %v5518, %v5614
        %v5616 = vpop.f32.mrb[0].mxu0
        %v5617 = vpop.f32.mrb[0].mxu0
        %v5618 = vadd.f32 %v5521, %v5617
        %v5619 = vpop.f32.mrb[0].mxu0
        %5620 = vmatprep.mubr.bf16.mxu0 %v4674
        %5621 = vmatmul.mubr.bf16.gmra.mrb[0].mxu0 %v4673
        %v5622 = vpop.f32.mrb[0].mxu0
        %v5623 = vadd.f32 %v5526, %v5622
        %v5624 = vpop.f32.mrb[0].mxu0
        %v5625 = vpop.f32.mrb[0].mxu0
        %v5626 = vadd.f32 %v5529, %v5625
        %v5627 = vpop.f32.mrb[0].mxu0
        %5628 = vmatprep.mubr.bf16.mxu0 %v4684
        %5629 = vmatmul.mubr.bf16.gmra.mrb[0].mxu0 %v4683
        %v5630 = vpop.f32.mrb[0].mxu0
        %v5631 = vadd.f32 %v5534, %v5630
        %v5632 = vpop.f32.mrb[0].mxu0
        %v5633 = vpop.f32.mrb[0].mxu0
        %v5634 = vadd.f32 %v5537, %v5633
        %v5635 = vpop.f32.mrb[0].mxu0
        %5636 = vmatprep.mubr.bf16.mxu0 %v4694
        %5637 = vmatmul.mubr.bf16.gmra.mrb[0].mxu0 %v4693
        %v5638 = vpop.f32.mrb[0].mxu0
        %v5639 = vadd.f32 %v5542, %v5638
        %v5640 = vpop.f32.mrb[0].mxu0
        %v5641 = vpop.f32.mrb[0].mxu0
        %v5642 = vadd.f32 %v5545, %v5641
        %v5643 = vpop.f32.mrb[0].mxu0
        %5644 = vmatprep.mubr.bf16.mxu0 %v4704
        %5645 = vmatmul.mubr.bf16.gmra.mrb[0].mxu0 %v4703
        %v5646 = vpop.f32.mrb[0].mxu0
        %v5647 = vadd.f32 %v5550, %v5646
        %v5648 = vpop.f32.mrb[0].mxu0
        %v5649 = vpop.f32.mrb[0].mxu0
        %v5650 = vadd.f32 %v5553, %v5649
        %v5651 = vpop.f32.mrb[0].mxu0
        %5652 = vmatprep.mubr.bf16.mxu0 %v4714
        %5653 = vmatmul.mubr.bf16.gmra.mrb[0].mxu0 %v4713
        %v5654 = vpop.f32.mrb[0].mxu0
        %v5655 = vadd.f32 %v5558, %v5654
        %v5656 = vpop.f32.mrb[0].mxu0
        %v5657 = vpop.f32.mrb[0].mxu0
        %v5658 = vadd.f32 %v5561, %v5657
        %v5659 = vpop.f32.mrb[0].mxu0
        %5660 = vmatprep.mubr.bf16.mxu0 %v4724
        %5661 = vmatmul.mubr.bf16.gmra.mrb[0].mxu0 %v4723
        %v5662 = vpop.f32.mrb[0].mxu0
        %v5663 = vadd.f32 %v5566, %v5662
        %v5664 = vpop.f32.mrb[0].mxu0
        %v5665 = vpop.f32.mrb[0].mxu0
        %v5666 = vadd.f32 %v5569, %v5665
        %v5667 = vpop.f32.mrb[0].mxu0
        %5668 = vmatprep.mubr.bf16.mxu0 %v4734
        %5669 = vmatmul.mubr.bf16.gmra.mrb[0].mxu0 %v4733
        %v5670 = vpop.f32.mrb[0].mxu0
        %v5671 = vadd.f32 %v5574, %v5670
        %v5672 = vpop.f32.mrb[0].mxu0
        %v5673 = vpop.f32.mrb[0].mxu0
        %v5674 = vadd.f32 %v5577, %v5673
        %v5675 = vpop.f32.mrb[0].mxu0
        %5676 = vdwg.mxu0
        %5677 = vmatprep.subr.bf16.mxu0 0
        %5678 = vmatpush1.bf16.msra.mxu0 %v5274
        %5679 = vmatprep.subr.bf16.mxu0 0
        %5680 = vmatpush1.bf16.msra.mxu0 %v5275
        %5681 = vmatprep.subr.bf16.mxu0 0
        %5682 = vmatpush1.bf16.msra.mxu0 %v5276
        %5683 = vmatprep.subr.bf16.mxu0 0
        %5684 = vmatpush1.bf16.msra.mxu0 %v5277
        %5685 = vmatprep.subr.bf16.mxu0 0
        %5686 = vmatpush1.bf16.msra.mxu0 %v5278
        %5687 = vmatprep.subr.bf16.mxu0 0
        %5688 = vmatpush1.bf16.msra.mxu0 %v5279
        %5689 = vmatprep.subr.bf16.mxu0 0
        %5690 = vmatpush1.bf16.msra.mxu0 %v5280
        %5691 = vmatprep.subr.bf16.mxu0 0
        %5692 = vmatpush1.bf16.msra.mxu0 %v5281
        %5693 = vmatprep.subr.bf16.mxu0 0
        %5694 = vmatpush1.bf16.msra.mxu0 %v5282
        %5695 = vmatprep.subr.bf16.mxu0 0
        %5696 = vmatpush1.bf16.msra.mxu0 %v5283
        %5697 = vmatprep.subr.bf16.mxu0 0
        %5698 = vmatpush1.bf16.msra.mxu0 %v5284
        %5699 = vmatprep.subr.bf16.mxu0 0
        %5700 = vmatpush1.bf16.msra.mxu0 %v5285
        %5701 = vmatprep.subr.bf16.mxu0 0
        %5702 = vmatpush1.bf16.msra.mxu0 %v5286
        %5703 = vmatprep.subr.bf16.mxu0 0
        %5704 = vmatpush1.bf16.msra.mxu0 %v5287
        %5705 = vmatprep.subr.bf16.mxu0 0
        %5706 = vmatpush1.bf16.msra.mxu0 %v5288
        %5707 = vmatprep.subr.bf16.mxu0 0
        %5708 = vmatpush1.bf16.msra.mxu0 %v5289
        %5709 = vmatprep.mubr.bf16.mxu0 %v4666
        %5710 = vmatmul.mubr.bf16.gmra.mrb[0].mxu0 %v4665
        %v5711 = vpop.f32.mrb[0].mxu0
        %v5712 = vadd.f32 %v5615, %v5711
        %v5713 = vpop.f32.mrb[0].mxu0
        %v5714 = vpop.f32.mrb[0].mxu0
        %v5715 = vadd.f32 %v5618, %v5714
        %v5716 = vpop.f32.mrb[0].mxu0
        %5717 = vmatprep.mubr.bf16.mxu0 %v4676
        %5718 = vmatmul.mubr.bf16.gmra.mrb[0].mxu0 %v4675
        %v5719 = vpop.f32.mrb[0].mxu0
        %v5720 = vadd.f32 %v5623, %v5719
        %v5721 = vpop.f32.mrb[0].mxu0
        %v5722 = vpop.f32.mrb[0].mxu0
        %v5723 = vadd.f32 %v5626, %v5722
        %v5724 = vpop.f32.mrb[0].mxu0
        %5725 = vmatprep.mubr.bf16.mxu0 %v4686
        %5726 = vmatmul.mubr.bf16.gmra.mrb[0].mxu0 %v4685
        %v5727 = vpop.f32.mrb[0].mxu0
        %v5728 = vadd.f32 %v5631, %v5727
        %v5729 = vpop.f32.mrb[0].mxu0
        %v5730 = vpop.f32.mrb[0].mxu0
        %v5731 = vadd.f32 %v5634, %v5730
        %v5732 = vpop.f32.mrb[0].mxu0
        %5733 = vmatprep.mubr.bf16.mxu0 %v4696
        %5734 = vmatmul.mubr.bf16.gmra.mrb[0].mxu0 %v4695
        %v5735 = vpop.f32.mrb[0].mxu0
        %v5736 = vadd.f32 %v5639, %v5735
        %v5737 = vpop.f32.mrb[0].mxu0
        %v5738 = vpop.f32.mrb[0].mxu0
        %v5739 = vadd.f32 %v5642, %v5738
        %v5740 = vpop.f32.mrb[0].mxu0
        %5741 = vmatprep.mubr.bf16.mxu0 %v4706
        %5742 = vmatmul.mubr.bf16.gmra.mrb[0].mxu0 %v4705
        %v5743 = vpop.f32.mrb[0].mxu0
        %v5744 = vadd.f32 %v5647, %v5743
        %v5745 = vpop.f32.mrb[0].mxu0
        %v5746 = vpop.f32.mrb[0].mxu0
        %v5747 = vadd.f32 %v5650, %v5746
        %v5748 = vpop.f32.mrb[0].mxu0
        %5749 = vmatprep.mubr.bf16.mxu0 %v4716
        %5750 = vmatmul.mubr.bf16.gmra.mrb[0].mxu0 %v4715
        %v5751 = vpop.f32.mrb[0].mxu0
        %v5752 = vadd.f32 %v5655, %v5751
        %v5753 = vpop.f32.mrb[0].mxu0
        %v5754 = vpop.f32.mrb[0].mxu0
        %v5755 = vadd.f32 %v5658, %v5754
        %v5756 = vpop.f32.mrb[0].mxu0
        %5757 = vmatprep.mubr.bf16.mxu0 %v4726
        %5758 = vmatmul.mubr.bf16.gmra.mrb[0].mxu0 %v4725
        %v5759 = vpop.f32.mrb[0].mxu0
        %v5760 = vadd.f32 %v5663, %v5759
        %v5761 = vpop.f32.mrb[0].mxu0
        %v5762 = vpop.f32.mrb[0].mxu0
        %v5763 = vadd.f32 %v5666, %v5762
        %v5764 = vpop.f32.mrb[0].mxu0
        %5765 = vmatprep.mubr.bf16.mxu0 %v4736
        %5766 = vmatmul.mubr.bf16.gmra.mrb[0].mxu0 %v4735
        %v5767 = vpop.f32.mrb[0].mxu0
        %v5768 = vadd.f32 %v5671, %v5767
        %v5769 = vpop.f32.mrb[0].mxu0
        %v5770 = vpop.f32.mrb[0].mxu0
        %v5771 = vadd.f32 %v5674, %v5770
        %v5772 = vpop.f32.mrb[0].mxu0
        %5773 = vdwg.mxu0
        %5774 = vmatprep.subr.bf16.mxu0 0
        %5775 = vmatpush1.bf16.msra.mxu0 %v5290
        %5776 = vmatprep.subr.bf16.mxu0 0
        %5777 = vmatpush1.bf16.msra.mxu0 %v5291
        %5778 = vmatprep.subr.bf16.mxu0 0
        %5779 = vmatpush1.bf16.msra.mxu0 %v5292
        %5780 = vmatprep.subr.bf16.mxu0 0
        %5781 = vmatpush1.bf16.msra.mxu0 %v5293
        %5782 = vmatprep.subr.bf16.mxu0 0
        %5783 = vmatpush1.bf16.msra.mxu0 %v5294
        %5784 = vmatprep.subr.bf16.mxu0 0
        %5785 = vmatpush1.bf16.msra.mxu0 %v5295
        %5786 = vmatprep.subr.bf16.mxu0 0
        %5787 = vmatpush1.bf16.msra.mxu0 %v5296
        %5788 = vmatprep.subr.bf16.mxu0 0
        %5789 = vmatpush1.bf16.msra.mxu0 %v5297
        %5790 = vmatprep.subr.bf16.mxu0 0
        %5791 = vmatpush1.bf16.msra.mxu0 %v5298
        %5792 = vmatprep.subr.bf16.mxu0 0
        %5793 = vmatpush1.bf16.msra.mxu0 %v5299
        %5794 = vmatprep.subr.bf16.mxu0 0
        %5795 = vmatpush1.bf16.msra.mxu0 %v5300
        %5796 = vmatprep.subr.bf16.mxu0 0
        %5797 = vmatpush1.bf16.msra.mxu0 %v5301
        %5798 = vmatprep.subr.bf16.mxu0 0
        %5799 = vmatpush1.bf16.msra.mxu0 %v5302
        %5800 = vmatprep.subr.bf16.mxu0 0
        %5801 = vmatpush1.bf16.msra.mxu0 %v5303
        %5802 = vmatprep.subr.bf16.mxu0 0
        %5803 = vmatpush1.bf16.msra.mxu0 %v5304
        %5804 = vmatprep.subr.bf16.mxu0 0
        %5805 = vmatpush1.bf16.msra.mxu0 %v5305
        %5806 = vmatprep.mubr.bf16.mxu0 %v4668
        %5807 = vmatmul.mubr.bf16.gmra.mrb[0].mxu0 %v4667
        %v5808 = vpop.f32.mrb[0].mxu0
        %v5809 = vadd.f32 %v5712, %v5808
        %v5810 = vpop.f32.mrb[0].mxu0
        %v5811 = vpop.f32.mrb[0].mxu0
        %v5812 = vadd.f32 %v5715, %v5811
        %v5813 = vpop.f32.mrb[0].mxu0
        %5814 = vmatprep.mubr.bf16.mxu0 %v4678
        %5815 = vmatmul.mubr.bf16.gmra.mrb[0].mxu0 %v4677
        %v5816 = vpop.f32.mrb[0].mxu0
        %v5817 = vadd.f32 %v5720, %v5816
        %v5818 = vpop.f32.mrb[0].mxu0
        %v5819 = vpop.f32.mrb[0].mxu0
        %v5820 = vadd.f32 %v5723, %v5819
        %v5821 = vpop.f32.mrb[0].mxu0
        %5822 = vmatprep.mubr.bf16.mxu0 %v4688
        %5823 = vmatmul.mubr.bf16.gmra.mrb[0].mxu0 %v4687
        %v5824 = vpop.f32.mrb[0].mxu0
        %v5825 = vadd.f32 %v5728, %v5824
        %v5826 = vpop.f32.mrb[0].mxu0
        %v5827 = vpop.f32.mrb[0].mxu0
        %v5828 = vadd.f32 %v5731, %v5827
        %v5829 = vpop.f32.mrb[0].mxu0
        %5830 = vmatprep.mubr.bf16.mxu0 %v4698
        %5831 = vmatmul.mubr.bf16.gmra.mrb[0].mxu0 %v4697
        %v5832 = vpop.f32.mrb[0].mxu0
        %v5833 = vadd.f32 %v5736, %v5832
        %v5834 = vpop.f32.mrb[0].mxu0
        %v5835 = vpop.f32.mrb[0].mxu0
        %v5836 = vadd.f32 %v5739, %v5835
        %v5837 = vpop.f32.mrb[0].mxu0
        %5838 = vmatprep.mubr.bf16.mxu0 %v4708
        %5839 = vmatmul.mubr.bf16.gmra.mrb[0].mxu0 %v4707
        %v5840 = vpop.f32.mrb[0].mxu0
        %v5841 = vadd.f32 %v5744, %v5840
        %v5842 = vpop.f32.mrb[0].mxu0
        %v5843 = vpop.f32.mrb[0].mxu0
        %v5844 = vadd.f32 %v5747, %v5843
        %v5845 = vpop.f32.mrb[0].mxu0
        %5846 = vmatprep.mubr.bf16.mxu0 %v4718
        %5847 = vmatmul.mubr.bf16.gmra.mrb[0].mxu0 %v4717
        %v5848 = vpop.f32.mrb[0].mxu0
        %v5849 = vadd.f32 %v5752, %v5848
        %v5850 = vpop.f32.mrb[0].mxu0
        %v5851 = vpop.f32.mrb[0].mxu0
        %v5852 = vadd.f32 %v5755, %v5851
        %v5853 = vpop.f32.mrb[0].mxu0
        %5854 = vmatprep.mubr.bf16.mxu0 %v4728
        %5855 = vmatmul.mubr.bf16.gmra.mrb[0].mxu0 %v4727
        %v5856 = vpop.f32.mrb[0].mxu0
        %v5857 = vadd.f32 %v5760, %v5856
        %v5858 = vpop.f32.mrb[0].mxu0
        %v5859 = vpop.f32.mrb[0].mxu0
        %v5860 = vadd.f32 %v5763, %v5859
        %v5861 = vpop.f32.mrb[0].mxu0
        %5862 = vmatprep.mubr.bf16.mxu0 %v4738
        %5863 = vmatmul.mubr.bf16.gmra.mrb[0].mxu0 %v4737
        %v5864 = vpop.f32.mrb[0].mxu0
        %v5865 = vadd.f32 %v5768, %v5864
        %v5866 = vpop.f32.mrb[0].mxu0
        %v5867 = vpop.f32.mrb[0].mxu0
        %v5868 = vadd.f32 %v5771, %v5867
        %v5869 = vpop.f32.mrb[0].mxu0
        %5870 = vdwg.mxu0
        %v5871 = vmax.f32 %v5809, 0.0
        %v5872 = vmax.f32 %v5812, 0.0
        %v5873 = vmax.f32 %v5817, 0.0
        %v5874 = vmax.f32 %v5820, 0.0
        %v5875 = vmax.f32 %v5825, 0.0
        %v5876 = vmax.f32 %v5828, 0.0
        %v5877 = vmax.f32 %v5833, 0.0
        %v5878 = vmax.f32 %v5836, 0.0
        %v5879 = vmax.f32 %v5841, 0.0
        %v5880 = vmax.f32 %v5844, 0.0
        %v5881 = vmax.f32 %v5849, 0.0
        %v5882 = vmax.f32 %v5852, 0.0
        %v5883 = vmax.f32 %v5857, 0.0
        %v5884 = vmax.f32 %v5860, 0.0
        %v5885 = vmax.f32 %v5865, 0.0
        %v5886 = vmax.f32 %v5868, 0.0
        %5887 = vst [vmem:[%s246] sm:$0xff] %v5871
        %5888 = vst [vmem:[%s246 + $0x8] sm:$0xff] %v5872
        %5889 = vst [vmem:[%s246 + $0x10] sm:$0xff] %v5873
        %5890 = vst [vmem:[%s246 + $0x18] sm:$0xff] %v5874
        %5891 = vst [vmem:[%s246 + $0x20] sm:$0xff] %v5875
        %5892 = vst [vmem:[%s246 + $0x28] sm:$0xff] %v5876
        %5893 = vst [vmem:[%s246 + $0x30] sm:$0xff] %v5877
        %5894 = vst [vmem:[%s246 + $0x38] sm:$0xff] %v5878
        %5895 = vst [vmem:[%s246 + $0x40] sm:$0xff] %v5879
        %5896 = vst [vmem:[%s246 + $0x48] sm:$0xff] %v5880
        %5897 = vst [vmem:[%s246 + $0x50] sm:$0xff] %v5881
        %5898 = vst [vmem:[%s246 + $0x58] sm:$0xff] %v5882
        %5899 = vst [vmem:[%s246 + $0x60] sm:$0xff] %v5883
        %5900 = vst [vmem:[%s246 + $0x68] sm:$0xff] %v5884
        %5901 = vst [vmem:[%s246 + $0x70] sm:$0xff] %v5885
        %5902 = vst [vmem:[%s246 + $0x78] sm:$0xff] %v5886
        %s5903 = sand.u32 %s152, 1
        %s5904 = scalar_lea.sflag [#allocation7], %s5903
        %s5905 = sand.u32 %s152, 1
        %s5906 = smul.addr %s5905, 128
        %s5907 = scalar_lea.vmem [#allocation8], %s5906
        // Predicated region
        $region53: #{tpu_custom_call.1} parent=39 // pred_check
          %p5908 = pneg %p162
        $region54: #{tpu_custom_call.1} parent=39 // pred_check_branch
          %5910 = sbr.rel (%p5908) target = $region56
        $region55: #{tpu_custom_call.1} parent=39 // pred_region
          %s5911 = smul.u32 8, %s25
          %s5913 = ssub.s32 2048, 2048
          %5914 = vsyncadd %s5904, %s5913
          %s5915 = smul.addr %s5911, 2
          %s5916 = smul.addr %s24, 32
          %s5917 = sadd.s32 %s5915, %s5916
          %s5918 = smul.addr %s5917, 128
          %s5919 = scalar_lea.hbm %s5, %s5918
          %s5920 = sshll.u32 %s5907, 4
          %s5921 = int_to_ptr.vmem [resolvable:$true] %s5920
          %5926 = dma.vmem_to_hbm [thread:$0]  %s5921, 2048, %s5919, %s5904, 128, 128, 8
        $region56: #{tpu_custom_call.1} parent=39 // pred_fallthru
          _
      $region40: #{tpu_custom_call.1} parent=5 // pred_fallthru
        _
      %p5927 = scmp.le.s32.totalorder 2, %s15
      // Predicated region
      $region57: #{tpu_custom_call.1} parent=5 // pred_check
        %p5928 = pneg %p5927
      $region58: #{tpu_custom_call.1} parent=5 // pred_check_branch
        %5930 = sbr.rel (%p5928) target = $region60
      $region59: #{tpu_custom_call.1} parent=5 // pred_region
        %s5931 = ssub.s32 %s15, 2
        // Predicated region
        $region61: #{tpu_custom_call.1} parent=59 // pred_check
          %p5932 = pneg %p168
        $region62: #{tpu_custom_call.1} parent=59 // pred_check_branch
          %5934 = sbr.rel (%p5932) target = $region64
        $region63: #{tpu_custom_call.1} parent=59 // pred_region
          %s5935 = sand.u32 %s153, 1
          %s5936 = scalar_lea.sflag [#allocation7], %s5935
          %s5937 = sand.u32 %s153, 1
          %s5938 = smul.addr %s5937, 128
          %s5939 = scalar_lea.vmem [#allocation8], %s5938
          %5940 = dma.done %s5936, 2048
        $region64: #{tpu_custom_call.1} parent=59 // pred_fallthru
          _
      $region60: #{tpu_custom_call.1} parent=5 // pred_fallthru
        _
    $region6: #{tpu_custom_call.1} parent=1 // loop_footer
      %s19 = sadd.s32 1, %s15
    $region7: #{tpu_custom_call.1} parent=1 // loop_footer_branch
      %14 = sbr.rel target = $region3
    $region8: #{tpu_custom_call.1} parent=1 // loop_exit
      _
    %5941 = vsyncpa [#allocation6], 1
    %s5942 = scalar_lea.sflag [#allocation6], 1
    %5943 = vsyncpa %s5942, 1
    %5944 = vsyncpa [#allocation7], 1
    %s5945 = scalar_lea.sflag [#allocation7], 1
    %5946 = vsyncpa %s5945, 1

</llo_original>
